<compile_context>
chip_gen: v5e
topology: v5e:2x2
jax: 0.10.0
libtpu: 0.0.40
codegen_flags: <defaults>
</compile_context>

<pallas_src>
import math

import numpy as np
import jax
import jax.numpy as jnp
from jax.experimental import pallas as pl
from jax.experimental.pallas import tpu as pltpu


def _compiler_params(**kwargs):
    cls = getattr(pltpu, "CompilerParams", None) or getattr(pltpu, "TPUCompilerParams", None)
    return cls(**kwargs) if cls is not None else None


def _pool_select_mats(W, Wout, pad):
    """0/1 matrices: (row @ s0, row @ s1) pick the two columns of each 2-wide pool
    window. Out-of-range (padded) columns select nothing -> 0, safe post-ReLU."""
    j = np.arange(W)[:, None]
    k = np.arange(Wout)[None, :]
    s0 = (j == 2 * k - pad).astype(np.float32)
    s1 = (j == 2 * k + 1 - pad).astype(np.float32)
    return jnp.asarray(s0), jnp.asarray(s1)


def make_conv_block(H, W, Cin, Cout, pool_pad):
    """Fused 5x5 conv (stride 1, pad 2) + ReLU + 2x2/2 max-pool (optional pad 1).

    Input : (B, H,    Cin,  W)    float32  (W on lanes, channels on sublanes)
    Output: (B, Hout, Cout, Wout) float32
    """
    Hp, Wp = H + 4, W + 4
    Hout = (H + 2 * pool_pad) // 2
    Wout = (W + 2 * pool_pad) // 2

    def kernel(x_ref, w_ref, b_ref, s0_ref, s1_ref, o_ref):
        # x_ref : (Hp, Cin, Wp)  zero-padded image
        # w_ref : (25, Cout, Cin) tap-major weights (pre-transposed on host)
        # b_ref : (Cout, 1)
        # s0/s1 : (W, Wout) pooling column-selection matrices
        # o_ref : (Hout, Cout, Wout)
        bias = b_ref[...]
        s0 = s0_ref[...]
        s1 = s1_ref[...]

        def conv_row(i):
            # One ReLU'd conv output row i in [0, H): (Cout, W), W on lanes.
            acc = jnp.zeros((Cout, W), jnp.float32)
            for dy in range(5):
                plane = x_ref[i + dy]                    # (Cin, Wp)
                for dx in range(5):
                    taps = w_ref[dy * 5 + dx]            # (Cout, Cin)
                    cols = plane[:, dx:dx + W]           # (Cin, W)
                    if Cin == 1:
                        # Tiny contraction -> stay on the VPU (broadcast FMA).
                        acc = acc + taps * cols
                    else:
                        acc = acc + jnp.dot(
                            taps, cols, preferred_element_type=jnp.float32)
            return jnp.maximum(acc + bias, 0.0)

        def body(io, carry):
            ia = 2 * io - pool_pad                       # top row of pool window
            ib = ia + 1
            if pool_pad:
                ra = conv_row(jnp.maximum(ia, 0))
                ra = ra * (ia >= 0).astype(jnp.float32)  # padded row -> 0 (post-ReLU safe)
            else:
                ra = conv_row(ia)
            rb = conv_row(ib)
            rowmax = jnp.maximum(ra, rb)                 # pooled along H: (Cout, W)
            pooled = jnp.maximum(
                jnp.dot(rowmax, s0, preferred_element_type=jnp.float32),
                jnp.dot(rowmax, s1, preferred_element_type=jnp.float32))
            o_ref[io] = pooled.astype(o_ref.dtype)       # (Cout, Wout)
            return carry

        jax.lax.fori_loop(0, Hout, body, 0)

    def forward(x_hcw, w_oihw, bias):
        # x_hcw: (B, H, Cin, W); w_oihw: (Cout, Cin, 5, 5) PyTorch layout; bias: (Cout,)
        B = x_hcw.shape[0]
        xp = jnp.pad(x_hcw, ((0, 0), (2, 2), (0, 0), (2, 2)))  # conv zero padding
        w_taps = jnp.transpose(w_oihw, (2, 3, 0, 1)).reshape(25, Cout, Cin)
        b2 = bias.reshape(Cout, 1)
        s0, s1 = _pool_select_mats(W, Wout, pool_pad)
        return pl.pallas_call(
            kernel,
            out_shape=jax.ShapeDtypeStruct((B, Hout, Cout, Wout), jnp.float32),
            grid=(B,),
            in_specs=[
                pl.BlockSpec((None, Hp, Cin, Wp), lambda b: (b, 0, 0, 0)),
                pl.BlockSpec((25, Cout, Cin), lambda b: (0, 0, 0)),
                pl.BlockSpec((Cout, 1), lambda b: (0, 0)),
                pl.BlockSpec((W, Wout), lambda b: (0, 0)),
                pl.BlockSpec((W, Wout), lambda b: (0, 0)),
            ],
            out_specs=pl.BlockSpec((None, Hout, Cout, Wout), lambda b: (b, 0, 0, 0)),
            compiler_params=_compiler_params(dimension_semantics=("parallel",)),
        )(xp, w_taps, b2, s0, s1)

    return forward


def _linear_kernel(x_ref, w_ref, b_ref, o_ref):
    o_ref[...] = (jnp.dot(x_ref[...], w_ref[...], preferred_element_type=jnp.float32)
                  + b_ref[...]).astype(o_ref.dtype)


def linear_forward(x, weight, bias):
    """x: (B, K), weight: (N, K) (PyTorch layout), bias: (N,) -> (B, N)."""
    B, K = x.shape
    N = weight.shape[0]
    w_t = jnp.transpose(weight)          # pre-transpose on host: no in-kernel transpose
    b2 = bias.reshape(1, N)
    return pl.pallas_call(
        _linear_kernel,
        out_shape=jax.ShapeDtypeStruct((B, N), jnp.float32),
        in_specs=[
            pl.BlockSpec((B, K), lambda: (0, 0)),
            pl.BlockSpec((K, N), lambda: (0, 0)),
            pl.BlockSpec((1, N), lambda: (0, 0)),
        ],
        out_specs=pl.BlockSpec((B, N), lambda: (0, 0)),
    )(x, w_t, b2)


_conv1 = make_conv_block(28, 28, 1, 10, 0)
_conv2 = make_conv_block(14, 14, 10, 20, 0)
_conv3 = make_conv_block(7, 7, 20, 40, 1)


def cnn_forward(x_nchw, params):
    """Pallas forward of the PyTorch CNN: (B, 1, 28, 28) f32 -> (B, 40) f32."""
    (w1, b1), (w2, b2), (w3, b3), (wl, bl) = params
    B = x_nchw.shape[0]
    h = jnp.transpose(x_nchw, (0, 2, 1, 3))            # NCHW -> (B, H, C, W)
    h = _conv1(h, w1, b1)                               # (B, 14, 10, 14)
    h = _conv2(h, w2, b2)                               # (B, 7, 20, 7)
    h = _conv3(h, w3, b3)                               # (B, 4, 40, 4)
    feat = jnp.transpose(h, (0, 2, 1, 3)).reshape(B, 40 * 4 * 4)  # NCHW flatten order
    return linear_forward(feat, wl, bl)


cnn_forward_jit = jax.jit(cnn_forward)


def init_params(key):
    """Deterministic init mimicking PyTorch defaults: U(+-1/sqrt(fan_in))."""
    def conv_init(k, cout, cin):
        kw, kb = jax.random.split(k)
        bound = 1.0 / math.sqrt(cin * 5 * 5)
        w = jax.random.uniform(kw, (cout, cin, 5, 5), jnp.float32, -bound, bound)
        b = jax.random.uniform(kb, (cout,), jnp.float32, -bound, bound)
        return w, b

    k1, k2, k3, k4 = jax.random.split(key, 4)
    p1 = conv_init(k1, 10, 1)
    p2 = conv_init(k2, 20, 10)
    p3 = conv_init(k3, 40, 20)
    kw, kb = jax.random.split(k4)
    bound = 1.0 / math.sqrt(40 * 4 * 4)
    wl = jax.random.uniform(kw, (40, 640), jnp.float32, -bound, bound)
    bl = jax.random.uniform(kb, (40,), jnp.float32, -bound, bound)
    return p1, p2, p3, (wl, bl)


def reference_forward(x, params):
    """Pure-JAX reference matching the PyTorch module (NCHW)."""
    (w1, b1), (w2, b2), (w3, b3), (wl, bl) = params

    def block(h, w, b, pool_pad):
        y = jax.lax.conv_general_dilated(
            h, w, window_strides=(1, 1), padding=((2, 2), (2, 2)),
            dimension_numbers=("NCHW", "OIHW", "NCHW"),
            precision=jax.lax.Precision.HIGHEST)
        y = jnp.maximum(y + b.reshape(1, -1, 1, 1), 0.0)
        return jax.lax.reduce_window(
            y, -jnp.inf, jax.lax.max,
            window_dimensions=(1, 1, 2, 2), window_strides=(1, 1, 2, 2),
            padding=((0, 0), (0, 0), (pool_pad, pool_pad), (pool_pad, pool_pad)))

    h = block(x, w1, b1, 0)
    h = block(h, w2, b2, 0)
    h = block(h, w3, b3, 1)
    feat = h.reshape(h.shape[0], -1)
    return jnp.dot(feat, wl.T, precision=jax.lax.Precision.HIGHEST) + bl


if __name__ == "__main__":
    key = jax.random.PRNGKey(0)
    kx, kp = jax.random.split(key)

    # MNIST-shaped input implied by Linear(40*4*4, 40): (B, 1, 28, 28).
    x = jax.random.normal(kx, (2, 1, 28, 28), jnp.float32)
    params = init_params(kp)

    out = cnn_forward_jit(x, params)
    out = jax.block_until_ready(out)

    ref = reference_forward(x, params)
    assert out.shape == (2, 40)
    # f32-accumulated kernel vs HIGHEST-precision XLA reference; tolerance leaves
    # headroom for MXU multi-pass f32 summation-order differences.
    assert jnp.allclose(out, ref, atol=5e-3, rtol=5e-3), \
        float(jnp.max(jnp.abs(out - ref)))

    print("KERNEL_OK")
</pallas_src>

<mosaic_0001>
module attributes {stable_mosaic.version = 11 : i64} {
  func.func @kernel(%arg0: i32, %arg1: memref<1x32x1x32xf32, #tpu.memory_space<vmem>>, %arg2: memref<25x10x1xf32, #tpu.memory_space<vmem>>, %arg3: memref<10x1xf32, #tpu.memory_space<vmem>>, %arg4: memref<28x14xf32, #tpu.memory_space<vmem>>, %arg5: memref<28x14xf32, #tpu.memory_space<vmem>>, %arg6: memref<1x14x10x14xf32, #tpu.memory_space<vmem>>) attributes {dimension_semantics = [#tpu.dimension_semantics<parallel>], iteration_bounds = array<i64: 2>, scalar_prefetch = 0 : i64, scratch_operands = 0 : i64, tpu.core_type = #tpu.core_type<tc>, window_params = [{transform_indices = @transform_0, window_bounds = array<i64: 1, 32, 1, 32>}, {pipeline_mode = #tpu.pipeline_mode<synchronous>, transform_indices = @transform_1, window_bounds = array<i64: 25, 10, 1>}, {pipeline_mode = #tpu.pipeline_mode<synchronous>, transform_indices = @transform_2, window_bounds = array<i64: 10, 1>}, {pipeline_mode = #tpu.pipeline_mode<synchronous>, transform_indices = @transform_3, window_bounds = array<i64: 28, 14>}, {pipeline_mode = #tpu.pipeline_mode<synchronous>, transform_indices = @transform_4, window_bounds = array<i64: 28, 14>}, {transform_indices = @transform_5, window_bounds = array<i64: 1, 14, 10, 14>}]} {
    %c0 = arith.constant 0 : index
    %c0_0 = arith.constant 0 : index
    %0 = vector.load %arg3[%c0, %c0_0] : memref<10x1xf32, #tpu.memory_space<vmem>>, vector<10x1xf32>
    %c0_1 = arith.constant 0 : index
    %c0_2 = arith.constant 0 : index
    %1 = vector.load %arg4[%c0_1, %c0_2] : memref<28x14xf32, #tpu.memory_space<vmem>>, vector<28x14xf32>
    %c0_3 = arith.constant 0 : index
    %c0_4 = arith.constant 0 : index
    %2 = vector.load %arg5[%c0_3, %c0_4] : memref<28x14xf32, #tpu.memory_space<vmem>>, vector<28x14xf32>
    %c0_i32 = arith.constant 0 : i32
    %c14_i32 = arith.constant 14 : i32
    %3 = arith.addi %c0_i32, %c14_i32 : i32
    %c1_i32 = arith.constant 1 : i32
    scf.for %arg7 = %c0_i32 to %3 step %c1_i32  : i32 {
      %c2_i32 = arith.constant 2 : i32
      %4 = arith.muli %c2_i32, %arg7 : i32
      %c0_i32_6 = arith.constant 0 : i32
      %5 = arith.subi %4, %c0_i32_6 : i32
      %c1_i32_7 = arith.constant 1 : i32
      %6 = arith.addi %5, %c1_i32_7 : i32
      %cst = arith.constant 0.000000e+00 : f32
      %7 = vector.broadcast %cst : f32 to vector<10x28xf32>
      %c0_i32_8 = arith.constant 0 : i32
      %8 = arith.addi %5, %c0_i32_8 : i32
      %c0_9 = arith.constant 0 : index
      %9 = arith.index_cast %8 : i32 to index
      %c0_10 = arith.constant 0 : index
      %c0_11 = arith.constant 0 : index
      %10 = vector.load %arg1[%c0_9, %9, %c0_10, %c0_11] : memref<1x32x1x32xf32, #tpu.memory_space<vmem>>, vector<1x1x1x32xf32>
      %11 = vector.shape_cast %10 : vector<1x1x1x32xf32> to vector<1x32xf32>
      %c0_12 = arith.constant 0 : index
      %c0_13 = arith.constant 0 : index
      %c0_14 = arith.constant 0 : index
      %12 = vector.load %arg2[%c0_12, %c0_13, %c0_14] : memref<25x10x1xf32, #tpu.memory_space<vmem>>, vector<1x10x1xf32>
      %13 = vector.shape_cast %12 : vector<1x10x1xf32> to vector<10x1xf32>
      %14 = vector.extract_strided_slice %11 {offsets = [0, 0], sizes = [1, 28], strides = [1, 1]} : vector<1x32xf32> to vector<1x28xf32>
      %15 = vector.broadcast %13 : vector<10x1xf32> to vector<10x28xf32>
      %16 = vector.broadcast %14 : vector<1x28xf32> to vector<10x28xf32>
      %17 = arith.mulf %15, %16 : vector<10x28xf32>
      %18 = arith.addf %7, %17 : vector<10x28xf32>
      %c1 = arith.constant 1 : index
      %c0_15 = arith.constant 0 : index
      %c0_16 = arith.constant 0 : index
      %19 = vector.load %arg2[%c1, %c0_15, %c0_16] : memref<25x10x1xf32, #tpu.memory_space<vmem>>, vector<1x10x1xf32>
      %20 = vector.shape_cast %19 : vector<1x10x1xf32> to vector<10x1xf32>
      %21 = vector.extract_strided_slice %11 {offsets = [0, 1], sizes = [1, 28], strides = [1, 1]} : vector<1x32xf32> to vector<1x28xf32>
      %22 = vector.broadcast %20 : vector<10x1xf32> to vector<10x28xf32>
      %23 = vector.broadcast %21 : vector<1x28xf32> to vector<10x28xf32>
      %24 = arith.mulf %22, %23 : vector<10x28xf32>
      %25 = arith.addf %18, %24 : vector<10x28xf32>
      %c2 = arith.constant 2 : index
      %c0_17 = arith.constant 0 : index
      %c0_18 = arith.constant 0 : index
      %26 = vector.load %arg2[%c2, %c0_17, %c0_18] : memref<25x10x1xf32, #tpu.memory_space<vmem>>, vector<1x10x1xf32>
      %27 = vector.shape_cast %26 : vector<1x10x1xf32> to vector<10x1xf32>
      %28 = vector.extract_strided_slice %11 {offsets = [0, 2], sizes = [1, 28], strides = [1, 1]} : vector<1x32xf32> to vector<1x28xf32>
      %29 = vector.broadcast %27 : vector<10x1xf32> to vector<10x28xf32>
      %30 = vector.broadcast %28 : vector<1x28xf32> to vector<10x28xf32>
      %31 = arith.mulf %29, %30 : vector<10x28xf32>
      %32 = arith.addf %25, %31 : vector<10x28xf32>
      %c3 = arith.constant 3 : index
      %c0_19 = arith.constant 0 : index
      %c0_20 = arith.constant 0 : index
      %33 = vector.load %arg2[%c3, %c0_19, %c0_20] : memref<25x10x1xf32, #tpu.memory_space<vmem>>, vector<1x10x1xf32>
      %34 = vector.shape_cast %33 : vector<1x10x1xf32> to vector<10x1xf32>
      %35 = vector.extract_strided_slice %11 {offsets = [0, 3], sizes = [1, 28], strides = [1, 1]} : vector<1x32xf32> to vector<1x28xf32>
      %36 = vector.broadcast %34 : vector<10x1xf32> to vector<10x28xf32>
      %37 = vector.broadcast %35 : vector<1x28xf32> to vector<10x28xf32>
      %38 = arith.mulf %36, %37 : vector<10x28xf32>
      %39 = arith.addf %32, %38 : vector<10x28xf32>
      %c4 = arith.constant 4 : index
      %c0_21 = arith.constant 0 : index
      %c0_22 = arith.constant 0 : index
      %40 = vector.load %arg2[%c4, %c0_21, %c0_22] : memref<25x10x1xf32, #tpu.memory_space<vmem>>, vector<1x10x1xf32>
      %41 = vector.shape_cast %40 : vector<1x10x1xf32> to vector<10x1xf32>
      %42 = vector.extract_strided_slice %11 {offsets = [0, 4], sizes = [1, 28], strides = [1, 1]} : vector<1x32xf32> to vector<1x28xf32>
      %43 = vector.broadcast %41 : vector<10x1xf32> to vector<10x28xf32>
      %44 = vector.broadcast %42 : vector<1x28xf32> to vector<10x28xf32>
      %45 = arith.mulf %43, %44 : vector<10x28xf32>
      %46 = arith.addf %39, %45 : vector<10x28xf32>
      %c1_i32_23 = arith.constant 1 : i32
      %47 = arith.addi %5, %c1_i32_23 : i32
      %c0_24 = arith.constant 0 : index
      %48 = arith.index_cast %47 : i32 to index
      %c0_25 = arith.constant 0 : index
      %c0_26 = arith.constant 0 : index
      %49 = vector.load %arg1[%c0_24, %48, %c0_25, %c0_26] : memref<1x32x1x32xf32, #tpu.memory_space<vmem>>, vector<1x1x1x32xf32>
      %50 = vector.shape_cast %49 : vector<1x1x1x32xf32> to vector<1x32xf32>
      %c5 = arith.constant 5 : index
      %c0_27 = arith.constant 0 : index
      %c0_28 = arith.constant 0 : index
      %51 = vector.load %arg2[%c5, %c0_27, %c0_28] : memref<25x10x1xf32, #tpu.memory_space<vmem>>, vector<1x10x1xf32>
      %52 = vector.shape_cast %51 : vector<1x10x1xf32> to vector<10x1xf32>
      %53 = vector.extract_strided_slice %50 {offsets = [0, 0], sizes = [1, 28], strides = [1, 1]} : vector<1x32xf32> to vector<1x28xf32>
      %54 = vector.broadcast %52 : vector<10x1xf32> to vector<10x28xf32>
      %55 = vector.broadcast %53 : vector<1x28xf32> to vector<10x28xf32>
      %56 = arith.mulf %54, %55 : vector<10x28xf32>
      %57 = arith.addf %46, %56 : vector<10x28xf32>
      %c6 = arith.constant 6 : index
      %c0_29 = arith.constant 0 : index
      %c0_30 = arith.constant 0 : index
      %58 = vector.load %arg2[%c6, %c0_29, %c0_30] : memref<25x10x1xf32, #tpu.memory_space<vmem>>, vector<1x10x1xf32>
      %59 = vector.shape_cast %58 : vector<1x10x1xf32> to vector<10x1xf32>
      %60 = vector.extract_strided_slice %50 {offsets = [0, 1], sizes = [1, 28], strides = [1, 1]} : vector<1x32xf32> to vector<1x28xf32>
      %61 = vector.broadcast %59 : vector<10x1xf32> to vector<10x28xf32>
      %62 = vector.broadcast %60 : vector<1x28xf32> to vector<10x28xf32>
      %63 = arith.mulf %61, %62 : vector<10x28xf32>
      %64 = arith.addf %57, %63 : vector<10x28xf32>
      %c7 = arith.constant 7 : index
      %c0_31 = arith.constant 0 : index
      %c0_32 = arith.constant 0 : index
      %65 = vector.load %arg2[%c7, %c0_31, %c0_32] : memref<25x10x1xf32, #tpu.memory_space<vmem>>, vector<1x10x1xf32>
      %66 = vector.shape_cast %65 : vector<1x10x1xf32> to vector<10x1xf32>
      %67 = vector.extract_strided_slice %50 {offsets = [0, 2], sizes = [1, 28], strides = [1, 1]} : vector<1x32xf32> to vector<1x28xf32>
      %68 = vector.broadcast %66 : vector<10x1xf32> to vector<10x28xf32>
      %69 = vector.broadcast %67 : vector<1x28xf32> to vector<10x28xf32>
      %70 = arith.mulf %68, %69 : vector<10x28xf32>
      %71 = arith.addf %64, %70 : vector<10x28xf32>
      %c8 = arith.constant 8 : index
      %c0_33 = arith.constant 0 : index
      %c0_34 = arith.constant 0 : index
      %72 = vector.load %arg2[%c8, %c0_33, %c0_34] : memref<25x10x1xf32, #tpu.memory_space<vmem>>, vector<1x10x1xf32>
      %73 = vector.shape_cast %72 : vector<1x10x1xf32> to vector<10x1xf32>
      %74 = vector.extract_strided_slice %50 {offsets = [0, 3], sizes = [1, 28], strides = [1, 1]} : vector<1x32xf32> to vector<1x28xf32>
      %75 = vector.broadcast %73 : vector<10x1xf32> to vector<10x28xf32>
      %76 = vector.broadcast %74 : vector<1x28xf32> to vector<10x28xf32>
      %77 = arith.mulf %75, %76 : vector<10x28xf32>
      %78 = arith.addf %71, %77 : vector<10x28xf32>
      %c9 = arith.constant 9 : index
      %c0_35 = arith.constant 0 : index
      %c0_36 = arith.constant 0 : index
      %79 = vector.load %arg2[%c9, %c0_35, %c0_36] : memref<25x10x1xf32, #tpu.memory_space<vmem>>, vector<1x10x1xf32>
      %80 = vector.shape_cast %79 : vector<1x10x1xf32> to vector<10x1xf32>
      %81 = vector.extract_strided_slice %50 {offsets = [0, 4], sizes = [1, 28], strides = [1, 1]} : vector<1x32xf32> to vector<1x28xf32>
      %82 = vector.broadcast %80 : vector<10x1xf32> to vector<10x28xf32>
      %83 = vector.broadcast %81 : vector<1x28xf32> to vector<10x28xf32>
      %84 = arith.mulf %82, %83 : vector<10x28xf32>
      %85 = arith.addf %78, %84 : vector<10x28xf32>
      %c2_i32_37 = arith.constant 2 : i32
      %86 = arith.addi %5, %c2_i32_37 : i32
      %c0_38 = arith.constant 0 : index
      %87 = arith.index_cast %86 : i32 to index
      %c0_39 = arith.constant 0 : index
      %c0_40 = arith.constant 0 : index
      %88 = vector.load %arg1[%c0_38, %87, %c0_39, %c0_40] : memref<1x32x1x32xf32, #tpu.memory_space<vmem>>, vector<1x1x1x32xf32>
      %89 = vector.shape_cast %88 : vector<1x1x1x32xf32> to vector<1x32xf32>
      %c10 = arith.constant 10 : index
      %c0_41 = arith.constant 0 : index
      %c0_42 = arith.constant 0 : index
      %90 = vector.load %arg2[%c10, %c0_41, %c0_42] : memref<25x10x1xf32, #tpu.memory_space<vmem>>, vector<1x10x1xf32>
      %91 = vector.shape_cast %90 : vector<1x10x1xf32> to vector<10x1xf32>
      %92 = vector.extract_strided_slice %89 {offsets = [0, 0], sizes = [1, 28], strides = [1, 1]} : vector<1x32xf32> to vector<1x28xf32>
      %93 = vector.broadcast %91 : vector<10x1xf32> to vector<10x28xf32>
      %94 = vector.broadcast %92 : vector<1x28xf32> to vector<10x28xf32>
      %95 = arith.mulf %93, %94 : vector<10x28xf32>
      %96 = arith.addf %85, %95 : vector<10x28xf32>
      %c11 = arith.constant 11 : index
      %c0_43 = arith.constant 0 : index
      %c0_44 = arith.constant 0 : index
      %97 = vector.load %arg2[%c11, %c0_43, %c0_44] : memref<25x10x1xf32, #tpu.memory_space<vmem>>, vector<1x10x1xf32>
      %98 = vector.shape_cast %97 : vector<1x10x1xf32> to vector<10x1xf32>
      %99 = vector.extract_strided_slice %89 {offsets = [0, 1], sizes = [1, 28], strides = [1, 1]} : vector<1x32xf32> to vector<1x28xf32>
      %100 = vector.broadcast %98 : vector<10x1xf32> to vector<10x28xf32>
      %101 = vector.broadcast %99 : vector<1x28xf32> to vector<10x28xf32>
      %102 = arith.mulf %100, %101 : vector<10x28xf32>
      %103 = arith.addf %96, %102 : vector<10x28xf32>
      %c12 = arith.constant 12 : index
      %c0_45 = arith.constant 0 : index
      %c0_46 = arith.constant 0 : index
      %104 = vector.load %arg2[%c12, %c0_45, %c0_46] : memref<25x10x1xf32, #tpu.memory_space<vmem>>, vector<1x10x1xf32>
      %105 = vector.shape_cast %104 : vector<1x10x1xf32> to vector<10x1xf32>
      %106 = vector.extract_strided_slice %89 {offsets = [0, 2], sizes = [1, 28], strides = [1, 1]} : vector<1x32xf32> to vector<1x28xf32>
      %107 = vector.broadcast %105 : vector<10x1xf32> to vector<10x28xf32>
      %108 = vector.broadcast %106 : vector<1x28xf32> to vector<10x28xf32>
      %109 = arith.mulf %107, %108 : vector<10x28xf32>
      %110 = arith.addf %103, %109 : vector<10x28xf32>
      %c13 = arith.constant 13 : index
      %c0_47 = arith.constant 0 : index
      %c0_48 = arith.constant 0 : index
      %111 = vector.load %arg2[%c13, %c0_47, %c0_48] : memref<25x10x1xf32, #tpu.memory_space<vmem>>, vector<1x10x1xf32>
      %112 = vector.shape_cast %111 : vector<1x10x1xf32> to vector<10x1xf32>
      %113 = vector.extract_strided_slice %89 {offsets = [0, 3], sizes = [1, 28], strides = [1, 1]} : vector<1x32xf32> to vector<1x28xf32>
      %114 = vector.broadcast %112 : vector<10x1xf32> to vector<10x28xf32>
      %115 = vector.broadcast %113 : vector<1x28xf32> to vector<10x28xf32>
      %116 = arith.mulf %114, %115 : vector<10x28xf32>
      %117 = arith.addf %110, %116 : vector<10x28xf32>
      %c14 = arith.constant 14 : index
      %c0_49 = arith.constant 0 : index
      %c0_50 = arith.constant 0 : index
      %118 = vector.load %arg2[%c14, %c0_49, %c0_50] : memref<25x10x1xf32, #tpu.memory_space<vmem>>, vector<1x10x1xf32>
      %119 = vector.shape_cast %118 : vector<1x10x1xf32> to vector<10x1xf32>
      %120 = vector.extract_strided_slice %89 {offsets = [0, 4], sizes = [1, 28], strides = [1, 1]} : vector<1x32xf32> to vector<1x28xf32>
      %121 = vector.broadcast %119 : vector<10x1xf32> to vector<10x28xf32>
      %122 = vector.broadcast %120 : vector<1x28xf32> to vector<10x28xf32>
      %123 = arith.mulf %121, %122 : vector<10x28xf32>
      %124 = arith.addf %117, %123 : vector<10x28xf32>
      %c3_i32 = arith.constant 3 : i32
      %125 = arith.addi %5, %c3_i32 : i32
      %c0_51 = arith.constant 0 : index
      %126 = arith.index_cast %125 : i32 to index
      %c0_52 = arith.constant 0 : index
      %c0_53 = arith.constant 0 : index
      %127 = vector.load %arg1[%c0_51, %126, %c0_52, %c0_53] : memref<1x32x1x32xf32, #tpu.memory_space<vmem>>, vector<1x1x1x32xf32>
      %128 = vector.shape_cast %127 : vector<1x1x1x32xf32> to vector<1x32xf32>
      %c15 = arith.constant 15 : index
      %c0_54 = arith.constant 0 : index
      %c0_55 = arith.constant 0 : index
      %129 = vector.load %arg2[%c15, %c0_54, %c0_55] : memref<25x10x1xf32, #tpu.memory_space<vmem>>, vector<1x10x1xf32>
      %130 = vector.shape_cast %129 : vector<1x10x1xf32> to vector<10x1xf32>
      %131 = vector.extract_strided_slice %128 {offsets = [0, 0], sizes = [1, 28], strides = [1, 1]} : vector<1x32xf32> to vector<1x28xf32>
      %132 = vector.broadcast %130 : vector<10x1xf32> to vector<10x28xf32>
      %133 = vector.broadcast %131 : vector<1x28xf32> to vector<10x28xf32>
      %134 = arith.mulf %132, %133 : vector<10x28xf32>
      %135 = arith.addf %124, %134 : vector<10x28xf32>
      %c16 = arith.constant 16 : index
      %c0_56 = arith.constant 0 : index
      %c0_57 = arith.constant 0 : index
      %136 = vector.load %arg2[%c16, %c0_56, %c0_57] : memref<25x10x1xf32, #tpu.memory_space<vmem>>, vector<1x10x1xf32>
      %137 = vector.shape_cast %136 : vector<1x10x1xf32> to vector<10x1xf32>
      %138 = vector.extract_strided_slice %128 {offsets = [0, 1], sizes = [1, 28], strides = [1, 1]} : vector<1x32xf32> to vector<1x28xf32>
      %139 = vector.broadcast %137 : vector<10x1xf32> to vector<10x28xf32>
      %140 = vector.broadcast %138 : vector<1x28xf32> to vector<10x28xf32>
      %141 = arith.mulf %139, %140 : vector<10x28xf32>
      %142 = arith.addf %135, %141 : vector<10x28xf32>
      %c17 = arith.constant 17 : index
      %c0_58 = arith.constant 0 : index
      %c0_59 = arith.constant 0 : index
      %143 = vector.load %arg2[%c17, %c0_58, %c0_59] : memref<25x10x1xf32, #tpu.memory_space<vmem>>, vector<1x10x1xf32>
      %144 = vector.shape_cast %143 : vector<1x10x1xf32> to vector<10x1xf32>
      %145 = vector.extract_strided_slice %128 {offsets = [0, 2], sizes = [1, 28], strides = [1, 1]} : vector<1x32xf32> to vector<1x28xf32>
      %146 = vector.broadcast %144 : vector<10x1xf32> to vector<10x28xf32>
      %147 = vector.broadcast %145 : vector<1x28xf32> to vector<10x28xf32>
      %148 = arith.mulf %146, %147 : vector<10x28xf32>
      %149 = arith.addf %142, %148 : vector<10x28xf32>
      %c18 = arith.constant 18 : index
      %c0_60 = arith.constant 0 : index
      %c0_61 = arith.constant 0 : index
      %150 = vector.load %arg2[%c18, %c0_60, %c0_61] : memref<25x10x1xf32, #tpu.memory_space<vmem>>, vector<1x10x1xf32>
      %151 = vector.shape_cast %150 : vector<1x10x1xf32> to vector<10x1xf32>
      %152 = vector.extract_strided_slice %128 {offsets = [0, 3], sizes = [1, 28], strides = [1, 1]} : vector<1x32xf32> to vector<1x28xf32>
      %153 = vector.broadcast %151 : vector<10x1xf32> to vector<10x28xf32>
      %154 = vector.broadcast %152 : vector<1x28xf32> to vector<10x28xf32>
      %155 = arith.mulf %153, %154 : vector<10x28xf32>
      %156 = arith.addf %149, %155 : vector<10x28xf32>
      %c19 = arith.constant 19 : index
      %c0_62 = arith.constant 0 : index
      %c0_63 = arith.constant 0 : index
      %157 = vector.load %arg2[%c19, %c0_62, %c0_63] : memref<25x10x1xf32, #tpu.memory_space<vmem>>, vector<1x10x1xf32>
      %158 = vector.shape_cast %157 : vector<1x10x1xf32> to vector<10x1xf32>
      %159 = vector.extract_strided_slice %128 {offsets = [0, 4], sizes = [1, 28], strides = [1, 1]} : vector<1x32xf32> to vector<1x28xf32>
      %160 = vector.broadcast %158 : vector<10x1xf32> to vector<10x28xf32>
      %161 = vector.broadcast %159 : vector<1x28xf32> to vector<10x28xf32>
      %162 = arith.mulf %160, %161 : vector<10x28xf32>
      %163 = arith.addf %156, %162 : vector<10x28xf32>
      %c4_i32 = arith.constant 4 : i32
      %164 = arith.addi %5, %c4_i32 : i32
      %c0_64 = arith.constant 0 : index
      %165 = arith.index_cast %164 : i32 to index
      %c0_65 = arith.constant 0 : index
      %c0_66 = arith.constant 0 : index
      %166 = vector.load %arg1[%c0_64, %165, %c0_65, %c0_66] : memref<1x32x1x32xf32, #tpu.memory_space<vmem>>, vector<1x1x1x32xf32>
      %167 = vector.shape_cast %166 : vector<1x1x1x32xf32> to vector<1x32xf32>
      %c20 = arith.constant 20 : index
      %c0_67 = arith.constant 0 : index
      %c0_68 = arith.constant 0 : index
      %168 = vector.load %arg2[%c20, %c0_67, %c0_68] : memref<25x10x1xf32, #tpu.memory_space<vmem>>, vector<1x10x1xf32>
      %169 = vector.shape_cast %168 : vector<1x10x1xf32> to vector<10x1xf32>
      %170 = vector.extract_strided_slice %167 {offsets = [0, 0], sizes = [1, 28], strides = [1, 1]} : vector<1x32xf32> to vector<1x28xf32>
      %171 = vector.broadcast %169 : vector<10x1xf32> to vector<10x28xf32>
      %172 = vector.broadcast %170 : vector<1x28xf32> to vector<10x28xf32>
      %173 = arith.mulf %171, %172 : vector<10x28xf32>
      %174 = arith.addf %163, %173 : vector<10x28xf32>
      %c21 = arith.constant 21 : index
      %c0_69 = arith.constant 0 : index
      %c0_70 = arith.constant 0 : index
      %175 = vector.load %arg2[%c21, %c0_69, %c0_70] : memref<25x10x1xf32, #tpu.memory_space<vmem>>, vector<1x10x1xf32>
      %176 = vector.shape_cast %175 : vector<1x10x1xf32> to vector<10x1xf32>
      %177 = vector.extract_strided_slice %167 {offsets = [0, 1], sizes = [1, 28], strides = [1, 1]} : vector<1x32xf32> to vector<1x28xf32>
      %178 = vector.broadcast %176 : vector<10x1xf32> to vector<10x28xf32>
      %179 = vector.broadcast %177 : vector<1x28xf32> to vector<10x28xf32>
      %180 = arith.mulf %178, %179 : vector<10x28xf32>
      %181 = arith.addf %174, %180 : vector<10x28xf32>
      %c22 = arith.constant 22 : index
      %c0_71 = arith.constant 0 : index
      %c0_72 = arith.constant 0 : index
      %182 = vector.load %arg2[%c22, %c0_71, %c0_72] : memref<25x10x1xf32, #tpu.memory_space<vmem>>, vector<1x10x1xf32>
      %183 = vector.shape_cast %182 : vector<1x10x1xf32> to vector<10x1xf32>
      %184 = vector.extract_strided_slice %167 {offsets = [0, 2], sizes = [1, 28], strides = [1, 1]} : vector<1x32xf32> to vector<1x28xf32>
      %185 = vector.broadcast %183 : vector<10x1xf32> to vector<10x28xf32>
      %186 = vector.broadcast %184 : vector<1x28xf32> to vector<10x28xf32>
      %187 = arith.mulf %185, %186 : vector<10x28xf32>
      %188 = arith.addf %181, %187 : vector<10x28xf32>
      %c23 = arith.constant 23 : index
      %c0_73 = arith.constant 0 : index
      %c0_74 = arith.constant 0 : index
      %189 = vector.load %arg2[%c23, %c0_73, %c0_74] : memref<25x10x1xf32, #tpu.memory_space<vmem>>, vector<1x10x1xf32>
      %190 = vector.shape_cast %189 : vector<1x10x1xf32> to vector<10x1xf32>
      %191 = vector.extract_strided_slice %167 {offsets = [0, 3], sizes = [1, 28], strides = [1, 1]} : vector<1x32xf32> to vector<1x28xf32>
      %192 = vector.broadcast %190 : vector<10x1xf32> to vector<10x28xf32>
      %193 = vector.broadcast %191 : vector<1x28xf32> to vector<10x28xf32>
      %194 = arith.mulf %192, %193 : vector<10x28xf32>
      %195 = arith.addf %188, %194 : vector<10x28xf32>
      %c24 = arith.constant 24 : index
      %c0_75 = arith.constant 0 : index
      %c0_76 = arith.constant 0 : index
      %196 = vector.load %arg2[%c24, %c0_75, %c0_76] : memref<25x10x1xf32, #tpu.memory_space<vmem>>, vector<1x10x1xf32>
      %197 = vector.shape_cast %196 : vector<1x10x1xf32> to vector<10x1xf32>
      %198 = vector.extract_strided_slice %167 {offsets = [0, 4], sizes = [1, 28], strides = [1, 1]} : vector<1x32xf32> to vector<1x28xf32>
      %199 = vector.broadcast %197 : vector<10x1xf32> to vector<10x28xf32>
      %200 = vector.broadcast %198 : vector<1x28xf32> to vector<10x28xf32>
      %201 = arith.mulf %199, %200 : vector<10x28xf32>
      %202 = arith.addf %195, %201 : vector<10x28xf32>
      %203 = vector.broadcast %0 : vector<10x1xf32> to vector<10x28xf32>
      %204 = arith.addf %202, %203 : vector<10x28xf32>
      %cst_77 = arith.constant 0.000000e+00 : f32
      %205 = vector.broadcast %cst_77 : f32 to vector<10x28xf32>
      %206 = arith.maximumf %204, %205 : vector<10x28xf32>
      %cst_78 = arith.constant 0.000000e+00 : f32
      %207 = vector.broadcast %cst_78 : f32 to vector<10x28xf32>
      %c0_i32_79 = arith.constant 0 : i32
      %208 = arith.addi %6, %c0_i32_79 : i32
      %c0_80 = arith.constant 0 : index
      %209 = arith.index_cast %208 : i32 to index
      %c0_81 = arith.constant 0 : index
      %c0_82 = arith.constant 0 : index
      %210 = vector.load %arg1[%c0_80, %209, %c0_81, %c0_82] : memref<1x32x1x32xf32, #tpu.memory_space<vmem>>, vector<1x1x1x32xf32>
      %211 = vector.shape_cast %210 : vector<1x1x1x32xf32> to vector<1x32xf32>
      %c0_83 = arith.constant 0 : index
      %c0_84 = arith.constant 0 : index
      %c0_85 = arith.constant 0 : index
      %212 = vector.load %arg2[%c0_83, %c0_84, %c0_85] : memref<25x10x1xf32, #tpu.memory_space<vmem>>, vector<1x10x1xf32>
      %213 = vector.shape_cast %212 : vector<1x10x1xf32> to vector<10x1xf32>
      %214 = vector.extract_strided_slice %211 {offsets = [0, 0], sizes = [1, 28], strides = [1, 1]} : vector<1x32xf32> to vector<1x28xf32>
      %215 = vector.broadcast %213 : vector<10x1xf32> to vector<10x28xf32>
      %216 = vector.broadcast %214 : vector<1x28xf32> to vector<10x28xf32>
      %217 = arith.mulf %215, %216 : vector<10x28xf32>
      %218 = arith.addf %207, %217 : vector<10x28xf32>
      %c1_86 = arith.constant 1 : index
      %c0_87 = arith.constant 0 : index
      %c0_88 = arith.constant 0 : index
      %219 = vector.load %arg2[%c1_86, %c0_87, %c0_88] : memref<25x10x1xf32, #tpu.memory_space<vmem>>, vector<1x10x1xf32>
      %220 = vector.shape_cast %219 : vector<1x10x1xf32> to vector<10x1xf32>
      %221 = vector.extract_strided_slice %211 {offsets = [0, 1], sizes = [1, 28], strides = [1, 1]} : vector<1x32xf32> to vector<1x28xf32>
      %222 = vector.broadcast %220 : vector<10x1xf32> to vector<10x28xf32>
      %223 = vector.broadcast %221 : vector<1x28xf32> to vector<10x28xf32>
      %224 = arith.mulf %222, %223 : vector<10x28xf32>
      %225 = arith.addf %218, %224 : vector<10x28xf32>
      %c2_89 = arith.constant 2 : index
      %c0_90 = arith.constant 0 : index
      %c0_91 = arith.constant 0 : index
      %226 = vector.load %arg2[%c2_89, %c0_90, %c0_91] : memref<25x10x1xf32, #tpu.memory_space<vmem>>, vector<1x10x1xf32>
      %227 = vector.shape_cast %226 : vector<1x10x1xf32> to vector<10x1xf32>
      %228 = vector.extract_strided_slice %211 {offsets = [0, 2], sizes = [1, 28], strides = [1, 1]} : vector<1x32xf32> to vector<1x28xf32>
      %229 = vector.broadcast %227 : vector<10x1xf32> to vector<10x28xf32>
      %230 = vector.broadcast %228 : vector<1x28xf32> to vector<10x28xf32>
      %231 = arith.mulf %229, %230 : vector<10x28xf32>
      %232 = arith.addf %225, %231 : vector<10x28xf32>
      %c3_92 = arith.constant 3 : index
      %c0_93 = arith.constant 0 : index
      %c0_94 = arith.constant 0 : index
      %233 = vector.load %arg2[%c3_92, %c0_93, %c0_94] : memref<25x10x1xf32, #tpu.memory_space<vmem>>, vector<1x10x1xf32>
      %234 = vector.shape_cast %233 : vector<1x10x1xf32> to vector<10x1xf32>
      %235 = vector.extract_strided_slice %211 {offsets = [0, 3], sizes = [1, 28], strides = [1, 1]} : vector<1x32xf32> to vector<1x28xf32>
      %236 = vector.broadcast %234 : vector<10x1xf32> to vector<10x28xf32>
      %237 = vector.broadcast %235 : vector<1x28xf32> to vector<10x28xf32>
      %238 = arith.mulf %236, %237 : vector<10x28xf32>
      %239 = arith.addf %232, %238 : vector<10x28xf32>
      %c4_95 = arith.constant 4 : index
      %c0_96 = arith.constant 0 : index
      %c0_97 = arith.constant 0 : index
      %240 = vector.load %arg2[%c4_95, %c0_96, %c0_97] : memref<25x10x1xf32, #tpu.memory_space<vmem>>, vector<1x10x1xf32>
      %241 = vector.shape_cast %240 : vector<1x10x1xf32> to vector<10x1xf32>
      %242 = vector.extract_strided_slice %211 {offsets = [0, 4], sizes = [1, 28], strides = [1, 1]} : vector<1x32xf32> to vector<1x28xf32>
      %243 = vector.broadcast %241 : vector<10x1xf32> to vector<10x28xf32>
      %244 = vector.broadcast %242 : vector<1x28xf32> to vector<10x28xf32>
      %245 = arith.mulf %243, %244 : vector<10x28xf32>
      %246 = arith.addf %239, %245 : vector<10x28xf32>
      %c1_i32_98 = arith.constant 1 : i32
      %247 = arith.addi %6, %c1_i32_98 : i32
      %c0_99 = arith.constant 0 : index
      %248 = arith.index_cast %247 : i32 to index
      %c0_100 = arith.constant 0 : index
      %c0_101 = arith.constant 0 : index
      %249 = vector.load %arg1[%c0_99, %248, %c0_100, %c0_101] : memref<1x32x1x32xf32, #tpu.memory_space<vmem>>, vector<1x1x1x32xf32>
      %250 = vector.shape_cast %249 : vector<1x1x1x32xf32> to vector<1x32xf32>
      %c5_102 = arith.constant 5 : index
      %c0_103 = arith.constant 0 : index
      %c0_104 = arith.constant 0 : index
      %251 = vector.load %arg2[%c5_102, %c0_103, %c0_104] : memref<25x10x1xf32, #tpu.memory_space<vmem>>, vector<1x10x1xf32>
      %252 = vector.shape_cast %251 : vector<1x10x1xf32> to vector<10x1xf32>
      %253 = vector.extract_strided_slice %250 {offsets = [0, 0], sizes = [1, 28], strides = [1, 1]} : vector<1x32xf32> to vector<1x28xf32>
      %254 = vector.broadcast %252 : vector<10x1xf32> to vector<10x28xf32>
      %255 = vector.broadcast %253 : vector<1x28xf32> to vector<10x28xf32>
      %256 = arith.mulf %254, %255 : vector<10x28xf32>
      %257 = arith.addf %246, %256 : vector<10x28xf32>
      %c6_105 = arith.constant 6 : index
      %c0_106 = arith.constant 0 : index
      %c0_107 = arith.constant 0 : index
      %258 = vector.load %arg2[%c6_105, %c0_106, %c0_107] : memref<25x10x1xf32, #tpu.memory_space<vmem>>, vector<1x10x1xf32>
      %259 = vector.shape_cast %258 : vector<1x10x1xf32> to vector<10x1xf32>
      %260 = vector.extract_strided_slice %250 {offsets = [0, 1], sizes = [1, 28], strides = [1, 1]} : vector<1x32xf32> to vector<1x28xf32>
      %261 = vector.broadcast %259 : vector<10x1xf32> to vector<10x28xf32>
      %262 = vector.broadcast %260 : vector<1x28xf32> to vector<10x28xf32>
      %263 = arith.mulf %261, %262 : vector<10x28xf32>
      %264 = arith.addf %257, %263 : vector<10x28xf32>
      %c7_108 = arith.constant 7 : index
      %c0_109 = arith.constant 0 : index
      %c0_110 = arith.constant 0 : index
      %265 = vector.load %arg2[%c7_108, %c0_109, %c0_110] : memref<25x10x1xf32, #tpu.memory_space<vmem>>, vector<1x10x1xf32>
      %266 = vector.shape_cast %265 : vector<1x10x1xf32> to vector<10x1xf32>
      %267 = vector.extract_strided_slice %250 {offsets = [0, 2], sizes = [1, 28], strides = [1, 1]} : vector<1x32xf32> to vector<1x28xf32>
      %268 = vector.broadcast %266 : vector<10x1xf32> to vector<10x28xf32>
      %269 = vector.broadcast %267 : vector<1x28xf32> to vector<10x28xf32>
      %270 = arith.mulf %268, %269 : vector<10x28xf32>
      %271 = arith.addf %264, %270 : vector<10x28xf32>
      %c8_111 = arith.constant 8 : index
      %c0_112 = arith.constant 0 : index
      %c0_113 = arith.constant 0 : index
      %272 = vector.load %arg2[%c8_111, %c0_112, %c0_113] : memref<25x10x1xf32, #tpu.memory_space<vmem>>, vector<1x10x1xf32>
      %273 = vector.shape_cast %272 : vector<1x10x1xf32> to vector<10x1xf32>
      %274 = vector.extract_strided_slice %250 {offsets = [0, 3], sizes = [1, 28], strides = [1, 1]} : vector<1x32xf32> to vector<1x28xf32>
      %275 = vector.broadcast %273 : vector<10x1xf32> to vector<10x28xf32>
      %276 = vector.broadcast %274 : vector<1x28xf32> to vector<10x28xf32>
      %277 = arith.mulf %275, %276 : vector<10x28xf32>
      %278 = arith.addf %271, %277 : vector<10x28xf32>
      %c9_114 = arith.constant 9 : index
      %c0_115 = arith.constant 0 : index
      %c0_116 = arith.constant 0 : index
      %279 = vector.load %arg2[%c9_114, %c0_115, %c0_116] : memref<25x10x1xf32, #tpu.memory_space<vmem>>, vector<1x10x1xf32>
      %280 = vector.shape_cast %279 : vector<1x10x1xf32> to vector<10x1xf32>
      %281 = vector.extract_strided_slice %250 {offsets = [0, 4], sizes = [1, 28], strides = [1, 1]} : vector<1x32xf32> to vector<1x28xf32>
      %282 = vector.broadcast %280 : vector<10x1xf32> to vector<10x28xf32>
      %283 = vector.broadcast %281 : vector<1x28xf32> to vector<10x28xf32>
      %284 = arith.mulf %282, %283 : vector<10x28xf32>
      %285 = arith.addf %278, %284 : vector<10x28xf32>
      %c2_i32_117 = arith.constant 2 : i32
      %286 = arith.addi %6, %c2_i32_117 : i32
      %c0_118 = arith.constant 0 : index
      %287 = arith.index_cast %286 : i32 to index
      %c0_119 = arith.constant 0 : index
      %c0_120 = arith.constant 0 : index
      %288 = vector.load %arg1[%c0_118, %287, %c0_119, %c0_120] : memref<1x32x1x32xf32, #tpu.memory_space<vmem>>, vector<1x1x1x32xf32>
      %289 = vector.shape_cast %288 : vector<1x1x1x32xf32> to vector<1x32xf32>
      %c10_121 = arith.constant 10 : index
      %c0_122 = arith.constant 0 : index
      %c0_123 = arith.constant 0 : index
      %290 = vector.load %arg2[%c10_121, %c0_122, %c0_123] : memref<25x10x1xf32, #tpu.memory_space<vmem>>, vector<1x10x1xf32>
      %291 = vector.shape_cast %290 : vector<1x10x1xf32> to vector<10x1xf32>
      %292 = vector.extract_strided_slice %289 {offsets = [0, 0], sizes = [1, 28], strides = [1, 1]} : vector<1x32xf32> to vector<1x28xf32>
      %293 = vector.broadcast %291 : vector<10x1xf32> to vector<10x28xf32>
      %294 = vector.broadcast %292 : vector<1x28xf32> to vector<10x28xf32>
      %295 = arith.mulf %293, %294 : vector<10x28xf32>
      %296 = arith.addf %285, %295 : vector<10x28xf32>
      %c11_124 = arith.constant 11 : index
      %c0_125 = arith.constant 0 : index
      %c0_126 = arith.constant 0 : index
      %297 = vector.load %arg2[%c11_124, %c0_125, %c0_126] : memref<25x10x1xf32, #tpu.memory_space<vmem>>, vector<1x10x1xf32>
      %298 = vector.shape_cast %297 : vector<1x10x1xf32> to vector<10x1xf32>
      %299 = vector.extract_strided_slice %289 {offsets = [0, 1], sizes = [1, 28], strides = [1, 1]} : vector<1x32xf32> to vector<1x28xf32>
      %300 = vector.broadcast %298 : vector<10x1xf32> to vector<10x28xf32>
      %301 = vector.broadcast %299 : vector<1x28xf32> to vector<10x28xf32>
      %302 = arith.mulf %300, %301 : vector<10x28xf32>
      %303 = arith.addf %296, %302 : vector<10x28xf32>
      %c12_127 = arith.constant 12 : index
      %c0_128 = arith.constant 0 : index
      %c0_129 = arith.constant 0 : index
      %304 = vector.load %arg2[%c12_127, %c0_128, %c0_129] : memref<25x10x1xf32, #tpu.memory_space<vmem>>, vector<1x10x1xf32>
      %305 = vector.shape_cast %304 : vector<1x10x1xf32> to vector<10x1xf32>
      %306 = vector.extract_strided_slice %289 {offsets = [0, 2], sizes = [1, 28], strides = [1, 1]} : vector<1x32xf32> to vector<1x28xf32>
      %307 = vector.broadcast %305 : vector<10x1xf32> to vector<10x28xf32>
      %308 = vector.broadcast %306 : vector<1x28xf32> to vector<10x28xf32>
      %309 = arith.mulf %307, %308 : vector<10x28xf32>
      %310 = arith.addf %303, %309 : vector<10x28xf32>
      %c13_130 = arith.constant 13 : index
      %c0_131 = arith.constant 0 : index
      %c0_132 = arith.constant 0 : index
      %311 = vector.load %arg2[%c13_130, %c0_131, %c0_132] : memref<25x10x1xf32, #tpu.memory_space<vmem>>, vector<1x10x1xf32>
      %312 = vector.shape_cast %311 : vector<1x10x1xf32> to vector<10x1xf32>
      %313 = vector.extract_strided_slice %289 {offsets = [0, 3], sizes = [1, 28], strides = [1, 1]} : vector<1x32xf32> to vector<1x28xf32>
      %314 = vector.broadcast %312 : vector<10x1xf32> to vector<10x28xf32>
      %315 = vector.broadcast %313 : vector<1x28xf32> to vector<10x28xf32>
      %316 = arith.mulf %314, %315 : vector<10x28xf32>
      %317 = arith.addf %310, %316 : vector<10x28xf32>
      %c14_133 = arith.constant 14 : index
      %c0_134 = arith.constant 0 : index
      %c0_135 = arith.constant 0 : index
      %318 = vector.load %arg2[%c14_133, %c0_134, %c0_135] : memref<25x10x1xf32, #tpu.memory_space<vmem>>, vector<1x10x1xf32>
      %319 = vector.shape_cast %318 : vector<1x10x1xf32> to vector<10x1xf32>
      %320 = vector.extract_strided_slice %289 {offsets = [0, 4], sizes = [1, 28], strides = [1, 1]} : vector<1x32xf32> to vector<1x28xf32>
      %321 = vector.broadcast %319 : vector<10x1xf32> to vector<10x28xf32>
      %322 = vector.broadcast %320 : vector<1x28xf32> to vector<10x28xf32>
      %323 = arith.mulf %321, %322 : vector<10x28xf32>
      %324 = arith.addf %317, %323 : vector<10x28xf32>
      %c3_i32_136 = arith.constant 3 : i32
      %325 = arith.addi %6, %c3_i32_136 : i32
      %c0_137 = arith.constant 0 : index
      %326 = arith.index_cast %325 : i32 to index
      %c0_138 = arith.constant 0 : index
      %c0_139 = arith.constant 0 : index
      %327 = vector.load %arg1[%c0_137, %326, %c0_138, %c0_139] : memref<1x32x1x32xf32, #tpu.memory_space<vmem>>, vector<1x1x1x32xf32>
      %328 = vector.shape_cast %327 : vector<1x1x1x32xf32> to vector<1x32xf32>
      %c15_140 = arith.constant 15 : index
      %c0_141 = arith.constant 0 : index
      %c0_142 = arith.constant 0 : index
      %329 = vector.load %arg2[%c15_140, %c0_141, %c0_142] : memref<25x10x1xf32, #tpu.memory_space<vmem>>, vector<1x10x1xf32>
      %330 = vector.shape_cast %329 : vector<1x10x1xf32> to vector<10x1xf32>
      %331 = vector.extract_strided_slice %328 {offsets = [0, 0], sizes = [1, 28], strides = [1, 1]} : vector<1x32xf32> to vector<1x28xf32>
      %332 = vector.broadcast %330 : vector<10x1xf32> to vector<10x28xf32>
      %333 = vector.broadcast %331 : vector<1x28xf32> to vector<10x28xf32>
      %334 = arith.mulf %332, %333 : vector<10x28xf32>
      %335 = arith.addf %324, %334 : vector<10x28xf32>
      %c16_143 = arith.constant 16 : index
      %c0_144 = arith.constant 0 : index
      %c0_145 = arith.constant 0 : index
      %336 = vector.load %arg2[%c16_143, %c0_144, %c0_145] : memref<25x10x1xf32, #tpu.memory_space<vmem>>, vector<1x10x1xf32>
      %337 = vector.shape_cast %336 : vector<1x10x1xf32> to vector<10x1xf32>
      %338 = vector.extract_strided_slice %328 {offsets = [0, 1], sizes = [1, 28], strides = [1, 1]} : vector<1x32xf32> to vector<1x28xf32>
      %339 = vector.broadcast %337 : vector<10x1xf32> to vector<10x28xf32>
      %340 = vector.broadcast %338 : vector<1x28xf32> to vector<10x28xf32>
      %341 = arith.mulf %339, %340 : vector<10x28xf32>
      %342 = arith.addf %335, %341 : vector<10x28xf32>
      %c17_146 = arith.constant 17 : index
      %c0_147 = arith.constant 0 : index
      %c0_148 = arith.constant 0 : index
      %343 = vector.load %arg2[%c17_146, %c0_147, %c0_148] : memref<25x10x1xf32, #tpu.memory_space<vmem>>, vector<1x10x1xf32>
      %344 = vector.shape_cast %343 : vector<1x10x1xf32> to vector<10x1xf32>
      %345 = vector.extract_strided_slice %328 {offsets = [0, 2], sizes = [1, 28], strides = [1, 1]} : vector<1x32xf32> to vector<1x28xf32>
      %346 = vector.broadcast %344 : vector<10x1xf32> to vector<10x28xf32>
      %347 = vector.broadcast %345 : vector<1x28xf32> to vector<10x28xf32>
      %348 = arith.mulf %346, %347 : vector<10x28xf32>
      %349 = arith.addf %342, %348 : vector<10x28xf32>
      %c18_149 = arith.constant 18 : index
      %c0_150 = arith.constant 0 : index
      %c0_151 = arith.constant 0 : index
      %350 = vector.load %arg2[%c18_149, %c0_150, %c0_151] : memref<25x10x1xf32, #tpu.memory_space<vmem>>, vector<1x10x1xf32>
      %351 = vector.shape_cast %350 : vector<1x10x1xf32> to vector<10x1xf32>
      %352 = vector.extract_strided_slice %328 {offsets = [0, 3], sizes = [1, 28], strides = [1, 1]} : vector<1x32xf32> to vector<1x28xf32>
      %353 = vector.broadcast %351 : vector<10x1xf32> to vector<10x28xf32>
      %354 = vector.broadcast %352 : vector<1x28xf32> to vector<10x28xf32>
      %355 = arith.mulf %353, %354 : vector<10x28xf32>
      %356 = arith.addf %349, %355 : vector<10x28xf32>
      %c19_152 = arith.constant 19 : index
      %c0_153 = arith.constant 0 : index
      %c0_154 = arith.constant 0 : index
      %357 = vector.load %arg2[%c19_152, %c0_153, %c0_154] : memref<25x10x1xf32, #tpu.memory_space<vmem>>, vector<1x10x1xf32>
      %358 = vector.shape_cast %357 : vector<1x10x1xf32> to vector<10x1xf32>
      %359 = vector.extract_strided_slice %328 {offsets = [0, 4], sizes = [1, 28], strides = [1, 1]} : vector<1x32xf32> to vector<1x28xf32>
      %360 = vector.broadcast %358 : vector<10x1xf32> to vector<10x28xf32>
      %361 = vector.broadcast %359 : vector<1x28xf32> to vector<10x28xf32>
      %362 = arith.mulf %360, %361 : vector<10x28xf32>
      %363 = arith.addf %356, %362 : vector<10x28xf32>
      %c4_i32_155 = arith.constant 4 : i32
      %364 = arith.addi %6, %c4_i32_155 : i32
      %c0_156 = arith.constant 0 : index
      %365 = arith.index_cast %364 : i32 to index
      %c0_157 = arith.constant 0 : index
      %c0_158 = arith.constant 0 : index
      %366 = vector.load %arg1[%c0_156, %365, %c0_157, %c0_158] : memref<1x32x1x32xf32, #tpu.memory_space<vmem>>, vector<1x1x1x32xf32>
      %367 = vector.shape_cast %366 : vector<1x1x1x32xf32> to vector<1x32xf32>
      %c20_159 = arith.constant 20 : index
      %c0_160 = arith.constant 0 : index
      %c0_161 = arith.constant 0 : index
      %368 = vector.load %arg2[%c20_159, %c0_160, %c0_161] : memref<25x10x1xf32, #tpu.memory_space<vmem>>, vector<1x10x1xf32>
      %369 = vector.shape_cast %368 : vector<1x10x1xf32> to vector<10x1xf32>
      %370 = vector.extract_strided_slice %367 {offsets = [0, 0], sizes = [1, 28], strides = [1, 1]} : vector<1x32xf32> to vector<1x28xf32>
      %371 = vector.broadcast %369 : vector<10x1xf32> to vector<10x28xf32>
      %372 = vector.broadcast %370 : vector<1x28xf32> to vector<10x28xf32>
      %373 = arith.mulf %371, %372 : vector<10x28xf32>
      %374 = arith.addf %363, %373 : vector<10x28xf32>
      %c21_162 = arith.constant 21 : index
      %c0_163 = arith.constant 0 : index
      %c0_164 = arith.constant 0 : index
      %375 = vector.load %arg2[%c21_162, %c0_163, %c0_164] : memref<25x10x1xf32, #tpu.memory_space<vmem>>, vector<1x10x1xf32>
      %376 = vector.shape_cast %375 : vector<1x10x1xf32> to vector<10x1xf32>
      %377 = vector.extract_strided_slice %367 {offsets = [0, 1], sizes = [1, 28], strides = [1, 1]} : vector<1x32xf32> to vector<1x28xf32>
      %378 = vector.broadcast %376 : vector<10x1xf32> to vector<10x28xf32>
      %379 = vector.broadcast %377 : vector<1x28xf32> to vector<10x28xf32>
      %380 = arith.mulf %378, %379 : vector<10x28xf32>
      %381 = arith.addf %374, %380 : vector<10x28xf32>
      %c22_165 = arith.constant 22 : index
      %c0_166 = arith.constant 0 : index
      %c0_167 = arith.constant 0 : index
      %382 = vector.load %arg2[%c22_165, %c0_166, %c0_167] : memref<25x10x1xf32, #tpu.memory_space<vmem>>, vector<1x10x1xf32>
      %383 = vector.shape_cast %382 : vector<1x10x1xf32> to vector<10x1xf32>
      %384 = vector.extract_strided_slice %367 {offsets = [0, 2], sizes = [1, 28], strides = [1, 1]} : vector<1x32xf32> to vector<1x28xf32>
      %385 = vector.broadcast %383 : vector<10x1xf32> to vector<10x28xf32>
      %386 = vector.broadcast %384 : vector<1x28xf32> to vector<10x28xf32>
      %387 = arith.mulf %385, %386 : vector<10x28xf32>
      %388 = arith.addf %381, %387 : vector<10x28xf32>
      %c23_168 = arith.constant 23 : index
      %c0_169 = arith.constant 0 : index
      %c0_170 = arith.constant 0 : index
      %389 = vector.load %arg2[%c23_168, %c0_169, %c0_170] : memref<25x10x1xf32, #tpu.memory_space<vmem>>, vector<1x10x1xf32>
      %390 = vector.shape_cast %389 : vector<1x10x1xf32> to vector<10x1xf32>
      %391 = vector.extract_strided_slice %367 {offsets = [0, 3], sizes = [1, 28], strides = [1, 1]} : vector<1x32xf32> to vector<1x28xf32>
      %392 = vector.broadcast %390 : vector<10x1xf32> to vector<10x28xf32>
      %393 = vector.broadcast %391 : vector<1x28xf32> to vector<10x28xf32>
      %394 = arith.mulf %392, %393 : vector<10x28xf32>
      %395 = arith.addf %388, %394 : vector<10x28xf32>
      %c24_171 = arith.constant 24 : index
      %c0_172 = arith.constant 0 : index
      %c0_173 = arith.constant 0 : index
      %396 = vector.load %arg2[%c24_171, %c0_172, %c0_173] : memref<25x10x1xf32, #tpu.memory_space<vmem>>, vector<1x10x1xf32>
      %397 = vector.shape_cast %396 : vector<1x10x1xf32> to vector<10x1xf32>
      %398 = vector.extract_strided_slice %367 {offsets = [0, 4], sizes = [1, 28], strides = [1, 1]} : vector<1x32xf32> to vector<1x28xf32>
      %399 = vector.broadcast %397 : vector<10x1xf32> to vector<10x28xf32>
      %400 = vector.broadcast %398 : vector<1x28xf32> to vector<10x28xf32>
      %401 = arith.mulf %399, %400 : vector<10x28xf32>
      %402 = arith.addf %395, %401 : vector<10x28xf32>
      %403 = vector.broadcast %0 : vector<10x1xf32> to vector<10x28xf32>
      %404 = arith.addf %402, %403 : vector<10x28xf32>
      %cst_174 = arith.constant 0.000000e+00 : f32
      %405 = vector.broadcast %cst_174 : f32 to vector<10x28xf32>
      %406 = arith.maximumf %404, %405 : vector<10x28xf32>
      %407 = arith.maximumf %206, %406 : vector<10x28xf32>
      %cst_175 = arith.constant dense<0.000000e+00> : vector<10x14xf32>
      %408 = tpu.matmul %407, %1, %cst_175 {dimension_numbers = #tpu.dot_dimension_numbers<[1], [0], [0], [1], [0, 0, 1, 1], [], []>} : vector<10x28xf32>, vector<28x14xf32>, vector<10x14xf32> -> vector<10x14xf32>
      %cst_176 = arith.constant dense<0.000000e+00> : vector<10x14xf32>
      %409 = tpu.matmul %407, %2, %cst_176 {dimension_numbers = #tpu.dot_dimension_numbers<[1], [0], [0], [1], [0, 0, 1, 1], [], []>} : vector<10x28xf32>, vector<28x14xf32>, vector<10x14xf32> -> vector<10x14xf32>
      %410 = arith.maximumf %408, %409 : vector<10x14xf32>
      %c0_177 = arith.constant 0 : index
      %411 = arith.index_cast %arg7 : i32 to index
      %c0_178 = arith.constant 0 : index
      %c0_179 = arith.constant 0 : index
      %412 = vector.load %arg6[%c0_177, %411, %c0_178, %c0_179] : memref<1x14x10x14xf32, #tpu.memory_space<vmem>>, vector<1x1x10x14xf32>
      %413 = vector.shape_cast %412 : vector<1x1x10x14xf32> to vector<10x14xf32>
      %414 = vector.shape_cast %410 : vector<10x14xf32> to vector<1x1x10x14xf32>
      tpu.vector_store %arg6[%c0_177, %411, %c0_178, %c0_179], %414 {strides = array<i32>} : memref<1x14x10x14xf32, #tpu.memory_space<vmem>>, vector<1x1x10x14xf32>,
    }
    %c14_i32_5 = arith.constant 14 : i32
    return
  }
  func.func @transform_0(%arg0: i32) -> (i32, i32, i32, i32) {
    %c0_i32 = arith.constant 0 : i32
    %c0_i32_0 = arith.constant 0 : i32
    %c0_i32_1 = arith.constant 0 : i32
    %c0_i32_2 = arith.constant 0 : i32
    return %arg0, %c0_i32, %c0_i32_0, %c0_i32_1 : i32, i32, i32, i32
  }
  func.func @transform_1(%arg0: i32) -> (i32, i32, i32) {
    %c0_i32 = arith.constant 0 : i32
    %c0_i32_0 = arith.constant 0 : i32
    %c0_i32_1 = arith.constant 0 : i32
    %c0_i32_2 = arith.constant 0 : i32
    return %c0_i32, %c0_i32_0, %c0_i32_1 : i32, i32, i32
  }
  func.func @transform_2(%arg0: i32) -> (i32, i32) {
    %c0_i32 = arith.constant 0 : i32
    %c0_i32_0 = arith.constant 0 : i32
    %c0_i32_1 = arith.constant 0 : i32
    return %c0_i32, %c0_i32_0 : i32, i32
  }
  func.func @transform_3(%arg0: i32) -> (i32, i32) {
    %c0_i32 = arith.constant 0 : i32
    %c0_i32_0 = arith.constant 0 : i32
    %c0_i32_1 = arith.constant 0 : i32
    return %c0_i32, %c0_i32_0 : i32, i32
  }
  func.func @transform_4(%arg0: i32) -> (i32, i32) {
    %c0_i32 = arith.constant 0 : i32
    %c0_i32_0 = arith.constant 0 : i32
    %c0_i32_1 = arith.constant 0 : i32
    return %c0_i32, %c0_i32_0 : i32, i32
  }
  func.func @transform_5(%arg0: i32) -> (i32, i32, i32, i32) {
    %c0_i32 = arith.constant 0 : i32
    %c0_i32_0 = arith.constant 0 : i32
    %c0_i32_1 = arith.constant 0 : i32
    %c0_i32_2 = arith.constant 0 : i32
    return %arg0, %c0_i32, %c0_i32_0, %c0_i32_1 : i32, i32, i32, i32
  }
}

module attributes {stable_mosaic.version = 11 : i64} {
  func.func @kernel(%arg0: i32, %arg1: memref<1x18x10x18xf32, #tpu.memory_space<vmem>>, %arg2: memref<25x20x10xf32, #tpu.memory_space<vmem>>, %arg3: memref<20x1xf32, #tpu.memory_space<vmem>>, %arg4: memref<14x7xf32, #tpu.memory_space<vmem>>, %arg5: memref<14x7xf32, #tpu.memory_space<vmem>>, %arg6: memref<1x7x20x7xf32, #tpu.memory_space<vmem>>) attributes {dimension_semantics = [#tpu.dimension_semantics<parallel>], iteration_bounds = array<i64: 2>, scalar_prefetch = 0 : i64, scratch_operands = 0 : i64, tpu.core_type = #tpu.core_type<tc>, window_params = [{transform_indices = @transform_0, window_bounds = array<i64: 1, 18, 10, 18>}, {pipeline_mode = #tpu.pipeline_mode<synchronous>, transform_indices = @transform_1, window_bounds = array<i64: 25, 20, 10>}, {pipeline_mode = #tpu.pipeline_mode<synchronous>, transform_indices = @transform_2, window_bounds = array<i64: 20, 1>}, {pipeline_mode = #tpu.pipeline_mode<synchronous>, transform_indices = @transform_3, window_bounds = array<i64: 14, 7>}, {pipeline_mode = #tpu.pipeline_mode<synchronous>, transform_indices = @transform_4, window_bounds = array<i64: 14, 7>}, {transform_indices = @transform_5, window_bounds = array<i64: 1, 7, 20, 7>}]} {
    %c0 = arith.constant 0 : index
    %c0_0 = arith.constant 0 : index
    %0 = vector.load %arg3[%c0, %c0_0] : memref<20x1xf32, #tpu.memory_space<vmem>>, vector<20x1xf32>
    %c0_1 = arith.constant 0 : index
    %c0_2 = arith.constant 0 : index
    %1 = vector.load %arg4[%c0_1, %c0_2] : memref<14x7xf32, #tpu.memory_space<vmem>>, vector<14x7xf32>
    %c0_3 = arith.constant 0 : index
    %c0_4 = arith.constant 0 : index
    %2 = vector.load %arg5[%c0_3, %c0_4] : memref<14x7xf32, #tpu.memory_space<vmem>>, vector<14x7xf32>
    %c0_i32 = arith.constant 0 : i32
    %c7_i32 = arith.constant 7 : i32
    %3 = arith.addi %c0_i32, %c7_i32 : i32
    %c1_i32 = arith.constant 1 : i32
    scf.for %arg7 = %c0_i32 to %3 step %c1_i32  : i32 {
      %c2_i32 = arith.constant 2 : i32
      %4 = arith.muli %c2_i32, %arg7 : i32
      %c0_i32_6 = arith.constant 0 : i32
      %5 = arith.subi %4, %c0_i32_6 : i32
      %c1_i32_7 = arith.constant 1 : i32
      %6 = arith.addi %5, %c1_i32_7 : i32
      %cst = arith.constant 0.000000e+00 : f32
      %7 = vector.broadcast %cst : f32 to vector<20x14xf32>
      %c0_i32_8 = arith.constant 0 : i32
      %8 = arith.addi %5, %c0_i32_8 : i32
      %c0_9 = arith.constant 0 : index
      %9 = arith.index_cast %8 : i32 to index
      %c0_10 = arith.constant 0 : index
      %c0_11 = arith.constant 0 : index
      %10 = vector.load %arg1[%c0_9, %9, %c0_10, %c0_11] : memref<1x18x10x18xf32, #tpu.memory_space<vmem>>, vector<1x1x10x18xf32>
      %11 = vector.shape_cast %10 : vector<1x1x10x18xf32> to vector<10x18xf32>
      %c0_12 = arith.constant 0 : index
      %c0_13 = arith.constant 0 : index
      %c0_14 = arith.constant 0 : index
      %12 = vector.load %arg2[%c0_12, %c0_13, %c0_14] : memref<25x20x10xf32, #tpu.memory_space<vmem>>, vector<1x20x10xf32>
      %13 = vector.shape_cast %12 : vector<1x20x10xf32> to vector<20x10xf32>
      %14 = vector.extract_strided_slice %11 {offsets = [0, 0], sizes = [10, 14], strides = [1, 1]} : vector<10x18xf32> to vector<10x14xf32>
      %cst_15 = arith.constant dense<0.000000e+00> : vector<20x14xf32>
      %15 = tpu.matmul %13, %14, %cst_15 {dimension_numbers = #tpu.dot_dimension_numbers<[1], [0], [0], [1], [0, 0, 1, 1], [], []>} : vector<20x10xf32>, vector<10x14xf32>, vector<20x14xf32> -> vector<20x14xf32>
      %16 = arith.addf %7, %15 : vector<20x14xf32>
      %c1 = arith.constant 1 : index
      %c0_16 = arith.constant 0 : index
      %c0_17 = arith.constant 0 : index
      %17 = vector.load %arg2[%c1, %c0_16, %c0_17] : memref<25x20x10xf32, #tpu.memory_space<vmem>>, vector<1x20x10xf32>
      %18 = vector.shape_cast %17 : vector<1x20x10xf32> to vector<20x10xf32>
      %19 = vector.extract_strided_slice %11 {offsets = [0, 1], sizes = [10, 14], strides = [1, 1]} : vector<10x18xf32> to vector<10x14xf32>
      %cst_18 = arith.constant dense<0.000000e+00> : vector<20x14xf32>
      %20 = tpu.matmul %18, %19, %cst_18 {dimension_numbers = #tpu.dot_dimension_numbers<[1], [0], [0], [1], [0, 0, 1, 1], [], []>} : vector<20x10xf32>, vector<10x14xf32>, vector<20x14xf32> -> vector<20x14xf32>
      %21 = arith.addf %16, %20 : vector<20x14xf32>
      %c2 = arith.constant 2 : index
      %c0_19 = arith.constant 0 : index
      %c0_20 = arith.constant 0 : index
      %22 = vector.load %arg2[%c2, %c0_19, %c0_20] : memref<25x20x10xf32, #tpu.memory_space<vmem>>, vector<1x20x10xf32>
      %23 = vector.shape_cast %22 : vector<1x20x10xf32> to vector<20x10xf32>
      %24 = vector.extract_strided_slice %11 {offsets = [0, 2], sizes = [10, 14], strides = [1, 1]} : vector<10x18xf32> to vector<10x14xf32>
      %cst_21 = arith.constant dense<0.000000e+00> : vector<20x14xf32>
      %25 = tpu.matmul %23, %24, %cst_21 {dimension_numbers = #tpu.dot_dimension_numbers<[1], [0], [0], [1], [0, 0, 1, 1], [], []>} : vector<20x10xf32>, vector<10x14xf32>, vector<20x14xf32> -> vector<20x14xf32>
      %26 = arith.addf %21, %25 : vector<20x14xf32>
      %c3 = arith.constant 3 : index
      %c0_22 = arith.constant 0 : index
      %c0_23 = arith.constant 0 : index
      %27 = vector.load %arg2[%c3, %c0_22, %c0_23] : memref<25x20x10xf32, #tpu.memory_space<vmem>>, vector<1x20x10xf32>
      %28 = vector.shape_cast %27 : vector<1x20x10xf32> to vector<20x10xf32>
      %29 = vector.extract_strided_slice %11 {offsets = [0, 3], sizes = [10, 14], strides = [1, 1]} : vector<10x18xf32> to vector<10x14xf32>
      %cst_24 = arith.constant dense<0.000000e+00> : vector<20x14xf32>
      %30 = tpu.matmul %28, %29, %cst_24 {dimension_numbers = #tpu.dot_dimension_numbers<[1], [0], [0], [1], [0, 0, 1, 1], [], []>} : vector<20x10xf32>, vector<10x14xf32>, vector<20x14xf32> -> vector<20x14xf32>
      %31 = arith.addf %26, %30 : vector<20x14xf32>
      %c4 = arith.constant 4 : index
      %c0_25 = arith.constant 0 : index
      %c0_26 = arith.constant 0 : index
      %32 = vector.load %arg2[%c4, %c0_25, %c0_26] : memref<25x20x10xf32, #tpu.memory_space<vmem>>, vector<1x20x10xf32>
      %33 = vector.shape_cast %32 : vector<1x20x10xf32> to vector<20x10xf32>
      %34 = vector.extract_strided_slice %11 {offsets = [0, 4], sizes = [10, 14], strides = [1, 1]} : vector<10x18xf32> to vector<10x14xf32>
      %cst_27 = arith.constant dense<0.000000e+00> : vector<20x14xf32>
      %35 = tpu.matmul %33, %34, %cst_27 {dimension_numbers = #tpu.dot_dimension_numbers<[1], [0], [0], [1], [0, 0, 1, 1], [], []>} : vector<20x10xf32>, vector<10x14xf32>, vector<20x14xf32> -> vector<20x14xf32>
      %36 = arith.addf %31, %35 : vector<20x14xf32>
      %c1_i32_28 = arith.constant 1 : i32
      %37 = arith.addi %5, %c1_i32_28 : i32
      %c0_29 = arith.constant 0 : index
      %38 = arith.index_cast %37 : i32 to index
      %c0_30 = arith.constant 0 : index
      %c0_31 = arith.constant 0 : index
      %39 = vector.load %arg1[%c0_29, %38, %c0_30, %c0_31] : memref<1x18x10x18xf32, #tpu.memory_space<vmem>>, vector<1x1x10x18xf32>
      %40 = vector.shape_cast %39 : vector<1x1x10x18xf32> to vector<10x18xf32>
      %c5 = arith.constant 5 : index
      %c0_32 = arith.constant 0 : index
      %c0_33 = arith.constant 0 : index
      %41 = vector.load %arg2[%c5, %c0_32, %c0_33] : memref<25x20x10xf32, #tpu.memory_space<vmem>>, vector<1x20x10xf32>
      %42 = vector.shape_cast %41 : vector<1x20x10xf32> to vector<20x10xf32>
      %43 = vector.extract_strided_slice %40 {offsets = [0, 0], sizes = [10, 14], strides = [1, 1]} : vector<10x18xf32> to vector<10x14xf32>
      %cst_34 = arith.constant dense<0.000000e+00> : vector<20x14xf32>
      %44 = tpu.matmul %42, %43, %cst_34 {dimension_numbers = #tpu.dot_dimension_numbers<[1], [0], [0], [1], [0, 0, 1, 1], [], []>} : vector<20x10xf32>, vector<10x14xf32>, vector<20x14xf32> -> vector<20x14xf32>
      %45 = arith.addf %36, %44 : vector<20x14xf32>
      %c6 = arith.constant 6 : index
      %c0_35 = arith.constant 0 : index
      %c0_36 = arith.constant 0 : index
      %46 = vector.load %arg2[%c6, %c0_35, %c0_36] : memref<25x20x10xf32, #tpu.memory_space<vmem>>, vector<1x20x10xf32>
      %47 = vector.shape_cast %46 : vector<1x20x10xf32> to vector<20x10xf32>
      %48 = vector.extract_strided_slice %40 {offsets = [0, 1], sizes = [10, 14], strides = [1, 1]} : vector<10x18xf32> to vector<10x14xf32>
      %cst_37 = arith.constant dense<0.000000e+00> : vector<20x14xf32>
      %49 = tpu.matmul %47, %48, %cst_37 {dimension_numbers = #tpu.dot_dimension_numbers<[1], [0], [0], [1], [0, 0, 1, 1], [], []>} : vector<20x10xf32>, vector<10x14xf32>, vector<20x14xf32> -> vector<20x14xf32>
      %50 = arith.addf %45, %49 : vector<20x14xf32>
      %c7 = arith.constant 7 : index
      %c0_38 = arith.constant 0 : index
      %c0_39 = arith.constant 0 : index
      %51 = vector.load %arg2[%c7, %c0_38, %c0_39] : memref<25x20x10xf32, #tpu.memory_space<vmem>>, vector<1x20x10xf32>
      %52 = vector.shape_cast %51 : vector<1x20x10xf32> to vector<20x10xf32>
      %53 = vector.extract_strided_slice %40 {offsets = [0, 2], sizes = [10, 14], strides = [1, 1]} : vector<10x18xf32> to vector<10x14xf32>
      %cst_40 = arith.constant dense<0.000000e+00> : vector<20x14xf32>
      %54 = tpu.matmul %52, %53, %cst_40 {dimension_numbers = #tpu.dot_dimension_numbers<[1], [0], [0], [1], [0, 0, 1, 1], [], []>} : vector<20x10xf32>, vector<10x14xf32>, vector<20x14xf32> -> vector<20x14xf32>
      %55 = arith.addf %50, %54 : vector<20x14xf32>
      %c8 = arith.constant 8 : index
      %c0_41 = arith.constant 0 : index
      %c0_42 = arith.constant 0 : index
      %56 = vector.load %arg2[%c8, %c0_41, %c0_42] : memref<25x20x10xf32, #tpu.memory_space<vmem>>, vector<1x20x10xf32>
      %57 = vector.shape_cast %56 : vector<1x20x10xf32> to vector<20x10xf32>
      %58 = vector.extract_strided_slice %40 {offsets = [0, 3], sizes = [10, 14], strides = [1, 1]} : vector<10x18xf32> to vector<10x14xf32>
      %cst_43 = arith.constant dense<0.000000e+00> : vector<20x14xf32>
      %59 = tpu.matmul %57, %58, %cst_43 {dimension_numbers = #tpu.dot_dimension_numbers<[1], [0], [0], [1], [0, 0, 1, 1], [], []>} : vector<20x10xf32>, vector<10x14xf32>, vector<20x14xf32> -> vector<20x14xf32>
      %60 = arith.addf %55, %59 : vector<20x14xf32>
      %c9 = arith.constant 9 : index
      %c0_44 = arith.constant 0 : index
      %c0_45 = arith.constant 0 : index
      %61 = vector.load %arg2[%c9, %c0_44, %c0_45] : memref<25x20x10xf32, #tpu.memory_space<vmem>>, vector<1x20x10xf32>
      %62 = vector.shape_cast %61 : vector<1x20x10xf32> to vector<20x10xf32>
      %63 = vector.extract_strided_slice %40 {offsets = [0, 4], sizes = [10, 14], strides = [1, 1]} : vector<10x18xf32> to vector<10x14xf32>
      %cst_46 = arith.constant dense<0.000000e+00> : vector<20x14xf32>
      %64 = tpu.matmul %62, %63, %cst_46 {dimension_numbers = #tpu.dot_dimension_numbers<[1], [0], [0], [1], [0, 0, 1, 1], [], []>} : vector<20x10xf32>, vector<10x14xf32>, vector<20x14xf32> -> vector<20x14xf32>
      %65 = arith.addf %60, %64 : vector<20x14xf32>
      %c2_i32_47 = arith.constant 2 : i32
      %66 = arith.addi %5, %c2_i32_47 : i32
      %c0_48 = arith.constant 0 : index
      %67 = arith.index_cast %66 : i32 to index
      %c0_49 = arith.constant 0 : index
      %c0_50 = arith.constant 0 : index
      %68 = vector.load %arg1[%c0_48, %67, %c0_49, %c0_50] : memref<1x18x10x18xf32, #tpu.memory_space<vmem>>, vector<1x1x10x18xf32>
      %69 = vector.shape_cast %68 : vector<1x1x10x18xf32> to vector<10x18xf32>
      %c10 = arith.constant 10 : index
      %c0_51 = arith.constant 0 : index
      %c0_52 = arith.constant 0 : index
      %70 = vector.load %arg2[%c10, %c0_51, %c0_52] : memref<25x20x10xf32, #tpu.memory_space<vmem>>, vector<1x20x10xf32>
      %71 = vector.shape_cast %70 : vector<1x20x10xf32> to vector<20x10xf32>
      %72 = vector.extract_strided_slice %69 {offsets = [0, 0], sizes = [10, 14], strides = [1, 1]} : vector<10x18xf32> to vector<10x14xf32>
      %cst_53 = arith.constant dense<0.000000e+00> : vector<20x14xf32>
      %73 = tpu.matmul %71, %72, %cst_53 {dimension_numbers = #tpu.dot_dimension_numbers<[1], [0], [0], [1], [0, 0, 1, 1], [], []>} : vector<20x10xf32>, vector<10x14xf32>, vector<20x14xf32> -> vector<20x14xf32>
      %74 = arith.addf %65, %73 : vector<20x14xf32>
      %c11 = arith.constant 11 : index
      %c0_54 = arith.constant 0 : index
      %c0_55 = arith.constant 0 : index
      %75 = vector.load %arg2[%c11, %c0_54, %c0_55] : memref<25x20x10xf32, #tpu.memory_space<vmem>>, vector<1x20x10xf32>
      %76 = vector.shape_cast %75 : vector<1x20x10xf32> to vector<20x10xf32>
      %77 = vector.extract_strided_slice %69 {offsets = [0, 1], sizes = [10, 14], strides = [1, 1]} : vector<10x18xf32> to vector<10x14xf32>
      %cst_56 = arith.constant dense<0.000000e+00> : vector<20x14xf32>
      %78 = tpu.matmul %76, %77, %cst_56 {dimension_numbers = #tpu.dot_dimension_numbers<[1], [0], [0], [1], [0, 0, 1, 1], [], []>} : vector<20x10xf32>, vector<10x14xf32>, vector<20x14xf32> -> vector<20x14xf32>
      %79 = arith.addf %74, %78 : vector<20x14xf32>
      %c12 = arith.constant 12 : index
      %c0_57 = arith.constant 0 : index
      %c0_58 = arith.constant 0 : index
      %80 = vector.load %arg2[%c12, %c0_57, %c0_58] : memref<25x20x10xf32, #tpu.memory_space<vmem>>, vector<1x20x10xf32>
      %81 = vector.shape_cast %80 : vector<1x20x10xf32> to vector<20x10xf32>
      %82 = vector.extract_strided_slice %69 {offsets = [0, 2], sizes = [10, 14], strides = [1, 1]} : vector<10x18xf32> to vector<10x14xf32>
      %cst_59 = arith.constant dense<0.000000e+00> : vector<20x14xf32>
      %83 = tpu.matmul %81, %82, %cst_59 {dimension_numbers = #tpu.dot_dimension_numbers<[1], [0], [0], [1], [0, 0, 1, 1], [], []>} : vector<20x10xf32>, vector<10x14xf32>, vector<20x14xf32> -> vector<20x14xf32>
      %84 = arith.addf %79, %83 : vector<20x14xf32>
      %c13 = arith.constant 13 : index
      %c0_60 = arith.constant 0 : index
      %c0_61 = arith.constant 0 : index
      %85 = vector.load %arg2[%c13, %c0_60, %c0_61] : memref<25x20x10xf32, #tpu.memory_space<vmem>>, vector<1x20x10xf32>
      %86 = vector.shape_cast %85 : vector<1x20x10xf32> to vector<20x10xf32>
      %87 = vector.extract_strided_slice %69 {offsets = [0, 3], sizes = [10, 14], strides = [1, 1]} : vector<10x18xf32> to vector<10x14xf32>
      %cst_62 = arith.constant dense<0.000000e+00> : vector<20x14xf32>
      %88 = tpu.matmul %86, %87, %cst_62 {dimension_numbers = #tpu.dot_dimension_numbers<[1], [0], [0], [1], [0, 0, 1, 1], [], []>} : vector<20x10xf32>, vector<10x14xf32>, vector<20x14xf32> -> vector<20x14xf32>
      %89 = arith.addf %84, %88 : vector<20x14xf32>
      %c14 = arith.constant 14 : index
      %c0_63 = arith.constant 0 : index
      %c0_64 = arith.constant 0 : index
      %90 = vector.load %arg2[%c14, %c0_63, %c0_64] : memref<25x20x10xf32, #tpu.memory_space<vmem>>, vector<1x20x10xf32>
      %91 = vector.shape_cast %90 : vector<1x20x10xf32> to vector<20x10xf32>
      %92 = vector.extract_strided_slice %69 {offsets = [0, 4], sizes = [10, 14], strides = [1, 1]} : vector<10x18xf32> to vector<10x14xf32>
      %cst_65 = arith.constant dense<0.000000e+00> : vector<20x14xf32>
      %93 = tpu.matmul %91, %92, %cst_65 {dimension_numbers = #tpu.dot_dimension_numbers<[1], [0], [0], [1], [0, 0, 1, 1], [], []>} : vector<20x10xf32>, vector<10x14xf32>, vector<20x14xf32> -> vector<20x14xf32>
      %94 = arith.addf %89, %93 : vector<20x14xf32>
      %c3_i32 = arith.constant 3 : i32
      %95 = arith.addi %5, %c3_i32 : i32
      %c0_66 = arith.constant 0 : index
      %96 = arith.index_cast %95 : i32 to index
      %c0_67 = arith.constant 0 : index
      %c0_68 = arith.constant 0 : index
      %97 = vector.load %arg1[%c0_66, %96, %c0_67, %c0_68] : memref<1x18x10x18xf32, #tpu.memory_space<vmem>>, vector<1x1x10x18xf32>
      %98 = vector.shape_cast %97 : vector<1x1x10x18xf32> to vector<10x18xf32>
      %c15 = arith.constant 15 : index
      %c0_69 = arith.constant 0 : index
      %c0_70 = arith.constant 0 : index
      %99 = vector.load %arg2[%c15, %c0_69, %c0_70] : memref<25x20x10xf32, #tpu.memory_space<vmem>>, vector<1x20x10xf32>
      %100 = vector.shape_cast %99 : vector<1x20x10xf32> to vector<20x10xf32>
      %101 = vector.extract_strided_slice %98 {offsets = [0, 0], sizes = [10, 14], strides = [1, 1]} : vector<10x18xf32> to vector<10x14xf32>
      %cst_71 = arith.constant dense<0.000000e+00> : vector<20x14xf32>
      %102 = tpu.matmul %100, %101, %cst_71 {dimension_numbers = #tpu.dot_dimension_numbers<[1], [0], [0], [1], [0, 0, 1, 1], [], []>} : vector<20x10xf32>, vector<10x14xf32>, vector<20x14xf32> -> vector<20x14xf32>
      %103 = arith.addf %94, %102 : vector<20x14xf32>
      %c16 = arith.constant 16 : index
      %c0_72 = arith.constant 0 : index
      %c0_73 = arith.constant 0 : index
      %104 = vector.load %arg2[%c16, %c0_72, %c0_73] : memref<25x20x10xf32, #tpu.memory_space<vmem>>, vector<1x20x10xf32>
      %105 = vector.shape_cast %104 : vector<1x20x10xf32> to vector<20x10xf32>
      %106 = vector.extract_strided_slice %98 {offsets = [0, 1], sizes = [10, 14], strides = [1, 1]} : vector<10x18xf32> to vector<10x14xf32>
      %cst_74 = arith.constant dense<0.000000e+00> : vector<20x14xf32>
      %107 = tpu.matmul %105, %106, %cst_74 {dimension_numbers = #tpu.dot_dimension_numbers<[1], [0], [0], [1], [0, 0, 1, 1], [], []>} : vector<20x10xf32>, vector<10x14xf32>, vector<20x14xf32> -> vector<20x14xf32>
      %108 = arith.addf %103, %107 : vector<20x14xf32>
      %c17 = arith.constant 17 : index
      %c0_75 = arith.constant 0 : index
      %c0_76 = arith.constant 0 : index
      %109 = vector.load %arg2[%c17, %c0_75, %c0_76] : memref<25x20x10xf32, #tpu.memory_space<vmem>>, vector<1x20x10xf32>
      %110 = vector.shape_cast %109 : vector<1x20x10xf32> to vector<20x10xf32>
      %111 = vector.extract_strided_slice %98 {offsets = [0, 2], sizes = [10, 14], strides = [1, 1]} : vector<10x18xf32> to vector<10x14xf32>
      %cst_77 = arith.constant dense<0.000000e+00> : vector<20x14xf32>
      %112 = tpu.matmul %110, %111, %cst_77 {dimension_numbers = #tpu.dot_dimension_numbers<[1], [0], [0], [1], [0, 0, 1, 1], [], []>} : vector<20x10xf32>, vector<10x14xf32>, vector<20x14xf32> -> vector<20x14xf32>
      %113 = arith.addf %108, %112 : vector<20x14xf32>
      %c18 = arith.constant 18 : index
      %c0_78 = arith.constant 0 : index
      %c0_79 = arith.constant 0 : index
      %114 = vector.load %arg2[%c18, %c0_78, %c0_79] : memref<25x20x10xf32, #tpu.memory_space<vmem>>, vector<1x20x10xf32>
      %115 = vector.shape_cast %114 : vector<1x20x10xf32> to vector<20x10xf32>
      %116 = vector.extract_strided_slice %98 {offsets = [0, 3], sizes = [10, 14], strides = [1, 1]} : vector<10x18xf32> to vector<10x14xf32>
      %cst_80 = arith.constant dense<0.000000e+00> : vector<20x14xf32>
      %117 = tpu.matmul %115, %116, %cst_80 {dimension_numbers = #tpu.dot_dimension_numbers<[1], [0], [0], [1], [0, 0, 1, 1], [], []>} : vector<20x10xf32>, vector<10x14xf32>, vector<20x14xf32> -> vector<20x14xf32>
      %118 = arith.addf %113, %117 : vector<20x14xf32>
      %c19 = arith.constant 19 : index
      %c0_81 = arith.constant 0 : index
      %c0_82 = arith.constant 0 : index
      %119 = vector.load %arg2[%c19, %c0_81, %c0_82] : memref<25x20x10xf32, #tpu.memory_space<vmem>>, vector<1x20x10xf32>
      %120 = vector.shape_cast %119 : vector<1x20x10xf32> to vector<20x10xf32>
      %121 = vector.extract_strided_slice %98 {offsets = [0, 4], sizes = [10, 14], strides = [1, 1]} : vector<10x18xf32> to vector<10x14xf32>
      %cst_83 = arith.constant dense<0.000000e+00> : vector<20x14xf32>
      %122 = tpu.matmul %120, %121, %cst_83 {dimension_numbers = #tpu.dot_dimension_numbers<[1], [0], [0], [1], [0, 0, 1, 1], [], []>} : vector<20x10xf32>, vector<10x14xf32>, vector<20x14xf32> -> vector<20x14xf32>
      %123 = arith.addf %118, %122 : vector<20x14xf32>
      %c4_i32 = arith.constant 4 : i32
      %124 = arith.addi %5, %c4_i32 : i32
      %c0_84 = arith.constant 0 : index
      %125 = arith.index_cast %124 : i32 to index
      %c0_85 = arith.constant 0 : index
      %c0_86 = arith.constant 0 : index
      %126 = vector.load %arg1[%c0_84, %125, %c0_85, %c0_86] : memref<1x18x10x18xf32, #tpu.memory_space<vmem>>, vector<1x1x10x18xf32>
      %127 = vector.shape_cast %126 : vector<1x1x10x18xf32> to vector<10x18xf32>
      %c20 = arith.constant 20 : index
      %c0_87 = arith.constant 0 : index
      %c0_88 = arith.constant 0 : index
      %128 = vector.load %arg2[%c20, %c0_87, %c0_88] : memref<25x20x10xf32, #tpu.memory_space<vmem>>, vector<1x20x10xf32>
      %129 = vector.shape_cast %128 : vector<1x20x10xf32> to vector<20x10xf32>
      %130 = vector.extract_strided_slice %127 {offsets = [0, 0], sizes = [10, 14], strides = [1, 1]} : vector<10x18xf32> to vector<10x14xf32>
      %cst_89 = arith.constant dense<0.000000e+00> : vector<20x14xf32>
      %131 = tpu.matmul %129, %130, %cst_89 {dimension_numbers = #tpu.dot_dimension_numbers<[1], [0], [0], [1], [0, 0, 1, 1], [], []>} : vector<20x10xf32>, vector<10x14xf32>, vector<20x14xf32> -> vector<20x14xf32>
      %132 = arith.addf %123, %131 : vector<20x14xf32>
      %c21 = arith.constant 21 : index
      %c0_90 = arith.constant 0 : index
      %c0_91 = arith.constant 0 : index
      %133 = vector.load %arg2[%c21, %c0_90, %c0_91] : memref<25x20x10xf32, #tpu.memory_space<vmem>>, vector<1x20x10xf32>
      %134 = vector.shape_cast %133 : vector<1x20x10xf32> to vector<20x10xf32>
      %135 = vector.extract_strided_slice %127 {offsets = [0, 1], sizes = [10, 14], strides = [1, 1]} : vector<10x18xf32> to vector<10x14xf32>
      %cst_92 = arith.constant dense<0.000000e+00> : vector<20x14xf32>
      %136 = tpu.matmul %134, %135, %cst_92 {dimension_numbers = #tpu.dot_dimension_numbers<[1], [0], [0], [1], [0, 0, 1, 1], [], []>} : vector<20x10xf32>, vector<10x14xf32>, vector<20x14xf32> -> vector<20x14xf32>
      %137 = arith.addf %132, %136 : vector<20x14xf32>
      %c22 = arith.constant 22 : index
      %c0_93 = arith.constant 0 : index
      %c0_94 = arith.constant 0 : index
      %138 = vector.load %arg2[%c22, %c0_93, %c0_94] : memref<25x20x10xf32, #tpu.memory_space<vmem>>, vector<1x20x10xf32>
      %139 = vector.shape_cast %138 : vector<1x20x10xf32> to vector<20x10xf32>
      %140 = vector.extract_strided_slice %127 {offsets = [0, 2], sizes = [10, 14], strides = [1, 1]} : vector<10x18xf32> to vector<10x14xf32>
      %cst_95 = arith.constant dense<0.000000e+00> : vector<20x14xf32>
      %141 = tpu.matmul %139, %140, %cst_95 {dimension_numbers = #tpu.dot_dimension_numbers<[1], [0], [0], [1], [0, 0, 1, 1], [], []>} : vector<20x10xf32>, vector<10x14xf32>, vector<20x14xf32> -> vector<20x14xf32>
      %142 = arith.addf %137, %141 : vector<20x14xf32>
      %c23 = arith.constant 23 : index
      %c0_96 = arith.constant 0 : index
      %c0_97 = arith.constant 0 : index
      %143 = vector.load %arg2[%c23, %c0_96, %c0_97] : memref<25x20x10xf32, #tpu.memory_space<vmem>>, vector<1x20x10xf32>
      %144 = vector.shape_cast %143 : vector<1x20x10xf32> to vector<20x10xf32>
      %145 = vector.extract_strided_slice %127 {offsets = [0, 3], sizes = [10, 14], strides = [1, 1]} : vector<10x18xf32> to vector<10x14xf32>
      %cst_98 = arith.constant dense<0.000000e+00> : vector<20x14xf32>
      %146 = tpu.matmul %144, %145, %cst_98 {dimension_numbers = #tpu.dot_dimension_numbers<[1], [0], [0], [1], [0, 0, 1, 1], [], []>} : vector<20x10xf32>, vector<10x14xf32>, vector<20x14xf32> -> vector<20x14xf32>
      %147 = arith.addf %142, %146 : vector<20x14xf32>
      %c24 = arith.constant 24 : index
      %c0_99 = arith.constant 0 : index
      %c0_100 = arith.constant 0 : index
      %148 = vector.load %arg2[%c24, %c0_99, %c0_100] : memref<25x20x10xf32, #tpu.memory_space<vmem>>, vector<1x20x10xf32>
      %149 = vector.shape_cast %148 : vector<1x20x10xf32> to vector<20x10xf32>
      %150 = vector.extract_strided_slice %127 {offsets = [0, 4], sizes = [10, 14], strides = [1, 1]} : vector<10x18xf32> to vector<10x14xf32>
      %cst_101 = arith.constant dense<0.000000e+00> : vector<20x14xf32>
      %151 = tpu.matmul %149, %150, %cst_101 {dimension_numbers = #tpu.dot_dimension_numbers<[1], [0], [0], [1], [0, 0, 1, 1], [], []>} : vector<20x10xf32>, vector<10x14xf32>, vector<20x14xf32> -> vector<20x14xf32>
      %152 = arith.addf %147, %151 : vector<20x14xf32>
      %153 = vector.broadcast %0 : vector<20x1xf32> to vector<20x14xf32>
      %154 = arith.addf %152, %153 : vector<20x14xf32>
      %cst_102 = arith.constant 0.000000e+00 : f32
      %155 = vector.broadcast %cst_102 : f32 to vector<20x14xf32>
      %156 = arith.maximumf %154, %155 : vector<20x14xf32>
      %cst_103 = arith.constant 0.000000e+00 : f32
      %157 = vector.broadcast %cst_103 : f32 to vector<20x14xf32>
      %c0_i32_104 = arith.constant 0 : i32
      %158 = arith.addi %6, %c0_i32_104 : i32
      %c0_105 = arith.constant 0 : index
      %159 = arith.index_cast %158 : i32 to index
      %c0_106 = arith.constant 0 : index
      %c0_107 = arith.constant 0 : index
      %160 = vector.load %arg1[%c0_105, %159, %c0_106, %c0_107] : memref<1x18x10x18xf32, #tpu.memory_space<vmem>>, vector<1x1x10x18xf32>
      %161 = vector.shape_cast %160 : vector<1x1x10x18xf32> to vector<10x18xf32>
      %c0_108 = arith.constant 0 : index
      %c0_109 = arith.constant 0 : index
      %c0_110 = arith.constant 0 : index
      %162 = vector.load %arg2[%c0_108, %c0_109, %c0_110] : memref<25x20x10xf32, #tpu.memory_space<vmem>>, vector<1x20x10xf32>
      %163 = vector.shape_cast %162 : vector<1x20x10xf32> to vector<20x10xf32>
      %164 = vector.extract_strided_slice %161 {offsets = [0, 0], sizes = [10, 14], strides = [1, 1]} : vector<10x18xf32> to vector<10x14xf32>
      %cst_111 = arith.constant dense<0.000000e+00> : vector<20x14xf32>
      %165 = tpu.matmul %163, %164, %cst_111 {dimension_numbers = #tpu.dot_dimension_numbers<[1], [0], [0], [1], [0, 0, 1, 1], [], []>} : vector<20x10xf32>, vector<10x14xf32>, vector<20x14xf32> -> vector<20x14xf32>
      %166 = arith.addf %157, %165 : vector<20x14xf32>
      %c1_112 = arith.constant 1 : index
      %c0_113 = arith.constant 0 : index
      %c0_114 = arith.constant 0 : index
      %167 = vector.load %arg2[%c1_112, %c0_113, %c0_114] : memref<25x20x10xf32, #tpu.memory_space<vmem>>, vector<1x20x10xf32>
      %168 = vector.shape_cast %167 : vector<1x20x10xf32> to vector<20x10xf32>
      %169 = vector.extract_strided_slice %161 {offsets = [0, 1], sizes = [10, 14], strides = [1, 1]} : vector<10x18xf32> to vector<10x14xf32>
      %cst_115 = arith.constant dense<0.000000e+00> : vector<20x14xf32>
      %170 = tpu.matmul %168, %169, %cst_115 {dimension_numbers = #tpu.dot_dimension_numbers<[1], [0], [0], [1], [0, 0, 1, 1], [], []>} : vector<20x10xf32>, vector<10x14xf32>, vector<20x14xf32> -> vector<20x14xf32>
      %171 = arith.addf %166, %170 : vector<20x14xf32>
      %c2_116 = arith.constant 2 : index
      %c0_117 = arith.constant 0 : index
      %c0_118 = arith.constant 0 : index
      %172 = vector.load %arg2[%c2_116, %c0_117, %c0_118] : memref<25x20x10xf32, #tpu.memory_space<vmem>>, vector<1x20x10xf32>
      %173 = vector.shape_cast %172 : vector<1x20x10xf32> to vector<20x10xf32>
      %174 = vector.extract_strided_slice %161 {offsets = [0, 2], sizes = [10, 14], strides = [1, 1]} : vector<10x18xf32> to vector<10x14xf32>
      %cst_119 = arith.constant dense<0.000000e+00> : vector<20x14xf32>
      %175 = tpu.matmul %173, %174, %cst_119 {dimension_numbers = #tpu.dot_dimension_numbers<[1], [0], [0], [1], [0, 0, 1, 1], [], []>} : vector<20x10xf32>, vector<10x14xf32>, vector<20x14xf32> -> vector<20x14xf32>
      %176 = arith.addf %171, %175 : vector<20x14xf32>
      %c3_120 = arith.constant 3 : index
      %c0_121 = arith.constant 0 : index
      %c0_122 = arith.constant 0 : index
      %177 = vector.load %arg2[%c3_120, %c0_121, %c0_122] : memref<25x20x10xf32, #tpu.memory_space<vmem>>, vector<1x20x10xf32>
      %178 = vector.shape_cast %177 : vector<1x20x10xf32> to vector<20x10xf32>
      %179 = vector.extract_strided_slice %161 {offsets = [0, 3], sizes = [10, 14], strides = [1, 1]} : vector<10x18xf32> to vector<10x14xf32>
      %cst_123 = arith.constant dense<0.000000e+00> : vector<20x14xf32>
      %180 = tpu.matmul %178, %179, %cst_123 {dimension_numbers = #tpu.dot_dimension_numbers<[1], [0], [0], [1], [0, 0, 1, 1], [], []>} : vector<20x10xf32>, vector<10x14xf32>, vector<20x14xf32> -> vector<20x14xf32>
      %181 = arith.addf %176, %180 : vector<20x14xf32>
      %c4_124 = arith.constant 4 : index
      %c0_125 = arith.constant 0 : index
      %c0_126 = arith.constant 0 : index
      %182 = vector.load %arg2[%c4_124, %c0_125, %c0_126] : memref<25x20x10xf32, #tpu.memory_space<vmem>>, vector<1x20x10xf32>
      %183 = vector.shape_cast %182 : vector<1x20x10xf32> to vector<20x10xf32>
      %184 = vector.extract_strided_slice %161 {offsets = [0, 4], sizes = [10, 14], strides = [1, 1]} : vector<10x18xf32> to vector<10x14xf32>
      %cst_127 = arith.constant dense<0.000000e+00> : vector<20x14xf32>
      %185 = tpu.matmul %183, %184, %cst_127 {dimension_numbers = #tpu.dot_dimension_numbers<[1], [0], [0], [1], [0, 0, 1, 1], [], []>} : vector<20x10xf32>, vector<10x14xf32>, vector<20x14xf32> -> vector<20x14xf32>
      %186 = arith.addf %181, %185 : vector<20x14xf32>
      %c1_i32_128 = arith.constant 1 : i32
      %187 = arith.addi %6, %c1_i32_128 : i32
      %c0_129 = arith.constant 0 : index
      %188 = arith.index_cast %187 : i32 to index
      %c0_130 = arith.constant 0 : index
      %c0_131 = arith.constant 0 : index
      %189 = vector.load %arg1[%c0_129, %188, %c0_130, %c0_131] : memref<1x18x10x18xf32, #tpu.memory_space<vmem>>, vector<1x1x10x18xf32>
      %190 = vector.shape_cast %189 : vector<1x1x10x18xf32> to vector<10x18xf32>
      %c5_132 = arith.constant 5 : index
      %c0_133 = arith.constant 0 : index
      %c0_134 = arith.constant 0 : index
      %191 = vector.load %arg2[%c5_132, %c0_133, %c0_134] : memref<25x20x10xf32, #tpu.memory_space<vmem>>, vector<1x20x10xf32>
      %192 = vector.shape_cast %191 : vector<1x20x10xf32> to vector<20x10xf32>
      %193 = vector.extract_strided_slice %190 {offsets = [0, 0], sizes = [10, 14], strides = [1, 1]} : vector<10x18xf32> to vector<10x14xf32>
      %cst_135 = arith.constant dense<0.000000e+00> : vector<20x14xf32>
      %194 = tpu.matmul %192, %193, %cst_135 {dimension_numbers = #tpu.dot_dimension_numbers<[1], [0], [0], [1], [0, 0, 1, 1], [], []>} : vector<20x10xf32>, vector<10x14xf32>, vector<20x14xf32> -> vector<20x14xf32>
      %195 = arith.addf %186, %194 : vector<20x14xf32>
      %c6_136 = arith.constant 6 : index
      %c0_137 = arith.constant 0 : index
      %c0_138 = arith.constant 0 : index
      %196 = vector.load %arg2[%c6_136, %c0_137, %c0_138] : memref<25x20x10xf32, #tpu.memory_space<vmem>>, vector<1x20x10xf32>
      %197 = vector.shape_cast %196 : vector<1x20x10xf32> to vector<20x10xf32>
      %198 = vector.extract_strided_slice %190 {offsets = [0, 1], sizes = [10, 14], strides = [1, 1]} : vector<10x18xf32> to vector<10x14xf32>
      %cst_139 = arith.constant dense<0.000000e+00> : vector<20x14xf32>
      %199 = tpu.matmul %197, %198, %cst_139 {dimension_numbers = #tpu.dot_dimension_numbers<[1], [0], [0], [1], [0, 0, 1, 1], [], []>} : vector<20x10xf32>, vector<10x14xf32>, vector<20x14xf32> -> vector<20x14xf32>
      %200 = arith.addf %195, %199 : vector<20x14xf32>
      %c7_140 = arith.constant 7 : index
      %c0_141 = arith.constant 0 : index
      %c0_142 = arith.constant 0 : index
      %201 = vector.load %arg2[%c7_140, %c0_141, %c0_142] : memref<25x20x10xf32, #tpu.memory_space<vmem>>, vector<1x20x10xf32>
      %202 = vector.shape_cast %201 : vector<1x20x10xf32> to vector<20x10xf32>
      %203 = vector.extract_strided_slice %190 {offsets = [0, 2], sizes = [10, 14], strides = [1, 1]} : vector<10x18xf32> to vector<10x14xf32>
      %cst_143 = arith.constant dense<0.000000e+00> : vector<20x14xf32>
      %204 = tpu.matmul %202, %203, %cst_143 {dimension_numbers = #tpu.dot_dimension_numbers<[1], [0], [0], [1], [0, 0, 1, 1], [], []>} : vector<20x10xf32>, vector<10x14xf32>, vector<20x14xf32> -> vector<20x14xf32>
      %205 = arith.addf %200, %204 : vector<20x14xf32>
      %c8_144 = arith.constant 8 : index
      %c0_145 = arith.constant 0 : index
      %c0_146 = arith.constant 0 : index
      %206 = vector.load %arg2[%c8_144, %c0_145, %c0_146] : memref<25x20x10xf32, #tpu.memory_space<vmem>>, vector<1x20x10xf32>
      %207 = vector.shape_cast %206 : vector<1x20x10xf32> to vector<20x10xf32>
      %208 = vector.extract_strided_slice %190 {offsets = [0, 3], sizes = [10, 14], strides = [1, 1]} : vector<10x18xf32> to vector<10x14xf32>
      %cst_147 = arith.constant dense<0.000000e+00> : vector<20x14xf32>
      %209 = tpu.matmul %207, %208, %cst_147 {dimension_numbers = #tpu.dot_dimension_numbers<[1], [0], [0], [1], [0, 0, 1, 1], [], []>} : vector<20x10xf32>, vector<10x14xf32>, vector<20x14xf32> -> vector<20x14xf32>
      %210 = arith.addf %205, %209 : vector<20x14xf32>
      %c9_148 = arith.constant 9 : index
      %c0_149 = arith.constant 0 : index
      %c0_150 = arith.constant 0 : index
      %211 = vector.load %arg2[%c9_148, %c0_149, %c0_150] : memref<25x20x10xf32, #tpu.memory_space<vmem>>, vector<1x20x10xf32>
      %212 = vector.shape_cast %211 : vector<1x20x10xf32> to vector<20x10xf32>
      %213 = vector.extract_strided_slice %190 {offsets = [0, 4], sizes = [10, 14], strides = [1, 1]} : vector<10x18xf32> to vector<10x14xf32>
      %cst_151 = arith.constant dense<0.000000e+00> : vector<20x14xf32>
      %214 = tpu.matmul %212, %213, %cst_151 {dimension_numbers = #tpu.dot_dimension_numbers<[1], [0], [0], [1], [0, 0, 1, 1], [], []>} : vector<20x10xf32>, vector<10x14xf32>, vector<20x14xf32> -> vector<20x14xf32>
      %215 = arith.addf %210, %214 : vector<20x14xf32>
      %c2_i32_152 = arith.constant 2 : i32
      %216 = arith.addi %6, %c2_i32_152 : i32
      %c0_153 = arith.constant 0 : index
      %217 = arith.index_cast %216 : i32 to index
      %c0_154 = arith.constant 0 : index
      %c0_155 = arith.constant 0 : index
      %218 = vector.load %arg1[%c0_153, %217, %c0_154, %c0_155] : memref<1x18x10x18xf32, #tpu.memory_space<vmem>>, vector<1x1x10x18xf32>
      %219 = vector.shape_cast %218 : vector<1x1x10x18xf32> to vector<10x18xf32>
      %c10_156 = arith.constant 10 : index
      %c0_157 = arith.constant 0 : index
      %c0_158 = arith.constant 0 : index
      %220 = vector.load %arg2[%c10_156, %c0_157, %c0_158] : memref<25x20x10xf32, #tpu.memory_space<vmem>>, vector<1x20x10xf32>
      %221 = vector.shape_cast %220 : vector<1x20x10xf32> to vector<20x10xf32>
      %222 = vector.extract_strided_slice %219 {offsets = [0, 0], sizes = [10, 14], strides = [1, 1]} : vector<10x18xf32> to vector<10x14xf32>
      %cst_159 = arith.constant dense<0.000000e+00> : vector<20x14xf32>
      %223 = tpu.matmul %221, %222, %cst_159 {dimension_numbers = #tpu.dot_dimension_numbers<[1], [0], [0], [1], [0, 0, 1, 1], [], []>} : vector<20x10xf32>, vector<10x14xf32>, vector<20x14xf32> -> vector<20x14xf32>
      %224 = arith.addf %215, %223 : vector<20x14xf32>
      %c11_160 = arith.constant 11 : index
      %c0_161 = arith.constant 0 : index
      %c0_162 = arith.constant 0 : index
      %225 = vector.load %arg2[%c11_160, %c0_161, %c0_162] : memref<25x20x10xf32, #tpu.memory_space<vmem>>, vector<1x20x10xf32>
      %226 = vector.shape_cast %225 : vector<1x20x10xf32> to vector<20x10xf32>
      %227 = vector.extract_strided_slice %219 {offsets = [0, 1], sizes = [10, 14], strides = [1, 1]} : vector<10x18xf32> to vector<10x14xf32>
      %cst_163 = arith.constant dense<0.000000e+00> : vector<20x14xf32>
      %228 = tpu.matmul %226, %227, %cst_163 {dimension_numbers = #tpu.dot_dimension_numbers<[1], [0], [0], [1], [0, 0, 1, 1], [], []>} : vector<20x10xf32>, vector<10x14xf32>, vector<20x14xf32> -> vector<20x14xf32>
      %229 = arith.addf %224, %228 : vector<20x14xf32>
      %c12_164 = arith.constant 12 : index
      %c0_165 = arith.constant 0 : index
      %c0_166 = arith.constant 0 : index
      %230 = vector.load %arg2[%c12_164, %c0_165, %c0_166] : memref<25x20x10xf32, #tpu.memory_space<vmem>>, vector<1x20x10xf32>
      %231 = vector.shape_cast %230 : vector<1x20x10xf32> to vector<20x10xf32>
      %232 = vector.extract_strided_slice %219 {offsets = [0, 2], sizes = [10, 14], strides = [1, 1]} : vector<10x18xf32> to vector<10x14xf32>
      %cst_167 = arith.constant dense<0.000000e+00> : vector<20x14xf32>
      %233 = tpu.matmul %231, %232, %cst_167 {dimension_numbers = #tpu.dot_dimension_numbers<[1], [0], [0], [1], [0, 0, 1, 1], [], []>} : vector<20x10xf32>, vector<10x14xf32>, vector<20x14xf32> -> vector<20x14xf32>
      %234 = arith.addf %229, %233 : vector<20x14xf32>
      %c13_168 = arith.constant 13 : index
      %c0_169 = arith.constant 0 : index
      %c0_170 = arith.constant 0 : index
      %235 = vector.load %arg2[%c13_168, %c0_169, %c0_170] : memref<25x20x10xf32, #tpu.memory_space<vmem>>, vector<1x20x10xf32>
      %236 = vector.shape_cast %235 : vector<1x20x10xf32> to vector<20x10xf32>
      %237 = vector.extract_strided_slice %219 {offsets = [0, 3], sizes = [10, 14], strides = [1, 1]} : vector<10x18xf32> to vector<10x14xf32>
      %cst_171 = arith.constant dense<0.000000e+00> : vector<20x14xf32>
      %238 = tpu.matmul %236, %237, %cst_171 {dimension_numbers = #tpu.dot_dimension_numbers<[1], [0], [0], [1], [0, 0, 1, 1], [], []>} : vector<20x10xf32>, vector<10x14xf32>, vector<20x14xf32> -> vector<20x14xf32>
      %239 = arith.addf %234, %238 : vector<20x14xf32>
      %c14_172 = arith.constant 14 : index
      %c0_173 = arith.constant 0 : index
      %c0_174 = arith.constant 0 : index
      %240 = vector.load %arg2[%c14_172, %c0_173, %c0_174] : memref<25x20x10xf32, #tpu.memory_space<vmem>>, vector<1x20x10xf32>
      %241 = vector.shape_cast %240 : vector<1x20x10xf32> to vector<20x10xf32>
      %242 = vector.extract_strided_slice %219 {offsets = [0, 4], sizes = [10, 14], strides = [1, 1]} : vector<10x18xf32> to vector<10x14xf32>
      %cst_175 = arith.constant dense<0.000000e+00> : vector<20x14xf32>
      %243 = tpu.matmul %241, %242, %cst_175 {dimension_numbers = #tpu.dot_dimension_numbers<[1], [0], [0], [1], [0, 0, 1, 1], [], []>} : vector<20x10xf32>, vector<10x14xf32>, vector<20x14xf32> -> vector<20x14xf32>
      %244 = arith.addf %239, %243 : vector<20x14xf32>
      %c3_i32_176 = arith.constant 3 : i32
      %245 = arith.addi %6, %c3_i32_176 : i32
      %c0_177 = arith.constant 0 : index
      %246 = arith.index_cast %245 : i32 to index
      %c0_178 = arith.constant 0 : index
      %c0_179 = arith.constant 0 : index
      %247 = vector.load %arg1[%c0_177, %246, %c0_178, %c0_179] : memref<1x18x10x18xf32, #tpu.memory_space<vmem>>, vector<1x1x10x18xf32>
      %248 = vector.shape_cast %247 : vector<1x1x10x18xf32> to vector<10x18xf32>
      %c15_180 = arith.constant 15 : index
      %c0_181 = arith.constant 0 : index
      %c0_182 = arith.constant 0 : index
      %249 = vector.load %arg2[%c15_180, %c0_181, %c0_182] : memref<25x20x10xf32, #tpu.memory_space<vmem>>, vector<1x20x10xf32>
      %250 = vector.shape_cast %249 : vector<1x20x10xf32> to vector<20x10xf32>
      %251 = vector.extract_strided_slice %248 {offsets = [0, 0], sizes = [10, 14], strides = [1, 1]} : vector<10x18xf32> to vector<10x14xf32>
      %cst_183 = arith.constant dense<0.000000e+00> : vector<20x14xf32>
      %252 = tpu.matmul %250, %251, %cst_183 {dimension_numbers = #tpu.dot_dimension_numbers<[1], [0], [0], [1], [0, 0, 1, 1], [], []>} : vector<20x10xf32>, vector<10x14xf32>, vector<20x14xf32> -> vector<20x14xf32>
      %253 = arith.addf %244, %252 : vector<20x14xf32>
      %c16_184 = arith.constant 16 : index
      %c0_185 = arith.constant 0 : index
      %c0_186 = arith.constant 0 : index
      %254 = vector.load %arg2[%c16_184, %c0_185, %c0_186] : memref<25x20x10xf32, #tpu.memory_space<vmem>>, vector<1x20x10xf32>
      %255 = vector.shape_cast %254 : vector<1x20x10xf32> to vector<20x10xf32>
      %256 = vector.extract_strided_slice %248 {offsets = [0, 1], sizes = [10, 14], strides = [1, 1]} : vector<10x18xf32> to vector<10x14xf32>
      %cst_187 = arith.constant dense<0.000000e+00> : vector<20x14xf32>
      %257 = tpu.matmul %255, %256, %cst_187 {dimension_numbers = #tpu.dot_dimension_numbers<[1], [0], [0], [1], [0, 0, 1, 1], [], []>} : vector<20x10xf32>, vector<10x14xf32>, vector<20x14xf32> -> vector<20x14xf32>
      %258 = arith.addf %253, %257 : vector<20x14xf32>
      %c17_188 = arith.constant 17 : index
      %c0_189 = arith.constant 0 : index
      %c0_190 = arith.constant 0 : index
      %259 = vector.load %arg2[%c17_188, %c0_189, %c0_190] : memref<25x20x10xf32, #tpu.memory_space<vmem>>, vector<1x20x10xf32>
      %260 = vector.shape_cast %259 : vector<1x20x10xf32> to vector<20x10xf32>
      %261 = vector.extract_strided_slice %248 {offsets = [0, 2], sizes = [10, 14], strides = [1, 1]} : vector<10x18xf32> to vector<10x14xf32>
      %cst_191 = arith.constant dense<0.000000e+00> : vector<20x14xf32>
      %262 = tpu.matmul %260, %261, %cst_191 {dimension_numbers = #tpu.dot_dimension_numbers<[1], [0], [0], [1], [0, 0, 1, 1], [], []>} : vector<20x10xf32>, vector<10x14xf32>, vector<20x14xf32> -> vector<20x14xf32>
      %263 = arith.addf %258, %262 : vector<20x14xf32>
      %c18_192 = arith.constant 18 : index
      %c0_193 = arith.constant 0 : index
      %c0_194 = arith.constant 0 : index
      %264 = vector.load %arg2[%c18_192, %c0_193, %c0_194] : memref<25x20x10xf32, #tpu.memory_space<vmem>>, vector<1x20x10xf32>
      %265 = vector.shape_cast %264 : vector<1x20x10xf32> to vector<20x10xf32>
      %266 = vector.extract_strided_slice %248 {offsets = [0, 3], sizes = [10, 14], strides = [1, 1]} : vector<10x18xf32> to vector<10x14xf32>
      %cst_195 = arith.constant dense<0.000000e+00> : vector<20x14xf32>
      %267 = tpu.matmul %265, %266, %cst_195 {dimension_numbers = #tpu.dot_dimension_numbers<[1], [0], [0], [1], [0, 0, 1, 1], [], []>} : vector<20x10xf32>, vector<10x14xf32>, vector<20x14xf32> -> vector<20x14xf32>
      %268 = arith.addf %263, %267 : vector<20x14xf32>
      %c19_196 = arith.constant 19 : index
      %c0_197 = arith.constant 0 : index
      %c0_198 = arith.constant 0 : index
      %269 = vector.load %arg2[%c19_196, %c0_197, %c0_198] : memref<25x20x10xf32, #tpu.memory_space<vmem>>, vector<1x20x10xf32>
      %270 = vector.shape_cast %269 : vector<1x20x10xf32> to vector<20x10xf32>
      %271 = vector.extract_strided_slice %248 {offsets = [0, 4], sizes = [10, 14], strides = [1, 1]} : vector<10x18xf32> to vector<10x14xf32>
      %cst_199 = arith.constant dense<0.000000e+00> : vector<20x14xf32>
      %272 = tpu.matmul %270, %271, %cst_199 {dimension_numbers = #tpu.dot_dimension_numbers<[1], [0], [0], [1], [0, 0, 1, 1], [], []>} : vector<20x10xf32>, vector<10x14xf32>, vector<20x14xf32> -> vector<20x14xf32>
      %273 = arith.addf %268, %272 : vector<20x14xf32>
      %c4_i32_200 = arith.constant 4 : i32
      %274 = arith.addi %6, %c4_i32_200 : i32
      %c0_201 = arith.constant 0 : index
      %275 = arith.index_cast %274 : i32 to index
      %c0_202 = arith.constant 0 : index
      %c0_203 = arith.constant 0 : index
      %276 = vector.load %arg1[%c0_201, %275, %c0_202, %c0_203] : memref<1x18x10x18xf32, #tpu.memory_space<vmem>>, vector<1x1x10x18xf32>
      %277 = vector.shape_cast %276 : vector<1x1x10x18xf32> to vector<10x18xf32>
      %c20_204 = arith.constant 20 : index
      %c0_205 = arith.constant 0 : index
      %c0_206 = arith.constant 0 : index
      %278 = vector.load %arg2[%c20_204, %c0_205, %c0_206] : memref<25x20x10xf32, #tpu.memory_space<vmem>>, vector<1x20x10xf32>
      %279 = vector.shape_cast %278 : vector<1x20x10xf32> to vector<20x10xf32>
      %280 = vector.extract_strided_slice %277 {offsets = [0, 0], sizes = [10, 14], strides = [1, 1]} : vector<10x18xf32> to vector<10x14xf32>
      %cst_207 = arith.constant dense<0.000000e+00> : vector<20x14xf32>
      %281 = tpu.matmul %279, %280, %cst_207 {dimension_numbers = #tpu.dot_dimension_numbers<[1], [0], [0], [1], [0, 0, 1, 1], [], []>} : vector<20x10xf32>, vector<10x14xf32>, vector<20x14xf32> -> vector<20x14xf32>
      %282 = arith.addf %273, %281 : vector<20x14xf32>
      %c21_208 = arith.constant 21 : index
      %c0_209 = arith.constant 0 : index
      %c0_210 = arith.constant 0 : index
      %283 = vector.load %arg2[%c21_208, %c0_209, %c0_210] : memref<25x20x10xf32, #tpu.memory_space<vmem>>, vector<1x20x10xf32>
      %284 = vector.shape_cast %283 : vector<1x20x10xf32> to vector<20x10xf32>
      %285 = vector.extract_strided_slice %277 {offsets = [0, 1], sizes = [10, 14], strides = [1, 1]} : vector<10x18xf32> to vector<10x14xf32>
      %cst_211 = arith.constant dense<0.000000e+00> : vector<20x14xf32>
      %286 = tpu.matmul %284, %285, %cst_211 {dimension_numbers = #tpu.dot_dimension_numbers<[1], [0], [0], [1], [0, 0, 1, 1], [], []>} : vector<20x10xf32>, vector<10x14xf32>, vector<20x14xf32> -> vector<20x14xf32>
      %287 = arith.addf %282, %286 : vector<20x14xf32>
      %c22_212 = arith.constant 22 : index
      %c0_213 = arith.constant 0 : index
      %c0_214 = arith.constant 0 : index
      %288 = vector.load %arg2[%c22_212, %c0_213, %c0_214] : memref<25x20x10xf32, #tpu.memory_space<vmem>>, vector<1x20x10xf32>
      %289 = vector.shape_cast %288 : vector<1x20x10xf32> to vector<20x10xf32>
      %290 = vector.extract_strided_slice %277 {offsets = [0, 2], sizes = [10, 14], strides = [1, 1]} : vector<10x18xf32> to vector<10x14xf32>
      %cst_215 = arith.constant dense<0.000000e+00> : vector<20x14xf32>
      %291 = tpu.matmul %289, %290, %cst_215 {dimension_numbers = #tpu.dot_dimension_numbers<[1], [0], [0], [1], [0, 0, 1, 1], [], []>} : vector<20x10xf32>, vector<10x14xf32>, vector<20x14xf32> -> vector<20x14xf32>
      %292 = arith.addf %287, %291 : vector<20x14xf32>
      %c23_216 = arith.constant 23 : index
      %c0_217 = arith.constant 0 : index
      %c0_218 = arith.constant 0 : index
      %293 = vector.load %arg2[%c23_216, %c0_217, %c0_218] : memref<25x20x10xf32, #tpu.memory_space<vmem>>, vector<1x20x10xf32>
      %294 = vector.shape_cast %293 : vector<1x20x10xf32> to vector<20x10xf32>
      %295 = vector.extract_strided_slice %277 {offsets = [0, 3], sizes = [10, 14], strides = [1, 1]} : vector<10x18xf32> to vector<10x14xf32>
      %cst_219 = arith.constant dense<0.000000e+00> : vector<20x14xf32>
      %296 = tpu.matmul %294, %295, %cst_219 {dimension_numbers = #tpu.dot_dimension_numbers<[1], [0], [0], [1], [0, 0, 1, 1], [], []>} : vector<20x10xf32>, vector<10x14xf32>, vector<20x14xf32> -> vector<20x14xf32>
      %297 = arith.addf %292, %296 : vector<20x14xf32>
      %c24_220 = arith.constant 24 : index
      %c0_221 = arith.constant 0 : index
      %c0_222 = arith.constant 0 : index
      %298 = vector.load %arg2[%c24_220, %c0_221, %c0_222] : memref<25x20x10xf32, #tpu.memory_space<vmem>>, vector<1x20x10xf32>
      %299 = vector.shape_cast %298 : vector<1x20x10xf32> to vector<20x10xf32>
      %300 = vector.extract_strided_slice %277 {offsets = [0, 4], sizes = [10, 14], strides = [1, 1]} : vector<10x18xf32> to vector<10x14xf32>
      %cst_223 = arith.constant dense<0.000000e+00> : vector<20x14xf32>
      %301 = tpu.matmul %299, %300, %cst_223 {dimension_numbers = #tpu.dot_dimension_numbers<[1], [0], [0], [1], [0, 0, 1, 1], [], []>} : vector<20x10xf32>, vector<10x14xf32>, vector<20x14xf32> -> vector<20x14xf32>
      %302 = arith.addf %297, %301 : vector<20x14xf32>
      %303 = vector.broadcast %0 : vector<20x1xf32> to vector<20x14xf32>
      %304 = arith.addf %302, %303 : vector<20x14xf32>
      %cst_224 = arith.constant 0.000000e+00 : f32
      %305 = vector.broadcast %cst_224 : f32 to vector<20x14xf32>
      %306 = arith.maximumf %304, %305 : vector<20x14xf32>
      %307 = arith.maximumf %156, %306 : vector<20x14xf32>
      %cst_225 = arith.constant dense<0.000000e+00> : vector<20x7xf32>
      %308 = tpu.matmul %307, %1, %cst_225 {dimension_numbers = #tpu.dot_dimension_numbers<[1], [0], [0], [1], [0, 0, 1, 1], [], []>} : vector<20x14xf32>, vector<14x7xf32>, vector<20x7xf32> -> vector<20x7xf32>
      %cst_226 = arith.constant dense<0.000000e+00> : vector<20x7xf32>
      %309 = tpu.matmul %307, %2, %cst_226 {dimension_numbers = #tpu.dot_dimension_numbers<[1], [0], [0], [1], [0, 0, 1, 1], [], []>} : vector<20x14xf32>, vector<14x7xf32>, vector<20x7xf32> -> vector<20x7xf32>
      %310 = arith.maximumf %308, %309 : vector<20x7xf32>
      %c0_227 = arith.constant 0 : index
      %311 = arith.index_cast %arg7 : i32 to index
      %c0_228 = arith.constant 0 : index
      %c0_229 = arith.constant 0 : index
      %312 = vector.load %arg6[%c0_227, %311, %c0_228, %c0_229] : memref<1x7x20x7xf32, #tpu.memory_space<vmem>>, vector<1x1x20x7xf32>
      %313 = vector.shape_cast %312 : vector<1x1x20x7xf32> to vector<20x7xf32>
      %314 = vector.shape_cast %310 : vector<20x7xf32> to vector<1x1x20x7xf32>
      tpu.vector_store %arg6[%c0_227, %311, %c0_228, %c0_229], %314 {strides = array<i32>} : memref<1x7x20x7xf32, #tpu.memory_space<vmem>>, vector<1x1x20x7xf32>,
    }
    %c7_i32_5 = arith.constant 7 : i32
    return
  }
  func.func @transform_0(%arg0: i32) -> (i32, i32, i32, i32) {
    %c0_i32 = arith.constant 0 : i32
    %c0_i32_0 = arith.constant 0 : i32
    %c0_i32_1 = arith.constant 0 : i32
    %c0_i32_2 = arith.constant 0 : i32
    return %arg0, %c0_i32, %c0_i32_0, %c0_i32_1 : i32, i32, i32, i32
  }
  func.func @transform_1(%arg0: i32) -> (i32, i32, i32) {
    %c0_i32 = arith.constant 0 : i32
    %c0_i32_0 = arith.constant 0 : i32
    %c0_i32_1 = arith.constant 0 : i32
    %c0_i32_2 = arith.constant 0 : i32
    return %c0_i32, %c0_i32_0, %c0_i32_1 : i32, i32, i32
  }
  func.func @transform_2(%arg0: i32) -> (i32, i32) {
    %c0_i32 = arith.constant 0 : i32
    %c0_i32_0 = arith.constant 0 : i32
    %c0_i32_1 = arith.constant 0 : i32
    return %c0_i32, %c0_i32_0 : i32, i32
  }
  func.func @transform_3(%arg0: i32) -> (i32, i32) {
    %c0_i32 = arith.constant 0 : i32
    %c0_i32_0 = arith.constant 0 : i32
    %c0_i32_1 = arith.constant 0 : i32
    return %c0_i32, %c0_i32_0 : i32, i32
  }
  func.func @transform_4(%arg0: i32) -> (i32, i32) {
    %c0_i32 = arith.constant 0 : i32
    %c0_i32_0 = arith.constant 0 : i32
    %c0_i32_1 = arith.constant 0 : i32
    return %c0_i32, %c0_i32_0 : i32, i32
  }
  func.func @transform_5(%arg0: i32) -> (i32, i32, i32, i32) {
    %c0_i32 = arith.constant 0 : i32
    %c0_i32_0 = arith.constant 0 : i32
    %c0_i32_1 = arith.constant 0 : i32
    %c0_i32_2 = arith.constant 0 : i32
    return %arg0, %c0_i32, %c0_i32_0, %c0_i32_1 : i32, i32, i32, i32
  }
}

module attributes {stable_mosaic.version = 11 : i64} {
  func.func @kernel(%arg0: i32, %arg1: memref<1x11x20x11xf32, #tpu.memory_space<vmem>>, %arg2: memref<25x40x20xf32, #tpu.memory_space<vmem>>, %arg3: memref<40x1xf32, #tpu.memory_space<vmem>>, %arg4: memref<7x4xf32, #tpu.memory_space<vmem>>, %arg5: memref<7x4xf32, #tpu.memory_space<vmem>>, %arg6: memref<1x4x40x4xf32, #tpu.memory_space<vmem>>) attributes {dimension_semantics = [#tpu.dimension_semantics<parallel>], iteration_bounds = array<i64: 2>, scalar_prefetch = 0 : i64, scratch_operands = 0 : i64, tpu.core_type = #tpu.core_type<tc>, window_params = [{transform_indices = @transform_0, window_bounds = array<i64: 1, 11, 20, 11>}, {pipeline_mode = #tpu.pipeline_mode<synchronous>, transform_indices = @transform_1, window_bounds = array<i64: 25, 40, 20>}, {pipeline_mode = #tpu.pipeline_mode<synchronous>, transform_indices = @transform_2, window_bounds = array<i64: 40, 1>}, {pipeline_mode = #tpu.pipeline_mode<synchronous>, transform_indices = @transform_3, window_bounds = array<i64: 7, 4>}, {pipeline_mode = #tpu.pipeline_mode<synchronous>, transform_indices = @transform_4, window_bounds = array<i64: 7, 4>}, {transform_indices = @transform_5, window_bounds = array<i64: 1, 4, 40, 4>}]} {
    %c0 = arith.constant 0 : index
    %c0_0 = arith.constant 0 : index
    %0 = vector.load %arg3[%c0, %c0_0] : memref<40x1xf32, #tpu.memory_space<vmem>>, vector<40x1xf32>
    %c0_1 = arith.constant 0 : index
    %c0_2 = arith.constant 0 : index
    %1 = vector.load %arg4[%c0_1, %c0_2] : memref<7x4xf32, #tpu.memory_space<vmem>>, vector<7x4xf32>
    %c0_3 = arith.constant 0 : index
    %c0_4 = arith.constant 0 : index
    %2 = vector.load %arg5[%c0_3, %c0_4] : memref<7x4xf32, #tpu.memory_space<vmem>>, vector<7x4xf32>
    %c0_i32 = arith.constant 0 : i32
    %c4_i32 = arith.constant 4 : i32
    %3 = arith.addi %c0_i32, %c4_i32 : i32
    %c1_i32 = arith.constant 1 : i32
    scf.for %arg7 = %c0_i32 to %3 step %c1_i32  : i32 {
      %c2_i32 = arith.constant 2 : i32
      %4 = arith.muli %c2_i32, %arg7 : i32
      %c1_i32_6 = arith.constant 1 : i32
      %5 = arith.subi %4, %c1_i32_6 : i32
      %c1_i32_7 = arith.constant 1 : i32
      %6 = arith.addi %5, %c1_i32_7 : i32
      %c0_i32_8 = arith.constant 0 : i32
      %7 = arith.maxsi %5, %c0_i32_8 : i32
      %cst = arith.constant 0.000000e+00 : f32
      %8 = vector.broadcast %cst : f32 to vector<40x7xf32>
      %c0_i32_9 = arith.constant 0 : i32
      %9 = arith.addi %7, %c0_i32_9 : i32
      %c0_10 = arith.constant 0 : index
      %10 = arith.index_cast %9 : i32 to index
      %c0_11 = arith.constant 0 : index
      %c0_12 = arith.constant 0 : index
      %11 = vector.load %arg1[%c0_10, %10, %c0_11, %c0_12] : memref<1x11x20x11xf32, #tpu.memory_space<vmem>>, vector<1x1x20x11xf32>
      %12 = vector.shape_cast %11 : vector<1x1x20x11xf32> to vector<20x11xf32>
      %c0_13 = arith.constant 0 : index
      %c0_14 = arith.constant 0 : index
      %c0_15 = arith.constant 0 : index
      %13 = vector.load %arg2[%c0_13, %c0_14, %c0_15] : memref<25x40x20xf32, #tpu.memory_space<vmem>>, vector<1x40x20xf32>
      %14 = vector.shape_cast %13 : vector<1x40x20xf32> to vector<40x20xf32>
      %15 = vector.extract_strided_slice %12 {offsets = [0, 0], sizes = [20, 7], strides = [1, 1]} : vector<20x11xf32> to vector<20x7xf32>
      %cst_16 = arith.constant dense<0.000000e+00> : vector<40x7xf32>
      %16 = tpu.matmul %14, %15, %cst_16 {dimension_numbers = #tpu.dot_dimension_numbers<[1], [0], [0], [1], [0, 0, 1, 1], [], []>} : vector<40x20xf32>, vector<20x7xf32>, vector<40x7xf32> -> vector<40x7xf32>
      %17 = arith.addf %8, %16 : vector<40x7xf32>
      %c1 = arith.constant 1 : index
      %c0_17 = arith.constant 0 : index
      %c0_18 = arith.constant 0 : index
      %18 = vector.load %arg2[%c1, %c0_17, %c0_18] : memref<25x40x20xf32, #tpu.memory_space<vmem>>, vector<1x40x20xf32>
      %19 = vector.shape_cast %18 : vector<1x40x20xf32> to vector<40x20xf32>
      %20 = vector.extract_strided_slice %12 {offsets = [0, 1], sizes = [20, 7], strides = [1, 1]} : vector<20x11xf32> to vector<20x7xf32>
      %cst_19 = arith.constant dense<0.000000e+00> : vector<40x7xf32>
      %21 = tpu.matmul %19, %20, %cst_19 {dimension_numbers = #tpu.dot_dimension_numbers<[1], [0], [0], [1], [0, 0, 1, 1], [], []>} : vector<40x20xf32>, vector<20x7xf32>, vector<40x7xf32> -> vector<40x7xf32>
      %22 = arith.addf %17, %21 : vector<40x7xf32>
      %c2 = arith.constant 2 : index
      %c0_20 = arith.constant 0 : index
      %c0_21 = arith.constant 0 : index
      %23 = vector.load %arg2[%c2, %c0_20, %c0_21] : memref<25x40x20xf32, #tpu.memory_space<vmem>>, vector<1x40x20xf32>
      %24 = vector.shape_cast %23 : vector<1x40x20xf32> to vector<40x20xf32>
      %25 = vector.extract_strided_slice %12 {offsets = [0, 2], sizes = [20, 7], strides = [1, 1]} : vector<20x11xf32> to vector<20x7xf32>
      %cst_22 = arith.constant dense<0.000000e+00> : vector<40x7xf32>
      %26 = tpu.matmul %24, %25, %cst_22 {dimension_numbers = #tpu.dot_dimension_numbers<[1], [0], [0], [1], [0, 0, 1, 1], [], []>} : vector<40x20xf32>, vector<20x7xf32>, vector<40x7xf32> -> vector<40x7xf32>
      %27 = arith.addf %22, %26 : vector<40x7xf32>
      %c3 = arith.constant 3 : index
      %c0_23 = arith.constant 0 : index
      %c0_24 = arith.constant 0 : index
      %28 = vector.load %arg2[%c3, %c0_23, %c0_24] : memref<25x40x20xf32, #tpu.memory_space<vmem>>, vector<1x40x20xf32>
      %29 = vector.shape_cast %28 : vector<1x40x20xf32> to vector<40x20xf32>
      %30 = vector.extract_strided_slice %12 {offsets = [0, 3], sizes = [20, 7], strides = [1, 1]} : vector<20x11xf32> to vector<20x7xf32>
      %cst_25 = arith.constant dense<0.000000e+00> : vector<40x7xf32>
      %31 = tpu.matmul %29, %30, %cst_25 {dimension_numbers = #tpu.dot_dimension_numbers<[1], [0], [0], [1], [0, 0, 1, 1], [], []>} : vector<40x20xf32>, vector<20x7xf32>, vector<40x7xf32> -> vector<40x7xf32>
      %32 = arith.addf %27, %31 : vector<40x7xf32>
      %c4 = arith.constant 4 : index
      %c0_26 = arith.constant 0 : index
      %c0_27 = arith.constant 0 : index
      %33 = vector.load %arg2[%c4, %c0_26, %c0_27] : memref<25x40x20xf32, #tpu.memory_space<vmem>>, vector<1x40x20xf32>
      %34 = vector.shape_cast %33 : vector<1x40x20xf32> to vector<40x20xf32>
      %35 = vector.extract_strided_slice %12 {offsets = [0, 4], sizes = [20, 7], strides = [1, 1]} : vector<20x11xf32> to vector<20x7xf32>
      %cst_28 = arith.constant dense<0.000000e+00> : vector<40x7xf32>
      %36 = tpu.matmul %34, %35, %cst_28 {dimension_numbers = #tpu.dot_dimension_numbers<[1], [0], [0], [1], [0, 0, 1, 1], [], []>} : vector<40x20xf32>, vector<20x7xf32>, vector<40x7xf32> -> vector<40x7xf32>
      %37 = arith.addf %32, %36 : vector<40x7xf32>
      %c1_i32_29 = arith.constant 1 : i32
      %38 = arith.addi %7, %c1_i32_29 : i32
      %c0_30 = arith.constant 0 : index
      %39 = arith.index_cast %38 : i32 to index
      %c0_31 = arith.constant 0 : index
      %c0_32 = arith.constant 0 : index
      %40 = vector.load %arg1[%c0_30, %39, %c0_31, %c0_32] : memref<1x11x20x11xf32, #tpu.memory_space<vmem>>, vector<1x1x20x11xf32>
      %41 = vector.shape_cast %40 : vector<1x1x20x11xf32> to vector<20x11xf32>
      %c5 = arith.constant 5 : index
      %c0_33 = arith.constant 0 : index
      %c0_34 = arith.constant 0 : index
      %42 = vector.load %arg2[%c5, %c0_33, %c0_34] : memref<25x40x20xf32, #tpu.memory_space<vmem>>, vector<1x40x20xf32>
      %43 = vector.shape_cast %42 : vector<1x40x20xf32> to vector<40x20xf32>
      %44 = vector.extract_strided_slice %41 {offsets = [0, 0], sizes = [20, 7], strides = [1, 1]} : vector<20x11xf32> to vector<20x7xf32>
      %cst_35 = arith.constant dense<0.000000e+00> : vector<40x7xf32>
      %45 = tpu.matmul %43, %44, %cst_35 {dimension_numbers = #tpu.dot_dimension_numbers<[1], [0], [0], [1], [0, 0, 1, 1], [], []>} : vector<40x20xf32>, vector<20x7xf32>, vector<40x7xf32> -> vector<40x7xf32>
      %46 = arith.addf %37, %45 : vector<40x7xf32>
      %c6 = arith.constant 6 : index
      %c0_36 = arith.constant 0 : index
      %c0_37 = arith.constant 0 : index
      %47 = vector.load %arg2[%c6, %c0_36, %c0_37] : memref<25x40x20xf32, #tpu.memory_space<vmem>>, vector<1x40x20xf32>
      %48 = vector.shape_cast %47 : vector<1x40x20xf32> to vector<40x20xf32>
      %49 = vector.extract_strided_slice %41 {offsets = [0, 1], sizes = [20, 7], strides = [1, 1]} : vector<20x11xf32> to vector<20x7xf32>
      %cst_38 = arith.constant dense<0.000000e+00> : vector<40x7xf32>
      %50 = tpu.matmul %48, %49, %cst_38 {dimension_numbers = #tpu.dot_dimension_numbers<[1], [0], [0], [1], [0, 0, 1, 1], [], []>} : vector<40x20xf32>, vector<20x7xf32>, vector<40x7xf32> -> vector<40x7xf32>
      %51 = arith.addf %46, %50 : vector<40x7xf32>
      %c7 = arith.constant 7 : index
      %c0_39 = arith.constant 0 : index
      %c0_40 = arith.constant 0 : index
      %52 = vector.load %arg2[%c7, %c0_39, %c0_40] : memref<25x40x20xf32, #tpu.memory_space<vmem>>, vector<1x40x20xf32>
      %53 = vector.shape_cast %52 : vector<1x40x20xf32> to vector<40x20xf32>
      %54 = vector.extract_strided_slice %41 {offsets = [0, 2], sizes = [20, 7], strides = [1, 1]} : vector<20x11xf32> to vector<20x7xf32>
      %cst_41 = arith.constant dense<0.000000e+00> : vector<40x7xf32>
      %55 = tpu.matmul %53, %54, %cst_41 {dimension_numbers = #tpu.dot_dimension_numbers<[1], [0], [0], [1], [0, 0, 1, 1], [], []>} : vector<40x20xf32>, vector<20x7xf32>, vector<40x7xf32> -> vector<40x7xf32>
      %56 = arith.addf %51, %55 : vector<40x7xf32>
      %c8 = arith.constant 8 : index
      %c0_42 = arith.constant 0 : index
      %c0_43 = arith.constant 0 : index
      %57 = vector.load %arg2[%c8, %c0_42, %c0_43] : memref<25x40x20xf32, #tpu.memory_space<vmem>>, vector<1x40x20xf32>
      %58 = vector.shape_cast %57 : vector<1x40x20xf32> to vector<40x20xf32>
      %59 = vector.extract_strided_slice %41 {offsets = [0, 3], sizes = [20, 7], strides = [1, 1]} : vector<20x11xf32> to vector<20x7xf32>
      %cst_44 = arith.constant dense<0.000000e+00> : vector<40x7xf32>
      %60 = tpu.matmul %58, %59, %cst_44 {dimension_numbers = #tpu.dot_dimension_numbers<[1], [0], [0], [1], [0, 0, 1, 1], [], []>} : vector<40x20xf32>, vector<20x7xf32>, vector<40x7xf32> -> vector<40x7xf32>
      %61 = arith.addf %56, %60 : vector<40x7xf32>
      %c9 = arith.constant 9 : index
      %c0_45 = arith.constant 0 : index
      %c0_46 = arith.constant 0 : index
      %62 = vector.load %arg2[%c9, %c0_45, %c0_46] : memref<25x40x20xf32, #tpu.memory_space<vmem>>, vector<1x40x20xf32>
      %63 = vector.shape_cast %62 : vector<1x40x20xf32> to vector<40x20xf32>
      %64 = vector.extract_strided_slice %41 {offsets = [0, 4], sizes = [20, 7], strides = [1, 1]} : vector<20x11xf32> to vector<20x7xf32>
      %cst_47 = arith.constant dense<0.000000e+00> : vector<40x7xf32>
      %65 = tpu.matmul %63, %64, %cst_47 {dimension_numbers = #tpu.dot_dimension_numbers<[1], [0], [0], [1], [0, 0, 1, 1], [], []>} : vector<40x20xf32>, vector<20x7xf32>, vector<40x7xf32> -> vector<40x7xf32>
      %66 = arith.addf %61, %65 : vector<40x7xf32>
      %c2_i32_48 = arith.constant 2 : i32
      %67 = arith.addi %7, %c2_i32_48 : i32
      %c0_49 = arith.constant 0 : index
      %68 = arith.index_cast %67 : i32 to index
      %c0_50 = arith.constant 0 : index
      %c0_51 = arith.constant 0 : index
      %69 = vector.load %arg1[%c0_49, %68, %c0_50, %c0_51] : memref<1x11x20x11xf32, #tpu.memory_space<vmem>>, vector<1x1x20x11xf32>
      %70 = vector.shape_cast %69 : vector<1x1x20x11xf32> to vector<20x11xf32>
      %c10 = arith.constant 10 : index
      %c0_52 = arith.constant 0 : index
      %c0_53 = arith.constant 0 : index
      %71 = vector.load %arg2[%c10, %c0_52, %c0_53] : memref<25x40x20xf32, #tpu.memory_space<vmem>>, vector<1x40x20xf32>
      %72 = vector.shape_cast %71 : vector<1x40x20xf32> to vector<40x20xf32>
      %73 = vector.extract_strided_slice %70 {offsets = [0, 0], sizes = [20, 7], strides = [1, 1]} : vector<20x11xf32> to vector<20x7xf32>
      %cst_54 = arith.constant dense<0.000000e+00> : vector<40x7xf32>
      %74 = tpu.matmul %72, %73, %cst_54 {dimension_numbers = #tpu.dot_dimension_numbers<[1], [0], [0], [1], [0, 0, 1, 1], [], []>} : vector<40x20xf32>, vector<20x7xf32>, vector<40x7xf32> -> vector<40x7xf32>
      %75 = arith.addf %66, %74 : vector<40x7xf32>
      %c11 = arith.constant 11 : index
      %c0_55 = arith.constant 0 : index
      %c0_56 = arith.constant 0 : index
      %76 = vector.load %arg2[%c11, %c0_55, %c0_56] : memref<25x40x20xf32, #tpu.memory_space<vmem>>, vector<1x40x20xf32>
      %77 = vector.shape_cast %76 : vector<1x40x20xf32> to vector<40x20xf32>
      %78 = vector.extract_strided_slice %70 {offsets = [0, 1], sizes = [20, 7], strides = [1, 1]} : vector<20x11xf32> to vector<20x7xf32>
      %cst_57 = arith.constant dense<0.000000e+00> : vector<40x7xf32>
      %79 = tpu.matmul %77, %78, %cst_57 {dimension_numbers = #tpu.dot_dimension_numbers<[1], [0], [0], [1], [0, 0, 1, 1], [], []>} : vector<40x20xf32>, vector<20x7xf32>, vector<40x7xf32> -> vector<40x7xf32>
      %80 = arith.addf %75, %79 : vector<40x7xf32>
      %c12 = arith.constant 12 : index
      %c0_58 = arith.constant 0 : index
      %c0_59 = arith.constant 0 : index
      %81 = vector.load %arg2[%c12, %c0_58, %c0_59] : memref<25x40x20xf32, #tpu.memory_space<vmem>>, vector<1x40x20xf32>
      %82 = vector.shape_cast %81 : vector<1x40x20xf32> to vector<40x20xf32>
      %83 = vector.extract_strided_slice %70 {offsets = [0, 2], sizes = [20, 7], strides = [1, 1]} : vector<20x11xf32> to vector<20x7xf32>
      %cst_60 = arith.constant dense<0.000000e+00> : vector<40x7xf32>
      %84 = tpu.matmul %82, %83, %cst_60 {dimension_numbers = #tpu.dot_dimension_numbers<[1], [0], [0], [1], [0, 0, 1, 1], [], []>} : vector<40x20xf32>, vector<20x7xf32>, vector<40x7xf32> -> vector<40x7xf32>
      %85 = arith.addf %80, %84 : vector<40x7xf32>
      %c13 = arith.constant 13 : index
      %c0_61 = arith.constant 0 : index
      %c0_62 = arith.constant 0 : index
      %86 = vector.load %arg2[%c13, %c0_61, %c0_62] : memref<25x40x20xf32, #tpu.memory_space<vmem>>, vector<1x40x20xf32>
      %87 = vector.shape_cast %86 : vector<1x40x20xf32> to vector<40x20xf32>
      %88 = vector.extract_strided_slice %70 {offsets = [0, 3], sizes = [20, 7], strides = [1, 1]} : vector<20x11xf32> to vector<20x7xf32>
      %cst_63 = arith.constant dense<0.000000e+00> : vector<40x7xf32>
      %89 = tpu.matmul %87, %88, %cst_63 {dimension_numbers = #tpu.dot_dimension_numbers<[1], [0], [0], [1], [0, 0, 1, 1], [], []>} : vector<40x20xf32>, vector<20x7xf32>, vector<40x7xf32> -> vector<40x7xf32>
      %90 = arith.addf %85, %89 : vector<40x7xf32>
      %c14 = arith.constant 14 : index
      %c0_64 = arith.constant 0 : index
      %c0_65 = arith.constant 0 : index
      %91 = vector.load %arg2[%c14, %c0_64, %c0_65] : memref<25x40x20xf32, #tpu.memory_space<vmem>>, vector<1x40x20xf32>
      %92 = vector.shape_cast %91 : vector<1x40x20xf32> to vector<40x20xf32>
      %93 = vector.extract_strided_slice %70 {offsets = [0, 4], sizes = [20, 7], strides = [1, 1]} : vector<20x11xf32> to vector<20x7xf32>
      %cst_66 = arith.constant dense<0.000000e+00> : vector<40x7xf32>
      %94 = tpu.matmul %92, %93, %cst_66 {dimension_numbers = #tpu.dot_dimension_numbers<[1], [0], [0], [1], [0, 0, 1, 1], [], []>} : vector<40x20xf32>, vector<20x7xf32>, vector<40x7xf32> -> vector<40x7xf32>
      %95 = arith.addf %90, %94 : vector<40x7xf32>
      %c3_i32 = arith.constant 3 : i32
      %96 = arith.addi %7, %c3_i32 : i32
      %c0_67 = arith.constant 0 : index
      %97 = arith.index_cast %96 : i32 to index
      %c0_68 = arith.constant 0 : index
      %c0_69 = arith.constant 0 : index
      %98 = vector.load %arg1[%c0_67, %97, %c0_68, %c0_69] : memref<1x11x20x11xf32, #tpu.memory_space<vmem>>, vector<1x1x20x11xf32>
      %99 = vector.shape_cast %98 : vector<1x1x20x11xf32> to vector<20x11xf32>
      %c15 = arith.constant 15 : index
      %c0_70 = arith.constant 0 : index
      %c0_71 = arith.constant 0 : index
      %100 = vector.load %arg2[%c15, %c0_70, %c0_71] : memref<25x40x20xf32, #tpu.memory_space<vmem>>, vector<1x40x20xf32>
      %101 = vector.shape_cast %100 : vector<1x40x20xf32> to vector<40x20xf32>
      %102 = vector.extract_strided_slice %99 {offsets = [0, 0], sizes = [20, 7], strides = [1, 1]} : vector<20x11xf32> to vector<20x7xf32>
      %cst_72 = arith.constant dense<0.000000e+00> : vector<40x7xf32>
      %103 = tpu.matmul %101, %102, %cst_72 {dimension_numbers = #tpu.dot_dimension_numbers<[1], [0], [0], [1], [0, 0, 1, 1], [], []>} : vector<40x20xf32>, vector<20x7xf32>, vector<40x7xf32> -> vector<40x7xf32>
      %104 = arith.addf %95, %103 : vector<40x7xf32>
      %c16 = arith.constant 16 : index
      %c0_73 = arith.constant 0 : index
      %c0_74 = arith.constant 0 : index
      %105 = vector.load %arg2[%c16, %c0_73, %c0_74] : memref<25x40x20xf32, #tpu.memory_space<vmem>>, vector<1x40x20xf32>
      %106 = vector.shape_cast %105 : vector<1x40x20xf32> to vector<40x20xf32>
      %107 = vector.extract_strided_slice %99 {offsets = [0, 1], sizes = [20, 7], strides = [1, 1]} : vector<20x11xf32> to vector<20x7xf32>
      %cst_75 = arith.constant dense<0.000000e+00> : vector<40x7xf32>
      %108 = tpu.matmul %106, %107, %cst_75 {dimension_numbers = #tpu.dot_dimension_numbers<[1], [0], [0], [1], [0, 0, 1, 1], [], []>} : vector<40x20xf32>, vector<20x7xf32>, vector<40x7xf32> -> vector<40x7xf32>
      %109 = arith.addf %104, %108 : vector<40x7xf32>
      %c17 = arith.constant 17 : index
      %c0_76 = arith.constant 0 : index
      %c0_77 = arith.constant 0 : index
      %110 = vector.load %arg2[%c17, %c0_76, %c0_77] : memref<25x40x20xf32, #tpu.memory_space<vmem>>, vector<1x40x20xf32>
      %111 = vector.shape_cast %110 : vector<1x40x20xf32> to vector<40x20xf32>
      %112 = vector.extract_strided_slice %99 {offsets = [0, 2], sizes = [20, 7], strides = [1, 1]} : vector<20x11xf32> to vector<20x7xf32>
      %cst_78 = arith.constant dense<0.000000e+00> : vector<40x7xf32>
      %113 = tpu.matmul %111, %112, %cst_78 {dimension_numbers = #tpu.dot_dimension_numbers<[1], [0], [0], [1], [0, 0, 1, 1], [], []>} : vector<40x20xf32>, vector<20x7xf32>, vector<40x7xf32> -> vector<40x7xf32>
      %114 = arith.addf %109, %113 : vector<40x7xf32>
      %c18 = arith.constant 18 : index
      %c0_79 = arith.constant 0 : index
      %c0_80 = arith.constant 0 : index
      %115 = vector.load %arg2[%c18, %c0_79, %c0_80] : memref<25x40x20xf32, #tpu.memory_space<vmem>>, vector<1x40x20xf32>
      %116 = vector.shape_cast %115 : vector<1x40x20xf32> to vector<40x20xf32>
      %117 = vector.extract_strided_slice %99 {offsets = [0, 3], sizes = [20, 7], strides = [1, 1]} : vector<20x11xf32> to vector<20x7xf32>
      %cst_81 = arith.constant dense<0.000000e+00> : vector<40x7xf32>
      %118 = tpu.matmul %116, %117, %cst_81 {dimension_numbers = #tpu.dot_dimension_numbers<[1], [0], [0], [1], [0, 0, 1, 1], [], []>} : vector<40x20xf32>, vector<20x7xf32>, vector<40x7xf32> -> vector<40x7xf32>
      %119 = arith.addf %114, %118 : vector<40x7xf32>
      %c19 = arith.constant 19 : index
      %c0_82 = arith.constant 0 : index
      %c0_83 = arith.constant 0 : index
      %120 = vector.load %arg2[%c19, %c0_82, %c0_83] : memref<25x40x20xf32, #tpu.memory_space<vmem>>, vector<1x40x20xf32>
      %121 = vector.shape_cast %120 : vector<1x40x20xf32> to vector<40x20xf32>
      %122 = vector.extract_strided_slice %99 {offsets = [0, 4], sizes = [20, 7], strides = [1, 1]} : vector<20x11xf32> to vector<20x7xf32>
      %cst_84 = arith.constant dense<0.000000e+00> : vector<40x7xf32>
      %123 = tpu.matmul %121, %122, %cst_84 {dimension_numbers = #tpu.dot_dimension_numbers<[1], [0], [0], [1], [0, 0, 1, 1], [], []>} : vector<40x20xf32>, vector<20x7xf32>, vector<40x7xf32> -> vector<40x7xf32>
      %124 = arith.addf %119, %123 : vector<40x7xf32>
      %c4_i32_85 = arith.constant 4 : i32
      %125 = arith.addi %7, %c4_i32_85 : i32
      %c0_86 = arith.constant 0 : index
      %126 = arith.index_cast %125 : i32 to index
      %c0_87 = arith.constant 0 : index
      %c0_88 = arith.constant 0 : index
      %127 = vector.load %arg1[%c0_86, %126, %c0_87, %c0_88] : memref<1x11x20x11xf32, #tpu.memory_space<vmem>>, vector<1x1x20x11xf32>
      %128 = vector.shape_cast %127 : vector<1x1x20x11xf32> to vector<20x11xf32>
      %c20 = arith.constant 20 : index
      %c0_89 = arith.constant 0 : index
      %c0_90 = arith.constant 0 : index
      %129 = vector.load %arg2[%c20, %c0_89, %c0_90] : memref<25x40x20xf32, #tpu.memory_space<vmem>>, vector<1x40x20xf32>
      %130 = vector.shape_cast %129 : vector<1x40x20xf32> to vector<40x20xf32>
      %131 = vector.extract_strided_slice %128 {offsets = [0, 0], sizes = [20, 7], strides = [1, 1]} : vector<20x11xf32> to vector<20x7xf32>
      %cst_91 = arith.constant dense<0.000000e+00> : vector<40x7xf32>
      %132 = tpu.matmul %130, %131, %cst_91 {dimension_numbers = #tpu.dot_dimension_numbers<[1], [0], [0], [1], [0, 0, 1, 1], [], []>} : vector<40x20xf32>, vector<20x7xf32>, vector<40x7xf32> -> vector<40x7xf32>
      %133 = arith.addf %124, %132 : vector<40x7xf32>
      %c21 = arith.constant 21 : index
      %c0_92 = arith.constant 0 : index
      %c0_93 = arith.constant 0 : index
      %134 = vector.load %arg2[%c21, %c0_92, %c0_93] : memref<25x40x20xf32, #tpu.memory_space<vmem>>, vector<1x40x20xf32>
      %135 = vector.shape_cast %134 : vector<1x40x20xf32> to vector<40x20xf32>
      %136 = vector.extract_strided_slice %128 {offsets = [0, 1], sizes = [20, 7], strides = [1, 1]} : vector<20x11xf32> to vector<20x7xf32>
      %cst_94 = arith.constant dense<0.000000e+00> : vector<40x7xf32>
      %137 = tpu.matmul %135, %136, %cst_94 {dimension_numbers = #tpu.dot_dimension_numbers<[1], [0], [0], [1], [0, 0, 1, 1], [], []>} : vector<40x20xf32>, vector<20x7xf32>, vector<40x7xf32> -> vector<40x7xf32>
      %138 = arith.addf %133, %137 : vector<40x7xf32>
      %c22 = arith.constant 22 : index
      %c0_95 = arith.constant 0 : index
      %c0_96 = arith.constant 0 : index
      %139 = vector.load %arg2[%c22, %c0_95, %c0_96] : memref<25x40x20xf32, #tpu.memory_space<vmem>>, vector<1x40x20xf32>
      %140 = vector.shape_cast %139 : vector<1x40x20xf32> to vector<40x20xf32>
      %141 = vector.extract_strided_slice %128 {offsets = [0, 2], sizes = [20, 7], strides = [1, 1]} : vector<20x11xf32> to vector<20x7xf32>
      %cst_97 = arith.constant dense<0.000000e+00> : vector<40x7xf32>
      %142 = tpu.matmul %140, %141, %cst_97 {dimension_numbers = #tpu.dot_dimension_numbers<[1], [0], [0], [1], [0, 0, 1, 1], [], []>} : vector<40x20xf32>, vector<20x7xf32>, vector<40x7xf32> -> vector<40x7xf32>
      %143 = arith.addf %138, %142 : vector<40x7xf32>
      %c23 = arith.constant 23 : index
      %c0_98 = arith.constant 0 : index
      %c0_99 = arith.constant 0 : index
      %144 = vector.load %arg2[%c23, %c0_98, %c0_99] : memref<25x40x20xf32, #tpu.memory_space<vmem>>, vector<1x40x20xf32>
      %145 = vector.shape_cast %144 : vector<1x40x20xf32> to vector<40x20xf32>
      %146 = vector.extract_strided_slice %128 {offsets = [0, 3], sizes = [20, 7], strides = [1, 1]} : vector<20x11xf32> to vector<20x7xf32>
      %cst_100 = arith.constant dense<0.000000e+00> : vector<40x7xf32>
      %147 = tpu.matmul %145, %146, %cst_100 {dimension_numbers = #tpu.dot_dimension_numbers<[1], [0], [0], [1], [0, 0, 1, 1], [], []>} : vector<40x20xf32>, vector<20x7xf32>, vector<40x7xf32> -> vector<40x7xf32>
      %148 = arith.addf %143, %147 : vector<40x7xf32>
      %c24 = arith.constant 24 : index
      %c0_101 = arith.constant 0 : index
      %c0_102 = arith.constant 0 : index
      %149 = vector.load %arg2[%c24, %c0_101, %c0_102] : memref<25x40x20xf32, #tpu.memory_space<vmem>>, vector<1x40x20xf32>
      %150 = vector.shape_cast %149 : vector<1x40x20xf32> to vector<40x20xf32>
      %151 = vector.extract_strided_slice %128 {offsets = [0, 4], sizes = [20, 7], strides = [1, 1]} : vector<20x11xf32> to vector<20x7xf32>
      %cst_103 = arith.constant dense<0.000000e+00> : vector<40x7xf32>
      %152 = tpu.matmul %150, %151, %cst_103 {dimension_numbers = #tpu.dot_dimension_numbers<[1], [0], [0], [1], [0, 0, 1, 1], [], []>} : vector<40x20xf32>, vector<20x7xf32>, vector<40x7xf32> -> vector<40x7xf32>
      %153 = arith.addf %148, %152 : vector<40x7xf32>
      %154 = vector.broadcast %0 : vector<40x1xf32> to vector<40x7xf32>
      %155 = arith.addf %153, %154 : vector<40x7xf32>
      %cst_104 = arith.constant 0.000000e+00 : f32
      %156 = vector.broadcast %cst_104 : f32 to vector<40x7xf32>
      %157 = arith.maximumf %155, %156 : vector<40x7xf32>
      %c0_i32_105 = arith.constant 0 : i32
      %158 = arith.cmpi sge, %5, %c0_i32_105 : i32
      %159 = arith.extui %158 : i1 to i32
      %160 = arith.sitofp %159 : i32 to f32
      %161 = vector.broadcast %160 : f32 to vector<40x7xf32>
      %162 = arith.mulf %157, %161 : vector<40x7xf32>
      %cst_106 = arith.constant 0.000000e+00 : f32
      %163 = vector.broadcast %cst_106 : f32 to vector<40x7xf32>
      %c0_i32_107 = arith.constant 0 : i32
      %164 = arith.addi %6, %c0_i32_107 : i32
      %c0_108 = arith.constant 0 : index
      %165 = arith.index_cast %164 : i32 to index
      %c0_109 = arith.constant 0 : index
      %c0_110 = arith.constant 0 : index
      %166 = vector.load %arg1[%c0_108, %165, %c0_109, %c0_110] : memref<1x11x20x11xf32, #tpu.memory_space<vmem>>, vector<1x1x20x11xf32>
      %167 = vector.shape_cast %166 : vector<1x1x20x11xf32> to vector<20x11xf32>
      %c0_111 = arith.constant 0 : index
      %c0_112 = arith.constant 0 : index
      %c0_113 = arith.constant 0 : index
      %168 = vector.load %arg2[%c0_111, %c0_112, %c0_113] : memref<25x40x20xf32, #tpu.memory_space<vmem>>, vector<1x40x20xf32>
      %169 = vector.shape_cast %168 : vector<1x40x20xf32> to vector<40x20xf32>
      %170 = vector.extract_strided_slice %167 {offsets = [0, 0], sizes = [20, 7], strides = [1, 1]} : vector<20x11xf32> to vector<20x7xf32>
      %cst_114 = arith.constant dense<0.000000e+00> : vector<40x7xf32>
      %171 = tpu.matmul %169, %170, %cst_114 {dimension_numbers = #tpu.dot_dimension_numbers<[1], [0], [0], [1], [0, 0, 1, 1], [], []>} : vector<40x20xf32>, vector<20x7xf32>, vector<40x7xf32> -> vector<40x7xf32>
      %172 = arith.addf %163, %171 : vector<40x7xf32>
      %c1_115 = arith.constant 1 : index
      %c0_116 = arith.constant 0 : index
      %c0_117 = arith.constant 0 : index
      %173 = vector.load %arg2[%c1_115, %c0_116, %c0_117] : memref<25x40x20xf32, #tpu.memory_space<vmem>>, vector<1x40x20xf32>
      %174 = vector.shape_cast %173 : vector<1x40x20xf32> to vector<40x20xf32>
      %175 = vector.extract_strided_slice %167 {offsets = [0, 1], sizes = [20, 7], strides = [1, 1]} : vector<20x11xf32> to vector<20x7xf32>
      %cst_118 = arith.constant dense<0.000000e+00> : vector<40x7xf32>
      %176 = tpu.matmul %174, %175, %cst_118 {dimension_numbers = #tpu.dot_dimension_numbers<[1], [0], [0], [1], [0, 0, 1, 1], [], []>} : vector<40x20xf32>, vector<20x7xf32>, vector<40x7xf32> -> vector<40x7xf32>
      %177 = arith.addf %172, %176 : vector<40x7xf32>
      %c2_119 = arith.constant 2 : index
      %c0_120 = arith.constant 0 : index
      %c0_121 = arith.constant 0 : index
      %178 = vector.load %arg2[%c2_119, %c0_120, %c0_121] : memref<25x40x20xf32, #tpu.memory_space<vmem>>, vector<1x40x20xf32>
      %179 = vector.shape_cast %178 : vector<1x40x20xf32> to vector<40x20xf32>
      %180 = vector.extract_strided_slice %167 {offsets = [0, 2], sizes = [20, 7], strides = [1, 1]} : vector<20x11xf32> to vector<20x7xf32>
      %cst_122 = arith.constant dense<0.000000e+00> : vector<40x7xf32>
      %181 = tpu.matmul %179, %180, %cst_122 {dimension_numbers = #tpu.dot_dimension_numbers<[1], [0], [0], [1], [0, 0, 1, 1], [], []>} : vector<40x20xf32>, vector<20x7xf32>, vector<40x7xf32> -> vector<40x7xf32>
      %182 = arith.addf %177, %181 : vector<40x7xf32>
      %c3_123 = arith.constant 3 : index
      %c0_124 = arith.constant 0 : index
      %c0_125 = arith.constant 0 : index
      %183 = vector.load %arg2[%c3_123, %c0_124, %c0_125] : memref<25x40x20xf32, #tpu.memory_space<vmem>>, vector<1x40x20xf32>
      %184 = vector.shape_cast %183 : vector<1x40x20xf32> to vector<40x20xf32>
      %185 = vector.extract_strided_slice %167 {offsets = [0, 3], sizes = [20, 7], strides = [1, 1]} : vector<20x11xf32> to vector<20x7xf32>
      %cst_126 = arith.constant dense<0.000000e+00> : vector<40x7xf32>
      %186 = tpu.matmul %184, %185, %cst_126 {dimension_numbers = #tpu.dot_dimension_numbers<[1], [0], [0], [1], [0, 0, 1, 1], [], []>} : vector<40x20xf32>, vector<20x7xf32>, vector<40x7xf32> -> vector<40x7xf32>
      %187 = arith.addf %182, %186 : vector<40x7xf32>
      %c4_127 = arith.constant 4 : index
      %c0_128 = arith.constant 0 : index
      %c0_129 = arith.constant 0 : index
      %188 = vector.load %arg2[%c4_127, %c0_128, %c0_129] : memref<25x40x20xf32, #tpu.memory_space<vmem>>, vector<1x40x20xf32>
      %189 = vector.shape_cast %188 : vector<1x40x20xf32> to vector<40x20xf32>
      %190 = vector.extract_strided_slice %167 {offsets = [0, 4], sizes = [20, 7], strides = [1, 1]} : vector<20x11xf32> to vector<20x7xf32>
      %cst_130 = arith.constant dense<0.000000e+00> : vector<40x7xf32>
      %191 = tpu.matmul %189, %190, %cst_130 {dimension_numbers = #tpu.dot_dimension_numbers<[1], [0], [0], [1], [0, 0, 1, 1], [], []>} : vector<40x20xf32>, vector<20x7xf32>, vector<40x7xf32> -> vector<40x7xf32>
      %192 = arith.addf %187, %191 : vector<40x7xf32>
      %c1_i32_131 = arith.constant 1 : i32
      %193 = arith.addi %6, %c1_i32_131 : i32
      %c0_132 = arith.constant 0 : index
      %194 = arith.index_cast %193 : i32 to index
      %c0_133 = arith.constant 0 : index
      %c0_134 = arith.constant 0 : index
      %195 = vector.load %arg1[%c0_132, %194, %c0_133, %c0_134] : memref<1x11x20x11xf32, #tpu.memory_space<vmem>>, vector<1x1x20x11xf32>
      %196 = vector.shape_cast %195 : vector<1x1x20x11xf32> to vector<20x11xf32>
      %c5_135 = arith.constant 5 : index
      %c0_136 = arith.constant 0 : index
      %c0_137 = arith.constant 0 : index
      %197 = vector.load %arg2[%c5_135, %c0_136, %c0_137] : memref<25x40x20xf32, #tpu.memory_space<vmem>>, vector<1x40x20xf32>
      %198 = vector.shape_cast %197 : vector<1x40x20xf32> to vector<40x20xf32>
      %199 = vector.extract_strided_slice %196 {offsets = [0, 0], sizes = [20, 7], strides = [1, 1]} : vector<20x11xf32> to vector<20x7xf32>
      %cst_138 = arith.constant dense<0.000000e+00> : vector<40x7xf32>
      %200 = tpu.matmul %198, %199, %cst_138 {dimension_numbers = #tpu.dot_dimension_numbers<[1], [0], [0], [1], [0, 0, 1, 1], [], []>} : vector<40x20xf32>, vector<20x7xf32>, vector<40x7xf32> -> vector<40x7xf32>
      %201 = arith.addf %192, %200 : vector<40x7xf32>
      %c6_139 = arith.constant 6 : index
      %c0_140 = arith.constant 0 : index
      %c0_141 = arith.constant 0 : index
      %202 = vector.load %arg2[%c6_139, %c0_140, %c0_141] : memref<25x40x20xf32, #tpu.memory_space<vmem>>, vector<1x40x20xf32>
      %203 = vector.shape_cast %202 : vector<1x40x20xf32> to vector<40x20xf32>
      %204 = vector.extract_strided_slice %196 {offsets = [0, 1], sizes = [20, 7], strides = [1, 1]} : vector<20x11xf32> to vector<20x7xf32>
      %cst_142 = arith.constant dense<0.000000e+00> : vector<40x7xf32>
      %205 = tpu.matmul %203, %204, %cst_142 {dimension_numbers = #tpu.dot_dimension_numbers<[1], [0], [0], [1], [0, 0, 1, 1], [], []>} : vector<40x20xf32>, vector<20x7xf32>, vector<40x7xf32> -> vector<40x7xf32>
      %206 = arith.addf %201, %205 : vector<40x7xf32>
      %c7_143 = arith.constant 7 : index
      %c0_144 = arith.constant 0 : index
      %c0_145 = arith.constant 0 : index
      %207 = vector.load %arg2[%c7_143, %c0_144, %c0_145] : memref<25x40x20xf32, #tpu.memory_space<vmem>>, vector<1x40x20xf32>
      %208 = vector.shape_cast %207 : vector<1x40x20xf32> to vector<40x20xf32>
      %209 = vector.extract_strided_slice %196 {offsets = [0, 2], sizes = [20, 7], strides = [1, 1]} : vector<20x11xf32> to vector<20x7xf32>
      %cst_146 = arith.constant dense<0.000000e+00> : vector<40x7xf32>
      %210 = tpu.matmul %208, %209, %cst_146 {dimension_numbers = #tpu.dot_dimension_numbers<[1], [0], [0], [1], [0, 0, 1, 1], [], []>} : vector<40x20xf32>, vector<20x7xf32>, vector<40x7xf32> -> vector<40x7xf32>
      %211 = arith.addf %206, %210 : vector<40x7xf32>
      %c8_147 = arith.constant 8 : index
      %c0_148 = arith.constant 0 : index
      %c0_149 = arith.constant 0 : index
      %212 = vector.load %arg2[%c8_147, %c0_148, %c0_149] : memref<25x40x20xf32, #tpu.memory_space<vmem>>, vector<1x40x20xf32>
      %213 = vector.shape_cast %212 : vector<1x40x20xf32> to vector<40x20xf32>
      %214 = vector.extract_strided_slice %196 {offsets = [0, 3], sizes = [20, 7], strides = [1, 1]} : vector<20x11xf32> to vector<20x7xf32>
      %cst_150 = arith.constant dense<0.000000e+00> : vector<40x7xf32>
      %215 = tpu.matmul %213, %214, %cst_150 {dimension_numbers = #tpu.dot_dimension_numbers<[1], [0], [0], [1], [0, 0, 1, 1], [], []>} : vector<40x20xf32>, vector<20x7xf32>, vector<40x7xf32> -> vector<40x7xf32>
      %216 = arith.addf %211, %215 : vector<40x7xf32>
      %c9_151 = arith.constant 9 : index
      %c0_152 = arith.constant 0 : index
      %c0_153 = arith.constant 0 : index
      %217 = vector.load %arg2[%c9_151, %c0_152, %c0_153] : memref<25x40x20xf32, #tpu.memory_space<vmem>>, vector<1x40x20xf32>
      %218 = vector.shape_cast %217 : vector<1x40x20xf32> to vector<40x20xf32>
      %219 = vector.extract_strided_slice %196 {offsets = [0, 4], sizes = [20, 7], strides = [1, 1]} : vector<20x11xf32> to vector<20x7xf32>
      %cst_154 = arith.constant dense<0.000000e+00> : vector<40x7xf32>
      %220 = tpu.matmul %218, %219, %cst_154 {dimension_numbers = #tpu.dot_dimension_numbers<[1], [0], [0], [1], [0, 0, 1, 1], [], []>} : vector<40x20xf32>, vector<20x7xf32>, vector<40x7xf32> -> vector<40x7xf32>
      %221 = arith.addf %216, %220 : vector<40x7xf32>
      %c2_i32_155 = arith.constant 2 : i32
      %222 = arith.addi %6, %c2_i32_155 : i32
      %c0_156 = arith.constant 0 : index
      %223 = arith.index_cast %222 : i32 to index
      %c0_157 = arith.constant 0 : index
      %c0_158 = arith.constant 0 : index
      %224 = vector.load %arg1[%c0_156, %223, %c0_157, %c0_158] : memref<1x11x20x11xf32, #tpu.memory_space<vmem>>, vector<1x1x20x11xf32>
      %225 = vector.shape_cast %224 : vector<1x1x20x11xf32> to vector<20x11xf32>
      %c10_159 = arith.constant 10 : index
      %c0_160 = arith.constant 0 : index
      %c0_161 = arith.constant 0 : index
      %226 = vector.load %arg2[%c10_159, %c0_160, %c0_161] : memref<25x40x20xf32, #tpu.memory_space<vmem>>, vector<1x40x20xf32>
      %227 = vector.shape_cast %226 : vector<1x40x20xf32> to vector<40x20xf32>
      %228 = vector.extract_strided_slice %225 {offsets = [0, 0], sizes = [20, 7], strides = [1, 1]} : vector<20x11xf32> to vector<20x7xf32>
      %cst_162 = arith.constant dense<0.000000e+00> : vector<40x7xf32>
      %229 = tpu.matmul %227, %228, %cst_162 {dimension_numbers = #tpu.dot_dimension_numbers<[1], [0], [0], [1], [0, 0, 1, 1], [], []>} : vector<40x20xf32>, vector<20x7xf32>, vector<40x7xf32> -> vector<40x7xf32>
      %230 = arith.addf %221, %229 : vector<40x7xf32>
      %c11_163 = arith.constant 11 : index
      %c0_164 = arith.constant 0 : index
      %c0_165 = arith.constant 0 : index
      %231 = vector.load %arg2[%c11_163, %c0_164, %c0_165] : memref<25x40x20xf32, #tpu.memory_space<vmem>>, vector<1x40x20xf32>
      %232 = vector.shape_cast %231 : vector<1x40x20xf32> to vector<40x20xf32>
      %233 = vector.extract_strided_slice %225 {offsets = [0, 1], sizes = [20, 7], strides = [1, 1]} : vector<20x11xf32> to vector<20x7xf32>
      %cst_166 = arith.constant dense<0.000000e+00> : vector<40x7xf32>
      %234 = tpu.matmul %232, %233, %cst_166 {dimension_numbers = #tpu.dot_dimension_numbers<[1], [0], [0], [1], [0, 0, 1, 1], [], []>} : vector<40x20xf32>, vector<20x7xf32>, vector<40x7xf32> -> vector<40x7xf32>
      %235 = arith.addf %230, %234 : vector<40x7xf32>
      %c12_167 = arith.constant 12 : index
      %c0_168 = arith.constant 0 : index
      %c0_169 = arith.constant 0 : index
      %236 = vector.load %arg2[%c12_167, %c0_168, %c0_169] : memref<25x40x20xf32, #tpu.memory_space<vmem>>, vector<1x40x20xf32>
      %237 = vector.shape_cast %236 : vector<1x40x20xf32> to vector<40x20xf32>
      %238 = vector.extract_strided_slice %225 {offsets = [0, 2], sizes = [20, 7], strides = [1, 1]} : vector<20x11xf32> to vector<20x7xf32>
      %cst_170 = arith.constant dense<0.000000e+00> : vector<40x7xf32>
      %239 = tpu.matmul %237, %238, %cst_170 {dimension_numbers = #tpu.dot_dimension_numbers<[1], [0], [0], [1], [0, 0, 1, 1], [], []>} : vector<40x20xf32>, vector<20x7xf32>, vector<40x7xf32> -> vector<40x7xf32>
      %240 = arith.addf %235, %239 : vector<40x7xf32>
      %c13_171 = arith.constant 13 : index
      %c0_172 = arith.constant 0 : index
      %c0_173 = arith.constant 0 : index
      %241 = vector.load %arg2[%c13_171, %c0_172, %c0_173] : memref<25x40x20xf32, #tpu.memory_space<vmem>>, vector<1x40x20xf32>
      %242 = vector.shape_cast %241 : vector<1x40x20xf32> to vector<40x20xf32>
      %243 = vector.extract_strided_slice %225 {offsets = [0, 3], sizes = [20, 7], strides = [1, 1]} : vector<20x11xf32> to vector<20x7xf32>
      %cst_174 = arith.constant dense<0.000000e+00> : vector<40x7xf32>
      %244 = tpu.matmul %242, %243, %cst_174 {dimension_numbers = #tpu.dot_dimension_numbers<[1], [0], [0], [1], [0, 0, 1, 1], [], []>} : vector<40x20xf32>, vector<20x7xf32>, vector<40x7xf32> -> vector<40x7xf32>
      %245 = arith.addf %240, %244 : vector<40x7xf32>
      %c14_175 = arith.constant 14 : index
      %c0_176 = arith.constant 0 : index
      %c0_177 = arith.constant 0 : index
      %246 = vector.load %arg2[%c14_175, %c0_176, %c0_177] : memref<25x40x20xf32, #tpu.memory_space<vmem>>, vector<1x40x20xf32>
      %247 = vector.shape_cast %246 : vector<1x40x20xf32> to vector<40x20xf32>
      %248 = vector.extract_strided_slice %225 {offsets = [0, 4], sizes = [20, 7], strides = [1, 1]} : vector<20x11xf32> to vector<20x7xf32>
      %cst_178 = arith.constant dense<0.000000e+00> : vector<40x7xf32>
      %249 = tpu.matmul %247, %248, %cst_178 {dimension_numbers = #tpu.dot_dimension_numbers<[1], [0], [0], [1], [0, 0, 1, 1], [], []>} : vector<40x20xf32>, vector<20x7xf32>, vector<40x7xf32> -> vector<40x7xf32>
      %250 = arith.addf %245, %249 : vector<40x7xf32>
      %c3_i32_179 = arith.constant 3 : i32
      %251 = arith.addi %6, %c3_i32_179 : i32
      %c0_180 = arith.constant 0 : index
      %252 = arith.index_cast %251 : i32 to index
      %c0_181 = arith.constant 0 : index
      %c0_182 = arith.constant 0 : index
      %253 = vector.load %arg1[%c0_180, %252, %c0_181, %c0_182] : memref<1x11x20x11xf32, #tpu.memory_space<vmem>>, vector<1x1x20x11xf32>
      %254 = vector.shape_cast %253 : vector<1x1x20x11xf32> to vector<20x11xf32>
      %c15_183 = arith.constant 15 : index
      %c0_184 = arith.constant 0 : index
      %c0_185 = arith.constant 0 : index
      %255 = vector.load %arg2[%c15_183, %c0_184, %c0_185] : memref<25x40x20xf32, #tpu.memory_space<vmem>>, vector<1x40x20xf32>
      %256 = vector.shape_cast %255 : vector<1x40x20xf32> to vector<40x20xf32>
      %257 = vector.extract_strided_slice %254 {offsets = [0, 0], sizes = [20, 7], strides = [1, 1]} : vector<20x11xf32> to vector<20x7xf32>
      %cst_186 = arith.constant dense<0.000000e+00> : vector<40x7xf32>
      %258 = tpu.matmul %256, %257, %cst_186 {dimension_numbers = #tpu.dot_dimension_numbers<[1], [0], [0], [1], [0, 0, 1, 1], [], []>} : vector<40x20xf32>, vector<20x7xf32>, vector<40x7xf32> -> vector<40x7xf32>
      %259 = arith.addf %250, %258 : vector<40x7xf32>
      %c16_187 = arith.constant 16 : index
      %c0_188 = arith.constant 0 : index
      %c0_189 = arith.constant 0 : index
      %260 = vector.load %arg2[%c16_187, %c0_188, %c0_189] : memref<25x40x20xf32, #tpu.memory_space<vmem>>, vector<1x40x20xf32>
      %261 = vector.shape_cast %260 : vector<1x40x20xf32> to vector<40x20xf32>
      %262 = vector.extract_strided_slice %254 {offsets = [0, 1], sizes = [20, 7], strides = [1, 1]} : vector<20x11xf32> to vector<20x7xf32>
      %cst_190 = arith.constant dense<0.000000e+00> : vector<40x7xf32>
      %263 = tpu.matmul %261, %262, %cst_190 {dimension_numbers = #tpu.dot_dimension_numbers<[1], [0], [0], [1], [0, 0, 1, 1], [], []>} : vector<40x20xf32>, vector<20x7xf32>, vector<40x7xf32> -> vector<40x7xf32>
      %264 = arith.addf %259, %263 : vector<40x7xf32>
      %c17_191 = arith.constant 17 : index
      %c0_192 = arith.constant 0 : index
      %c0_193 = arith.constant 0 : index
      %265 = vector.load %arg2[%c17_191, %c0_192, %c0_193] : memref<25x40x20xf32, #tpu.memory_space<vmem>>, vector<1x40x20xf32>
      %266 = vector.shape_cast %265 : vector<1x40x20xf32> to vector<40x20xf32>
      %267 = vector.extract_strided_slice %254 {offsets = [0, 2], sizes = [20, 7], strides = [1, 1]} : vector<20x11xf32> to vector<20x7xf32>
      %cst_194 = arith.constant dense<0.000000e+00> : vector<40x7xf32>
      %268 = tpu.matmul %266, %267, %cst_194 {dimension_numbers = #tpu.dot_dimension_numbers<[1], [0], [0], [1], [0, 0, 1, 1], [], []>} : vector<40x20xf32>, vector<20x7xf32>, vector<40x7xf32> -> vector<40x7xf32>
      %269 = arith.addf %264, %268 : vector<40x7xf32>
      %c18_195 = arith.constant 18 : index
      %c0_196 = arith.constant 0 : index
      %c0_197 = arith.constant 0 : index
      %270 = vector.load %arg2[%c18_195, %c0_196, %c0_197] : memref<25x40x20xf32, #tpu.memory_space<vmem>>, vector<1x40x20xf32>
      %271 = vector.shape_cast %270 : vector<1x40x20xf32> to vector<40x20xf32>
      %272 = vector.extract_strided_slice %254 {offsets = [0, 3], sizes = [20, 7], strides = [1, 1]} : vector<20x11xf32> to vector<20x7xf32>
      %cst_198 = arith.constant dense<0.000000e+00> : vector<40x7xf32>
      %273 = tpu.matmul %271, %272, %cst_198 {dimension_numbers = #tpu.dot_dimension_numbers<[1], [0], [0], [1], [0, 0, 1, 1], [], []>} : vector<40x20xf32>, vector<20x7xf32>, vector<40x7xf32> -> vector<40x7xf32>
      %274 = arith.addf %269, %273 : vector<40x7xf32>
      %c19_199 = arith.constant 19 : index
      %c0_200 = arith.constant 0 : index
      %c0_201 = arith.constant 0 : index
      %275 = vector.load %arg2[%c19_199, %c0_200, %c0_201] : memref<25x40x20xf32, #tpu.memory_space<vmem>>, vector<1x40x20xf32>
      %276 = vector.shape_cast %275 : vector<1x40x20xf32> to vector<40x20xf32>
      %277 = vector.extract_strided_slice %254 {offsets = [0, 4], sizes = [20, 7], strides = [1, 1]} : vector<20x11xf32> to vector<20x7xf32>
      %cst_202 = arith.constant dense<0.000000e+00> : vector<40x7xf32>
      %278 = tpu.matmul %276, %277, %cst_202 {dimension_numbers = #tpu.dot_dimension_numbers<[1], [0], [0], [1], [0, 0, 1, 1], [], []>} : vector<40x20xf32>, vector<20x7xf32>, vector<40x7xf32> -> vector<40x7xf32>
      %279 = arith.addf %274, %278 : vector<40x7xf32>
      %c4_i32_203 = arith.constant 4 : i32
      %280 = arith.addi %6, %c4_i32_203 : i32
      %c0_204 = arith.constant 0 : index
      %281 = arith.index_cast %280 : i32 to index
      %c0_205 = arith.constant 0 : index
      %c0_206 = arith.constant 0 : index
      %282 = vector.load %arg1[%c0_204, %281, %c0_205, %c0_206] : memref<1x11x20x11xf32, #tpu.memory_space<vmem>>, vector<1x1x20x11xf32>
      %283 = vector.shape_cast %282 : vector<1x1x20x11xf32> to vector<20x11xf32>
      %c20_207 = arith.constant 20 : index
      %c0_208 = arith.constant 0 : index
      %c0_209 = arith.constant 0 : index
      %284 = vector.load %arg2[%c20_207, %c0_208, %c0_209] : memref<25x40x20xf32, #tpu.memory_space<vmem>>, vector<1x40x20xf32>
      %285 = vector.shape_cast %284 : vector<1x40x20xf32> to vector<40x20xf32>
      %286 = vector.extract_strided_slice %283 {offsets = [0, 0], sizes = [20, 7], strides = [1, 1]} : vector<20x11xf32> to vector<20x7xf32>
      %cst_210 = arith.constant dense<0.000000e+00> : vector<40x7xf32>
      %287 = tpu.matmul %285, %286, %cst_210 {dimension_numbers = #tpu.dot_dimension_numbers<[1], [0], [0], [1], [0, 0, 1, 1], [], []>} : vector<40x20xf32>, vector<20x7xf32>, vector<40x7xf32> -> vector<40x7xf32>
      %288 = arith.addf %279, %287 : vector<40x7xf32>
      %c21_211 = arith.constant 21 : index
      %c0_212 = arith.constant 0 : index
      %c0_213 = arith.constant 0 : index
      %289 = vector.load %arg2[%c21_211, %c0_212, %c0_213] : memref<25x40x20xf32, #tpu.memory_space<vmem>>, vector<1x40x20xf32>
      %290 = vector.shape_cast %289 : vector<1x40x20xf32> to vector<40x20xf32>
      %291 = vector.extract_strided_slice %283 {offsets = [0, 1], sizes = [20, 7], strides = [1, 1]} : vector<20x11xf32> to vector<20x7xf32>
      %cst_214 = arith.constant dense<0.000000e+00> : vector<40x7xf32>
      %292 = tpu.matmul %290, %291, %cst_214 {dimension_numbers = #tpu.dot_dimension_numbers<[1], [0], [0], [1], [0, 0, 1, 1], [], []>} : vector<40x20xf32>, vector<20x7xf32>, vector<40x7xf32> -> vector<40x7xf32>
      %293 = arith.addf %288, %292 : vector<40x7xf32>
      %c22_215 = arith.constant 22 : index
      %c0_216 = arith.constant 0 : index
      %c0_217 = arith.constant 0 : index
      %294 = vector.load %arg2[%c22_215, %c0_216, %c0_217] : memref<25x40x20xf32, #tpu.memory_space<vmem>>, vector<1x40x20xf32>
      %295 = vector.shape_cast %294 : vector<1x40x20xf32> to vector<40x20xf32>
      %296 = vector.extract_strided_slice %283 {offsets = [0, 2], sizes = [20, 7], strides = [1, 1]} : vector<20x11xf32> to vector<20x7xf32>
      %cst_218 = arith.constant dense<0.000000e+00> : vector<40x7xf32>
      %297 = tpu.matmul %295, %296, %cst_218 {dimension_numbers = #tpu.dot_dimension_numbers<[1], [0], [0], [1], [0, 0, 1, 1], [], []>} : vector<40x20xf32>, vector<20x7xf32>, vector<40x7xf32> -> vector<40x7xf32>
      %298 = arith.addf %293, %297 : vector<40x7xf32>
      %c23_219 = arith.constant 23 : index
      %c0_220 = arith.constant 0 : index
      %c0_221 = arith.constant 0 : index
      %299 = vector.load %arg2[%c23_219, %c0_220, %c0_221] : memref<25x40x20xf32, #tpu.memory_space<vmem>>, vector<1x40x20xf32>
      %300 = vector.shape_cast %299 : vector<1x40x20xf32> to vector<40x20xf32>
      %301 = vector.extract_strided_slice %283 {offsets = [0, 3], sizes = [20, 7], strides = [1, 1]} : vector<20x11xf32> to vector<20x7xf32>
      %cst_222 = arith.constant dense<0.000000e+00> : vector<40x7xf32>
      %302 = tpu.matmul %300, %301, %cst_222 {dimension_numbers = #tpu.dot_dimension_numbers<[1], [0], [0], [1], [0, 0, 1, 1], [], []>} : vector<40x20xf32>, vector<20x7xf32>, vector<40x7xf32> -> vector<40x7xf32>
      %303 = arith.addf %298, %302 : vector<40x7xf32>
      %c24_223 = arith.constant 24 : index
      %c0_224 = arith.constant 0 : index
      %c0_225 = arith.constant 0 : index
      %304 = vector.load %arg2[%c24_223, %c0_224, %c0_225] : memref<25x40x20xf32, #tpu.memory_space<vmem>>, vector<1x40x20xf32>
      %305 = vector.shape_cast %304 : vector<1x40x20xf32> to vector<40x20xf32>
      %306 = vector.extract_strided_slice %283 {offsets = [0, 4], sizes = [20, 7], strides = [1, 1]} : vector<20x11xf32> to vector<20x7xf32>
      %cst_226 = arith.constant dense<0.000000e+00> : vector<40x7xf32>
      %307 = tpu.matmul %305, %306, %cst_226 {dimension_numbers = #tpu.dot_dimension_numbers<[1], [0], [0], [1], [0, 0, 1, 1], [], []>} : vector<40x20xf32>, vector<20x7xf32>, vector<40x7xf32> -> vector<40x7xf32>
      %308 = arith.addf %303, %307 : vector<40x7xf32>
      %309 = vector.broadcast %0 : vector<40x1xf32> to vector<40x7xf32>
      %310 = arith.addf %308, %309 : vector<40x7xf32>
      %cst_227 = arith.constant 0.000000e+00 : f32
      %311 = vector.broadcast %cst_227 : f32 to vector<40x7xf32>
      %312 = arith.maximumf %310, %311 : vector<40x7xf32>
      %313 = arith.maximumf %162, %312 : vector<40x7xf32>
      %cst_228 = arith.constant dense<0.000000e+00> : vector<40x4xf32>
      %314 = tpu.matmul %313, %1, %cst_228 {dimension_numbers = #tpu.dot_dimension_numbers<[1], [0], [0], [1], [0, 0, 1, 1], [], []>} : vector<40x7xf32>, vector<7x4xf32>, vector<40x4xf32> -> vector<40x4xf32>
      %cst_229 = arith.constant dense<0.000000e+00> : vector<40x4xf32>
      %315 = tpu.matmul %313, %2, %cst_229 {dimension_numbers = #tpu.dot_dimension_numbers<[1], [0], [0], [1], [0, 0, 1, 1], [], []>} : vector<40x7xf32>, vector<7x4xf32>, vector<40x4xf32> -> vector<40x4xf32>
      %316 = arith.maximumf %314, %315 : vector<40x4xf32>
      %c0_230 = arith.constant 0 : index
      %317 = arith.index_cast %arg7 : i32 to index
      %c0_231 = arith.constant 0 : index
      %c0_232 = arith.constant 0 : index
      %318 = vector.load %arg6[%c0_230, %317, %c0_231, %c0_232] : memref<1x4x40x4xf32, #tpu.memory_space<vmem>>, vector<1x1x40x4xf32>
      %319 = vector.shape_cast %318 : vector<1x1x40x4xf32> to vector<40x4xf32>
      %320 = vector.shape_cast %316 : vector<40x4xf32> to vector<1x1x40x4xf32>
      tpu.vector_store %arg6[%c0_230, %317, %c0_231, %c0_232], %320 {strides = array<i32>} : memref<1x4x40x4xf32, #tpu.memory_space<vmem>>, vector<1x1x40x4xf32>,
    }
    %c4_i32_5 = arith.constant 4 : i32
    return
  }
  func.func @transform_0(%arg0: i32) -> (i32, i32, i32, i32) {
    %c0_i32 = arith.constant 0 : i32
    %c0_i32_0 = arith.constant 0 : i32
    %c0_i32_1 = arith.constant 0 : i32
    %c0_i32_2 = arith.constant 0 : i32
    return %arg0, %c0_i32, %c0_i32_0, %c0_i32_1 : i32, i32, i32, i32
  }
  func.func @transform_1(%arg0: i32) -> (i32, i32, i32) {
    %c0_i32 = arith.constant 0 : i32
    %c0_i32_0 = arith.constant 0 : i32
    %c0_i32_1 = arith.constant 0 : i32
    %c0_i32_2 = arith.constant 0 : i32
    return %c0_i32, %c0_i32_0, %c0_i32_1 : i32, i32, i32
  }
  func.func @transform_2(%arg0: i32) -> (i32, i32) {
    %c0_i32 = arith.constant 0 : i32
    %c0_i32_0 = arith.constant 0 : i32
    %c0_i32_1 = arith.constant 0 : i32
    return %c0_i32, %c0_i32_0 : i32, i32
  }
  func.func @transform_3(%arg0: i32) -> (i32, i32) {
    %c0_i32 = arith.constant 0 : i32
    %c0_i32_0 = arith.constant 0 : i32
    %c0_i32_1 = arith.constant 0 : i32
    return %c0_i32, %c0_i32_0 : i32, i32
  }
  func.func @transform_4(%arg0: i32) -> (i32, i32) {
    %c0_i32 = arith.constant 0 : i32
    %c0_i32_0 = arith.constant 0 : i32
    %c0_i32_1 = arith.constant 0 : i32
    return %c0_i32, %c0_i32_0 : i32, i32
  }
  func.func @transform_5(%arg0: i32) -> (i32, i32, i32, i32) {
    %c0_i32 = arith.constant 0 : i32
    %c0_i32_0 = arith.constant 0 : i32
    %c0_i32_1 = arith.constant 0 : i32
    %c0_i32_2 = arith.constant 0 : i32
    return %arg0, %c0_i32, %c0_i32_0, %c0_i32_1 : i32, i32, i32, i32
  }
}

module attributes {stable_mosaic.version = 11 : i64} {
  func.func @_linear_kernel(%arg0: memref<2x640xf32, #tpu.memory_space<vmem>>, %arg1: memref<640x40xf32, #tpu.memory_space<vmem>>, %arg2: memref<1x40xf32, #tpu.memory_space<vmem>>, %arg3: memref<2x40xf32, #tpu.memory_space<vmem>>) attributes {dimension_semantics = [], scalar_prefetch = 0 : i64, scratch_operands = 0 : i64, tpu.core_type = #tpu.core_type<tc>} {
    %c0 = arith.constant 0 : index
    %c0_0 = arith.constant 0 : index
    %0 = vector.load %arg0[%c0, %c0_0] : memref<2x640xf32, #tpu.memory_space<vmem>>, vector<2x640xf32>
    %c0_1 = arith.constant 0 : index
    %c0_2 = arith.constant 0 : index
    %1 = vector.load %arg1[%c0_1, %c0_2] : memref<640x40xf32, #tpu.memory_space<vmem>>, vector<640x40xf32>
    %cst = arith.constant dense<0.000000e+00> : vector<2x40xf32>
    %2 = tpu.matmul %0, %1, %cst {dimension_numbers = #tpu.dot_dimension_numbers<[1], [0], [0], [1], [0, 0, 1, 1], [], []>} : vector<2x640xf32>, vector<640x40xf32>, vector<2x40xf32> -> vector<2x40xf32>
    %c0_3 = arith.constant 0 : index
    %c0_4 = arith.constant 0 : index
    %3 = vector.load %arg2[%c0_3, %c0_4] : memref<1x40xf32, #tpu.memory_space<vmem>>, vector<1x40xf32>
    %4 = vector.broadcast %3 : vector<1x40xf32> to vector<2x40xf32>
    %5 = arith.addf %2, %4 : vector<2x40xf32>
    %c0_5 = arith.constant 0 : index
    %c0_6 = arith.constant 0 : index
    %6 = vector.load %arg3[%c0_5, %c0_6] : memref<2x40xf32, #tpu.memory_space<vmem>>, vector<2x40xf32>
    tpu.vector_store %arg3[%c0_5, %c0_6], %5 {strides = array<i32>} : memref<2x40xf32, #tpu.memory_space<vmem>>, vector<2x40xf32>,
    return
  }
}

</mosaic_0001>

<llo_original>
// kernel: cnn_forward.4
$region0: #{cnn_forward.4}
  #allocation0 [shape = 'u32[]', space=smem, size = 0x4, offset = 0x4, fixed_abs, tag = 'smem constant byte address 0x4 - core index']
  #allocation1 [shape = 'u32[72,128]{1,0:T(1,128)}', space=vmem, size = 0x9000, scoped, tag = 'internal scratch']
  %s0 = inlined_call_operand.vmem [shape: f32[2,32,1,32], index: 0, kind: input, shape index: {}]
  %s1 = inlined_call_operand.vmem [shape: f32[25,10,1], index: 1, kind: input, shape index: {}]
  %s2 = inlined_call_operand.vmem [shape: f32[10,1], index: 2, kind: input, shape index: {}]
  %s3 = inlined_call_operand.vmem [shape: f32[28,14], index: 3, kind: input, shape index: {}]
  %s4 = inlined_call_operand.vmem [shape: f32[28,14], index: 4, kind: input, shape index: {}]
  %s5 = inlined_call_operand.vmem [shape: f32[2,14,10,14], index: 5, kind: output, shape index: {}]
  %s6 = sld [smem:[#allocation0]]
  $region60: #{cnn_forward.4} parent=0
    _
  %s8 = ssub.s32 1, %s6
  %s9 = scalar_select 0, %s8, %s6
  loop: start=0, step=1, limit=4
  $region2: #{cnn_forward.4} parent=0 // loop_pre_header
    _
  $region3: #{cnn_forward.4} parent=0 // loop_header
    %s11 = sphi 0, %s15
    %p12 = scmp.ge.s32.totalorder %s11, 4
    %s21 = sphi 0, %s23
    %s24 = sphi 0, %s21
    %s25 = sphi 0, %s24
    %s41 = sphi 0, %s25
    %s45 = sphi 0, %s45
    %s47 = sphi 0, %s45
    %s48 = sphi 0, %s47
    %s62 = sphi 0, %s48
    %s66 = sphi 0, %s66
    %s68 = sphi 0, %s66
    %s69 = sphi 0, %s68
    %s83 = sphi 0, %s69
    %s87 = sphi 0, %s87
    %s89 = sphi 0, %s87
    %s90 = sphi 0, %s89
    %s104 = sphi 0, %s90
    %s108 = sphi 0, %s108
    %s110 = sphi 0, %s108
    %s111 = sphi 0, %s110
    %s125 = sphi 0, %s111
    %s131 = sphi 0, %s133
    %s134 = sphi 0, %s131
    %s135 = sphi 0, %s134
    %s151 = sphi 0, %s135
  $region4: #{cnn_forward.4} parent=0 // loop_header_branch
    %14 = sbr.rel (%p12) target = $region8
  $region5: #{cnn_forward.4} parent=0 // loop_body
    %s16 = ssub.s32 %s11, 1
    %s17 = ssub.s32 %s11, 2
    %s18 = sadd.s32 %s11, 1
    %s19 = ssub.s32 %s11, %s18
    %p20 = scmp.eq.s32.totalorder %s19, 0
    %s22 = sadd.s32 %s21, 1
    %s23 = scalar_select %p20, %s21, %s22
    %p26 = pneg %p20
    %p27 = scmp.eq.s32.totalorder %s11, 1
    %p28 = por %p26, %p27
    %p29 = scmp.ne.s32.totalorder %s21, %s24
    %p30 = scmp.eq.s32.totalorder %s11, 0
    %p31 = por %p29, %p30
    %p32 = scmp.ne.s32.totalorder %s21, %s24
    %p33 = scmp.eq.s32.totalorder %s16, 1
    %p34 = por %p32, %p33
    %p35 = scmp.ne.s32.totalorder %s24, %s25
    %p36 = scmp.eq.s32.totalorder %s16, 0
    %p37 = por %p35, %p36
    %p38 = scmp.ne.s32.totalorder %s24, %s25
    %p39 = scmp.eq.s32.totalorder %s17, 1
    %p40 = por %p38, %p39
    %p42 = scmp.ne.s32.totalorder %s25, %s41
    %p43 = scmp.eq.s32.totalorder %s17, 0
    %p44 = por %p42, %p43
    %s46 = sadd.s32 %s45, 1
    %p49 = scmp.eq.s32.totalorder %s11, 1
    %p50 = scmp.ne.s32.totalorder %s45, %s47
    %p51 = scmp.eq.s32.totalorder %s11, 0
    %p52 = por %p50, %p51
    %p53 = scmp.ne.s32.totalorder %s45, %s47
    %p54 = scmp.eq.s32.totalorder %s16, 1
    %p55 = por %p53, %p54
    %p56 = scmp.ne.s32.totalorder %s47, %s48
    %p57 = scmp.eq.s32.totalorder %s16, 0
    %p58 = por %p56, %p57
    %p59 = scmp.ne.s32.totalorder %s47, %s48
    %p60 = scmp.eq.s32.totalorder %s17, 1
    %p61 = por %p59, %p60
    %p63 = scmp.ne.s32.totalorder %s48, %s62
    %p64 = scmp.eq.s32.totalorder %s17, 0
    %p65 = por %p63, %p64
    %s67 = sadd.s32 %s66, 1
    %p70 = scmp.eq.s32.totalorder %s11, 1
    %p71 = scmp.ne.s32.totalorder %s66, %s68
    %p72 = scmp.eq.s32.totalorder %s11, 0
    %p73 = por %p71, %p72
    %p74 = scmp.ne.s32.totalorder %s66, %s68
    %p75 = scmp.eq.s32.totalorder %s16, 1
    %p76 = por %p74, %p75
    %p77 = scmp.ne.s32.totalorder %s68, %s69
    %p78 = scmp.eq.s32.totalorder %s16, 0
    %p79 = por %p77, %p78
    %p80 = scmp.ne.s32.totalorder %s68, %s69
    %p81 = scmp.eq.s32.totalorder %s17, 1
    %p82 = por %p80, %p81
    %p84 = scmp.ne.s32.totalorder %s69, %s83
    %p85 = scmp.eq.s32.totalorder %s17, 0
    %p86 = por %p84, %p85
    %s88 = sadd.s32 %s87, 1
    %p91 = scmp.eq.s32.totalorder %s11, 1
    %p92 = scmp.ne.s32.totalorder %s87, %s89
    %p93 = scmp.eq.s32.totalorder %s11, 0
    %p94 = por %p92, %p93
    %p95 = scmp.ne.s32.totalorder %s87, %s89
    %p96 = scmp.eq.s32.totalorder %s16, 1
    %p97 = por %p95, %p96
    %p98 = scmp.ne.s32.totalorder %s89, %s90
    %p99 = scmp.eq.s32.totalorder %s16, 0
    %p100 = por %p98, %p99
    %p101 = scmp.ne.s32.totalorder %s89, %s90
    %p102 = scmp.eq.s32.totalorder %s17, 1
    %p103 = por %p101, %p102
    %p105 = scmp.ne.s32.totalorder %s90, %s104
    %p106 = scmp.eq.s32.totalorder %s17, 0
    %p107 = por %p105, %p106
    %s109 = sadd.s32 %s108, 1
    %p112 = scmp.eq.s32.totalorder %s11, 1
    %p113 = scmp.ne.s32.totalorder %s108, %s110
    %p114 = scmp.eq.s32.totalorder %s11, 0
    %p115 = por %p113, %p114
    %p116 = scmp.ne.s32.totalorder %s108, %s110
    %p117 = scmp.eq.s32.totalorder %s16, 1
    %p118 = por %p116, %p117
    %p119 = scmp.ne.s32.totalorder %s110, %s111
    %p120 = scmp.eq.s32.totalorder %s16, 0
    %p121 = por %p119, %p120
    %p122 = scmp.ne.s32.totalorder %s110, %s111
    %p123 = scmp.eq.s32.totalorder %s17, 1
    %p124 = por %p122, %p123
    %p126 = scmp.ne.s32.totalorder %s111, %s125
    %p127 = scmp.eq.s32.totalorder %s17, 0
    %p128 = por %p126, %p127
    %s129 = ssub.s32 %s11, %s18
    %p130 = scmp.eq.s32.totalorder %s129, 0
    %s132 = sadd.s32 %s131, 1
    %s133 = scalar_select %p130, %s131, %s132
    %p136 = pneg %p130
    %p137 = scmp.eq.s32.totalorder %s11, 1
    %p138 = por %p136, %p137
    %p139 = scmp.ne.s32.totalorder %s131, %s134
    %p140 = scmp.eq.s32.totalorder %s11, 0
    %p141 = por %p139, %p140
    %p142 = scmp.ne.s32.totalorder %s131, %s134
    %p143 = scmp.eq.s32.totalorder %s16, 1
    %p144 = por %p142, %p143
    %p145 = scmp.ne.s32.totalorder %s134, %s135
    %p146 = scmp.eq.s32.totalorder %s16, 0
    %p147 = por %p145, %p146
    %p148 = scmp.ne.s32.totalorder %s134, %s135
    %p149 = scmp.eq.s32.totalorder %s17, 1
    %p150 = por %p148, %p149
    %p152 = scmp.ne.s32.totalorder %s135, %s151
    %p153 = scmp.eq.s32.totalorder %s17, 0
    %p154 = por %p152, %p153
    %p155 = scmp.le.s32.totalorder 1, %s11
    %p156 = scmp.lt.s32.totalorder %s11, 3
    %p157 = pnand %p155, %p156
    %p158 = pneg %p157
    // Predicated region
    $region9: #{cnn_forward.4} parent=5 // pred_check
      _
    $region10: #{cnn_forward.4} parent=5 // pred_check_branch
      %160 = sbr.rel (%p157) target = $region12
    $region11: #{cnn_forward.4} parent=5 // pred_region
      %s161 = ssub.s32 %s11, 1
      // Predicated region
      $region13: #{cnn_forward.4} parent=11 // pred_check
        %p162 = pneg %p58
      $region14: #{cnn_forward.4} parent=11 // pred_check_branch
        %164 = sbr.rel (%p162) target = $region16
      $region15: #{cnn_forward.4} parent=11 // pred_region
        _
      $region16: #{cnn_forward.4} parent=11 // pred_fallthru
        _
      // Predicated region
      $region17: #{cnn_forward.4} parent=11 // pred_check
        %p165 = pneg %p79
      $region18: #{cnn_forward.4} parent=11 // pred_check_branch
        %167 = sbr.rel (%p165) target = $region20
      $region19: #{cnn_forward.4} parent=11 // pred_region
        _
      $region20: #{cnn_forward.4} parent=11 // pred_fallthru
        _
      // Predicated region
      $region21: #{cnn_forward.4} parent=11 // pred_check
        %p168 = pneg %p100
      $region22: #{cnn_forward.4} parent=11 // pred_check_branch
        %170 = sbr.rel (%p168) target = $region24
      $region23: #{cnn_forward.4} parent=11 // pred_region
        _
      $region24: #{cnn_forward.4} parent=11 // pred_fallthru
        _
      // Predicated region
      $region25: #{cnn_forward.4} parent=11 // pred_check
        %p171 = pneg %p121
      $region26: #{cnn_forward.4} parent=11 // pred_check_branch
        %173 = sbr.rel (%p171) target = $region28
      $region27: #{cnn_forward.4} parent=11 // pred_region
        _
      $region28: #{cnn_forward.4} parent=11 // pred_fallthru
        _
    $region12: #{cnn_forward.4} parent=5 // pred_fallthru
      _
    %p174 = scmp.lt.s32.totalorder %s11, 2
    // Predicated region
    $region29: #{cnn_forward.4} parent=5 // pred_check
      %p175 = pneg %p174
    $region30: #{cnn_forward.4} parent=5 // pred_check_branch
      %177 = sbr.rel (%p175) target = $region32
    $region31: #{cnn_forward.4} parent=5 // pred_region
      // Predicated region
      $region33: #{cnn_forward.4} parent=31 // pred_check
        %p178 = pneg %p31
      $region34: #{cnn_forward.4} parent=31 // pred_check_branch
        %180 = sbr.rel (%p178) target = $region36
      $region35: #{cnn_forward.4} parent=31 // pred_region
        %p181 = scmp.lt.s32.totalorder %s11, 1
        %s182 = scalar_select %p181, %s11, 1
        %s183 = smul.addr %s182, 32
        %s184 = scalar_lea.vmem %s0, %s183
      $region36: #{cnn_forward.4} parent=31 // pred_fallthru
        _
    $region32: #{cnn_forward.4} parent=5 // pred_fallthru
      _
    %p185 = scmp.le.s32.totalorder 1, %s11
    %p186 = scmp.lt.s32.totalorder %s11, 3
    %p187 = pnand %p185, %p186
    %p188 = pneg %p187
    // Predicated region
    $region37: #{cnn_forward.4} parent=5 // pred_check
      _
    $region38: #{cnn_forward.4} parent=5 // pred_check_branch
      %190 = sbr.rel (%p187) target = $region40
    $region39: #{cnn_forward.4} parent=5 // pred_region
      %s191 = ssub.s32 %s11, 1
      %p192 = scmp.lt.s32.totalorder %s16, 1
      %s193 = scalar_select %p192, %s16, 1
      %s194 = smul.addr %s193, 32
      %s195 = scalar_lea.vmem %s0, %s194
      %p196 = pneg %p37
      %p197 = pneg %p34
      %p198 = pneg %p58
      %p199 = pneg %p55
      %p200 = pneg %p79
      %p201 = pneg %p76
      %p202 = pneg %p100
      %p203 = pneg %p97
      %p204 = pneg %p121
      %p205 = pneg %p118
      %p206 = pneg %p147
      %p207 = pneg %p144
      %p208 = scmp.lt.s32.totalorder %s16, 1
      %s209 = scalar_select %p208, %s16, 1
      %s210 = smul.addr %s209, 28
      %s211 = smul.addr %s210, 8
      %s212 = scalar_lea.vmem %s5, %s211
      %p213 = scmp.lt.s32.totalorder %s16, 1
      %s214 = scalar_select %p213, %s16, 1
      %s215 = smul.addr %s214, 32
      %s216 = scalar_lea.vmem %s0, %s215
      %p217 = scmp.lt.s32.totalorder %s16, 1
      %s218 = scalar_select %p217, %s16, 1
      %s219 = smul.addr %s218, 28
      %s220 = smul.addr %s219, 8
      %s221 = scalar_lea.vmem %s5, %s220
      %v222 = vld [vmem:[%s2] sm:$0xff]
      %v223 = vld [vmem:[%s2 + $0x8] sm:$0x3]
      %v224 = vld [vmem:[%s3] sm:$0xff]
      %v225 = vld [vmem:[%s3 + $0x8] sm:$0xff]
      %v226 = vld [vmem:[%s3 + $0x10] sm:$0xff]
      %v227 = vld [vmem:[%s3 + $0x18] sm:$0xf]
      %v228 = vld [vmem:[%s4] sm:$0xff]
      %v229 = vld [vmem:[%s4 + $0x8] sm:$0xff]
      %v230 = vld [vmem:[%s4 + $0x10] sm:$0xff]
      %v231 = vld [vmem:[%s4 + $0x18] sm:$0xf]
      loop: start=0, step=1, limit=14
      $region41: #{cnn_forward.4} parent=39 // loop_pre_header
        _
      $region42: #{cnn_forward.4} parent=39 // loop_header
        %s233 = sphi 0, %s237
        %p234 = scmp.ge.s32.totalorder %s233, 14
      $region43: #{cnn_forward.4} parent=39 // loop_header_branch
        %236 = sbr.rel (%p234) target = $region47
      $region44: #{cnn_forward.4} parent=39 // loop_body
        %s238 = smul.u32 %s233, 2
        %s239 = sadd.s32 %s238, 1
        %s240 = scalar_lea.vmem %s216, %s238
        %v241 = vld [vmem:[%s240] sm:$0x1]
        %v242 = vld [vmem:[%s1] sm:$0xff]
        %v243 = vld [vmem:[%s1 + $0x8] sm:$0x3]
        %245 = vset.pattern.permute.xlu0 0
        %246 = vperm.xlu0 %245, %v242
        %v247 = vpop.permute.xlu0 %246
        %250 = vset.pattern.permute.xlu0 0
        %251 = vperm.xlu0 %250, %v243
        %v252 = vpop.permute.xlu0 %251
        %v255 = vperm.slane %v241, 0
        %v257 = vmul.f32 %v247, %v255
        %v258 = vmul.f32 %v252, %v255
        %v259 = vadd.f32 %v257, 0.0
        %v260 = vadd.f32 %v258, 0.0
        %s261 = scalar_lea.vmem %s1, 16
        %v262 = vld [vmem:[%s261] sm:$0xff]
        %v263 = vld [vmem:[%s261 + $0x8] sm:$0x3]
        %265 = vset.pattern.permute.xlu0 0
        %266 = vperm.xlu0 %265, %v262
        %v267 = vpop.permute.xlu0 %266
        %270 = vset.pattern.permute.xlu0 0
        %271 = vperm.xlu0 %270, %v263
        %v272 = vpop.permute.xlu0 %271
        %v274 = vmul.f32 %v267, %v255
        %v275 = vmul.f32 %v272, %v255
        %278 = vrot.lane.b32.xlu0 %v274, 127
        %v279 = vpop.permute.xlu0 %278
        %280 = vrot.lane.b32.xlu0 %v275, 127
        %v281 = vpop.permute.xlu0 %280
        %v284 = vadd.f32 %v259, %v279
        %v285 = vadd.f32 %v260, %v281
        %s286 = scalar_lea.vmem %s1, 32
        %v287 = vld [vmem:[%s286] sm:$0xff]
        %v288 = vld [vmem:[%s286 + $0x8] sm:$0x3]
        %290 = vset.pattern.permute.xlu0 0
        %291 = vperm.xlu0 %290, %v287
        %v292 = vpop.permute.xlu0 %291
        %295 = vset.pattern.permute.xlu0 0
        %296 = vperm.xlu0 %295, %v288
        %v297 = vpop.permute.xlu0 %296
        %v299 = vmul.f32 %v292, %v255
        %v300 = vmul.f32 %v297, %v255
        %303 = vrot.lane.b32.xlu0 %v299, 126
        %v304 = vpop.permute.xlu0 %303
        %305 = vrot.lane.b32.xlu0 %v300, 126
        %v306 = vpop.permute.xlu0 %305
        %v309 = vadd.f32 %v284, %v304
        %v310 = vadd.f32 %v285, %v306
        %s311 = scalar_lea.vmem %s1, 48
        %v312 = vld [vmem:[%s311] sm:$0xff]
        %v313 = vld [vmem:[%s311 + $0x8] sm:$0x3]
        %315 = vset.pattern.permute.xlu0 0
        %316 = vperm.xlu0 %315, %v312
        %v317 = vpop.permute.xlu0 %316
        %320 = vset.pattern.permute.xlu0 0
        %321 = vperm.xlu0 %320, %v313
        %v322 = vpop.permute.xlu0 %321
        %v324 = vmul.f32 %v317, %v255
        %v325 = vmul.f32 %v322, %v255
        %328 = vrot.lane.b32.xlu0 %v324, 125
        %v329 = vpop.permute.xlu0 %328
        %330 = vrot.lane.b32.xlu0 %v325, 125
        %v331 = vpop.permute.xlu0 %330
        %v334 = vadd.f32 %v309, %v329
        %v335 = vadd.f32 %v310, %v331
        %s336 = scalar_lea.vmem %s1, 64
        %v337 = vld [vmem:[%s336] sm:$0xff]
        %v338 = vld [vmem:[%s336 + $0x8] sm:$0x3]
        %340 = vset.pattern.permute.xlu0 0
        %341 = vperm.xlu0 %340, %v337
        %v342 = vpop.permute.xlu0 %341
        %345 = vset.pattern.permute.xlu0 0
        %346 = vperm.xlu0 %345, %v338
        %v347 = vpop.permute.xlu0 %346
        %v349 = vmul.f32 %v342, %v255
        %v350 = vmul.f32 %v347, %v255
        %353 = vrot.lane.b32.xlu0 %v349, 124
        %v354 = vpop.permute.xlu0 %353
        %355 = vrot.lane.b32.xlu0 %v350, 124
        %v356 = vpop.permute.xlu0 %355
        %v359 = vadd.f32 %v334, %v354
        %v360 = vadd.f32 %v335, %v356
        %s361 = scalar_lea.vmem %s216, %s239
        %v362 = vld [vmem:[%s361] sm:$0x1]
        %s363 = scalar_lea.vmem %s1, 80
        %v364 = vld [vmem:[%s363] sm:$0xff]
        %v365 = vld [vmem:[%s363 + $0x8] sm:$0x3]
        %367 = vset.pattern.permute.xlu0 0
        %368 = vperm.xlu0 %367, %v364
        %v369 = vpop.permute.xlu0 %368
        %372 = vset.pattern.permute.xlu0 0
        %373 = vperm.xlu0 %372, %v365
        %v374 = vpop.permute.xlu0 %373
        %v377 = vperm.slane %v362, 0
        %v379 = vmul.f32 %v369, %v377
        %v380 = vmul.f32 %v374, %v377
        %v381 = vadd.f32 %v359, %v379
        %v382 = vadd.f32 %v360, %v380
        %s383 = scalar_lea.vmem %s1, 96
        %v384 = vld [vmem:[%s383] sm:$0xff]
        %v385 = vld [vmem:[%s383 + $0x8] sm:$0x3]
        %387 = vset.pattern.permute.xlu0 0
        %388 = vperm.xlu0 %387, %v384
        %v389 = vpop.permute.xlu0 %388
        %392 = vset.pattern.permute.xlu0 0
        %393 = vperm.xlu0 %392, %v385
        %v394 = vpop.permute.xlu0 %393
        %v396 = vmul.f32 %v389, %v377
        %v397 = vmul.f32 %v394, %v377
        %400 = vrot.lane.b32.xlu0 %v396, 127
        %v401 = vpop.permute.xlu0 %400
        %402 = vrot.lane.b32.xlu0 %v397, 127
        %v403 = vpop.permute.xlu0 %402
        %v406 = vadd.f32 %v381, %v401
        %v407 = vadd.f32 %v382, %v403
        %s408 = scalar_lea.vmem %s1, 112
        %v409 = vld [vmem:[%s408] sm:$0xff]
        %v410 = vld [vmem:[%s408 + $0x8] sm:$0x3]
        %412 = vset.pattern.permute.xlu0 0
        %413 = vperm.xlu0 %412, %v409
        %v414 = vpop.permute.xlu0 %413
        %417 = vset.pattern.permute.xlu0 0
        %418 = vperm.xlu0 %417, %v410
        %v419 = vpop.permute.xlu0 %418
        %v421 = vmul.f32 %v414, %v377
        %v422 = vmul.f32 %v419, %v377
        %425 = vrot.lane.b32.xlu0 %v421, 126
        %v426 = vpop.permute.xlu0 %425
        %427 = vrot.lane.b32.xlu0 %v422, 126
        %v428 = vpop.permute.xlu0 %427
        %v431 = vadd.f32 %v406, %v426
        %v432 = vadd.f32 %v407, %v428
        %s433 = scalar_lea.vmem %s1, 128
        %v434 = vld [vmem:[%s433] sm:$0xff]
        %v435 = vld [vmem:[%s433 + $0x8] sm:$0x3]
        %437 = vset.pattern.permute.xlu0 0
        %438 = vperm.xlu0 %437, %v434
        %v439 = vpop.permute.xlu0 %438
        %442 = vset.pattern.permute.xlu0 0
        %443 = vperm.xlu0 %442, %v435
        %v444 = vpop.permute.xlu0 %443
        %v446 = vmul.f32 %v439, %v377
        %v447 = vmul.f32 %v444, %v377
        %450 = vrot.lane.b32.xlu0 %v446, 125
        %v451 = vpop.permute.xlu0 %450
        %452 = vrot.lane.b32.xlu0 %v447, 125
        %v453 = vpop.permute.xlu0 %452
        %v456 = vadd.f32 %v431, %v451
        %v457 = vadd.f32 %v432, %v453
        %s458 = scalar_lea.vmem %s1, 144
        %v459 = vld [vmem:[%s458] sm:$0xff]
        %v460 = vld [vmem:[%s458 + $0x8] sm:$0x3]
        %462 = vset.pattern.permute.xlu0 0
        %463 = vperm.xlu0 %462, %v459
        %v464 = vpop.permute.xlu0 %463
        %467 = vset.pattern.permute.xlu0 0
        %468 = vperm.xlu0 %467, %v460
        %v469 = vpop.permute.xlu0 %468
        %v471 = vmul.f32 %v464, %v377
        %v472 = vmul.f32 %v469, %v377
        %475 = vrot.lane.b32.xlu0 %v471, 124
        %v476 = vpop.permute.xlu0 %475
        %477 = vrot.lane.b32.xlu0 %v472, 124
        %v478 = vpop.permute.xlu0 %477
        %v481 = vadd.f32 %v456, %v476
        %v482 = vadd.f32 %v457, %v478
        %s483 = sadd.s32 %s238, 2
        %s484 = scalar_lea.vmem %s216, %s483
        %v485 = vld [vmem:[%s484] sm:$0x1]
        %s486 = scalar_lea.vmem %s1, 160
        %v487 = vld [vmem:[%s486] sm:$0xff]
        %v488 = vld [vmem:[%s486 + $0x8] sm:$0x3]
        %490 = vset.pattern.permute.xlu0 0
        %491 = vperm.xlu0 %490, %v487
        %v492 = vpop.permute.xlu0 %491
        %495 = vset.pattern.permute.xlu0 0
        %496 = vperm.xlu0 %495, %v488
        %v497 = vpop.permute.xlu0 %496
        %v500 = vperm.slane %v485, 0
        %v502 = vmul.f32 %v492, %v500
        %v503 = vmul.f32 %v497, %v500
        %v504 = vadd.f32 %v481, %v502
        %v505 = vadd.f32 %v482, %v503
        %s506 = scalar_lea.vmem %s1, 176
        %v507 = vld [vmem:[%s506] sm:$0xff]
        %v508 = vld [vmem:[%s506 + $0x8] sm:$0x3]
        %510 = vset.pattern.permute.xlu0 0
        %511 = vperm.xlu0 %510, %v507
        %v512 = vpop.permute.xlu0 %511
        %515 = vset.pattern.permute.xlu0 0
        %516 = vperm.xlu0 %515, %v508
        %v517 = vpop.permute.xlu0 %516
        %v519 = vmul.f32 %v512, %v500
        %v520 = vmul.f32 %v517, %v500
        %523 = vrot.lane.b32.xlu0 %v519, 127
        %v524 = vpop.permute.xlu0 %523
        %525 = vrot.lane.b32.xlu0 %v520, 127
        %v526 = vpop.permute.xlu0 %525
        %v529 = vadd.f32 %v504, %v524
        %v530 = vadd.f32 %v505, %v526
        %s531 = scalar_lea.vmem %s1, 192
        %v532 = vld [vmem:[%s531] sm:$0xff]
        %v533 = vld [vmem:[%s531 + $0x8] sm:$0x3]
        %535 = vset.pattern.permute.xlu0 0
        %536 = vperm.xlu0 %535, %v532
        %v537 = vpop.permute.xlu0 %536
        %540 = vset.pattern.permute.xlu0 0
        %541 = vperm.xlu0 %540, %v533
        %v542 = vpop.permute.xlu0 %541
        %v544 = vmul.f32 %v537, %v500
        %v545 = vmul.f32 %v542, %v500
        %548 = vrot.lane.b32.xlu0 %v544, 126
        %v549 = vpop.permute.xlu0 %548
        %550 = vrot.lane.b32.xlu0 %v545, 126
        %v551 = vpop.permute.xlu0 %550
        %v554 = vadd.f32 %v529, %v549
        %v555 = vadd.f32 %v530, %v551
        %s556 = scalar_lea.vmem %s1, 208
        %v557 = vld [vmem:[%s556] sm:$0xff]
        %v558 = vld [vmem:[%s556 + $0x8] sm:$0x3]
        %560 = vset.pattern.permute.xlu0 0
        %561 = vperm.xlu0 %560, %v557
        %v562 = vpop.permute.xlu0 %561
        %565 = vset.pattern.permute.xlu0 0
        %566 = vperm.xlu0 %565, %v558
        %v567 = vpop.permute.xlu0 %566
        %v569 = vmul.f32 %v562, %v500
        %v570 = vmul.f32 %v567, %v500
        %573 = vrot.lane.b32.xlu0 %v569, 125
        %v574 = vpop.permute.xlu0 %573
        %575 = vrot.lane.b32.xlu0 %v570, 125
        %v576 = vpop.permute.xlu0 %575
        %v579 = vadd.f32 %v554, %v574
        %v580 = vadd.f32 %v555, %v576
        %s581 = scalar_lea.vmem %s1, 224
        %v582 = vld [vmem:[%s581] sm:$0xff]
        %v583 = vld [vmem:[%s581 + $0x8] sm:$0x3]
        %585 = vset.pattern.permute.xlu0 0
        %586 = vperm.xlu0 %585, %v582
        %v587 = vpop.permute.xlu0 %586
        %590 = vset.pattern.permute.xlu0 0
        %591 = vperm.xlu0 %590, %v583
        %v592 = vpop.permute.xlu0 %591
        %v594 = vmul.f32 %v587, %v500
        %v595 = vmul.f32 %v592, %v500
        %598 = vrot.lane.b32.xlu0 %v594, 124
        %v599 = vpop.permute.xlu0 %598
        %600 = vrot.lane.b32.xlu0 %v595, 124
        %v601 = vpop.permute.xlu0 %600
        %v604 = vadd.f32 %v579, %v599
        %v605 = vadd.f32 %v580, %v601
        %s606 = sadd.s32 %s238, 3
        %s607 = scalar_lea.vmem %s216, %s606
        %v608 = vld [vmem:[%s607] sm:$0x1]
        %s609 = scalar_lea.vmem %s1, 240
        %v610 = vld [vmem:[%s609] sm:$0xff]
        %v611 = vld [vmem:[%s609 + $0x8] sm:$0x3]
        %613 = vset.pattern.permute.xlu0 0
        %614 = vperm.xlu0 %613, %v610
        %v615 = vpop.permute.xlu0 %614
        %618 = vset.pattern.permute.xlu0 0
        %619 = vperm.xlu0 %618, %v611
        %v620 = vpop.permute.xlu0 %619
        %v623 = vperm.slane %v608, 0
        %v625 = vmul.f32 %v615, %v623
        %v626 = vmul.f32 %v620, %v623
        %v627 = vadd.f32 %v604, %v625
        %v628 = vadd.f32 %v605, %v626
        %s629 = scalar_lea.vmem %s1, 256
        %v630 = vld [vmem:[%s629] sm:$0xff]
        %v631 = vld [vmem:[%s629 + $0x8] sm:$0x3]
        %633 = vset.pattern.permute.xlu0 0
        %634 = vperm.xlu0 %633, %v630
        %v635 = vpop.permute.xlu0 %634
        %638 = vset.pattern.permute.xlu0 0
        %639 = vperm.xlu0 %638, %v631
        %v640 = vpop.permute.xlu0 %639
        %v642 = vmul.f32 %v635, %v623
        %v643 = vmul.f32 %v640, %v623
        %646 = vrot.lane.b32.xlu0 %v642, 127
        %v647 = vpop.permute.xlu0 %646
        %648 = vrot.lane.b32.xlu0 %v643, 127
        %v649 = vpop.permute.xlu0 %648
        %v652 = vadd.f32 %v627, %v647
        %v653 = vadd.f32 %v628, %v649
        %s654 = scalar_lea.vmem %s1, 272
        %v655 = vld [vmem:[%s654] sm:$0xff]
        %v656 = vld [vmem:[%s654 + $0x8] sm:$0x3]
        %658 = vset.pattern.permute.xlu0 0
        %659 = vperm.xlu0 %658, %v655
        %v660 = vpop.permute.xlu0 %659
        %663 = vset.pattern.permute.xlu0 0
        %664 = vperm.xlu0 %663, %v656
        %v665 = vpop.permute.xlu0 %664
        %v667 = vmul.f32 %v660, %v623
        %v668 = vmul.f32 %v665, %v623
        %671 = vrot.lane.b32.xlu0 %v667, 126
        %v672 = vpop.permute.xlu0 %671
        %673 = vrot.lane.b32.xlu0 %v668, 126
        %v674 = vpop.permute.xlu0 %673
        %v677 = vadd.f32 %v652, %v672
        %v678 = vadd.f32 %v653, %v674
        %s679 = scalar_lea.vmem %s1, 288
        %v680 = vld [vmem:[%s679] sm:$0xff]
        %v681 = vld [vmem:[%s679 + $0x8] sm:$0x3]
        %683 = vset.pattern.permute.xlu0 0
        %684 = vperm.xlu0 %683, %v680
        %v685 = vpop.permute.xlu0 %684
        %688 = vset.pattern.permute.xlu0 0
        %689 = vperm.xlu0 %688, %v681
        %v690 = vpop.permute.xlu0 %689
        %v692 = vmul.f32 %v685, %v623
        %v693 = vmul.f32 %v690, %v623
        %696 = vrot.lane.b32.xlu0 %v692, 125
        %v697 = vpop.permute.xlu0 %696
        %698 = vrot.lane.b32.xlu0 %v693, 125
        %v699 = vpop.permute.xlu0 %698
        %v702 = vadd.f32 %v677, %v697
        %v703 = vadd.f32 %v678, %v699
        %s704 = scalar_lea.vmem %s1, 304
        %v705 = vld [vmem:[%s704] sm:$0xff]
        %v706 = vld [vmem:[%s704 + $0x8] sm:$0x3]
        %708 = vset.pattern.permute.xlu0 0
        %709 = vperm.xlu0 %708, %v705
        %v710 = vpop.permute.xlu0 %709
        %713 = vset.pattern.permute.xlu0 0
        %714 = vperm.xlu0 %713, %v706
        %v715 = vpop.permute.xlu0 %714
        %v717 = vmul.f32 %v710, %v623
        %v718 = vmul.f32 %v715, %v623
        %721 = vrot.lane.b32.xlu0 %v717, 124
        %v722 = vpop.permute.xlu0 %721
        %723 = vrot.lane.b32.xlu0 %v718, 124
        %v724 = vpop.permute.xlu0 %723
        %v727 = vadd.f32 %v702, %v722
        %v728 = vadd.f32 %v703, %v724
        %s729 = sadd.s32 %s238, 4
        %s730 = scalar_lea.vmem %s216, %s729
        %v731 = vld [vmem:[%s730] sm:$0x1]
        %s732 = scalar_lea.vmem %s1, 320
        %v733 = vld [vmem:[%s732] sm:$0xff]
        %v734 = vld [vmem:[%s732 + $0x8] sm:$0x3]
        %736 = vset.pattern.permute.xlu0 0
        %737 = vperm.xlu0 %736, %v733
        %v738 = vpop.permute.xlu0 %737
        %741 = vset.pattern.permute.xlu0 0
        %742 = vperm.xlu0 %741, %v734
        %v743 = vpop.permute.xlu0 %742
        %v746 = vperm.slane %v731, 0
        %v748 = vmul.f32 %v738, %v746
        %v749 = vmul.f32 %v743, %v746
        %v750 = vadd.f32 %v727, %v748
        %v751 = vadd.f32 %v728, %v749
        %s752 = scalar_lea.vmem %s1, 336
        %v753 = vld [vmem:[%s752] sm:$0xff]
        %v754 = vld [vmem:[%s752 + $0x8] sm:$0x3]
        %756 = vset.pattern.permute.xlu0 0
        %757 = vperm.xlu0 %756, %v753
        %v758 = vpop.permute.xlu0 %757
        %761 = vset.pattern.permute.xlu0 0
        %762 = vperm.xlu0 %761, %v754
        %v763 = vpop.permute.xlu0 %762
        %v765 = vmul.f32 %v758, %v746
        %v766 = vmul.f32 %v763, %v746
        %769 = vrot.lane.b32.xlu0 %v765, 127
        %v770 = vpop.permute.xlu0 %769
        %771 = vrot.lane.b32.xlu0 %v766, 127
        %v772 = vpop.permute.xlu0 %771
        %v775 = vadd.f32 %v750, %v770
        %v776 = vadd.f32 %v751, %v772
        %s777 = scalar_lea.vmem %s1, 352
        %v778 = vld [vmem:[%s777] sm:$0xff]
        %v779 = vld [vmem:[%s777 + $0x8] sm:$0x3]
        %781 = vset.pattern.permute.xlu0 0
        %782 = vperm.xlu0 %781, %v778
        %v783 = vpop.permute.xlu0 %782
        %786 = vset.pattern.permute.xlu0 0
        %787 = vperm.xlu0 %786, %v779
        %v788 = vpop.permute.xlu0 %787
        %v790 = vmul.f32 %v783, %v746
        %v791 = vmul.f32 %v788, %v746
        %794 = vrot.lane.b32.xlu0 %v790, 126
        %v795 = vpop.permute.xlu0 %794
        %796 = vrot.lane.b32.xlu0 %v791, 126
        %v797 = vpop.permute.xlu0 %796
        %v800 = vadd.f32 %v775, %v795
        %v801 = vadd.f32 %v776, %v797
        %s802 = scalar_lea.vmem %s1, 368
        %v803 = vld [vmem:[%s802] sm:$0xff]
        %v804 = vld [vmem:[%s802 + $0x8] sm:$0x3]
        %806 = vset.pattern.permute.xlu0 0
        %807 = vperm.xlu0 %806, %v803
        %v808 = vpop.permute.xlu0 %807
        %811 = vset.pattern.permute.xlu0 0
        %812 = vperm.xlu0 %811, %v804
        %v813 = vpop.permute.xlu0 %812
        %v815 = vmul.f32 %v808, %v746
        %v816 = vmul.f32 %v813, %v746
        %819 = vrot.lane.b32.xlu0 %v815, 125
        %v820 = vpop.permute.xlu0 %819
        %821 = vrot.lane.b32.xlu0 %v816, 125
        %v822 = vpop.permute.xlu0 %821
        %v825 = vadd.f32 %v800, %v820
        %v826 = vadd.f32 %v801, %v822
        %s827 = scalar_lea.vmem %s1, 384
        %v828 = vld [vmem:[%s827] sm:$0xff]
        %v829 = vld [vmem:[%s827 + $0x8] sm:$0x3]
        %831 = vset.pattern.permute.xlu0 0
        %832 = vperm.xlu0 %831, %v828
        %v833 = vpop.permute.xlu0 %832
        %836 = vset.pattern.permute.xlu0 0
        %837 = vperm.xlu0 %836, %v829
        %v838 = vpop.permute.xlu0 %837
        %v840 = vmul.f32 %v833, %v746
        %v841 = vmul.f32 %v838, %v746
        %844 = vrot.lane.b32.xlu0 %v840, 124
        %v845 = vpop.permute.xlu0 %844
        %846 = vrot.lane.b32.xlu0 %v841, 124
        %v847 = vpop.permute.xlu0 %846
        %v850 = vadd.f32 %v825, %v845
        %v851 = vadd.f32 %v826, %v847
        %853 = vset.pattern.permute.xlu0 0
        %854 = vperm.xlu0 %853, %v222
        %v855 = vpop.permute.xlu0 %854
        %858 = vset.pattern.permute.xlu0 0
        %859 = vperm.xlu0 %858, %v223
        %v860 = vpop.permute.xlu0 %859
        %v862 = vadd.f32 %v850, %v855
        %v863 = vadd.f32 %v851, %v860
        %v864 = vmax.f32 %v862, 0.0
        %v865 = vmax.f32 %v863, 0.0
        %v866 = vmul.f32 %v247, %v377
        %v867 = vmul.f32 %v252, %v377
        %v868 = vadd.f32 %v866, 0.0
        %v869 = vadd.f32 %v867, 0.0
        %v870 = vmul.f32 %v267, %v377
        %v871 = vmul.f32 %v272, %v377
        %874 = vrot.lane.b32.xlu0 %v870, 127
        %v875 = vpop.permute.xlu0 %874
        %876 = vrot.lane.b32.xlu0 %v871, 127
        %v877 = vpop.permute.xlu0 %876
        %v880 = vadd.f32 %v868, %v875
        %v881 = vadd.f32 %v869, %v877
        %v882 = vmul.f32 %v292, %v377
        %v883 = vmul.f32 %v297, %v377
        %886 = vrot.lane.b32.xlu0 %v882, 126
        %v887 = vpop.permute.xlu0 %886
        %888 = vrot.lane.b32.xlu0 %v883, 126
        %v889 = vpop.permute.xlu0 %888
        %v892 = vadd.f32 %v880, %v887
        %v893 = vadd.f32 %v881, %v889
        %v894 = vmul.f32 %v317, %v377
        %v895 = vmul.f32 %v322, %v377
        %898 = vrot.lane.b32.xlu0 %v894, 125
        %v899 = vpop.permute.xlu0 %898
        %900 = vrot.lane.b32.xlu0 %v895, 125
        %v901 = vpop.permute.xlu0 %900
        %v904 = vadd.f32 %v892, %v899
        %v905 = vadd.f32 %v893, %v901
        %v906 = vmul.f32 %v342, %v377
        %v907 = vmul.f32 %v347, %v377
        %910 = vrot.lane.b32.xlu0 %v906, 124
        %v911 = vpop.permute.xlu0 %910
        %912 = vrot.lane.b32.xlu0 %v907, 124
        %v913 = vpop.permute.xlu0 %912
        %v916 = vadd.f32 %v904, %v911
        %v917 = vadd.f32 %v905, %v913
        %v918 = vmul.f32 %v369, %v500
        %v919 = vmul.f32 %v374, %v500
        %v920 = vadd.f32 %v916, %v918
        %v921 = vadd.f32 %v917, %v919
        %v922 = vmul.f32 %v389, %v500
        %v923 = vmul.f32 %v394, %v500
        %926 = vrot.lane.b32.xlu0 %v922, 127
        %v927 = vpop.permute.xlu0 %926
        %928 = vrot.lane.b32.xlu0 %v923, 127
        %v929 = vpop.permute.xlu0 %928
        %v932 = vadd.f32 %v920, %v927
        %v933 = vadd.f32 %v921, %v929
        %v934 = vmul.f32 %v414, %v500
        %v935 = vmul.f32 %v419, %v500
        %938 = vrot.lane.b32.xlu0 %v934, 126
        %v939 = vpop.permute.xlu0 %938
        %940 = vrot.lane.b32.xlu0 %v935, 126
        %v941 = vpop.permute.xlu0 %940
        %v944 = vadd.f32 %v932, %v939
        %v945 = vadd.f32 %v933, %v941
        %v946 = vmul.f32 %v439, %v500
        %v947 = vmul.f32 %v444, %v500
        %950 = vrot.lane.b32.xlu0 %v946, 125
        %v951 = vpop.permute.xlu0 %950
        %952 = vrot.lane.b32.xlu0 %v947, 125
        %v953 = vpop.permute.xlu0 %952
        %v956 = vadd.f32 %v944, %v951
        %v957 = vadd.f32 %v945, %v953
        %v958 = vmul.f32 %v464, %v500
        %v959 = vmul.f32 %v469, %v500
        %962 = vrot.lane.b32.xlu0 %v958, 124
        %v963 = vpop.permute.xlu0 %962
        %964 = vrot.lane.b32.xlu0 %v959, 124
        %v965 = vpop.permute.xlu0 %964
        %v968 = vadd.f32 %v956, %v963
        %v969 = vadd.f32 %v957, %v965
        %v970 = vmul.f32 %v492, %v623
        %v971 = vmul.f32 %v497, %v623
        %v972 = vadd.f32 %v968, %v970
        %v973 = vadd.f32 %v969, %v971
        %v974 = vmul.f32 %v512, %v623
        %v975 = vmul.f32 %v517, %v623
        %978 = vrot.lane.b32.xlu0 %v974, 127
        %v979 = vpop.permute.xlu0 %978
        %980 = vrot.lane.b32.xlu0 %v975, 127
        %v981 = vpop.permute.xlu0 %980
        %v984 = vadd.f32 %v972, %v979
        %v985 = vadd.f32 %v973, %v981
        %v986 = vmul.f32 %v537, %v623
        %v987 = vmul.f32 %v542, %v623
        %990 = vrot.lane.b32.xlu0 %v986, 126
        %v991 = vpop.permute.xlu0 %990
        %992 = vrot.lane.b32.xlu0 %v987, 126
        %v993 = vpop.permute.xlu0 %992
        %v996 = vadd.f32 %v984, %v991
        %v997 = vadd.f32 %v985, %v993
        %v998 = vmul.f32 %v562, %v623
        %v999 = vmul.f32 %v567, %v623
        %1002 = vrot.lane.b32.xlu0 %v998, 125
        %v1003 = vpop.permute.xlu0 %1002
        %1004 = vrot.lane.b32.xlu0 %v999, 125
        %v1005 = vpop.permute.xlu0 %1004
        %v1008 = vadd.f32 %v996, %v1003
        %v1009 = vadd.f32 %v997, %v1005
        %v1010 = vmul.f32 %v587, %v623
        %v1011 = vmul.f32 %v592, %v623
        %1014 = vrot.lane.b32.xlu0 %v1010, 124
        %v1015 = vpop.permute.xlu0 %1014
        %1016 = vrot.lane.b32.xlu0 %v1011, 124
        %v1017 = vpop.permute.xlu0 %1016
        %v1020 = vadd.f32 %v1008, %v1015
        %v1021 = vadd.f32 %v1009, %v1017
        %v1022 = vmul.f32 %v615, %v746
        %v1023 = vmul.f32 %v620, %v746
        %v1024 = vadd.f32 %v1020, %v1022
        %v1025 = vadd.f32 %v1021, %v1023
        %v1026 = vmul.f32 %v635, %v746
        %v1027 = vmul.f32 %v640, %v746
        %1030 = vrot.lane.b32.xlu0 %v1026, 127
        %v1031 = vpop.permute.xlu0 %1030
        %1032 = vrot.lane.b32.xlu0 %v1027, 127
        %v1033 = vpop.permute.xlu0 %1032
        %v1036 = vadd.f32 %v1024, %v1031
        %v1037 = vadd.f32 %v1025, %v1033
        %v1038 = vmul.f32 %v660, %v746
        %v1039 = vmul.f32 %v665, %v746
        %1042 = vrot.lane.b32.xlu0 %v1038, 126
        %v1043 = vpop.permute.xlu0 %1042
        %1044 = vrot.lane.b32.xlu0 %v1039, 126
        %v1045 = vpop.permute.xlu0 %1044
        %v1048 = vadd.f32 %v1036, %v1043
        %v1049 = vadd.f32 %v1037, %v1045
        %v1050 = vmul.f32 %v685, %v746
        %v1051 = vmul.f32 %v690, %v746
        %1054 = vrot.lane.b32.xlu0 %v1050, 125
        %v1055 = vpop.permute.xlu0 %1054
        %1056 = vrot.lane.b32.xlu0 %v1051, 125
        %v1057 = vpop.permute.xlu0 %1056
        %v1060 = vadd.f32 %v1048, %v1055
        %v1061 = vadd.f32 %v1049, %v1057
        %v1062 = vmul.f32 %v710, %v746
        %v1063 = vmul.f32 %v715, %v746
        %1066 = vrot.lane.b32.xlu0 %v1062, 124
        %v1067 = vpop.permute.xlu0 %1066
        %1068 = vrot.lane.b32.xlu0 %v1063, 124
        %v1069 = vpop.permute.xlu0 %1068
        %v1072 = vadd.f32 %v1060, %v1067
        %v1073 = vadd.f32 %v1061, %v1069
        %s1074 = sadd.s32 %s238, 5
        %s1075 = scalar_lea.vmem %s216, %s1074
        %v1076 = vld [vmem:[%s1075] sm:$0x1]
        %v1078 = vperm.slane %v1076, 0
        %v1080 = vmul.f32 %v738, %v1078
        %v1081 = vmul.f32 %v743, %v1078
        %v1082 = vadd.f32 %v1072, %v1080
        %v1083 = vadd.f32 %v1073, %v1081
        %v1084 = vmul.f32 %v758, %v1078
        %v1085 = vmul.f32 %v763, %v1078
        %1088 = vrot.lane.b32.xlu0 %v1084, 127
        %v1089 = vpop.permute.xlu0 %1088
        %1090 = vrot.lane.b32.xlu0 %v1085, 127
        %v1091 = vpop.permute.xlu0 %1090
        %v1094 = vadd.f32 %v1082, %v1089
        %v1095 = vadd.f32 %v1083, %v1091
        %v1096 = vmul.f32 %v783, %v1078
        %v1097 = vmul.f32 %v788, %v1078
        %1100 = vrot.lane.b32.xlu0 %v1096, 126
        %v1101 = vpop.permute.xlu0 %1100
        %1102 = vrot.lane.b32.xlu0 %v1097, 126
        %v1103 = vpop.permute.xlu0 %1102
        %v1106 = vadd.f32 %v1094, %v1101
        %v1107 = vadd.f32 %v1095, %v1103
        %v1108 = vmul.f32 %v808, %v1078
        %v1109 = vmul.f32 %v813, %v1078
        %1112 = vrot.lane.b32.xlu0 %v1108, 125
        %v1113 = vpop.permute.xlu0 %1112
        %1114 = vrot.lane.b32.xlu0 %v1109, 125
        %v1115 = vpop.permute.xlu0 %1114
        %v1118 = vadd.f32 %v1106, %v1113
        %v1119 = vadd.f32 %v1107, %v1115
        %v1120 = vmul.f32 %v833, %v1078
        %v1121 = vmul.f32 %v838, %v1078
        %1124 = vrot.lane.b32.xlu0 %v1120, 124
        %v1125 = vpop.permute.xlu0 %1124
        %1126 = vrot.lane.b32.xlu0 %v1121, 124
        %v1127 = vpop.permute.xlu0 %1126
        %v1130 = vadd.f32 %v1118, %v1125
        %v1131 = vadd.f32 %v1119, %v1127
        %v1132 = vadd.f32 %v1130, %v855
        %v1133 = vadd.f32 %v1131, %v860
        %v1134 = vmax.f32 %v1132, 0.0
        %v1135 = vmax.f32 %v1133, 0.0
        %v1136 = vmax.f32 %v864, %v1134
        %v1137 = vmax.f32 %v865, %v1135
        %vm1138 = vcmask 228352
        %v1140 = vsel %vm1138, %v1136, 0
        %v1143 = vsel %vm1138, %v1137, 0
        %vm1145 = vcmask 1043456
        %v1147 = vsel %vm1145, %v227, 0
        %1149 = vmatpush.msra.mxu0 0.0
        %1150 = vmatpush.msra.mxu0 0.0
        %1151 = vmatpush.msra.mxu0 0.0
        %1152 = vmatpush.msra.mxu0 0.0
        %1153 = vmatpush.msra.mxu0 0.0
        %1154 = vmatpush.msra.mxu0 0.0
        %1155 = vmatpush.msra.mxu0 0.0
        %1156 = vmatpush.msra.mxu0 0.0
        %1157 = vmatpush.msra.mxu0 0.0
        %1158 = vmatpush.msra.mxu0 0.0
        %1159 = vmatpush.msra.mxu0 0.0
        %1160 = vmatpush.msra.mxu0 0.0
        %1161 = vmatpush.msra.mxu0 %v1147
        %1162 = vmatpush.msra.mxu0 %v226
        %1163 = vmatpush.msra.mxu0 %v225
        %1164 = vmatpush.msra.mxu0 %v224
        %1165 = vmatmul.f32.gmra.mxu0 %v1140
        %v1166 = vpop.f32.mrf.mxu0
        %v1167 = vadd.f32 0.0, %v1166
        %1168 = vmatmul.f32.gmra.mxu0 %v1143
        %v1169 = vpop.f32.mrf.mxu0
        %v1170 = vadd.f32 0.0, %v1169
        %1171 = vdwg.mxu0
        %v1173 = vsel %vm1145, %v231, 0
        %1175 = vmatpush.msra.mxu0 0.0
        %1176 = vmatpush.msra.mxu0 0.0
        %1177 = vmatpush.msra.mxu0 0.0
        %1178 = vmatpush.msra.mxu0 0.0
        %1179 = vmatpush.msra.mxu0 0.0
        %1180 = vmatpush.msra.mxu0 0.0
        %1181 = vmatpush.msra.mxu0 0.0
        %1182 = vmatpush.msra.mxu0 0.0
        %1183 = vmatpush.msra.mxu0 0.0
        %1184 = vmatpush.msra.mxu0 0.0
        %1185 = vmatpush.msra.mxu0 0.0
        %1186 = vmatpush.msra.mxu0 0.0
        %1187 = vmatpush.msra.mxu0 %v1173
        %1188 = vmatpush.msra.mxu0 %v230
        %1189 = vmatpush.msra.mxu0 %v229
        %1190 = vmatpush.msra.mxu0 %v228
        %1191 = vmatmul.f32.gmra.mxu0 %v1140
        %v1192 = vpop.f32.mrf.mxu0
        %v1193 = vadd.f32 0.0, %v1192
        %1194 = vmatmul.f32.gmra.mxu0 %v1143
        %v1195 = vpop.f32.mrf.mxu0
        %v1196 = vadd.f32 0.0, %v1195
        %1197 = vdwg.mxu0
        %v1198 = vmax.f32 %v1167, %v1193
        %v1199 = vmax.f32 %v1170, %v1196
        %s1200 = smul.u32 %s233, 16
        %s1201 = scalar_lea.vmem %s221, %s1200
        %vm1202 = vcmask 113664
        %1203 = vst.msk [vmem:[%s1201] sm:$0xff] %vm1202, %v1198
        %vm1204 = vcmask 107520
        %1205 = vst.msk [vmem:[%s1201 + $0x8] sm:$0x3] %vm1204, %v1199
      $region45: #{cnn_forward.4} parent=39 // loop_footer
        %s237 = sadd.s32 1, %s233
      $region46: #{cnn_forward.4} parent=39 // loop_footer_branch
        %232 = sbr.rel target = $region42
      $region47: #{cnn_forward.4} parent=39 // loop_exit
        _
      %p1206 = scmp.lt.s32.totalorder %s16, 1
      %s1207 = scalar_select %p1206, %s16, 1
      %s1208 = smul.addr %s1207, 28
      %s1209 = smul.addr %s1208, 8
      %s1210 = scalar_lea.vmem %s5, %s1209
      // Predicated region
      $region48: #{cnn_forward.4} parent=39 // pred_check
        %p1211 = pneg %p144
      $region49: #{cnn_forward.4} parent=39 // pred_check_branch
        %1213 = sbr.rel (%p1211) target = $region51
      $region50: #{cnn_forward.4} parent=39 // pred_region
        _
      $region51: #{cnn_forward.4} parent=39 // pred_fallthru
        _
    $region40: #{cnn_forward.4} parent=5 // pred_fallthru
      _
    %p1214 = scmp.le.s32.totalorder 2, %s11
    // Predicated region
    $region52: #{cnn_forward.4} parent=5 // pred_check
      %p1215 = pneg %p1214
    $region53: #{cnn_forward.4} parent=5 // pred_check_branch
      %1217 = sbr.rel (%p1215) target = $region55
    $region54: #{cnn_forward.4} parent=5 // pred_region
      %s1218 = ssub.s32 %s11, 2
      // Predicated region
      $region56: #{cnn_forward.4} parent=54 // pred_check
        %p1219 = pneg %p150
      $region57: #{cnn_forward.4} parent=54 // pred_check_branch
        %1221 = sbr.rel (%p1219) target = $region59
      $region58: #{cnn_forward.4} parent=54 // pred_region
        %p1222 = scmp.lt.s32.totalorder %s17, 1
        %s1223 = scalar_select %p1222, %s17, 1
        %s1224 = smul.addr %s1223, 28
        %s1225 = smul.addr %s1224, 8
        %s1226 = scalar_lea.vmem %s5, %s1225
      $region59: #{cnn_forward.4} parent=54 // pred_fallthru
        _
    $region55: #{cnn_forward.4} parent=5 // pred_fallthru
      _
  $region6: #{cnn_forward.4} parent=0 // loop_footer
    %s15 = sadd.s32 1, %s11
  $region7: #{cnn_forward.4} parent=0 // loop_footer_branch
    %10 = sbr.rel target = $region3
  $region8: #{cnn_forward.4} parent=0 // loop_exit
    _

// kernel: cnn_forward.5
$region0: #{cnn_forward.5}
  #allocation0 [shape = 'u32[]', space=smem, size = 0x4, offset = 0x4, fixed_abs, tag = 'smem constant byte address 0x4 - core index']
  #allocation1 [shape = 'u32[72,128]{1,0:T(1,128)}', space=vmem, size = 0x9000, scoped, tag = 'internal scratch']
  %s0 = inlined_call_operand.vmem [shape: f32[2,18,10,18], index: 0, kind: input, shape index: {}]
  %s1 = inlined_call_operand.vmem [shape: f32[25,20,10], index: 1, kind: input, shape index: {}]
  %s2 = inlined_call_operand.vmem [shape: f32[20,1], index: 2, kind: input, shape index: {}]
  %s3 = inlined_call_operand.vmem [shape: f32[14,7], index: 3, kind: input, shape index: {}]
  %s4 = inlined_call_operand.vmem [shape: f32[14,7], index: 4, kind: input, shape index: {}]
  %s5 = inlined_call_operand.vmem [shape: f32[2,7,20,7], index: 5, kind: output, shape index: {}]
  %s6 = sld [smem:[#allocation0]]
  $region60: #{cnn_forward.5} parent=0
    _
  %s8 = ssub.s32 1, %s6
  %s9 = scalar_select 0, %s8, %s6
  loop: start=0, step=1, limit=4
  $region2: #{cnn_forward.5} parent=0 // loop_pre_header
    _
  $region3: #{cnn_forward.5} parent=0 // loop_header
    %s11 = sphi 0, %s15
    %p12 = scmp.ge.s32.totalorder %s11, 4
    %s21 = sphi 0, %s23
    %s24 = sphi 0, %s21
    %s25 = sphi 0, %s24
    %s41 = sphi 0, %s25
    %s45 = sphi 0, %s45
    %s47 = sphi 0, %s45
    %s48 = sphi 0, %s47
    %s62 = sphi 0, %s48
    %s66 = sphi 0, %s66
    %s68 = sphi 0, %s66
    %s69 = sphi 0, %s68
    %s83 = sphi 0, %s69
    %s87 = sphi 0, %s87
    %s89 = sphi 0, %s87
    %s90 = sphi 0, %s89
    %s104 = sphi 0, %s90
    %s108 = sphi 0, %s108
    %s110 = sphi 0, %s108
    %s111 = sphi 0, %s110
    %s125 = sphi 0, %s111
    %s131 = sphi 0, %s133
    %s134 = sphi 0, %s131
    %s135 = sphi 0, %s134
    %s151 = sphi 0, %s135
  $region4: #{cnn_forward.5} parent=0 // loop_header_branch
    %14 = sbr.rel (%p12) target = $region8
  $region5: #{cnn_forward.5} parent=0 // loop_body
    %s16 = ssub.s32 %s11, 1
    %s17 = ssub.s32 %s11, 2
    %s18 = sadd.s32 %s11, 1
    %s19 = ssub.s32 %s11, %s18
    %p20 = scmp.eq.s32.totalorder %s19, 0
    %s22 = sadd.s32 %s21, 1
    %s23 = scalar_select %p20, %s21, %s22
    %p26 = pneg %p20
    %p27 = scmp.eq.s32.totalorder %s11, 1
    %p28 = por %p26, %p27
    %p29 = scmp.ne.s32.totalorder %s21, %s24
    %p30 = scmp.eq.s32.totalorder %s11, 0
    %p31 = por %p29, %p30
    %p32 = scmp.ne.s32.totalorder %s21, %s24
    %p33 = scmp.eq.s32.totalorder %s16, 1
    %p34 = por %p32, %p33
    %p35 = scmp.ne.s32.totalorder %s24, %s25
    %p36 = scmp.eq.s32.totalorder %s16, 0
    %p37 = por %p35, %p36
    %p38 = scmp.ne.s32.totalorder %s24, %s25
    %p39 = scmp.eq.s32.totalorder %s17, 1
    %p40 = por %p38, %p39
    %p42 = scmp.ne.s32.totalorder %s25, %s41
    %p43 = scmp.eq.s32.totalorder %s17, 0
    %p44 = por %p42, %p43
    %s46 = sadd.s32 %s45, 1
    %p49 = scmp.eq.s32.totalorder %s11, 1
    %p50 = scmp.ne.s32.totalorder %s45, %s47
    %p51 = scmp.eq.s32.totalorder %s11, 0
    %p52 = por %p50, %p51
    %p53 = scmp.ne.s32.totalorder %s45, %s47
    %p54 = scmp.eq.s32.totalorder %s16, 1
    %p55 = por %p53, %p54
    %p56 = scmp.ne.s32.totalorder %s47, %s48
    %p57 = scmp.eq.s32.totalorder %s16, 0
    %p58 = por %p56, %p57
    %p59 = scmp.ne.s32.totalorder %s47, %s48
    %p60 = scmp.eq.s32.totalorder %s17, 1
    %p61 = por %p59, %p60
    %p63 = scmp.ne.s32.totalorder %s48, %s62
    %p64 = scmp.eq.s32.totalorder %s17, 0
    %p65 = por %p63, %p64
    %s67 = sadd.s32 %s66, 1
    %p70 = scmp.eq.s32.totalorder %s11, 1
    %p71 = scmp.ne.s32.totalorder %s66, %s68
    %p72 = scmp.eq.s32.totalorder %s11, 0
    %p73 = por %p71, %p72
    %p74 = scmp.ne.s32.totalorder %s66, %s68
    %p75 = scmp.eq.s32.totalorder %s16, 1
    %p76 = por %p74, %p75
    %p77 = scmp.ne.s32.totalorder %s68, %s69
    %p78 = scmp.eq.s32.totalorder %s16, 0
    %p79 = por %p77, %p78
    %p80 = scmp.ne.s32.totalorder %s68, %s69
    %p81 = scmp.eq.s32.totalorder %s17, 1
    %p82 = por %p80, %p81
    %p84 = scmp.ne.s32.totalorder %s69, %s83
    %p85 = scmp.eq.s32.totalorder %s17, 0
    %p86 = por %p84, %p85
    %s88 = sadd.s32 %s87, 1
    %p91 = scmp.eq.s32.totalorder %s11, 1
    %p92 = scmp.ne.s32.totalorder %s87, %s89
    %p93 = scmp.eq.s32.totalorder %s11, 0
    %p94 = por %p92, %p93
    %p95 = scmp.ne.s32.totalorder %s87, %s89
    %p96 = scmp.eq.s32.totalorder %s16, 1
    %p97 = por %p95, %p96
    %p98 = scmp.ne.s32.totalorder %s89, %s90
    %p99 = scmp.eq.s32.totalorder %s16, 0
    %p100 = por %p98, %p99
    %p101 = scmp.ne.s32.totalorder %s89, %s90
    %p102 = scmp.eq.s32.totalorder %s17, 1
    %p103 = por %p101, %p102
    %p105 = scmp.ne.s32.totalorder %s90, %s104
    %p106 = scmp.eq.s32.totalorder %s17, 0
    %p107 = por %p105, %p106
    %s109 = sadd.s32 %s108, 1
    %p112 = scmp.eq.s32.totalorder %s11, 1
    %p113 = scmp.ne.s32.totalorder %s108, %s110
    %p114 = scmp.eq.s32.totalorder %s11, 0
    %p115 = por %p113, %p114
    %p116 = scmp.ne.s32.totalorder %s108, %s110
    %p117 = scmp.eq.s32.totalorder %s16, 1
    %p118 = por %p116, %p117
    %p119 = scmp.ne.s32.totalorder %s110, %s111
    %p120 = scmp.eq.s32.totalorder %s16, 0
    %p121 = por %p119, %p120
    %p122 = scmp.ne.s32.totalorder %s110, %s111
    %p123 = scmp.eq.s32.totalorder %s17, 1
    %p124 = por %p122, %p123
    %p126 = scmp.ne.s32.totalorder %s111, %s125
    %p127 = scmp.eq.s32.totalorder %s17, 0
    %p128 = por %p126, %p127
    %s129 = ssub.s32 %s11, %s18
    %p130 = scmp.eq.s32.totalorder %s129, 0
    %s132 = sadd.s32 %s131, 1
    %s133 = scalar_select %p130, %s131, %s132
    %p136 = pneg %p130
    %p137 = scmp.eq.s32.totalorder %s11, 1
    %p138 = por %p136, %p137
    %p139 = scmp.ne.s32.totalorder %s131, %s134
    %p140 = scmp.eq.s32.totalorder %s11, 0
    %p141 = por %p139, %p140
    %p142 = scmp.ne.s32.totalorder %s131, %s134
    %p143 = scmp.eq.s32.totalorder %s16, 1
    %p144 = por %p142, %p143
    %p145 = scmp.ne.s32.totalorder %s134, %s135
    %p146 = scmp.eq.s32.totalorder %s16, 0
    %p147 = por %p145, %p146
    %p148 = scmp.ne.s32.totalorder %s134, %s135
    %p149 = scmp.eq.s32.totalorder %s17, 1
    %p150 = por %p148, %p149
    %p152 = scmp.ne.s32.totalorder %s135, %s151
    %p153 = scmp.eq.s32.totalorder %s17, 0
    %p154 = por %p152, %p153
    %p155 = scmp.le.s32.totalorder 1, %s11
    %p156 = scmp.lt.s32.totalorder %s11, 3
    %p157 = pnand %p155, %p156
    %p158 = pneg %p157
    // Predicated region
    $region9: #{cnn_forward.5} parent=5 // pred_check
      _
    $region10: #{cnn_forward.5} parent=5 // pred_check_branch
      %160 = sbr.rel (%p157) target = $region12
    $region11: #{cnn_forward.5} parent=5 // pred_region
      %s161 = ssub.s32 %s11, 1
      // Predicated region
      $region13: #{cnn_forward.5} parent=11 // pred_check
        %p162 = pneg %p58
      $region14: #{cnn_forward.5} parent=11 // pred_check_branch
        %164 = sbr.rel (%p162) target = $region16
      $region15: #{cnn_forward.5} parent=11 // pred_region
        _
      $region16: #{cnn_forward.5} parent=11 // pred_fallthru
        _
      // Predicated region
      $region17: #{cnn_forward.5} parent=11 // pred_check
        %p165 = pneg %p79
      $region18: #{cnn_forward.5} parent=11 // pred_check_branch
        %167 = sbr.rel (%p165) target = $region20
      $region19: #{cnn_forward.5} parent=11 // pred_region
        _
      $region20: #{cnn_forward.5} parent=11 // pred_fallthru
        _
      // Predicated region
      $region21: #{cnn_forward.5} parent=11 // pred_check
        %p168 = pneg %p100
      $region22: #{cnn_forward.5} parent=11 // pred_check_branch
        %170 = sbr.rel (%p168) target = $region24
      $region23: #{cnn_forward.5} parent=11 // pred_region
        _
      $region24: #{cnn_forward.5} parent=11 // pred_fallthru
        _
      // Predicated region
      $region25: #{cnn_forward.5} parent=11 // pred_check
        %p171 = pneg %p121
      $region26: #{cnn_forward.5} parent=11 // pred_check_branch
        %173 = sbr.rel (%p171) target = $region28
      $region27: #{cnn_forward.5} parent=11 // pred_region
        _
      $region28: #{cnn_forward.5} parent=11 // pred_fallthru
        _
    $region12: #{cnn_forward.5} parent=5 // pred_fallthru
      _
    %p174 = scmp.lt.s32.totalorder %s11, 2
    // Predicated region
    $region29: #{cnn_forward.5} parent=5 // pred_check
      %p175 = pneg %p174
    $region30: #{cnn_forward.5} parent=5 // pred_check_branch
      %177 = sbr.rel (%p175) target = $region32
    $region31: #{cnn_forward.5} parent=5 // pred_region
      // Predicated region
      $region33: #{cnn_forward.5} parent=31 // pred_check
        %p178 = pneg %p31
      $region34: #{cnn_forward.5} parent=31 // pred_check_branch
        %180 = sbr.rel (%p178) target = $region36
      $region35: #{cnn_forward.5} parent=31 // pred_region
        %p181 = scmp.lt.s32.totalorder %s11, 1
        %s182 = scalar_select %p181, %s11, 1
        %s183 = smul.addr %s182, 36
        %s184 = smul.addr %s183, 8
        %s185 = scalar_lea.vmem %s0, %s184
      $region36: #{cnn_forward.5} parent=31 // pred_fallthru
        _
    $region32: #{cnn_forward.5} parent=5 // pred_fallthru
      _
    %p186 = scmp.le.s32.totalorder 1, %s11
    %p187 = scmp.lt.s32.totalorder %s11, 3
    %p188 = pnand %p186, %p187
    %p189 = pneg %p188
    // Predicated region
    $region37: #{cnn_forward.5} parent=5 // pred_check
      _
    $region38: #{cnn_forward.5} parent=5 // pred_check_branch
      %191 = sbr.rel (%p188) target = $region40
    $region39: #{cnn_forward.5} parent=5 // pred_region
      %s192 = ssub.s32 %s11, 1
      %p193 = scmp.lt.s32.totalorder %s16, 1
      %s194 = scalar_select %p193, %s16, 1
      %s195 = smul.addr %s194, 36
      %s196 = smul.addr %s195, 8
      %s197 = scalar_lea.vmem %s0, %s196
      %p198 = pneg %p37
      %p199 = pneg %p34
      %p200 = pneg %p58
      %p201 = pneg %p55
      %p202 = pneg %p79
      %p203 = pneg %p76
      %p204 = pneg %p100
      %p205 = pneg %p97
      %p206 = pneg %p121
      %p207 = pneg %p118
      %p208 = pneg %p147
      %p209 = pneg %p144
      %p210 = scmp.lt.s32.totalorder %s16, 1
      %s211 = scalar_select %p210, %s16, 1
      %s212 = smul.addr %s211, 21
      %s213 = smul.addr %s212, 8
      %s214 = scalar_lea.vmem %s5, %s213
      %p215 = scmp.lt.s32.totalorder %s16, 1
      %s216 = scalar_select %p215, %s16, 1
      %s217 = smul.addr %s216, 36
      %s218 = smul.addr %s217, 8
      %s219 = scalar_lea.vmem %s0, %s218
      %p220 = scmp.lt.s32.totalorder %s16, 1
      %s221 = scalar_select %p220, %s16, 1
      %s222 = smul.addr %s221, 21
      %s223 = smul.addr %s222, 8
      %s224 = scalar_lea.vmem %s5, %s223
      %v225 = vld [vmem:[%s2] sm:$0xff]
      %v226 = vld [vmem:[%s2 + $0x8] sm:$0xff]
      %v227 = vld [vmem:[%s2 + $0x10] sm:$0xf]
      %v228 = vld [vmem:[%s3] sm:$0xff]
      %v229 = vld [vmem:[%s3 + $0x8] sm:$0x3f]
      %v230 = vld [vmem:[%s4] sm:$0xff]
      %v231 = vld [vmem:[%s4 + $0x8] sm:$0x3f]
      loop: start=0, step=1, limit=7
      $region41: #{cnn_forward.5} parent=39 // loop_pre_header
        _
      $region42: #{cnn_forward.5} parent=39 // loop_header
        %s233 = sphi 0, %s237
        %p234 = scmp.ge.s32.totalorder %s233, 7
      $region43: #{cnn_forward.5} parent=39 // loop_header_branch
        %236 = sbr.rel (%p234) target = $region47
      $region44: #{cnn_forward.5} parent=39 // loop_body
        %s238 = smul.u32 %s233, 2
        %s239 = sadd.s32 %s238, 1
        %s240 = smul.u32 %s238, 16
        %s241 = scalar_lea.vmem %s219, %s240
        %v242 = vld [vmem:[%s241] sm:$0xff]
        %v243 = vld [vmem:[%s241 + $0x8] sm:$0x3]
        %v244 = vld [vmem:[%s1] sm:$0xff]
        %v245 = vld [vmem:[%s1 + $0x8] sm:$0xff]
        %v246 = vld [vmem:[%s1 + $0x10] sm:$0xf]
        %s247 = scalar_lea.vmem %s1, 24
        %v248 = vld [vmem:[%s247] sm:$0xff]
        %v249 = vld [vmem:[%s247 + $0x8] sm:$0xff]
        %v250 = vld [vmem:[%s247 + $0x10] sm:$0xf]
        %253 = vrot.lane.b32.xlu0 %v242, 127
        %v254 = vpop.permute.xlu0 %253
        %255 = vrot.lane.b32.xlu0 %v243, 127
        %v256 = vpop.permute.xlu0 %255
        %vm258 = vcmask 80896
        %v260 = vsel %vm258, %v248, 0
        %v263 = vsel %vm258, %v249, 0
        %v266 = vsel %vm258, %v250, 0
        %vm268 = vcmask 1041408
        %v269 = vsel %vm268, %v256, 0
        %271 = vmatpush.msra.mxu0 0.0
        %272 = vmatpush.msra.mxu0 0.0
        %273 = vmatpush.msra.mxu0 0.0
        %274 = vmatpush.msra.mxu0 0.0
        %275 = vmatpush.msra.mxu0 0.0
        %276 = vmatpush.msra.mxu0 0.0
        %277 = vmatpush.msra.mxu0 0.0
        %278 = vmatpush.msra.mxu0 0.0
        %279 = vmatpush.msra.mxu0 0.0
        %280 = vmatpush.msra.mxu0 0.0
        %281 = vmatpush.msra.mxu0 0.0
        %282 = vmatpush.msra.mxu0 0.0
        %283 = vmatpush.msra.mxu0 0.0
        %284 = vmatpush.msra.mxu0 0.0
        %285 = vmatpush.msra.mxu0 %v269
        %286 = vmatpush.msra.mxu0 %v254
        %287 = vmatmul.f32.gmra.mxu0 %v260
        %v288 = vpop.f32.mrf.mxu0
        %v289 = vadd.f32 0.0, %v288
        %290 = vmatmul.f32.gmra.mxu0 %v263
        %v291 = vpop.f32.mrf.mxu0
        %v292 = vadd.f32 0.0, %v291
        %293 = vmatmul.f32.gmra.mxu0 %v266
        %v294 = vpop.f32.mrf.mxu0
        %v295 = vadd.f32 0.0, %v294
        %296 = vdwg.mxu0
        %v298 = vsel %vm258, %v244, 0
        %v301 = vsel %vm258, %v245, 0
        %v304 = vsel %vm258, %v246, 0
        %v306 = vsel %vm268, %v243, 0
        %308 = vmatpush.msra.mxu0 0.0
        %309 = vmatpush.msra.mxu0 0.0
        %310 = vmatpush.msra.mxu0 0.0
        %311 = vmatpush.msra.mxu0 0.0
        %312 = vmatpush.msra.mxu0 0.0
        %313 = vmatpush.msra.mxu0 0.0
        %314 = vmatpush.msra.mxu0 0.0
        %315 = vmatpush.msra.mxu0 0.0
        %316 = vmatpush.msra.mxu0 0.0
        %317 = vmatpush.msra.mxu0 0.0
        %318 = vmatpush.msra.mxu0 0.0
        %319 = vmatpush.msra.mxu0 0.0
        %320 = vmatpush.msra.mxu0 0.0
        %321 = vmatpush.msra.mxu0 0.0
        %322 = vmatpush.msra.mxu0 %v306
        %323 = vmatpush.msra.mxu0 %v242
        %324 = vmatmul.f32.gmra.mxu0 %v298
        %v325 = vpop.f32.mrf.mxu0
        %v326 = vadd.f32 %v289, %v325
        %327 = vmatmul.f32.gmra.mxu0 %v301
        %v328 = vpop.f32.mrf.mxu0
        %v329 = vadd.f32 %v292, %v328
        %330 = vmatmul.f32.gmra.mxu0 %v304
        %v331 = vpop.f32.mrf.mxu0
        %v332 = vadd.f32 %v295, %v331
        %333 = vdwg.mxu0
        %s334 = scalar_lea.vmem %s1, 48
        %v335 = vld [vmem:[%s334] sm:$0xff]
        %v336 = vld [vmem:[%s334 + $0x8] sm:$0xff]
        %v337 = vld [vmem:[%s334 + $0x10] sm:$0xf]
        %338 = vrot.lane.b32.xlu0 %v242, 126
        %v339 = vpop.permute.xlu0 %338
        %340 = vrot.lane.b32.xlu0 %v243, 126
        %v341 = vpop.permute.xlu0 %340
        %v344 = vsel %vm258, %v335, 0
        %v347 = vsel %vm258, %v336, 0
        %v350 = vsel %vm258, %v337, 0
        %v352 = vsel %vm268, %v341, 0
        %354 = vmatpush.msra.mxu0 0.0
        %355 = vmatpush.msra.mxu0 0.0
        %356 = vmatpush.msra.mxu0 0.0
        %357 = vmatpush.msra.mxu0 0.0
        %358 = vmatpush.msra.mxu0 0.0
        %359 = vmatpush.msra.mxu0 0.0
        %360 = vmatpush.msra.mxu0 0.0
        %361 = vmatpush.msra.mxu0 0.0
        %362 = vmatpush.msra.mxu0 0.0
        %363 = vmatpush.msra.mxu0 0.0
        %364 = vmatpush.msra.mxu0 0.0
        %365 = vmatpush.msra.mxu0 0.0
        %366 = vmatpush.msra.mxu0 0.0
        %367 = vmatpush.msra.mxu0 0.0
        %368 = vmatpush.msra.mxu0 %v352
        %369 = vmatpush.msra.mxu0 %v339
        %370 = vmatmul.f32.gmra.mxu0 %v344
        %v371 = vpop.f32.mrf.mxu0
        %v372 = vadd.f32 0.0, %v371
        %373 = vmatmul.f32.gmra.mxu0 %v347
        %v374 = vpop.f32.mrf.mxu0
        %v375 = vadd.f32 0.0, %v374
        %376 = vmatmul.f32.gmra.mxu0 %v350
        %v377 = vpop.f32.mrf.mxu0
        %v378 = vadd.f32 0.0, %v377
        %379 = vdwg.mxu0
        %v380 = vadd.f32 %v326, %v372
        %v381 = vadd.f32 %v329, %v375
        %v382 = vadd.f32 %v332, %v378
        %s383 = scalar_lea.vmem %s1, 72
        %v384 = vld [vmem:[%s383] sm:$0xff]
        %v385 = vld [vmem:[%s383 + $0x8] sm:$0xff]
        %v386 = vld [vmem:[%s383 + $0x10] sm:$0xf]
        %387 = vrot.lane.b32.xlu0 %v242, 125
        %v388 = vpop.permute.xlu0 %387
        %389 = vrot.lane.b32.xlu0 %v243, 125
        %v390 = vpop.permute.xlu0 %389
        %v393 = vsel %vm258, %v384, 0
        %v396 = vsel %vm258, %v385, 0
        %v399 = vsel %vm258, %v386, 0
        %v401 = vsel %vm268, %v390, 0
        %403 = vmatpush.msra.mxu0 0.0
        %404 = vmatpush.msra.mxu0 0.0
        %405 = vmatpush.msra.mxu0 0.0
        %406 = vmatpush.msra.mxu0 0.0
        %407 = vmatpush.msra.mxu0 0.0
        %408 = vmatpush.msra.mxu0 0.0
        %409 = vmatpush.msra.mxu0 0.0
        %410 = vmatpush.msra.mxu0 0.0
        %411 = vmatpush.msra.mxu0 0.0
        %412 = vmatpush.msra.mxu0 0.0
        %413 = vmatpush.msra.mxu0 0.0
        %414 = vmatpush.msra.mxu0 0.0
        %415 = vmatpush.msra.mxu0 0.0
        %416 = vmatpush.msra.mxu0 0.0
        %417 = vmatpush.msra.mxu0 %v401
        %418 = vmatpush.msra.mxu0 %v388
        %419 = vmatmul.f32.gmra.mxu0 %v393
        %v420 = vpop.f32.mrf.mxu0
        %v421 = vadd.f32 0.0, %v420
        %422 = vmatmul.f32.gmra.mxu0 %v396
        %v423 = vpop.f32.mrf.mxu0
        %v424 = vadd.f32 0.0, %v423
        %425 = vmatmul.f32.gmra.mxu0 %v399
        %v426 = vpop.f32.mrf.mxu0
        %v427 = vadd.f32 0.0, %v426
        %428 = vdwg.mxu0
        %v429 = vadd.f32 %v380, %v421
        %v430 = vadd.f32 %v381, %v424
        %v431 = vadd.f32 %v382, %v427
        %s432 = scalar_lea.vmem %s1, 96
        %v433 = vld [vmem:[%s432] sm:$0xff]
        %v434 = vld [vmem:[%s432 + $0x8] sm:$0xff]
        %v435 = vld [vmem:[%s432 + $0x10] sm:$0xf]
        %436 = vrot.lane.b32.xlu0 %v242, 124
        %v437 = vpop.permute.xlu0 %436
        %438 = vrot.lane.b32.xlu0 %v243, 124
        %v439 = vpop.permute.xlu0 %438
        %v442 = vsel %vm258, %v433, 0
        %v445 = vsel %vm258, %v434, 0
        %v448 = vsel %vm258, %v435, 0
        %v450 = vsel %vm268, %v439, 0
        %452 = vmatpush.msra.mxu0 0.0
        %453 = vmatpush.msra.mxu0 0.0
        %454 = vmatpush.msra.mxu0 0.0
        %455 = vmatpush.msra.mxu0 0.0
        %456 = vmatpush.msra.mxu0 0.0
        %457 = vmatpush.msra.mxu0 0.0
        %458 = vmatpush.msra.mxu0 0.0
        %459 = vmatpush.msra.mxu0 0.0
        %460 = vmatpush.msra.mxu0 0.0
        %461 = vmatpush.msra.mxu0 0.0
        %462 = vmatpush.msra.mxu0 0.0
        %463 = vmatpush.msra.mxu0 0.0
        %464 = vmatpush.msra.mxu0 0.0
        %465 = vmatpush.msra.mxu0 0.0
        %466 = vmatpush.msra.mxu0 %v450
        %467 = vmatpush.msra.mxu0 %v437
        %468 = vmatmul.f32.gmra.mxu0 %v442
        %v469 = vpop.f32.mrf.mxu0
        %v470 = vadd.f32 0.0, %v469
        %471 = vmatmul.f32.gmra.mxu0 %v445
        %v472 = vpop.f32.mrf.mxu0
        %v473 = vadd.f32 0.0, %v472
        %474 = vmatmul.f32.gmra.mxu0 %v448
        %v475 = vpop.f32.mrf.mxu0
        %v476 = vadd.f32 0.0, %v475
        %477 = vdwg.mxu0
        %v478 = vadd.f32 %v429, %v470
        %v479 = vadd.f32 %v430, %v473
        %v480 = vadd.f32 %v431, %v476
        %s481 = smul.u32 %s239, 16
        %s482 = scalar_lea.vmem %s219, %s481
        %v483 = vld [vmem:[%s482] sm:$0xff]
        %v484 = vld [vmem:[%s482 + $0x8] sm:$0x3]
        %s485 = scalar_lea.vmem %s1, 120
        %v486 = vld [vmem:[%s485] sm:$0xff]
        %v487 = vld [vmem:[%s485 + $0x8] sm:$0xff]
        %v488 = vld [vmem:[%s485 + $0x10] sm:$0xf]
        %v490 = vsel %vm258, %v486, 0
        %v493 = vsel %vm258, %v487, 0
        %v496 = vsel %vm258, %v488, 0
        %v499 = vsel %vm268, %v484, 0
        %501 = vmatpush.msra.mxu0 0.0
        %502 = vmatpush.msra.mxu0 0.0
        %503 = vmatpush.msra.mxu0 0.0
        %504 = vmatpush.msra.mxu0 0.0
        %505 = vmatpush.msra.mxu0 0.0
        %506 = vmatpush.msra.mxu0 0.0
        %507 = vmatpush.msra.mxu0 0.0
        %508 = vmatpush.msra.mxu0 0.0
        %509 = vmatpush.msra.mxu0 0.0
        %510 = vmatpush.msra.mxu0 0.0
        %511 = vmatpush.msra.mxu0 0.0
        %512 = vmatpush.msra.mxu0 0.0
        %513 = vmatpush.msra.mxu0 0.0
        %514 = vmatpush.msra.mxu0 0.0
        %515 = vmatpush.msra.mxu0 %v499
        %516 = vmatpush.msra.mxu0 %v483
        %517 = vmatmul.f32.gmra.mxu0 %v490
        %v518 = vpop.f32.mrf.mxu0
        %v519 = vadd.f32 0.0, %v518
        %520 = vmatmul.f32.gmra.mxu0 %v493
        %v521 = vpop.f32.mrf.mxu0
        %v522 = vadd.f32 0.0, %v521
        %523 = vmatmul.f32.gmra.mxu0 %v496
        %v524 = vpop.f32.mrf.mxu0
        %v525 = vadd.f32 0.0, %v524
        %526 = vdwg.mxu0
        %v527 = vadd.f32 %v478, %v519
        %v528 = vadd.f32 %v479, %v522
        %v529 = vadd.f32 %v480, %v525
        %s530 = scalar_lea.vmem %s1, 144
        %v531 = vld [vmem:[%s530] sm:$0xff]
        %v532 = vld [vmem:[%s530 + $0x8] sm:$0xff]
        %v533 = vld [vmem:[%s530 + $0x10] sm:$0xf]
        %535 = vrot.lane.b32.xlu0 %v483, 127
        %v536 = vpop.permute.xlu0 %535
        %537 = vrot.lane.b32.xlu0 %v484, 127
        %v538 = vpop.permute.xlu0 %537
        %v541 = vsel %vm258, %v531, 0
        %v544 = vsel %vm258, %v532, 0
        %v547 = vsel %vm258, %v533, 0
        %v549 = vsel %vm268, %v538, 0
        %551 = vmatpush.msra.mxu0 0.0
        %552 = vmatpush.msra.mxu0 0.0
        %553 = vmatpush.msra.mxu0 0.0
        %554 = vmatpush.msra.mxu0 0.0
        %555 = vmatpush.msra.mxu0 0.0
        %556 = vmatpush.msra.mxu0 0.0
        %557 = vmatpush.msra.mxu0 0.0
        %558 = vmatpush.msra.mxu0 0.0
        %559 = vmatpush.msra.mxu0 0.0
        %560 = vmatpush.msra.mxu0 0.0
        %561 = vmatpush.msra.mxu0 0.0
        %562 = vmatpush.msra.mxu0 0.0
        %563 = vmatpush.msra.mxu0 0.0
        %564 = vmatpush.msra.mxu0 0.0
        %565 = vmatpush.msra.mxu0 %v549
        %566 = vmatpush.msra.mxu0 %v536
        %567 = vmatmul.f32.gmra.mxu0 %v541
        %v568 = vpop.f32.mrf.mxu0
        %v569 = vadd.f32 0.0, %v568
        %570 = vmatmul.f32.gmra.mxu0 %v544
        %v571 = vpop.f32.mrf.mxu0
        %v572 = vadd.f32 0.0, %v571
        %573 = vmatmul.f32.gmra.mxu0 %v547
        %v574 = vpop.f32.mrf.mxu0
        %v575 = vadd.f32 0.0, %v574
        %576 = vdwg.mxu0
        %v577 = vadd.f32 %v527, %v569
        %v578 = vadd.f32 %v528, %v572
        %v579 = vadd.f32 %v529, %v575
        %s580 = scalar_lea.vmem %s1, 168
        %v581 = vld [vmem:[%s580] sm:$0xff]
        %v582 = vld [vmem:[%s580 + $0x8] sm:$0xff]
        %v583 = vld [vmem:[%s580 + $0x10] sm:$0xf]
        %584 = vrot.lane.b32.xlu0 %v483, 126
        %v585 = vpop.permute.xlu0 %584
        %586 = vrot.lane.b32.xlu0 %v484, 126
        %v587 = vpop.permute.xlu0 %586
        %v590 = vsel %vm258, %v581, 0
        %v593 = vsel %vm258, %v582, 0
        %v596 = vsel %vm258, %v583, 0
        %v598 = vsel %vm268, %v587, 0
        %600 = vmatpush.msra.mxu0 0.0
        %601 = vmatpush.msra.mxu0 0.0
        %602 = vmatpush.msra.mxu0 0.0
        %603 = vmatpush.msra.mxu0 0.0
        %604 = vmatpush.msra.mxu0 0.0
        %605 = vmatpush.msra.mxu0 0.0
        %606 = vmatpush.msra.mxu0 0.0
        %607 = vmatpush.msra.mxu0 0.0
        %608 = vmatpush.msra.mxu0 0.0
        %609 = vmatpush.msra.mxu0 0.0
        %610 = vmatpush.msra.mxu0 0.0
        %611 = vmatpush.msra.mxu0 0.0
        %612 = vmatpush.msra.mxu0 0.0
        %613 = vmatpush.msra.mxu0 0.0
        %614 = vmatpush.msra.mxu0 %v598
        %615 = vmatpush.msra.mxu0 %v585
        %616 = vmatmul.f32.gmra.mxu0 %v590
        %v617 = vpop.f32.mrf.mxu0
        %v618 = vadd.f32 0.0, %v617
        %619 = vmatmul.f32.gmra.mxu0 %v593
        %v620 = vpop.f32.mrf.mxu0
        %v621 = vadd.f32 0.0, %v620
        %622 = vmatmul.f32.gmra.mxu0 %v596
        %v623 = vpop.f32.mrf.mxu0
        %v624 = vadd.f32 0.0, %v623
        %625 = vdwg.mxu0
        %v626 = vadd.f32 %v577, %v618
        %v627 = vadd.f32 %v578, %v621
        %v628 = vadd.f32 %v579, %v624
        %s629 = scalar_lea.vmem %s1, 192
        %v630 = vld [vmem:[%s629] sm:$0xff]
        %v631 = vld [vmem:[%s629 + $0x8] sm:$0xff]
        %v632 = vld [vmem:[%s629 + $0x10] sm:$0xf]
        %633 = vrot.lane.b32.xlu0 %v483, 125
        %v634 = vpop.permute.xlu0 %633
        %635 = vrot.lane.b32.xlu0 %v484, 125
        %v636 = vpop.permute.xlu0 %635
        %v639 = vsel %vm258, %v630, 0
        %v642 = vsel %vm258, %v631, 0
        %v645 = vsel %vm258, %v632, 0
        %v647 = vsel %vm268, %v636, 0
        %649 = vmatpush.msra.mxu0 0.0
        %650 = vmatpush.msra.mxu0 0.0
        %651 = vmatpush.msra.mxu0 0.0
        %652 = vmatpush.msra.mxu0 0.0
        %653 = vmatpush.msra.mxu0 0.0
        %654 = vmatpush.msra.mxu0 0.0
        %655 = vmatpush.msra.mxu0 0.0
        %656 = vmatpush.msra.mxu0 0.0
        %657 = vmatpush.msra.mxu0 0.0
        %658 = vmatpush.msra.mxu0 0.0
        %659 = vmatpush.msra.mxu0 0.0
        %660 = vmatpush.msra.mxu0 0.0
        %661 = vmatpush.msra.mxu0 0.0
        %662 = vmatpush.msra.mxu0 0.0
        %663 = vmatpush.msra.mxu0 %v647
        %664 = vmatpush.msra.mxu0 %v634
        %665 = vmatmul.f32.gmra.mxu0 %v639
        %v666 = vpop.f32.mrf.mxu0
        %v667 = vadd.f32 0.0, %v666
        %668 = vmatmul.f32.gmra.mxu0 %v642
        %v669 = vpop.f32.mrf.mxu0
        %v670 = vadd.f32 0.0, %v669
        %671 = vmatmul.f32.gmra.mxu0 %v645
        %v672 = vpop.f32.mrf.mxu0
        %v673 = vadd.f32 0.0, %v672
        %674 = vdwg.mxu0
        %v675 = vadd.f32 %v626, %v667
        %v676 = vadd.f32 %v627, %v670
        %v677 = vadd.f32 %v628, %v673
        %s678 = scalar_lea.vmem %s1, 216
        %v679 = vld [vmem:[%s678] sm:$0xff]
        %v680 = vld [vmem:[%s678 + $0x8] sm:$0xff]
        %v681 = vld [vmem:[%s678 + $0x10] sm:$0xf]
        %682 = vrot.lane.b32.xlu0 %v483, 124
        %v683 = vpop.permute.xlu0 %682
        %684 = vrot.lane.b32.xlu0 %v484, 124
        %v685 = vpop.permute.xlu0 %684
        %v688 = vsel %vm258, %v679, 0
        %v691 = vsel %vm258, %v680, 0
        %v694 = vsel %vm258, %v681, 0
        %v696 = vsel %vm268, %v685, 0
        %698 = vmatpush.msra.mxu0 0.0
        %699 = vmatpush.msra.mxu0 0.0
        %700 = vmatpush.msra.mxu0 0.0
        %701 = vmatpush.msra.mxu0 0.0
        %702 = vmatpush.msra.mxu0 0.0
        %703 = vmatpush.msra.mxu0 0.0
        %704 = vmatpush.msra.mxu0 0.0
        %705 = vmatpush.msra.mxu0 0.0
        %706 = vmatpush.msra.mxu0 0.0
        %707 = vmatpush.msra.mxu0 0.0
        %708 = vmatpush.msra.mxu0 0.0
        %709 = vmatpush.msra.mxu0 0.0
        %710 = vmatpush.msra.mxu0 0.0
        %711 = vmatpush.msra.mxu0 0.0
        %712 = vmatpush.msra.mxu0 %v696
        %713 = vmatpush.msra.mxu0 %v683
        %714 = vmatmul.f32.gmra.mxu0 %v688
        %v715 = vpop.f32.mrf.mxu0
        %v716 = vadd.f32 0.0, %v715
        %717 = vmatmul.f32.gmra.mxu0 %v691
        %v718 = vpop.f32.mrf.mxu0
        %v719 = vadd.f32 0.0, %v718
        %720 = vmatmul.f32.gmra.mxu0 %v694
        %v721 = vpop.f32.mrf.mxu0
        %v722 = vadd.f32 0.0, %v721
        %723 = vdwg.mxu0
        %v724 = vadd.f32 %v675, %v716
        %v725 = vadd.f32 %v676, %v719
        %v726 = vadd.f32 %v677, %v722
        %s727 = sadd.s32 %s238, 2
        %s728 = smul.u32 %s727, 16
        %s729 = scalar_lea.vmem %s219, %s728
        %v730 = vld [vmem:[%s729] sm:$0xff]
        %v731 = vld [vmem:[%s729 + $0x8] sm:$0x3]
        %s732 = scalar_lea.vmem %s1, 240
        %v733 = vld [vmem:[%s732] sm:$0xff]
        %v734 = vld [vmem:[%s732 + $0x8] sm:$0xff]
        %v735 = vld [vmem:[%s732 + $0x10] sm:$0xf]
        %v737 = vsel %vm258, %v733, 0
        %v740 = vsel %vm258, %v734, 0
        %v743 = vsel %vm258, %v735, 0
        %v746 = vsel %vm268, %v731, 0
        %748 = vmatpush.msra.mxu0 0.0
        %749 = vmatpush.msra.mxu0 0.0
        %750 = vmatpush.msra.mxu0 0.0
        %751 = vmatpush.msra.mxu0 0.0
        %752 = vmatpush.msra.mxu0 0.0
        %753 = vmatpush.msra.mxu0 0.0
        %754 = vmatpush.msra.mxu0 0.0
        %755 = vmatpush.msra.mxu0 0.0
        %756 = vmatpush.msra.mxu0 0.0
        %757 = vmatpush.msra.mxu0 0.0
        %758 = vmatpush.msra.mxu0 0.0
        %759 = vmatpush.msra.mxu0 0.0
        %760 = vmatpush.msra.mxu0 0.0
        %761 = vmatpush.msra.mxu0 0.0
        %762 = vmatpush.msra.mxu0 %v746
        %763 = vmatpush.msra.mxu0 %v730
        %764 = vmatmul.f32.gmra.mxu0 %v737
        %v765 = vpop.f32.mrf.mxu0
        %v766 = vadd.f32 0.0, %v765
        %767 = vmatmul.f32.gmra.mxu0 %v740
        %v768 = vpop.f32.mrf.mxu0
        %v769 = vadd.f32 0.0, %v768
        %770 = vmatmul.f32.gmra.mxu0 %v743
        %v771 = vpop.f32.mrf.mxu0
        %v772 = vadd.f32 0.0, %v771
        %773 = vdwg.mxu0
        %v774 = vadd.f32 %v724, %v766
        %v775 = vadd.f32 %v725, %v769
        %v776 = vadd.f32 %v726, %v772
        %s777 = scalar_lea.vmem %s1, 264
        %v778 = vld [vmem:[%s777] sm:$0xff]
        %v779 = vld [vmem:[%s777 + $0x8] sm:$0xff]
        %v780 = vld [vmem:[%s777 + $0x10] sm:$0xf]
        %782 = vrot.lane.b32.xlu0 %v730, 127
        %v783 = vpop.permute.xlu0 %782
        %784 = vrot.lane.b32.xlu0 %v731, 127
        %v785 = vpop.permute.xlu0 %784
        %v788 = vsel %vm258, %v778, 0
        %v791 = vsel %vm258, %v779, 0
        %v794 = vsel %vm258, %v780, 0
        %v796 = vsel %vm268, %v785, 0
        %798 = vmatpush.msra.mxu0 0.0
        %799 = vmatpush.msra.mxu0 0.0
        %800 = vmatpush.msra.mxu0 0.0
        %801 = vmatpush.msra.mxu0 0.0
        %802 = vmatpush.msra.mxu0 0.0
        %803 = vmatpush.msra.mxu0 0.0
        %804 = vmatpush.msra.mxu0 0.0
        %805 = vmatpush.msra.mxu0 0.0
        %806 = vmatpush.msra.mxu0 0.0
        %807 = vmatpush.msra.mxu0 0.0
        %808 = vmatpush.msra.mxu0 0.0
        %809 = vmatpush.msra.mxu0 0.0
        %810 = vmatpush.msra.mxu0 0.0
        %811 = vmatpush.msra.mxu0 0.0
        %812 = vmatpush.msra.mxu0 %v796
        %813 = vmatpush.msra.mxu0 %v783
        %814 = vmatmul.f32.gmra.mxu0 %v788
        %v815 = vpop.f32.mrf.mxu0
        %v816 = vadd.f32 0.0, %v815
        %817 = vmatmul.f32.gmra.mxu0 %v791
        %v818 = vpop.f32.mrf.mxu0
        %v819 = vadd.f32 0.0, %v818
        %820 = vmatmul.f32.gmra.mxu0 %v794
        %v821 = vpop.f32.mrf.mxu0
        %v822 = vadd.f32 0.0, %v821
        %823 = vdwg.mxu0
        %v824 = vadd.f32 %v774, %v816
        %v825 = vadd.f32 %v775, %v819
        %v826 = vadd.f32 %v776, %v822
        %s827 = scalar_lea.vmem %s1, 288
        %v828 = vld [vmem:[%s827] sm:$0xff]
        %v829 = vld [vmem:[%s827 + $0x8] sm:$0xff]
        %v830 = vld [vmem:[%s827 + $0x10] sm:$0xf]
        %831 = vrot.lane.b32.xlu0 %v730, 126
        %v832 = vpop.permute.xlu0 %831
        %833 = vrot.lane.b32.xlu0 %v731, 126
        %v834 = vpop.permute.xlu0 %833
        %v837 = vsel %vm258, %v828, 0
        %v840 = vsel %vm258, %v829, 0
        %v843 = vsel %vm258, %v830, 0
        %v845 = vsel %vm268, %v834, 0
        %847 = vmatpush.msra.mxu0 0.0
        %848 = vmatpush.msra.mxu0 0.0
        %849 = vmatpush.msra.mxu0 0.0
        %850 = vmatpush.msra.mxu0 0.0
        %851 = vmatpush.msra.mxu0 0.0
        %852 = vmatpush.msra.mxu0 0.0
        %853 = vmatpush.msra.mxu0 0.0
        %854 = vmatpush.msra.mxu0 0.0
        %855 = vmatpush.msra.mxu0 0.0
        %856 = vmatpush.msra.mxu0 0.0
        %857 = vmatpush.msra.mxu0 0.0
        %858 = vmatpush.msra.mxu0 0.0
        %859 = vmatpush.msra.mxu0 0.0
        %860 = vmatpush.msra.mxu0 0.0
        %861 = vmatpush.msra.mxu0 %v845
        %862 = vmatpush.msra.mxu0 %v832
        %863 = vmatmul.f32.gmra.mxu0 %v837
        %v864 = vpop.f32.mrf.mxu0
        %v865 = vadd.f32 0.0, %v864
        %866 = vmatmul.f32.gmra.mxu0 %v840
        %v867 = vpop.f32.mrf.mxu0
        %v868 = vadd.f32 0.0, %v867
        %869 = vmatmul.f32.gmra.mxu0 %v843
        %v870 = vpop.f32.mrf.mxu0
        %v871 = vadd.f32 0.0, %v870
        %872 = vdwg.mxu0
        %v873 = vadd.f32 %v824, %v865
        %v874 = vadd.f32 %v825, %v868
        %v875 = vadd.f32 %v826, %v871
        %s876 = scalar_lea.vmem %s1, 312
        %v877 = vld [vmem:[%s876] sm:$0xff]
        %v878 = vld [vmem:[%s876 + $0x8] sm:$0xff]
        %v879 = vld [vmem:[%s876 + $0x10] sm:$0xf]
        %880 = vrot.lane.b32.xlu0 %v730, 125
        %v881 = vpop.permute.xlu0 %880
        %882 = vrot.lane.b32.xlu0 %v731, 125
        %v883 = vpop.permute.xlu0 %882
        %v886 = vsel %vm258, %v877, 0
        %v889 = vsel %vm258, %v878, 0
        %v892 = vsel %vm258, %v879, 0
        %v894 = vsel %vm268, %v883, 0
        %896 = vmatpush.msra.mxu0 0.0
        %897 = vmatpush.msra.mxu0 0.0
        %898 = vmatpush.msra.mxu0 0.0
        %899 = vmatpush.msra.mxu0 0.0
        %900 = vmatpush.msra.mxu0 0.0
        %901 = vmatpush.msra.mxu0 0.0
        %902 = vmatpush.msra.mxu0 0.0
        %903 = vmatpush.msra.mxu0 0.0
        %904 = vmatpush.msra.mxu0 0.0
        %905 = vmatpush.msra.mxu0 0.0
        %906 = vmatpush.msra.mxu0 0.0
        %907 = vmatpush.msra.mxu0 0.0
        %908 = vmatpush.msra.mxu0 0.0
        %909 = vmatpush.msra.mxu0 0.0
        %910 = vmatpush.msra.mxu0 %v894
        %911 = vmatpush.msra.mxu0 %v881
        %912 = vmatmul.f32.gmra.mxu0 %v886
        %v913 = vpop.f32.mrf.mxu0
        %v914 = vadd.f32 0.0, %v913
        %915 = vmatmul.f32.gmra.mxu0 %v889
        %v916 = vpop.f32.mrf.mxu0
        %v917 = vadd.f32 0.0, %v916
        %918 = vmatmul.f32.gmra.mxu0 %v892
        %v919 = vpop.f32.mrf.mxu0
        %v920 = vadd.f32 0.0, %v919
        %921 = vdwg.mxu0
        %v922 = vadd.f32 %v873, %v914
        %v923 = vadd.f32 %v874, %v917
        %v924 = vadd.f32 %v875, %v920
        %s925 = scalar_lea.vmem %s1, 336
        %v926 = vld [vmem:[%s925] sm:$0xff]
        %v927 = vld [vmem:[%s925 + $0x8] sm:$0xff]
        %v928 = vld [vmem:[%s925 + $0x10] sm:$0xf]
        %929 = vrot.lane.b32.xlu0 %v730, 124
        %v930 = vpop.permute.xlu0 %929
        %931 = vrot.lane.b32.xlu0 %v731, 124
        %v932 = vpop.permute.xlu0 %931
        %v935 = vsel %vm258, %v926, 0
        %v938 = vsel %vm258, %v927, 0
        %v941 = vsel %vm258, %v928, 0
        %v943 = vsel %vm268, %v932, 0
        %945 = vmatpush.msra.mxu0 0.0
        %946 = vmatpush.msra.mxu0 0.0
        %947 = vmatpush.msra.mxu0 0.0
        %948 = vmatpush.msra.mxu0 0.0
        %949 = vmatpush.msra.mxu0 0.0
        %950 = vmatpush.msra.mxu0 0.0
        %951 = vmatpush.msra.mxu0 0.0
        %952 = vmatpush.msra.mxu0 0.0
        %953 = vmatpush.msra.mxu0 0.0
        %954 = vmatpush.msra.mxu0 0.0
        %955 = vmatpush.msra.mxu0 0.0
        %956 = vmatpush.msra.mxu0 0.0
        %957 = vmatpush.msra.mxu0 0.0
        %958 = vmatpush.msra.mxu0 0.0
        %959 = vmatpush.msra.mxu0 %v943
        %960 = vmatpush.msra.mxu0 %v930
        %961 = vmatmul.f32.gmra.mxu0 %v935
        %v962 = vpop.f32.mrf.mxu0
        %v963 = vadd.f32 0.0, %v962
        %964 = vmatmul.f32.gmra.mxu0 %v938
        %v965 = vpop.f32.mrf.mxu0
        %v966 = vadd.f32 0.0, %v965
        %967 = vmatmul.f32.gmra.mxu0 %v941
        %v968 = vpop.f32.mrf.mxu0
        %v969 = vadd.f32 0.0, %v968
        %970 = vdwg.mxu0
        %v971 = vadd.f32 %v922, %v963
        %v972 = vadd.f32 %v923, %v966
        %v973 = vadd.f32 %v924, %v969
        %s974 = sadd.s32 %s238, 3
        %s975 = smul.u32 %s974, 16
        %s976 = scalar_lea.vmem %s219, %s975
        %v977 = vld [vmem:[%s976] sm:$0xff]
        %v978 = vld [vmem:[%s976 + $0x8] sm:$0x3]
        %s979 = scalar_lea.vmem %s1, 360
        %v980 = vld [vmem:[%s979] sm:$0xff]
        %v981 = vld [vmem:[%s979 + $0x8] sm:$0xff]
        %v982 = vld [vmem:[%s979 + $0x10] sm:$0xf]
        %v984 = vsel %vm258, %v980, 0
        %v987 = vsel %vm258, %v981, 0
        %v990 = vsel %vm258, %v982, 0
        %v993 = vsel %vm268, %v978, 0
        %995 = vmatpush.msra.mxu0 0.0
        %996 = vmatpush.msra.mxu0 0.0
        %997 = vmatpush.msra.mxu0 0.0
        %998 = vmatpush.msra.mxu0 0.0
        %999 = vmatpush.msra.mxu0 0.0
        %1000 = vmatpush.msra.mxu0 0.0
        %1001 = vmatpush.msra.mxu0 0.0
        %1002 = vmatpush.msra.mxu0 0.0
        %1003 = vmatpush.msra.mxu0 0.0
        %1004 = vmatpush.msra.mxu0 0.0
        %1005 = vmatpush.msra.mxu0 0.0
        %1006 = vmatpush.msra.mxu0 0.0
        %1007 = vmatpush.msra.mxu0 0.0
        %1008 = vmatpush.msra.mxu0 0.0
        %1009 = vmatpush.msra.mxu0 %v993
        %1010 = vmatpush.msra.mxu0 %v977
        %1011 = vmatmul.f32.gmra.mxu0 %v984
        %v1012 = vpop.f32.mrf.mxu0
        %v1013 = vadd.f32 0.0, %v1012
        %1014 = vmatmul.f32.gmra.mxu0 %v987
        %v1015 = vpop.f32.mrf.mxu0
        %v1016 = vadd.f32 0.0, %v1015
        %1017 = vmatmul.f32.gmra.mxu0 %v990
        %v1018 = vpop.f32.mrf.mxu0
        %v1019 = vadd.f32 0.0, %v1018
        %1020 = vdwg.mxu0
        %v1021 = vadd.f32 %v971, %v1013
        %v1022 = vadd.f32 %v972, %v1016
        %v1023 = vadd.f32 %v973, %v1019
        %s1024 = scalar_lea.vmem %s1, 384
        %v1025 = vld [vmem:[%s1024] sm:$0xff]
        %v1026 = vld [vmem:[%s1024 + $0x8] sm:$0xff]
        %v1027 = vld [vmem:[%s1024 + $0x10] sm:$0xf]
        %1029 = vrot.lane.b32.xlu0 %v977, 127
        %v1030 = vpop.permute.xlu0 %1029
        %1031 = vrot.lane.b32.xlu0 %v978, 127
        %v1032 = vpop.permute.xlu0 %1031
        %v1035 = vsel %vm258, %v1025, 0
        %v1038 = vsel %vm258, %v1026, 0
        %v1041 = vsel %vm258, %v1027, 0
        %v1043 = vsel %vm268, %v1032, 0
        %1045 = vmatpush.msra.mxu0 0.0
        %1046 = vmatpush.msra.mxu0 0.0
        %1047 = vmatpush.msra.mxu0 0.0
        %1048 = vmatpush.msra.mxu0 0.0
        %1049 = vmatpush.msra.mxu0 0.0
        %1050 = vmatpush.msra.mxu0 0.0
        %1051 = vmatpush.msra.mxu0 0.0
        %1052 = vmatpush.msra.mxu0 0.0
        %1053 = vmatpush.msra.mxu0 0.0
        %1054 = vmatpush.msra.mxu0 0.0
        %1055 = vmatpush.msra.mxu0 0.0
        %1056 = vmatpush.msra.mxu0 0.0
        %1057 = vmatpush.msra.mxu0 0.0
        %1058 = vmatpush.msra.mxu0 0.0
        %1059 = vmatpush.msra.mxu0 %v1043
        %1060 = vmatpush.msra.mxu0 %v1030
        %1061 = vmatmul.f32.gmra.mxu0 %v1035
        %v1062 = vpop.f32.mrf.mxu0
        %v1063 = vadd.f32 0.0, %v1062
        %1064 = vmatmul.f32.gmra.mxu0 %v1038
        %v1065 = vpop.f32.mrf.mxu0
        %v1066 = vadd.f32 0.0, %v1065
        %1067 = vmatmul.f32.gmra.mxu0 %v1041
        %v1068 = vpop.f32.mrf.mxu0
        %v1069 = vadd.f32 0.0, %v1068
        %1070 = vdwg.mxu0
        %v1071 = vadd.f32 %v1021, %v1063
        %v1072 = vadd.f32 %v1022, %v1066
        %v1073 = vadd.f32 %v1023, %v1069
        %s1074 = scalar_lea.vmem %s1, 408
        %v1075 = vld [vmem:[%s1074] sm:$0xff]
        %v1076 = vld [vmem:[%s1074 + $0x8] sm:$0xff]
        %v1077 = vld [vmem:[%s1074 + $0x10] sm:$0xf]
        %1078 = vrot.lane.b32.xlu0 %v977, 126
        %v1079 = vpop.permute.xlu0 %1078
        %1080 = vrot.lane.b32.xlu0 %v978, 126
        %v1081 = vpop.permute.xlu0 %1080
        %v1084 = vsel %vm258, %v1075, 0
        %v1087 = vsel %vm258, %v1076, 0
        %v1090 = vsel %vm258, %v1077, 0
        %v1092 = vsel %vm268, %v1081, 0
        %1094 = vmatpush.msra.mxu0 0.0
        %1095 = vmatpush.msra.mxu0 0.0
        %1096 = vmatpush.msra.mxu0 0.0
        %1097 = vmatpush.msra.mxu0 0.0
        %1098 = vmatpush.msra.mxu0 0.0
        %1099 = vmatpush.msra.mxu0 0.0
        %1100 = vmatpush.msra.mxu0 0.0
        %1101 = vmatpush.msra.mxu0 0.0
        %1102 = vmatpush.msra.mxu0 0.0
        %1103 = vmatpush.msra.mxu0 0.0
        %1104 = vmatpush.msra.mxu0 0.0
        %1105 = vmatpush.msra.mxu0 0.0
        %1106 = vmatpush.msra.mxu0 0.0
        %1107 = vmatpush.msra.mxu0 0.0
        %1108 = vmatpush.msra.mxu0 %v1092
        %1109 = vmatpush.msra.mxu0 %v1079
        %1110 = vmatmul.f32.gmra.mxu0 %v1084
        %v1111 = vpop.f32.mrf.mxu0
        %v1112 = vadd.f32 0.0, %v1111
        %1113 = vmatmul.f32.gmra.mxu0 %v1087
        %v1114 = vpop.f32.mrf.mxu0
        %v1115 = vadd.f32 0.0, %v1114
        %1116 = vmatmul.f32.gmra.mxu0 %v1090
        %v1117 = vpop.f32.mrf.mxu0
        %v1118 = vadd.f32 0.0, %v1117
        %1119 = vdwg.mxu0
        %v1120 = vadd.f32 %v1071, %v1112
        %v1121 = vadd.f32 %v1072, %v1115
        %v1122 = vadd.f32 %v1073, %v1118
        %s1123 = scalar_lea.vmem %s1, 432
        %v1124 = vld [vmem:[%s1123] sm:$0xff]
        %v1125 = vld [vmem:[%s1123 + $0x8] sm:$0xff]
        %v1126 = vld [vmem:[%s1123 + $0x10] sm:$0xf]
        %1127 = vrot.lane.b32.xlu0 %v977, 125
        %v1128 = vpop.permute.xlu0 %1127
        %1129 = vrot.lane.b32.xlu0 %v978, 125
        %v1130 = vpop.permute.xlu0 %1129
        %v1133 = vsel %vm258, %v1124, 0
        %v1136 = vsel %vm258, %v1125, 0
        %v1139 = vsel %vm258, %v1126, 0
        %v1141 = vsel %vm268, %v1130, 0
        %1143 = vmatpush.msra.mxu0 0.0
        %1144 = vmatpush.msra.mxu0 0.0
        %1145 = vmatpush.msra.mxu0 0.0
        %1146 = vmatpush.msra.mxu0 0.0
        %1147 = vmatpush.msra.mxu0 0.0
        %1148 = vmatpush.msra.mxu0 0.0
        %1149 = vmatpush.msra.mxu0 0.0
        %1150 = vmatpush.msra.mxu0 0.0
        %1151 = vmatpush.msra.mxu0 0.0
        %1152 = vmatpush.msra.mxu0 0.0
        %1153 = vmatpush.msra.mxu0 0.0
        %1154 = vmatpush.msra.mxu0 0.0
        %1155 = vmatpush.msra.mxu0 0.0
        %1156 = vmatpush.msra.mxu0 0.0
        %1157 = vmatpush.msra.mxu0 %v1141
        %1158 = vmatpush.msra.mxu0 %v1128
        %1159 = vmatmul.f32.gmra.mxu0 %v1133
        %v1160 = vpop.f32.mrf.mxu0
        %v1161 = vadd.f32 0.0, %v1160
        %1162 = vmatmul.f32.gmra.mxu0 %v1136
        %v1163 = vpop.f32.mrf.mxu0
        %v1164 = vadd.f32 0.0, %v1163
        %1165 = vmatmul.f32.gmra.mxu0 %v1139
        %v1166 = vpop.f32.mrf.mxu0
        %v1167 = vadd.f32 0.0, %v1166
        %1168 = vdwg.mxu0
        %v1169 = vadd.f32 %v1120, %v1161
        %v1170 = vadd.f32 %v1121, %v1164
        %v1171 = vadd.f32 %v1122, %v1167
        %s1172 = scalar_lea.vmem %s1, 456
        %v1173 = vld [vmem:[%s1172] sm:$0xff]
        %v1174 = vld [vmem:[%s1172 + $0x8] sm:$0xff]
        %v1175 = vld [vmem:[%s1172 + $0x10] sm:$0xf]
        %1176 = vrot.lane.b32.xlu0 %v977, 124
        %v1177 = vpop.permute.xlu0 %1176
        %1178 = vrot.lane.b32.xlu0 %v978, 124
        %v1179 = vpop.permute.xlu0 %1178
        %v1182 = vsel %vm258, %v1173, 0
        %v1185 = vsel %vm258, %v1174, 0
        %v1188 = vsel %vm258, %v1175, 0
        %v1190 = vsel %vm268, %v1179, 0
        %1192 = vmatpush.msra.mxu0 0.0
        %1193 = vmatpush.msra.mxu0 0.0
        %1194 = vmatpush.msra.mxu0 0.0
        %1195 = vmatpush.msra.mxu0 0.0
        %1196 = vmatpush.msra.mxu0 0.0
        %1197 = vmatpush.msra.mxu0 0.0
        %1198 = vmatpush.msra.mxu0 0.0
        %1199 = vmatpush.msra.mxu0 0.0
        %1200 = vmatpush.msra.mxu0 0.0
        %1201 = vmatpush.msra.mxu0 0.0
        %1202 = vmatpush.msra.mxu0 0.0
        %1203 = vmatpush.msra.mxu0 0.0
        %1204 = vmatpush.msra.mxu0 0.0
        %1205 = vmatpush.msra.mxu0 0.0
        %1206 = vmatpush.msra.mxu0 %v1190
        %1207 = vmatpush.msra.mxu0 %v1177
        %1208 = vmatmul.f32.gmra.mxu0 %v1182
        %v1209 = vpop.f32.mrf.mxu0
        %v1210 = vadd.f32 0.0, %v1209
        %1211 = vmatmul.f32.gmra.mxu0 %v1185
        %v1212 = vpop.f32.mrf.mxu0
        %v1213 = vadd.f32 0.0, %v1212
        %1214 = vmatmul.f32.gmra.mxu0 %v1188
        %v1215 = vpop.f32.mrf.mxu0
        %v1216 = vadd.f32 0.0, %v1215
        %1217 = vdwg.mxu0
        %v1218 = vadd.f32 %v1169, %v1210
        %v1219 = vadd.f32 %v1170, %v1213
        %v1220 = vadd.f32 %v1171, %v1216
        %s1221 = sadd.s32 %s238, 4
        %s1222 = smul.u32 %s1221, 16
        %s1223 = scalar_lea.vmem %s219, %s1222
        %v1224 = vld [vmem:[%s1223] sm:$0xff]
        %v1225 = vld [vmem:[%s1223 + $0x8] sm:$0x3]
        %s1226 = scalar_lea.vmem %s1, 480
        %v1227 = vld [vmem:[%s1226] sm:$0xff]
        %v1228 = vld [vmem:[%s1226 + $0x8] sm:$0xff]
        %v1229 = vld [vmem:[%s1226 + $0x10] sm:$0xf]
        %v1231 = vsel %vm258, %v1227, 0
        %v1234 = vsel %vm258, %v1228, 0
        %v1237 = vsel %vm258, %v1229, 0
        %v1240 = vsel %vm268, %v1225, 0
        %1242 = vmatpush.msra.mxu0 0.0
        %1243 = vmatpush.msra.mxu0 0.0
        %1244 = vmatpush.msra.mxu0 0.0
        %1245 = vmatpush.msra.mxu0 0.0
        %1246 = vmatpush.msra.mxu0 0.0
        %1247 = vmatpush.msra.mxu0 0.0
        %1248 = vmatpush.msra.mxu0 0.0
        %1249 = vmatpush.msra.mxu0 0.0
        %1250 = vmatpush.msra.mxu0 0.0
        %1251 = vmatpush.msra.mxu0 0.0
        %1252 = vmatpush.msra.mxu0 0.0
        %1253 = vmatpush.msra.mxu0 0.0
        %1254 = vmatpush.msra.mxu0 0.0
        %1255 = vmatpush.msra.mxu0 0.0
        %1256 = vmatpush.msra.mxu0 %v1240
        %1257 = vmatpush.msra.mxu0 %v1224
        %1258 = vmatmul.f32.gmra.mxu0 %v1231
        %v1259 = vpop.f32.mrf.mxu0
        %v1260 = vadd.f32 0.0, %v1259
        %1261 = vmatmul.f32.gmra.mxu0 %v1234
        %v1262 = vpop.f32.mrf.mxu0
        %v1263 = vadd.f32 0.0, %v1262
        %1264 = vmatmul.f32.gmra.mxu0 %v1237
        %v1265 = vpop.f32.mrf.mxu0
        %v1266 = vadd.f32 0.0, %v1265
        %1267 = vdwg.mxu0
        %v1268 = vadd.f32 %v1218, %v1260
        %v1269 = vadd.f32 %v1219, %v1263
        %v1270 = vadd.f32 %v1220, %v1266
        %s1271 = scalar_lea.vmem %s1, 504
        %v1272 = vld [vmem:[%s1271] sm:$0xff]
        %v1273 = vld [vmem:[%s1271 + $0x8] sm:$0xff]
        %v1274 = vld [vmem:[%s1271 + $0x10] sm:$0xf]
        %1276 = vrot.lane.b32.xlu0 %v1224, 127
        %v1277 = vpop.permute.xlu0 %1276
        %1278 = vrot.lane.b32.xlu0 %v1225, 127
        %v1279 = vpop.permute.xlu0 %1278
        %v1282 = vsel %vm258, %v1272, 0
        %v1285 = vsel %vm258, %v1273, 0
        %v1288 = vsel %vm258, %v1274, 0
        %v1290 = vsel %vm268, %v1279, 0
        %1292 = vmatpush.msra.mxu0 0.0
        %1293 = vmatpush.msra.mxu0 0.0
        %1294 = vmatpush.msra.mxu0 0.0
        %1295 = vmatpush.msra.mxu0 0.0
        %1296 = vmatpush.msra.mxu0 0.0
        %1297 = vmatpush.msra.mxu0 0.0
        %1298 = vmatpush.msra.mxu0 0.0
        %1299 = vmatpush.msra.mxu0 0.0
        %1300 = vmatpush.msra.mxu0 0.0
        %1301 = vmatpush.msra.mxu0 0.0
        %1302 = vmatpush.msra.mxu0 0.0
        %1303 = vmatpush.msra.mxu0 0.0
        %1304 = vmatpush.msra.mxu0 0.0
        %1305 = vmatpush.msra.mxu0 0.0
        %1306 = vmatpush.msra.mxu0 %v1290
        %1307 = vmatpush.msra.mxu0 %v1277
        %1308 = vmatmul.f32.gmra.mxu0 %v1282
        %v1309 = vpop.f32.mrf.mxu0
        %v1310 = vadd.f32 0.0, %v1309
        %1311 = vmatmul.f32.gmra.mxu0 %v1285
        %v1312 = vpop.f32.mrf.mxu0
        %v1313 = vadd.f32 0.0, %v1312
        %1314 = vmatmul.f32.gmra.mxu0 %v1288
        %v1315 = vpop.f32.mrf.mxu0
        %v1316 = vadd.f32 0.0, %v1315
        %1317 = vdwg.mxu0
        %v1318 = vadd.f32 %v1268, %v1310
        %v1319 = vadd.f32 %v1269, %v1313
        %v1320 = vadd.f32 %v1270, %v1316
        %s1321 = scalar_lea.vmem %s1, 528
        %v1322 = vld [vmem:[%s1321] sm:$0xff]
        %v1323 = vld [vmem:[%s1321 + $0x8] sm:$0xff]
        %v1324 = vld [vmem:[%s1321 + $0x10] sm:$0xf]
        %1325 = vrot.lane.b32.xlu0 %v1224, 126
        %v1326 = vpop.permute.xlu0 %1325
        %1327 = vrot.lane.b32.xlu0 %v1225, 126
        %v1328 = vpop.permute.xlu0 %1327
        %v1331 = vsel %vm258, %v1322, 0
        %v1334 = vsel %vm258, %v1323, 0
        %v1337 = vsel %vm258, %v1324, 0
        %v1339 = vsel %vm268, %v1328, 0
        %1341 = vmatpush.msra.mxu0 0.0
        %1342 = vmatpush.msra.mxu0 0.0
        %1343 = vmatpush.msra.mxu0 0.0
        %1344 = vmatpush.msra.mxu0 0.0
        %1345 = vmatpush.msra.mxu0 0.0
        %1346 = vmatpush.msra.mxu0 0.0
        %1347 = vmatpush.msra.mxu0 0.0
        %1348 = vmatpush.msra.mxu0 0.0
        %1349 = vmatpush.msra.mxu0 0.0
        %1350 = vmatpush.msra.mxu0 0.0
        %1351 = vmatpush.msra.mxu0 0.0
        %1352 = vmatpush.msra.mxu0 0.0
        %1353 = vmatpush.msra.mxu0 0.0
        %1354 = vmatpush.msra.mxu0 0.0
        %1355 = vmatpush.msra.mxu0 %v1339
        %1356 = vmatpush.msra.mxu0 %v1326
        %1357 = vmatmul.f32.gmra.mxu0 %v1331
        %v1358 = vpop.f32.mrf.mxu0
        %v1359 = vadd.f32 0.0, %v1358
        %1360 = vmatmul.f32.gmra.mxu0 %v1334
        %v1361 = vpop.f32.mrf.mxu0
        %v1362 = vadd.f32 0.0, %v1361
        %1363 = vmatmul.f32.gmra.mxu0 %v1337
        %v1364 = vpop.f32.mrf.mxu0
        %v1365 = vadd.f32 0.0, %v1364
        %1366 = vdwg.mxu0
        %v1367 = vadd.f32 %v1318, %v1359
        %v1368 = vadd.f32 %v1319, %v1362
        %v1369 = vadd.f32 %v1320, %v1365
        %s1370 = scalar_lea.vmem %s1, 552
        %v1371 = vld [vmem:[%s1370] sm:$0xff]
        %v1372 = vld [vmem:[%s1370 + $0x8] sm:$0xff]
        %v1373 = vld [vmem:[%s1370 + $0x10] sm:$0xf]
        %1374 = vrot.lane.b32.xlu0 %v1224, 125
        %v1375 = vpop.permute.xlu0 %1374
        %1376 = vrot.lane.b32.xlu0 %v1225, 125
        %v1377 = vpop.permute.xlu0 %1376
        %v1380 = vsel %vm258, %v1371, 0
        %v1383 = vsel %vm258, %v1372, 0
        %v1386 = vsel %vm258, %v1373, 0
        %v1388 = vsel %vm268, %v1377, 0
        %1390 = vmatpush.msra.mxu0 0.0
        %1391 = vmatpush.msra.mxu0 0.0
        %1392 = vmatpush.msra.mxu0 0.0
        %1393 = vmatpush.msra.mxu0 0.0
        %1394 = vmatpush.msra.mxu0 0.0
        %1395 = vmatpush.msra.mxu0 0.0
        %1396 = vmatpush.msra.mxu0 0.0
        %1397 = vmatpush.msra.mxu0 0.0
        %1398 = vmatpush.msra.mxu0 0.0
        %1399 = vmatpush.msra.mxu0 0.0
        %1400 = vmatpush.msra.mxu0 0.0
        %1401 = vmatpush.msra.mxu0 0.0
        %1402 = vmatpush.msra.mxu0 0.0
        %1403 = vmatpush.msra.mxu0 0.0
        %1404 = vmatpush.msra.mxu0 %v1388
        %1405 = vmatpush.msra.mxu0 %v1375
        %1406 = vmatmul.f32.gmra.mxu0 %v1380
        %v1407 = vpop.f32.mrf.mxu0
        %v1408 = vadd.f32 0.0, %v1407
        %1409 = vmatmul.f32.gmra.mxu0 %v1383
        %v1410 = vpop.f32.mrf.mxu0
        %v1411 = vadd.f32 0.0, %v1410
        %1412 = vmatmul.f32.gmra.mxu0 %v1386
        %v1413 = vpop.f32.mrf.mxu0
        %v1414 = vadd.f32 0.0, %v1413
        %1415 = vdwg.mxu0
        %v1416 = vadd.f32 %v1367, %v1408
        %v1417 = vadd.f32 %v1368, %v1411
        %v1418 = vadd.f32 %v1369, %v1414
        %s1419 = scalar_lea.vmem %s1, 576
        %v1420 = vld [vmem:[%s1419] sm:$0xff]
        %v1421 = vld [vmem:[%s1419 + $0x8] sm:$0xff]
        %v1422 = vld [vmem:[%s1419 + $0x10] sm:$0xf]
        %1423 = vrot.lane.b32.xlu0 %v1224, 124
        %v1424 = vpop.permute.xlu0 %1423
        %1425 = vrot.lane.b32.xlu0 %v1225, 124
        %v1426 = vpop.permute.xlu0 %1425
        %v1429 = vsel %vm258, %v1420, 0
        %v1432 = vsel %vm258, %v1421, 0
        %v1435 = vsel %vm258, %v1422, 0
        %v1437 = vsel %vm268, %v1426, 0
        %1439 = vmatpush.msra.mxu0 0.0
        %1440 = vmatpush.msra.mxu0 0.0
        %1441 = vmatpush.msra.mxu0 0.0
        %1442 = vmatpush.msra.mxu0 0.0
        %1443 = vmatpush.msra.mxu0 0.0
        %1444 = vmatpush.msra.mxu0 0.0
        %1445 = vmatpush.msra.mxu0 0.0
        %1446 = vmatpush.msra.mxu0 0.0
        %1447 = vmatpush.msra.mxu0 0.0
        %1448 = vmatpush.msra.mxu0 0.0
        %1449 = vmatpush.msra.mxu0 0.0
        %1450 = vmatpush.msra.mxu0 0.0
        %1451 = vmatpush.msra.mxu0 0.0
        %1452 = vmatpush.msra.mxu0 0.0
        %1453 = vmatpush.msra.mxu0 %v1437
        %1454 = vmatpush.msra.mxu0 %v1424
        %1455 = vmatmul.f32.gmra.mxu0 %v1429
        %v1456 = vpop.f32.mrf.mxu0
        %v1457 = vadd.f32 0.0, %v1456
        %1458 = vmatmul.f32.gmra.mxu0 %v1432
        %v1459 = vpop.f32.mrf.mxu0
        %v1460 = vadd.f32 0.0, %v1459
        %1461 = vmatmul.f32.gmra.mxu0 %v1435
        %v1462 = vpop.f32.mrf.mxu0
        %v1463 = vadd.f32 0.0, %v1462
        %1464 = vdwg.mxu0
        %v1465 = vadd.f32 %v1416, %v1457
        %v1466 = vadd.f32 %v1417, %v1460
        %v1467 = vadd.f32 %v1418, %v1463
        %1469 = vset.pattern.permute.xlu0 0
        %1470 = vperm.xlu0 %1469, %v225
        %v1471 = vpop.permute.xlu0 %1470
        %1474 = vset.pattern.permute.xlu0 0
        %1475 = vperm.xlu0 %1474, %v226
        %v1476 = vpop.permute.xlu0 %1475
        %1479 = vset.pattern.permute.xlu0 0
        %1480 = vperm.xlu0 %1479, %v227
        %v1481 = vpop.permute.xlu0 %1480
        %v1483 = vadd.f32 %v1465, %v1471
        %v1484 = vadd.f32 %v1466, %v1476
        %v1485 = vadd.f32 %v1467, %v1481
        %v1486 = vmax.f32 %v1483, 0.0
        %v1487 = vmax.f32 %v1484, 0.0
        %v1488 = vmax.f32 %v1485, 0.0
        %1489 = vmatpush.msra.mxu0 0.0
        %1490 = vmatpush.msra.mxu0 0.0
        %1491 = vmatpush.msra.mxu0 0.0
        %1492 = vmatpush.msra.mxu0 0.0
        %1493 = vmatpush.msra.mxu0 0.0
        %1494 = vmatpush.msra.mxu0 0.0
        %1495 = vmatpush.msra.mxu0 0.0
        %1496 = vmatpush.msra.mxu0 0.0
        %1497 = vmatpush.msra.mxu0 0.0
        %1498 = vmatpush.msra.mxu0 0.0
        %1499 = vmatpush.msra.mxu0 0.0
        %1500 = vmatpush.msra.mxu0 0.0
        %1501 = vmatpush.msra.mxu0 0.0
        %1502 = vmatpush.msra.mxu0 0.0
        %1503 = vmatpush.msra.mxu0 %v549
        %1504 = vmatpush.msra.mxu0 %v536
        %1505 = vmatmul.f32.gmra.mxu0 %v260
        %v1506 = vpop.f32.mrf.mxu0
        %v1507 = vadd.f32 0.0, %v1506
        %1508 = vmatmul.f32.gmra.mxu0 %v263
        %v1509 = vpop.f32.mrf.mxu0
        %v1510 = vadd.f32 0.0, %v1509
        %1511 = vmatmul.f32.gmra.mxu0 %v266
        %v1512 = vpop.f32.mrf.mxu0
        %v1513 = vadd.f32 0.0, %v1512
        %1514 = vdwg.mxu0
        %1515 = vmatpush.msra.mxu0 0.0
        %1516 = vmatpush.msra.mxu0 0.0
        %1517 = vmatpush.msra.mxu0 0.0
        %1518 = vmatpush.msra.mxu0 0.0
        %1519 = vmatpush.msra.mxu0 0.0
        %1520 = vmatpush.msra.mxu0 0.0
        %1521 = vmatpush.msra.mxu0 0.0
        %1522 = vmatpush.msra.mxu0 0.0
        %1523 = vmatpush.msra.mxu0 0.0
        %1524 = vmatpush.msra.mxu0 0.0
        %1525 = vmatpush.msra.mxu0 0.0
        %1526 = vmatpush.msra.mxu0 0.0
        %1527 = vmatpush.msra.mxu0 0.0
        %1528 = vmatpush.msra.mxu0 0.0
        %1529 = vmatpush.msra.mxu0 %v499
        %1530 = vmatpush.msra.mxu0 %v483
        %1531 = vmatmul.f32.gmra.mxu0 %v298
        %v1532 = vpop.f32.mrf.mxu0
        %v1533 = vadd.f32 %v1507, %v1532
        %1534 = vmatmul.f32.gmra.mxu0 %v301
        %v1535 = vpop.f32.mrf.mxu0
        %v1536 = vadd.f32 %v1510, %v1535
        %1537 = vmatmul.f32.gmra.mxu0 %v304
        %v1538 = vpop.f32.mrf.mxu0
        %v1539 = vadd.f32 %v1513, %v1538
        %1540 = vdwg.mxu0
        %1541 = vmatpush.msra.mxu0 0.0
        %1542 = vmatpush.msra.mxu0 0.0
        %1543 = vmatpush.msra.mxu0 0.0
        %1544 = vmatpush.msra.mxu0 0.0
        %1545 = vmatpush.msra.mxu0 0.0
        %1546 = vmatpush.msra.mxu0 0.0
        %1547 = vmatpush.msra.mxu0 0.0
        %1548 = vmatpush.msra.mxu0 0.0
        %1549 = vmatpush.msra.mxu0 0.0
        %1550 = vmatpush.msra.mxu0 0.0
        %1551 = vmatpush.msra.mxu0 0.0
        %1552 = vmatpush.msra.mxu0 0.0
        %1553 = vmatpush.msra.mxu0 0.0
        %1554 = vmatpush.msra.mxu0 0.0
        %1555 = vmatpush.msra.mxu0 %v598
        %1556 = vmatpush.msra.mxu0 %v585
        %1557 = vmatmul.f32.gmra.mxu0 %v344
        %v1558 = vpop.f32.mrf.mxu0
        %v1559 = vadd.f32 0.0, %v1558
        %1560 = vmatmul.f32.gmra.mxu0 %v347
        %v1561 = vpop.f32.mrf.mxu0
        %v1562 = vadd.f32 0.0, %v1561
        %1563 = vmatmul.f32.gmra.mxu0 %v350
        %v1564 = vpop.f32.mrf.mxu0
        %v1565 = vadd.f32 0.0, %v1564
        %1566 = vdwg.mxu0
        %v1567 = vadd.f32 %v1533, %v1559
        %v1568 = vadd.f32 %v1536, %v1562
        %v1569 = vadd.f32 %v1539, %v1565
        %1570 = vmatpush.msra.mxu0 0.0
        %1571 = vmatpush.msra.mxu0 0.0
        %1572 = vmatpush.msra.mxu0 0.0
        %1573 = vmatpush.msra.mxu0 0.0
        %1574 = vmatpush.msra.mxu0 0.0
        %1575 = vmatpush.msra.mxu0 0.0
        %1576 = vmatpush.msra.mxu0 0.0
        %1577 = vmatpush.msra.mxu0 0.0
        %1578 = vmatpush.msra.mxu0 0.0
        %1579 = vmatpush.msra.mxu0 0.0
        %1580 = vmatpush.msra.mxu0 0.0
        %1581 = vmatpush.msra.mxu0 0.0
        %1582 = vmatpush.msra.mxu0 0.0
        %1583 = vmatpush.msra.mxu0 0.0
        %1584 = vmatpush.msra.mxu0 %v647
        %1585 = vmatpush.msra.mxu0 %v634
        %1586 = vmatmul.f32.gmra.mxu0 %v393
        %v1587 = vpop.f32.mrf.mxu0
        %v1588 = vadd.f32 0.0, %v1587
        %1589 = vmatmul.f32.gmra.mxu0 %v396
        %v1590 = vpop.f32.mrf.mxu0
        %v1591 = vadd.f32 0.0, %v1590
        %1592 = vmatmul.f32.gmra.mxu0 %v399
        %v1593 = vpop.f32.mrf.mxu0
        %v1594 = vadd.f32 0.0, %v1593
        %1595 = vdwg.mxu0
        %v1596 = vadd.f32 %v1567, %v1588
        %v1597 = vadd.f32 %v1568, %v1591
        %v1598 = vadd.f32 %v1569, %v1594
        %1599 = vmatpush.msra.mxu0 0.0
        %1600 = vmatpush.msra.mxu0 0.0
        %1601 = vmatpush.msra.mxu0 0.0
        %1602 = vmatpush.msra.mxu0 0.0
        %1603 = vmatpush.msra.mxu0 0.0
        %1604 = vmatpush.msra.mxu0 0.0
        %1605 = vmatpush.msra.mxu0 0.0
        %1606 = vmatpush.msra.mxu0 0.0
        %1607 = vmatpush.msra.mxu0 0.0
        %1608 = vmatpush.msra.mxu0 0.0
        %1609 = vmatpush.msra.mxu0 0.0
        %1610 = vmatpush.msra.mxu0 0.0
        %1611 = vmatpush.msra.mxu0 0.0
        %1612 = vmatpush.msra.mxu0 0.0
        %1613 = vmatpush.msra.mxu0 %v696
        %1614 = vmatpush.msra.mxu0 %v683
        %1615 = vmatmul.f32.gmra.mxu0 %v442
        %v1616 = vpop.f32.mrf.mxu0
        %v1617 = vadd.f32 0.0, %v1616
        %1618 = vmatmul.f32.gmra.mxu0 %v445
        %v1619 = vpop.f32.mrf.mxu0
        %v1620 = vadd.f32 0.0, %v1619
        %1621 = vmatmul.f32.gmra.mxu0 %v448
        %v1622 = vpop.f32.mrf.mxu0
        %v1623 = vadd.f32 0.0, %v1622
        %1624 = vdwg.mxu0
        %v1625 = vadd.f32 %v1596, %v1617
        %v1626 = vadd.f32 %v1597, %v1620
        %v1627 = vadd.f32 %v1598, %v1623
        %1628 = vmatpush.msra.mxu0 0.0
        %1629 = vmatpush.msra.mxu0 0.0
        %1630 = vmatpush.msra.mxu0 0.0
        %1631 = vmatpush.msra.mxu0 0.0
        %1632 = vmatpush.msra.mxu0 0.0
        %1633 = vmatpush.msra.mxu0 0.0
        %1634 = vmatpush.msra.mxu0 0.0
        %1635 = vmatpush.msra.mxu0 0.0
        %1636 = vmatpush.msra.mxu0 0.0
        %1637 = vmatpush.msra.mxu0 0.0
        %1638 = vmatpush.msra.mxu0 0.0
        %1639 = vmatpush.msra.mxu0 0.0
        %1640 = vmatpush.msra.mxu0 0.0
        %1641 = vmatpush.msra.mxu0 0.0
        %1642 = vmatpush.msra.mxu0 %v746
        %1643 = vmatpush.msra.mxu0 %v730
        %1644 = vmatmul.f32.gmra.mxu0 %v490
        %v1645 = vpop.f32.mrf.mxu0
        %v1646 = vadd.f32 0.0, %v1645
        %1647 = vmatmul.f32.gmra.mxu0 %v493
        %v1648 = vpop.f32.mrf.mxu0
        %v1649 = vadd.f32 0.0, %v1648
        %1650 = vmatmul.f32.gmra.mxu0 %v496
        %v1651 = vpop.f32.mrf.mxu0
        %v1652 = vadd.f32 0.0, %v1651
        %1653 = vdwg.mxu0
        %v1654 = vadd.f32 %v1625, %v1646
        %v1655 = vadd.f32 %v1626, %v1649
        %v1656 = vadd.f32 %v1627, %v1652
        %1657 = vmatpush.msra.mxu0 0.0
        %1658 = vmatpush.msra.mxu0 0.0
        %1659 = vmatpush.msra.mxu0 0.0
        %1660 = vmatpush.msra.mxu0 0.0
        %1661 = vmatpush.msra.mxu0 0.0
        %1662 = vmatpush.msra.mxu0 0.0
        %1663 = vmatpush.msra.mxu0 0.0
        %1664 = vmatpush.msra.mxu0 0.0
        %1665 = vmatpush.msra.mxu0 0.0
        %1666 = vmatpush.msra.mxu0 0.0
        %1667 = vmatpush.msra.mxu0 0.0
        %1668 = vmatpush.msra.mxu0 0.0
        %1669 = vmatpush.msra.mxu0 0.0
        %1670 = vmatpush.msra.mxu0 0.0
        %1671 = vmatpush.msra.mxu0 %v796
        %1672 = vmatpush.msra.mxu0 %v783
        %1673 = vmatmul.f32.gmra.mxu0 %v541
        %v1674 = vpop.f32.mrf.mxu0
        %v1675 = vadd.f32 0.0, %v1674
        %1676 = vmatmul.f32.gmra.mxu0 %v544
        %v1677 = vpop.f32.mrf.mxu0
        %v1678 = vadd.f32 0.0, %v1677
        %1679 = vmatmul.f32.gmra.mxu0 %v547
        %v1680 = vpop.f32.mrf.mxu0
        %v1681 = vadd.f32 0.0, %v1680
        %1682 = vdwg.mxu0
        %v1683 = vadd.f32 %v1654, %v1675
        %v1684 = vadd.f32 %v1655, %v1678
        %v1685 = vadd.f32 %v1656, %v1681
        %1686 = vmatpush.msra.mxu0 0.0
        %1687 = vmatpush.msra.mxu0 0.0
        %1688 = vmatpush.msra.mxu0 0.0
        %1689 = vmatpush.msra.mxu0 0.0
        %1690 = vmatpush.msra.mxu0 0.0
        %1691 = vmatpush.msra.mxu0 0.0
        %1692 = vmatpush.msra.mxu0 0.0
        %1693 = vmatpush.msra.mxu0 0.0
        %1694 = vmatpush.msra.mxu0 0.0
        %1695 = vmatpush.msra.mxu0 0.0
        %1696 = vmatpush.msra.mxu0 0.0
        %1697 = vmatpush.msra.mxu0 0.0
        %1698 = vmatpush.msra.mxu0 0.0
        %1699 = vmatpush.msra.mxu0 0.0
        %1700 = vmatpush.msra.mxu0 %v845
        %1701 = vmatpush.msra.mxu0 %v832
        %1702 = vmatmul.f32.gmra.mxu0 %v590
        %v1703 = vpop.f32.mrf.mxu0
        %v1704 = vadd.f32 0.0, %v1703
        %1705 = vmatmul.f32.gmra.mxu0 %v593
        %v1706 = vpop.f32.mrf.mxu0
        %v1707 = vadd.f32 0.0, %v1706
        %1708 = vmatmul.f32.gmra.mxu0 %v596
        %v1709 = vpop.f32.mrf.mxu0
        %v1710 = vadd.f32 0.0, %v1709
        %1711 = vdwg.mxu0
        %v1712 = vadd.f32 %v1683, %v1704
        %v1713 = vadd.f32 %v1684, %v1707
        %v1714 = vadd.f32 %v1685, %v1710
        %1715 = vmatpush.msra.mxu0 0.0
        %1716 = vmatpush.msra.mxu0 0.0
        %1717 = vmatpush.msra.mxu0 0.0
        %1718 = vmatpush.msra.mxu0 0.0
        %1719 = vmatpush.msra.mxu0 0.0
        %1720 = vmatpush.msra.mxu0 0.0
        %1721 = vmatpush.msra.mxu0 0.0
        %1722 = vmatpush.msra.mxu0 0.0
        %1723 = vmatpush.msra.mxu0 0.0
        %1724 = vmatpush.msra.mxu0 0.0
        %1725 = vmatpush.msra.mxu0 0.0
        %1726 = vmatpush.msra.mxu0 0.0
        %1727 = vmatpush.msra.mxu0 0.0
        %1728 = vmatpush.msra.mxu0 0.0
        %1729 = vmatpush.msra.mxu0 %v894
        %1730 = vmatpush.msra.mxu0 %v881
        %1731 = vmatmul.f32.gmra.mxu0 %v639
        %v1732 = vpop.f32.mrf.mxu0
        %v1733 = vadd.f32 0.0, %v1732
        %1734 = vmatmul.f32.gmra.mxu0 %v642
        %v1735 = vpop.f32.mrf.mxu0
        %v1736 = vadd.f32 0.0, %v1735
        %1737 = vmatmul.f32.gmra.mxu0 %v645
        %v1738 = vpop.f32.mrf.mxu0
        %v1739 = vadd.f32 0.0, %v1738
        %1740 = vdwg.mxu0
        %v1741 = vadd.f32 %v1712, %v1733
        %v1742 = vadd.f32 %v1713, %v1736
        %v1743 = vadd.f32 %v1714, %v1739
        %1744 = vmatpush.msra.mxu0 0.0
        %1745 = vmatpush.msra.mxu0 0.0
        %1746 = vmatpush.msra.mxu0 0.0
        %1747 = vmatpush.msra.mxu0 0.0
        %1748 = vmatpush.msra.mxu0 0.0
        %1749 = vmatpush.msra.mxu0 0.0
        %1750 = vmatpush.msra.mxu0 0.0
        %1751 = vmatpush.msra.mxu0 0.0
        %1752 = vmatpush.msra.mxu0 0.0
        %1753 = vmatpush.msra.mxu0 0.0
        %1754 = vmatpush.msra.mxu0 0.0
        %1755 = vmatpush.msra.mxu0 0.0
        %1756 = vmatpush.msra.mxu0 0.0
        %1757 = vmatpush.msra.mxu0 0.0
        %1758 = vmatpush.msra.mxu0 %v943
        %1759 = vmatpush.msra.mxu0 %v930
        %1760 = vmatmul.f32.gmra.mxu0 %v688
        %v1761 = vpop.f32.mrf.mxu0
        %v1762 = vadd.f32 0.0, %v1761
        %1763 = vmatmul.f32.gmra.mxu0 %v691
        %v1764 = vpop.f32.mrf.mxu0
        %v1765 = vadd.f32 0.0, %v1764
        %1766 = vmatmul.f32.gmra.mxu0 %v694
        %v1767 = vpop.f32.mrf.mxu0
        %v1768 = vadd.f32 0.0, %v1767
        %1769 = vdwg.mxu0
        %v1770 = vadd.f32 %v1741, %v1762
        %v1771 = vadd.f32 %v1742, %v1765
        %v1772 = vadd.f32 %v1743, %v1768
        %1773 = vmatpush.msra.mxu0 0.0
        %1774 = vmatpush.msra.mxu0 0.0
        %1775 = vmatpush.msra.mxu0 0.0
        %1776 = vmatpush.msra.mxu0 0.0
        %1777 = vmatpush.msra.mxu0 0.0
        %1778 = vmatpush.msra.mxu0 0.0
        %1779 = vmatpush.msra.mxu0 0.0
        %1780 = vmatpush.msra.mxu0 0.0
        %1781 = vmatpush.msra.mxu0 0.0
        %1782 = vmatpush.msra.mxu0 0.0
        %1783 = vmatpush.msra.mxu0 0.0
        %1784 = vmatpush.msra.mxu0 0.0
        %1785 = vmatpush.msra.mxu0 0.0
        %1786 = vmatpush.msra.mxu0 0.0
        %1787 = vmatpush.msra.mxu0 %v993
        %1788 = vmatpush.msra.mxu0 %v977
        %1789 = vmatmul.f32.gmra.mxu0 %v737
        %v1790 = vpop.f32.mrf.mxu0
        %v1791 = vadd.f32 0.0, %v1790
        %1792 = vmatmul.f32.gmra.mxu0 %v740
        %v1793 = vpop.f32.mrf.mxu0
        %v1794 = vadd.f32 0.0, %v1793
        %1795 = vmatmul.f32.gmra.mxu0 %v743
        %v1796 = vpop.f32.mrf.mxu0
        %v1797 = vadd.f32 0.0, %v1796
        %1798 = vdwg.mxu0
        %v1799 = vadd.f32 %v1770, %v1791
        %v1800 = vadd.f32 %v1771, %v1794
        %v1801 = vadd.f32 %v1772, %v1797
        %1802 = vmatpush.msra.mxu0 0.0
        %1803 = vmatpush.msra.mxu0 0.0
        %1804 = vmatpush.msra.mxu0 0.0
        %1805 = vmatpush.msra.mxu0 0.0
        %1806 = vmatpush.msra.mxu0 0.0
        %1807 = vmatpush.msra.mxu0 0.0
        %1808 = vmatpush.msra.mxu0 0.0
        %1809 = vmatpush.msra.mxu0 0.0
        %1810 = vmatpush.msra.mxu0 0.0
        %1811 = vmatpush.msra.mxu0 0.0
        %1812 = vmatpush.msra.mxu0 0.0
        %1813 = vmatpush.msra.mxu0 0.0
        %1814 = vmatpush.msra.mxu0 0.0
        %1815 = vmatpush.msra.mxu0 0.0
        %1816 = vmatpush.msra.mxu0 %v1043
        %1817 = vmatpush.msra.mxu0 %v1030
        %1818 = vmatmul.f32.gmra.mxu0 %v788
        %v1819 = vpop.f32.mrf.mxu0
        %v1820 = vadd.f32 0.0, %v1819
        %1821 = vmatmul.f32.gmra.mxu0 %v791
        %v1822 = vpop.f32.mrf.mxu0
        %v1823 = vadd.f32 0.0, %v1822
        %1824 = vmatmul.f32.gmra.mxu0 %v794
        %v1825 = vpop.f32.mrf.mxu0
        %v1826 = vadd.f32 0.0, %v1825
        %1827 = vdwg.mxu0
        %v1828 = vadd.f32 %v1799, %v1820
        %v1829 = vadd.f32 %v1800, %v1823
        %v1830 = vadd.f32 %v1801, %v1826
        %1831 = vmatpush.msra.mxu0 0.0
        %1832 = vmatpush.msra.mxu0 0.0
        %1833 = vmatpush.msra.mxu0 0.0
        %1834 = vmatpush.msra.mxu0 0.0
        %1835 = vmatpush.msra.mxu0 0.0
        %1836 = vmatpush.msra.mxu0 0.0
        %1837 = vmatpush.msra.mxu0 0.0
        %1838 = vmatpush.msra.mxu0 0.0
        %1839 = vmatpush.msra.mxu0 0.0
        %1840 = vmatpush.msra.mxu0 0.0
        %1841 = vmatpush.msra.mxu0 0.0
        %1842 = vmatpush.msra.mxu0 0.0
        %1843 = vmatpush.msra.mxu0 0.0
        %1844 = vmatpush.msra.mxu0 0.0
        %1845 = vmatpush.msra.mxu0 %v1092
        %1846 = vmatpush.msra.mxu0 %v1079
        %1847 = vmatmul.f32.gmra.mxu0 %v837
        %v1848 = vpop.f32.mrf.mxu0
        %v1849 = vadd.f32 0.0, %v1848
        %1850 = vmatmul.f32.gmra.mxu0 %v840
        %v1851 = vpop.f32.mrf.mxu0
        %v1852 = vadd.f32 0.0, %v1851
        %1853 = vmatmul.f32.gmra.mxu0 %v843
        %v1854 = vpop.f32.mrf.mxu0
        %v1855 = vadd.f32 0.0, %v1854
        %1856 = vdwg.mxu0
        %v1857 = vadd.f32 %v1828, %v1849
        %v1858 = vadd.f32 %v1829, %v1852
        %v1859 = vadd.f32 %v1830, %v1855
        %1860 = vmatpush.msra.mxu0 0.0
        %1861 = vmatpush.msra.mxu0 0.0
        %1862 = vmatpush.msra.mxu0 0.0
        %1863 = vmatpush.msra.mxu0 0.0
        %1864 = vmatpush.msra.mxu0 0.0
        %1865 = vmatpush.msra.mxu0 0.0
        %1866 = vmatpush.msra.mxu0 0.0
        %1867 = vmatpush.msra.mxu0 0.0
        %1868 = vmatpush.msra.mxu0 0.0
        %1869 = vmatpush.msra.mxu0 0.0
        %1870 = vmatpush.msra.mxu0 0.0
        %1871 = vmatpush.msra.mxu0 0.0
        %1872 = vmatpush.msra.mxu0 0.0
        %1873 = vmatpush.msra.mxu0 0.0
        %1874 = vmatpush.msra.mxu0 %v1141
        %1875 = vmatpush.msra.mxu0 %v1128
        %1876 = vmatmul.f32.gmra.mxu0 %v886
        %v1877 = vpop.f32.mrf.mxu0
        %v1878 = vadd.f32 0.0, %v1877
        %1879 = vmatmul.f32.gmra.mxu0 %v889
        %v1880 = vpop.f32.mrf.mxu0
        %v1881 = vadd.f32 0.0, %v1880
        %1882 = vmatmul.f32.gmra.mxu0 %v892
        %v1883 = vpop.f32.mrf.mxu0
        %v1884 = vadd.f32 0.0, %v1883
        %1885 = vdwg.mxu0
        %v1886 = vadd.f32 %v1857, %v1878
        %v1887 = vadd.f32 %v1858, %v1881
        %v1888 = vadd.f32 %v1859, %v1884
        %1889 = vmatpush.msra.mxu0 0.0
        %1890 = vmatpush.msra.mxu0 0.0
        %1891 = vmatpush.msra.mxu0 0.0
        %1892 = vmatpush.msra.mxu0 0.0
        %1893 = vmatpush.msra.mxu0 0.0
        %1894 = vmatpush.msra.mxu0 0.0
        %1895 = vmatpush.msra.mxu0 0.0
        %1896 = vmatpush.msra.mxu0 0.0
        %1897 = vmatpush.msra.mxu0 0.0
        %1898 = vmatpush.msra.mxu0 0.0
        %1899 = vmatpush.msra.mxu0 0.0
        %1900 = vmatpush.msra.mxu0 0.0
        %1901 = vmatpush.msra.mxu0 0.0
        %1902 = vmatpush.msra.mxu0 0.0
        %1903 = vmatpush.msra.mxu0 %v1190
        %1904 = vmatpush.msra.mxu0 %v1177
        %1905 = vmatmul.f32.gmra.mxu0 %v935
        %v1906 = vpop.f32.mrf.mxu0
        %v1907 = vadd.f32 0.0, %v1906
        %1908 = vmatmul.f32.gmra.mxu0 %v938
        %v1909 = vpop.f32.mrf.mxu0
        %v1910 = vadd.f32 0.0, %v1909
        %1911 = vmatmul.f32.gmra.mxu0 %v941
        %v1912 = vpop.f32.mrf.mxu0
        %v1913 = vadd.f32 0.0, %v1912
        %1914 = vdwg.mxu0
        %v1915 = vadd.f32 %v1886, %v1907
        %v1916 = vadd.f32 %v1887, %v1910
        %v1917 = vadd.f32 %v1888, %v1913
        %1918 = vmatpush.msra.mxu0 0.0
        %1919 = vmatpush.msra.mxu0 0.0
        %1920 = vmatpush.msra.mxu0 0.0
        %1921 = vmatpush.msra.mxu0 0.0
        %1922 = vmatpush.msra.mxu0 0.0
        %1923 = vmatpush.msra.mxu0 0.0
        %1924 = vmatpush.msra.mxu0 0.0
        %1925 = vmatpush.msra.mxu0 0.0
        %1926 = vmatpush.msra.mxu0 0.0
        %1927 = vmatpush.msra.mxu0 0.0
        %1928 = vmatpush.msra.mxu0 0.0
        %1929 = vmatpush.msra.mxu0 0.0
        %1930 = vmatpush.msra.mxu0 0.0
        %1931 = vmatpush.msra.mxu0 0.0
        %1932 = vmatpush.msra.mxu0 %v1240
        %1933 = vmatpush.msra.mxu0 %v1224
        %1934 = vmatmul.f32.gmra.mxu0 %v984
        %v1935 = vpop.f32.mrf.mxu0
        %v1936 = vadd.f32 0.0, %v1935
        %1937 = vmatmul.f32.gmra.mxu0 %v987
        %v1938 = vpop.f32.mrf.mxu0
        %v1939 = vadd.f32 0.0, %v1938
        %1940 = vmatmul.f32.gmra.mxu0 %v990
        %v1941 = vpop.f32.mrf.mxu0
        %v1942 = vadd.f32 0.0, %v1941
        %1943 = vdwg.mxu0
        %v1944 = vadd.f32 %v1915, %v1936
        %v1945 = vadd.f32 %v1916, %v1939
        %v1946 = vadd.f32 %v1917, %v1942
        %1947 = vmatpush.msra.mxu0 0.0
        %1948 = vmatpush.msra.mxu0 0.0
        %1949 = vmatpush.msra.mxu0 0.0
        %1950 = vmatpush.msra.mxu0 0.0
        %1951 = vmatpush.msra.mxu0 0.0
        %1952 = vmatpush.msra.mxu0 0.0
        %1953 = vmatpush.msra.mxu0 0.0
        %1954 = vmatpush.msra.mxu0 0.0
        %1955 = vmatpush.msra.mxu0 0.0
        %1956 = vmatpush.msra.mxu0 0.0
        %1957 = vmatpush.msra.mxu0 0.0
        %1958 = vmatpush.msra.mxu0 0.0
        %1959 = vmatpush.msra.mxu0 0.0
        %1960 = vmatpush.msra.mxu0 0.0
        %1961 = vmatpush.msra.mxu0 %v1290
        %1962 = vmatpush.msra.mxu0 %v1277
        %1963 = vmatmul.f32.gmra.mxu0 %v1035
        %v1964 = vpop.f32.mrf.mxu0
        %v1965 = vadd.f32 0.0, %v1964
        %1966 = vmatmul.f32.gmra.mxu0 %v1038
        %v1967 = vpop.f32.mrf.mxu0
        %v1968 = vadd.f32 0.0, %v1967
        %1969 = vmatmul.f32.gmra.mxu0 %v1041
        %v1970 = vpop.f32.mrf.mxu0
        %v1971 = vadd.f32 0.0, %v1970
        %1972 = vdwg.mxu0
        %v1973 = vadd.f32 %v1944, %v1965
        %v1974 = vadd.f32 %v1945, %v1968
        %v1975 = vadd.f32 %v1946, %v1971
        %1976 = vmatpush.msra.mxu0 0.0
        %1977 = vmatpush.msra.mxu0 0.0
        %1978 = vmatpush.msra.mxu0 0.0
        %1979 = vmatpush.msra.mxu0 0.0
        %1980 = vmatpush.msra.mxu0 0.0
        %1981 = vmatpush.msra.mxu0 0.0
        %1982 = vmatpush.msra.mxu0 0.0
        %1983 = vmatpush.msra.mxu0 0.0
        %1984 = vmatpush.msra.mxu0 0.0
        %1985 = vmatpush.msra.mxu0 0.0
        %1986 = vmatpush.msra.mxu0 0.0
        %1987 = vmatpush.msra.mxu0 0.0
        %1988 = vmatpush.msra.mxu0 0.0
        %1989 = vmatpush.msra.mxu0 0.0
        %1990 = vmatpush.msra.mxu0 %v1339
        %1991 = vmatpush.msra.mxu0 %v1326
        %1992 = vmatmul.f32.gmra.mxu0 %v1084
        %v1993 = vpop.f32.mrf.mxu0
        %v1994 = vadd.f32 0.0, %v1993
        %1995 = vmatmul.f32.gmra.mxu0 %v1087
        %v1996 = vpop.f32.mrf.mxu0
        %v1997 = vadd.f32 0.0, %v1996
        %1998 = vmatmul.f32.gmra.mxu0 %v1090
        %v1999 = vpop.f32.mrf.mxu0
        %v2000 = vadd.f32 0.0, %v1999
        %2001 = vdwg.mxu0
        %v2002 = vadd.f32 %v1973, %v1994
        %v2003 = vadd.f32 %v1974, %v1997
        %v2004 = vadd.f32 %v1975, %v2000
        %2005 = vmatpush.msra.mxu0 0.0
        %2006 = vmatpush.msra.mxu0 0.0
        %2007 = vmatpush.msra.mxu0 0.0
        %2008 = vmatpush.msra.mxu0 0.0
        %2009 = vmatpush.msra.mxu0 0.0
        %2010 = vmatpush.msra.mxu0 0.0
        %2011 = vmatpush.msra.mxu0 0.0
        %2012 = vmatpush.msra.mxu0 0.0
        %2013 = vmatpush.msra.mxu0 0.0
        %2014 = vmatpush.msra.mxu0 0.0
        %2015 = vmatpush.msra.mxu0 0.0
        %2016 = vmatpush.msra.mxu0 0.0
        %2017 = vmatpush.msra.mxu0 0.0
        %2018 = vmatpush.msra.mxu0 0.0
        %2019 = vmatpush.msra.mxu0 %v1388
        %2020 = vmatpush.msra.mxu0 %v1375
        %2021 = vmatmul.f32.gmra.mxu0 %v1133
        %v2022 = vpop.f32.mrf.mxu0
        %v2023 = vadd.f32 0.0, %v2022
        %2024 = vmatmul.f32.gmra.mxu0 %v1136
        %v2025 = vpop.f32.mrf.mxu0
        %v2026 = vadd.f32 0.0, %v2025
        %2027 = vmatmul.f32.gmra.mxu0 %v1139
        %v2028 = vpop.f32.mrf.mxu0
        %v2029 = vadd.f32 0.0, %v2028
        %2030 = vdwg.mxu0
        %v2031 = vadd.f32 %v2002, %v2023
        %v2032 = vadd.f32 %v2003, %v2026
        %v2033 = vadd.f32 %v2004, %v2029
        %2034 = vmatpush.msra.mxu0 0.0
        %2035 = vmatpush.msra.mxu0 0.0
        %2036 = vmatpush.msra.mxu0 0.0
        %2037 = vmatpush.msra.mxu0 0.0
        %2038 = vmatpush.msra.mxu0 0.0
        %2039 = vmatpush.msra.mxu0 0.0
        %2040 = vmatpush.msra.mxu0 0.0
        %2041 = vmatpush.msra.mxu0 0.0
        %2042 = vmatpush.msra.mxu0 0.0
        %2043 = vmatpush.msra.mxu0 0.0
        %2044 = vmatpush.msra.mxu0 0.0
        %2045 = vmatpush.msra.mxu0 0.0
        %2046 = vmatpush.msra.mxu0 0.0
        %2047 = vmatpush.msra.mxu0 0.0
        %2048 = vmatpush.msra.mxu0 %v1437
        %2049 = vmatpush.msra.mxu0 %v1424
        %2050 = vmatmul.f32.gmra.mxu0 %v1182
        %v2051 = vpop.f32.mrf.mxu0
        %v2052 = vadd.f32 0.0, %v2051
        %2053 = vmatmul.f32.gmra.mxu0 %v1185
        %v2054 = vpop.f32.mrf.mxu0
        %v2055 = vadd.f32 0.0, %v2054
        %2056 = vmatmul.f32.gmra.mxu0 %v1188
        %v2057 = vpop.f32.mrf.mxu0
        %v2058 = vadd.f32 0.0, %v2057
        %2059 = vdwg.mxu0
        %v2060 = vadd.f32 %v2031, %v2052
        %v2061 = vadd.f32 %v2032, %v2055
        %v2062 = vadd.f32 %v2033, %v2058
        %s2063 = sadd.s32 %s238, 5
        %s2064 = smul.u32 %s2063, 16
        %s2065 = scalar_lea.vmem %s219, %s2064
        %v2066 = vld [vmem:[%s2065] sm:$0xff]
        %v2067 = vld [vmem:[%s2065 + $0x8] sm:$0x3]
        %v2069 = vsel %vm268, %v2067, 0
        %2071 = vmatpush.msra.mxu0 0.0
        %2072 = vmatpush.msra.mxu0 0.0
        %2073 = vmatpush.msra.mxu0 0.0
        %2074 = vmatpush.msra.mxu0 0.0
        %2075 = vmatpush.msra.mxu0 0.0
        %2076 = vmatpush.msra.mxu0 0.0
        %2077 = vmatpush.msra.mxu0 0.0
        %2078 = vmatpush.msra.mxu0 0.0
        %2079 = vmatpush.msra.mxu0 0.0
        %2080 = vmatpush.msra.mxu0 0.0
        %2081 = vmatpush.msra.mxu0 0.0
        %2082 = vmatpush.msra.mxu0 0.0
        %2083 = vmatpush.msra.mxu0 0.0
        %2084 = vmatpush.msra.mxu0 0.0
        %2085 = vmatpush.msra.mxu0 %v2069
        %2086 = vmatpush.msra.mxu0 %v2066
        %2087 = vmatmul.f32.gmra.mxu0 %v1231
        %v2088 = vpop.f32.mrf.mxu0
        %v2089 = vadd.f32 0.0, %v2088
        %2090 = vmatmul.f32.gmra.mxu0 %v1234
        %v2091 = vpop.f32.mrf.mxu0
        %v2092 = vadd.f32 0.0, %v2091
        %2093 = vmatmul.f32.gmra.mxu0 %v1237
        %v2094 = vpop.f32.mrf.mxu0
        %v2095 = vadd.f32 0.0, %v2094
        %2096 = vdwg.mxu0
        %v2097 = vadd.f32 %v2060, %v2089
        %v2098 = vadd.f32 %v2061, %v2092
        %v2099 = vadd.f32 %v2062, %v2095
        %2101 = vrot.lane.b32.xlu0 %v2066, 127
        %v2102 = vpop.permute.xlu0 %2101
        %2103 = vrot.lane.b32.xlu0 %v2067, 127
        %v2104 = vpop.permute.xlu0 %2103
        %v2106 = vsel %vm268, %v2104, 0
        %2108 = vmatpush.msra.mxu0 0.0
        %2109 = vmatpush.msra.mxu0 0.0
        %2110 = vmatpush.msra.mxu0 0.0
        %2111 = vmatpush.msra.mxu0 0.0
        %2112 = vmatpush.msra.mxu0 0.0
        %2113 = vmatpush.msra.mxu0 0.0
        %2114 = vmatpush.msra.mxu0 0.0
        %2115 = vmatpush.msra.mxu0 0.0
        %2116 = vmatpush.msra.mxu0 0.0
        %2117 = vmatpush.msra.mxu0 0.0
        %2118 = vmatpush.msra.mxu0 0.0
        %2119 = vmatpush.msra.mxu0 0.0
        %2120 = vmatpush.msra.mxu0 0.0
        %2121 = vmatpush.msra.mxu0 0.0
        %2122 = vmatpush.msra.mxu0 %v2106
        %2123 = vmatpush.msra.mxu0 %v2102
        %2124 = vmatmul.f32.gmra.mxu0 %v1282
        %v2125 = vpop.f32.mrf.mxu0
        %v2126 = vadd.f32 0.0, %v2125
        %2127 = vmatmul.f32.gmra.mxu0 %v1285
        %v2128 = vpop.f32.mrf.mxu0
        %v2129 = vadd.f32 0.0, %v2128
        %2130 = vmatmul.f32.gmra.mxu0 %v1288
        %v2131 = vpop.f32.mrf.mxu0
        %v2132 = vadd.f32 0.0, %v2131
        %2133 = vdwg.mxu0
        %v2134 = vadd.f32 %v2097, %v2126
        %v2135 = vadd.f32 %v2098, %v2129
        %v2136 = vadd.f32 %v2099, %v2132
        %2137 = vrot.lane.b32.xlu0 %v2066, 126
        %v2138 = vpop.permute.xlu0 %2137
        %2139 = vrot.lane.b32.xlu0 %v2067, 126
        %v2140 = vpop.permute.xlu0 %2139
        %v2142 = vsel %vm268, %v2140, 0
        %2144 = vmatpush.msra.mxu0 0.0
        %2145 = vmatpush.msra.mxu0 0.0
        %2146 = vmatpush.msra.mxu0 0.0
        %2147 = vmatpush.msra.mxu0 0.0
        %2148 = vmatpush.msra.mxu0 0.0
        %2149 = vmatpush.msra.mxu0 0.0
        %2150 = vmatpush.msra.mxu0 0.0
        %2151 = vmatpush.msra.mxu0 0.0
        %2152 = vmatpush.msra.mxu0 0.0
        %2153 = vmatpush.msra.mxu0 0.0
        %2154 = vmatpush.msra.mxu0 0.0
        %2155 = vmatpush.msra.mxu0 0.0
        %2156 = vmatpush.msra.mxu0 0.0
        %2157 = vmatpush.msra.mxu0 0.0
        %2158 = vmatpush.msra.mxu0 %v2142
        %2159 = vmatpush.msra.mxu0 %v2138
        %2160 = vmatmul.f32.gmra.mxu0 %v1331
        %v2161 = vpop.f32.mrf.mxu0
        %v2162 = vadd.f32 0.0, %v2161
        %2163 = vmatmul.f32.gmra.mxu0 %v1334
        %v2164 = vpop.f32.mrf.mxu0
        %v2165 = vadd.f32 0.0, %v2164
        %2166 = vmatmul.f32.gmra.mxu0 %v1337
        %v2167 = vpop.f32.mrf.mxu0
        %v2168 = vadd.f32 0.0, %v2167
        %2169 = vdwg.mxu0
        %v2170 = vadd.f32 %v2134, %v2162
        %v2171 = vadd.f32 %v2135, %v2165
        %v2172 = vadd.f32 %v2136, %v2168
        %2173 = vrot.lane.b32.xlu0 %v2066, 125
        %v2174 = vpop.permute.xlu0 %2173
        %2175 = vrot.lane.b32.xlu0 %v2067, 125
        %v2176 = vpop.permute.xlu0 %2175
        %v2178 = vsel %vm268, %v2176, 0
        %2180 = vmatpush.msra.mxu0 0.0
        %2181 = vmatpush.msra.mxu0 0.0
        %2182 = vmatpush.msra.mxu0 0.0
        %2183 = vmatpush.msra.mxu0 0.0
        %2184 = vmatpush.msra.mxu0 0.0
        %2185 = vmatpush.msra.mxu0 0.0
        %2186 = vmatpush.msra.mxu0 0.0
        %2187 = vmatpush.msra.mxu0 0.0
        %2188 = vmatpush.msra.mxu0 0.0
        %2189 = vmatpush.msra.mxu0 0.0
        %2190 = vmatpush.msra.mxu0 0.0
        %2191 = vmatpush.msra.mxu0 0.0
        %2192 = vmatpush.msra.mxu0 0.0
        %2193 = vmatpush.msra.mxu0 0.0
        %2194 = vmatpush.msra.mxu0 %v2178
        %2195 = vmatpush.msra.mxu0 %v2174
        %2196 = vmatmul.f32.gmra.mxu0 %v1380
        %v2197 = vpop.f32.mrf.mxu0
        %v2198 = vadd.f32 0.0, %v2197
        %2199 = vmatmul.f32.gmra.mxu0 %v1383
        %v2200 = vpop.f32.mrf.mxu0
        %v2201 = vadd.f32 0.0, %v2200
        %2202 = vmatmul.f32.gmra.mxu0 %v1386
        %v2203 = vpop.f32.mrf.mxu0
        %v2204 = vadd.f32 0.0, %v2203
        %2205 = vdwg.mxu0
        %v2206 = vadd.f32 %v2170, %v2198
        %v2207 = vadd.f32 %v2171, %v2201
        %v2208 = vadd.f32 %v2172, %v2204
        %2209 = vrot.lane.b32.xlu0 %v2066, 124
        %v2210 = vpop.permute.xlu0 %2209
        %2211 = vrot.lane.b32.xlu0 %v2067, 124
        %v2212 = vpop.permute.xlu0 %2211
        %v2214 = vsel %vm268, %v2212, 0
        %2216 = vmatpush.msra.mxu0 0.0
        %2217 = vmatpush.msra.mxu0 0.0
        %2218 = vmatpush.msra.mxu0 0.0
        %2219 = vmatpush.msra.mxu0 0.0
        %2220 = vmatpush.msra.mxu0 0.0
        %2221 = vmatpush.msra.mxu0 0.0
        %2222 = vmatpush.msra.mxu0 0.0
        %2223 = vmatpush.msra.mxu0 0.0
        %2224 = vmatpush.msra.mxu0 0.0
        %2225 = vmatpush.msra.mxu0 0.0
        %2226 = vmatpush.msra.mxu0 0.0
        %2227 = vmatpush.msra.mxu0 0.0
        %2228 = vmatpush.msra.mxu0 0.0
        %2229 = vmatpush.msra.mxu0 0.0
        %2230 = vmatpush.msra.mxu0 %v2214
        %2231 = vmatpush.msra.mxu0 %v2210
        %2232 = vmatmul.f32.gmra.mxu0 %v1429
        %v2233 = vpop.f32.mrf.mxu0
        %v2234 = vadd.f32 0.0, %v2233
        %2235 = vmatmul.f32.gmra.mxu0 %v1432
        %v2236 = vpop.f32.mrf.mxu0
        %v2237 = vadd.f32 0.0, %v2236
        %2238 = vmatmul.f32.gmra.mxu0 %v1435
        %v2239 = vpop.f32.mrf.mxu0
        %v2240 = vadd.f32 0.0, %v2239
        %2241 = vdwg.mxu0
        %v2242 = vadd.f32 %v2206, %v2234
        %v2243 = vadd.f32 %v2207, %v2237
        %v2244 = vadd.f32 %v2208, %v2240
        %v2245 = vadd.f32 %v2242, %v1471
        %v2246 = vadd.f32 %v2243, %v1476
        %v2247 = vadd.f32 %v2244, %v1481
        %v2248 = vmax.f32 %v2245, 0.0
        %v2249 = vmax.f32 %v2246, 0.0
        %v2250 = vmax.f32 %v2247, 0.0
        %v2251 = vmax.f32 %v1486, %v2248
        %v2252 = vmax.f32 %v1487, %v2249
        %v2253 = vmax.f32 %v1488, %v2250
        %vm2254 = vcmask 113664
        %v2256 = vsel %vm2254, %v2251, 0
        %v2259 = vsel %vm2254, %v2252, 0
        %v2262 = vsel %vm2254, %v2253, 0
        %vm2264 = vcmask 1045504
        %v2266 = vsel %vm2264, %v229, 0
        %2268 = vmatpush.msra.mxu0 0.0
        %2269 = vmatpush.msra.mxu0 0.0
        %2270 = vmatpush.msra.mxu0 0.0
        %2271 = vmatpush.msra.mxu0 0.0
        %2272 = vmatpush.msra.mxu0 0.0
        %2273 = vmatpush.msra.mxu0 0.0
        %2274 = vmatpush.msra.mxu0 0.0
        %2275 = vmatpush.msra.mxu0 0.0
        %2276 = vmatpush.msra.mxu0 0.0
        %2277 = vmatpush.msra.mxu0 0.0
        %2278 = vmatpush.msra.mxu0 0.0
        %2279 = vmatpush.msra.mxu0 0.0
        %2280 = vmatpush.msra.mxu0 0.0
        %2281 = vmatpush.msra.mxu0 0.0
        %2282 = vmatpush.msra.mxu0 %v2266
        %2283 = vmatpush.msra.mxu0 %v228
        %2284 = vmatmul.f32.gmra.mxu0 %v2256
        %v2285 = vpop.f32.mrf.mxu0
        %v2286 = vadd.f32 0.0, %v2285
        %2287 = vmatmul.f32.gmra.mxu0 %v2259
        %v2288 = vpop.f32.mrf.mxu0
        %v2289 = vadd.f32 0.0, %v2288
        %2290 = vmatmul.f32.gmra.mxu0 %v2262
        %v2291 = vpop.f32.mrf.mxu0
        %v2292 = vadd.f32 0.0, %v2291
        %2293 = vdwg.mxu0
        %v2295 = vsel %vm2264, %v231, 0
        %2297 = vmatpush.msra.mxu0 0.0
        %2298 = vmatpush.msra.mxu0 0.0
        %2299 = vmatpush.msra.mxu0 0.0
        %2300 = vmatpush.msra.mxu0 0.0
        %2301 = vmatpush.msra.mxu0 0.0
        %2302 = vmatpush.msra.mxu0 0.0
        %2303 = vmatpush.msra.mxu0 0.0
        %2304 = vmatpush.msra.mxu0 0.0
        %2305 = vmatpush.msra.mxu0 0.0
        %2306 = vmatpush.msra.mxu0 0.0
        %2307 = vmatpush.msra.mxu0 0.0
        %2308 = vmatpush.msra.mxu0 0.0
        %2309 = vmatpush.msra.mxu0 0.0
        %2310 = vmatpush.msra.mxu0 0.0
        %2311 = vmatpush.msra.mxu0 %v2295
        %2312 = vmatpush.msra.mxu0 %v230
        %2313 = vmatmul.f32.gmra.mxu0 %v2256
        %v2314 = vpop.f32.mrf.mxu0
        %v2315 = vadd.f32 0.0, %v2314
        %2316 = vmatmul.f32.gmra.mxu0 %v2259
        %v2317 = vpop.f32.mrf.mxu0
        %v2318 = vadd.f32 0.0, %v2317
        %2319 = vmatmul.f32.gmra.mxu0 %v2262
        %v2320 = vpop.f32.mrf.mxu0
        %v2321 = vadd.f32 0.0, %v2320
        %2322 = vdwg.mxu0
        %v2323 = vmax.f32 %v2286, %v2315
        %v2324 = vmax.f32 %v2289, %v2318
        %v2325 = vmax.f32 %v2292, %v2321
        %s2326 = smul.u32 %s233, 24
        %s2327 = scalar_lea.vmem %s224, %s2326
        %vm2328 = vcmask 56320
        %2329 = vst.msk [vmem:[%s2327] sm:$0xff] %vm2328, %v2323
        %2330 = vst.msk [vmem:[%s2327 + $0x8] sm:$0xff] %vm2328, %v2324
        %vm2331 = vcmask 52224
        %2332 = vst.msk [vmem:[%s2327 + $0x10] sm:$0xf] %vm2331, %v2325
      $region45: #{cnn_forward.5} parent=39 // loop_footer
        %s237 = sadd.s32 1, %s233
      $region46: #{cnn_forward.5} parent=39 // loop_footer_branch
        %232 = sbr.rel target = $region42
      $region47: #{cnn_forward.5} parent=39 // loop_exit
        _
      %p2333 = scmp.lt.s32.totalorder %s16, 1
      %s2334 = scalar_select %p2333, %s16, 1
      %s2335 = smul.addr %s2334, 21
      %s2336 = smul.addr %s2335, 8
      %s2337 = scalar_lea.vmem %s5, %s2336
      // Predicated region
      $region48: #{cnn_forward.5} parent=39 // pred_check
        %p2338 = pneg %p144
      $region49: #{cnn_forward.5} parent=39 // pred_check_branch
        %2340 = sbr.rel (%p2338) target = $region51
      $region50: #{cnn_forward.5} parent=39 // pred_region
        _
      $region51: #{cnn_forward.5} parent=39 // pred_fallthru
        _
    $region40: #{cnn_forward.5} parent=5 // pred_fallthru
      _
    %p2341 = scmp.le.s32.totalorder 2, %s11
    // Predicated region
    $region52: #{cnn_forward.5} parent=5 // pred_check
      %p2342 = pneg %p2341
    $region53: #{cnn_forward.5} parent=5 // pred_check_branch
      %2344 = sbr.rel (%p2342) target = $region55
    $region54: #{cnn_forward.5} parent=5 // pred_region
      %s2345 = ssub.s32 %s11, 2
      // Predicated region
      $region56: #{cnn_forward.5} parent=54 // pred_check
        %p2346 = pneg %p150
      $region57: #{cnn_forward.5} parent=54 // pred_check_branch
        %2348 = sbr.rel (%p2346) target = $region59
      $region58: #{cnn_forward.5} parent=54 // pred_region
        %p2349 = scmp.lt.s32.totalorder %s17, 1
        %s2350 = scalar_select %p2349, %s17, 1
        %s2351 = smul.addr %s2350, 21
        %s2352 = smul.addr %s2351, 8
        %s2353 = scalar_lea.vmem %s5, %s2352
      $region59: #{cnn_forward.5} parent=54 // pred_fallthru
        _
    $region55: #{cnn_forward.5} parent=5 // pred_fallthru
      _
  $region6: #{cnn_forward.5} parent=0 // loop_footer
    %s15 = sadd.s32 1, %s11
  $region7: #{cnn_forward.5} parent=0 // loop_footer_branch
    %10 = sbr.rel target = $region3
  $region8: #{cnn_forward.5} parent=0 // loop_exit
    _

// kernel: cnn_forward.6
$region0: #{cnn_forward.6}
  #allocation0 [shape = 'u32[]', space=smem, size = 0x4, offset = 0x4, fixed_abs, tag = 'smem constant byte address 0x4 - core index']
  #allocation1 [shape = 'u32[72,128]{1,0:T(1,128)}', space=vmem, size = 0x9000, scoped, tag = 'internal scratch']
  %s0 = inlined_call_operand.vmem [shape: f32[2,11,20,11], index: 0, kind: input, shape index: {}]
  %s1 = inlined_call_operand.vmem [shape: f32[25,40,20], index: 1, kind: input, shape index: {}]
  %s2 = inlined_call_operand.vmem [shape: f32[40,1], index: 2, kind: input, shape index: {}]
  %s3 = inlined_call_operand.vmem [shape: f32[7,4], index: 3, kind: input, shape index: {}]
  %s4 = inlined_call_operand.vmem [shape: f32[7,4], index: 4, kind: input, shape index: {}]
  %s5 = inlined_call_operand.vmem [shape: f32[2,4,40,4], index: 5, kind: output, shape index: {}]
  %s6 = sld [smem:[#allocation0]]
  $region60: #{cnn_forward.6} parent=0
    _
  %s8 = ssub.s32 1, %s6
  %s9 = scalar_select 0, %s8, %s6
  loop: start=0, step=1, limit=4
  $region2: #{cnn_forward.6} parent=0 // loop_pre_header
    _
  $region3: #{cnn_forward.6} parent=0 // loop_header
    %s11 = sphi 0, %s15
    %p12 = scmp.ge.s32.totalorder %s11, 4
    %s21 = sphi 0, %s23
    %s24 = sphi 0, %s21
    %s25 = sphi 0, %s24
    %s41 = sphi 0, %s25
    %s45 = sphi 0, %s45
    %s47 = sphi 0, %s45
    %s48 = sphi 0, %s47
    %s62 = sphi 0, %s48
    %s66 = sphi 0, %s66
    %s68 = sphi 0, %s66
    %s69 = sphi 0, %s68
    %s83 = sphi 0, %s69
    %s87 = sphi 0, %s87
    %s89 = sphi 0, %s87
    %s90 = sphi 0, %s89
    %s104 = sphi 0, %s90
    %s108 = sphi 0, %s108
    %s110 = sphi 0, %s108
    %s111 = sphi 0, %s110
    %s125 = sphi 0, %s111
    %s131 = sphi 0, %s133
    %s134 = sphi 0, %s131
    %s135 = sphi 0, %s134
    %s151 = sphi 0, %s135
  $region4: #{cnn_forward.6} parent=0 // loop_header_branch
    %14 = sbr.rel (%p12) target = $region8
  $region5: #{cnn_forward.6} parent=0 // loop_body
    %s16 = ssub.s32 %s11, 1
    %s17 = ssub.s32 %s11, 2
    %s18 = sadd.s32 %s11, 1
    %s19 = ssub.s32 %s11, %s18
    %p20 = scmp.eq.s32.totalorder %s19, 0
    %s22 = sadd.s32 %s21, 1
    %s23 = scalar_select %p20, %s21, %s22
    %p26 = pneg %p20
    %p27 = scmp.eq.s32.totalorder %s11, 1
    %p28 = por %p26, %p27
    %p29 = scmp.ne.s32.totalorder %s21, %s24
    %p30 = scmp.eq.s32.totalorder %s11, 0
    %p31 = por %p29, %p30
    %p32 = scmp.ne.s32.totalorder %s21, %s24
    %p33 = scmp.eq.s32.totalorder %s16, 1
    %p34 = por %p32, %p33
    %p35 = scmp.ne.s32.totalorder %s24, %s25
    %p36 = scmp.eq.s32.totalorder %s16, 0
    %p37 = por %p35, %p36
    %p38 = scmp.ne.s32.totalorder %s24, %s25
    %p39 = scmp.eq.s32.totalorder %s17, 1
    %p40 = por %p38, %p39
    %p42 = scmp.ne.s32.totalorder %s25, %s41
    %p43 = scmp.eq.s32.totalorder %s17, 0
    %p44 = por %p42, %p43
    %s46 = sadd.s32 %s45, 1
    %p49 = scmp.eq.s32.totalorder %s11, 1
    %p50 = scmp.ne.s32.totalorder %s45, %s47
    %p51 = scmp.eq.s32.totalorder %s11, 0
    %p52 = por %p50, %p51
    %p53 = scmp.ne.s32.totalorder %s45, %s47
    %p54 = scmp.eq.s32.totalorder %s16, 1
    %p55 = por %p53, %p54
    %p56 = scmp.ne.s32.totalorder %s47, %s48
    %p57 = scmp.eq.s32.totalorder %s16, 0
    %p58 = por %p56, %p57
    %p59 = scmp.ne.s32.totalorder %s47, %s48
    %p60 = scmp.eq.s32.totalorder %s17, 1
    %p61 = por %p59, %p60
    %p63 = scmp.ne.s32.totalorder %s48, %s62
    %p64 = scmp.eq.s32.totalorder %s17, 0
    %p65 = por %p63, %p64
    %s67 = sadd.s32 %s66, 1
    %p70 = scmp.eq.s32.totalorder %s11, 1
    %p71 = scmp.ne.s32.totalorder %s66, %s68
    %p72 = scmp.eq.s32.totalorder %s11, 0
    %p73 = por %p71, %p72
    %p74 = scmp.ne.s32.totalorder %s66, %s68
    %p75 = scmp.eq.s32.totalorder %s16, 1
    %p76 = por %p74, %p75
    %p77 = scmp.ne.s32.totalorder %s68, %s69
    %p78 = scmp.eq.s32.totalorder %s16, 0
    %p79 = por %p77, %p78
    %p80 = scmp.ne.s32.totalorder %s68, %s69
    %p81 = scmp.eq.s32.totalorder %s17, 1
    %p82 = por %p80, %p81
    %p84 = scmp.ne.s32.totalorder %s69, %s83
    %p85 = scmp.eq.s32.totalorder %s17, 0
    %p86 = por %p84, %p85
    %s88 = sadd.s32 %s87, 1
    %p91 = scmp.eq.s32.totalorder %s11, 1
    %p92 = scmp.ne.s32.totalorder %s87, %s89
    %p93 = scmp.eq.s32.totalorder %s11, 0
    %p94 = por %p92, %p93
    %p95 = scmp.ne.s32.totalorder %s87, %s89
    %p96 = scmp.eq.s32.totalorder %s16, 1
    %p97 = por %p95, %p96
    %p98 = scmp.ne.s32.totalorder %s89, %s90
    %p99 = scmp.eq.s32.totalorder %s16, 0
    %p100 = por %p98, %p99
    %p101 = scmp.ne.s32.totalorder %s89, %s90
    %p102 = scmp.eq.s32.totalorder %s17, 1
    %p103 = por %p101, %p102
    %p105 = scmp.ne.s32.totalorder %s90, %s104
    %p106 = scmp.eq.s32.totalorder %s17, 0
    %p107 = por %p105, %p106
    %s109 = sadd.s32 %s108, 1
    %p112 = scmp.eq.s32.totalorder %s11, 1
    %p113 = scmp.ne.s32.totalorder %s108, %s110
    %p114 = scmp.eq.s32.totalorder %s11, 0
    %p115 = por %p113, %p114
    %p116 = scmp.ne.s32.totalorder %s108, %s110
    %p117 = scmp.eq.s32.totalorder %s16, 1
    %p118 = por %p116, %p117
    %p119 = scmp.ne.s32.totalorder %s110, %s111
    %p120 = scmp.eq.s32.totalorder %s16, 0
    %p121 = por %p119, %p120
    %p122 = scmp.ne.s32.totalorder %s110, %s111
    %p123 = scmp.eq.s32.totalorder %s17, 1
    %p124 = por %p122, %p123
    %p126 = scmp.ne.s32.totalorder %s111, %s125
    %p127 = scmp.eq.s32.totalorder %s17, 0
    %p128 = por %p126, %p127
    %s129 = ssub.s32 %s11, %s18
    %p130 = scmp.eq.s32.totalorder %s129, 0
    %s132 = sadd.s32 %s131, 1
    %s133 = scalar_select %p130, %s131, %s132
    %p136 = pneg %p130
    %p137 = scmp.eq.s32.totalorder %s11, 1
    %p138 = por %p136, %p137
    %p139 = scmp.ne.s32.totalorder %s131, %s134
    %p140 = scmp.eq.s32.totalorder %s11, 0
    %p141 = por %p139, %p140
    %p142 = scmp.ne.s32.totalorder %s131, %s134
    %p143 = scmp.eq.s32.totalorder %s16, 1
    %p144 = por %p142, %p143
    %p145 = scmp.ne.s32.totalorder %s134, %s135
    %p146 = scmp.eq.s32.totalorder %s16, 0
    %p147 = por %p145, %p146
    %p148 = scmp.ne.s32.totalorder %s134, %s135
    %p149 = scmp.eq.s32.totalorder %s17, 1
    %p150 = por %p148, %p149
    %p152 = scmp.ne.s32.totalorder %s135, %s151
    %p153 = scmp.eq.s32.totalorder %s17, 0
    %p154 = por %p152, %p153
    %p155 = scmp.le.s32.totalorder 1, %s11
    %p156 = scmp.lt.s32.totalorder %s11, 3
    %p157 = pnand %p155, %p156
    %p158 = pneg %p157
    // Predicated region
    $region9: #{cnn_forward.6} parent=5 // pred_check
      _
    $region10: #{cnn_forward.6} parent=5 // pred_check_branch
      %160 = sbr.rel (%p157) target = $region12
    $region11: #{cnn_forward.6} parent=5 // pred_region
      %s161 = ssub.s32 %s11, 1
      // Predicated region
      $region13: #{cnn_forward.6} parent=11 // pred_check
        %p162 = pneg %p58
      $region14: #{cnn_forward.6} parent=11 // pred_check_branch
        %164 = sbr.rel (%p162) target = $region16
      $region15: #{cnn_forward.6} parent=11 // pred_region
        _
      $region16: #{cnn_forward.6} parent=11 // pred_fallthru
        _
      // Predicated region
      $region17: #{cnn_forward.6} parent=11 // pred_check
        %p165 = pneg %p79
      $region18: #{cnn_forward.6} parent=11 // pred_check_branch
        %167 = sbr.rel (%p165) target = $region20
      $region19: #{cnn_forward.6} parent=11 // pred_region
        _
      $region20: #{cnn_forward.6} parent=11 // pred_fallthru
        _
      // Predicated region
      $region21: #{cnn_forward.6} parent=11 // pred_check
        %p168 = pneg %p100
      $region22: #{cnn_forward.6} parent=11 // pred_check_branch
        %170 = sbr.rel (%p168) target = $region24
      $region23: #{cnn_forward.6} parent=11 // pred_region
        _
      $region24: #{cnn_forward.6} parent=11 // pred_fallthru
        _
      // Predicated region
      $region25: #{cnn_forward.6} parent=11 // pred_check
        %p171 = pneg %p121
      $region26: #{cnn_forward.6} parent=11 // pred_check_branch
        %173 = sbr.rel (%p171) target = $region28
      $region27: #{cnn_forward.6} parent=11 // pred_region
        _
      $region28: #{cnn_forward.6} parent=11 // pred_fallthru
        _
    $region12: #{cnn_forward.6} parent=5 // pred_fallthru
      _
    %p174 = scmp.lt.s32.totalorder %s11, 2
    // Predicated region
    $region29: #{cnn_forward.6} parent=5 // pred_check
      %p175 = pneg %p174
    $region30: #{cnn_forward.6} parent=5 // pred_check_branch
      %177 = sbr.rel (%p175) target = $region32
    $region31: #{cnn_forward.6} parent=5 // pred_region
      // Predicated region
      $region33: #{cnn_forward.6} parent=31 // pred_check
        %p178 = pneg %p31
      $region34: #{cnn_forward.6} parent=31 // pred_check_branch
        %180 = sbr.rel (%p178) target = $region36
      $region35: #{cnn_forward.6} parent=31 // pred_region
        %p181 = scmp.lt.s32.totalorder %s11, 1
        %s182 = scalar_select %p181, %s11, 1
        %s183 = smul.addr %s182, 33
        %s184 = smul.addr %s183, 8
        %s185 = scalar_lea.vmem %s0, %s184
      $region36: #{cnn_forward.6} parent=31 // pred_fallthru
        _
    $region32: #{cnn_forward.6} parent=5 // pred_fallthru
      _
    %p186 = scmp.le.s32.totalorder 1, %s11
    %p187 = scmp.lt.s32.totalorder %s11, 3
    %p188 = pnand %p186, %p187
    %p189 = pneg %p188
    // Predicated region
    $region37: #{cnn_forward.6} parent=5 // pred_check
      _
    $region38: #{cnn_forward.6} parent=5 // pred_check_branch
      %191 = sbr.rel (%p188) target = $region40
    $region39: #{cnn_forward.6} parent=5 // pred_region
      %s192 = ssub.s32 %s11, 1
      %p193 = scmp.lt.s32.totalorder %s16, 1
      %s194 = scalar_select %p193, %s16, 1
      %s195 = smul.addr %s194, 33
      %s196 = smul.addr %s195, 8
      %s197 = scalar_lea.vmem %s0, %s196
      %p198 = pneg %p37
      %p199 = pneg %p34
      %p200 = pneg %p58
      %p201 = pneg %p55
      %p202 = pneg %p79
      %p203 = pneg %p76
      %p204 = pneg %p100
      %p205 = pneg %p97
      %p206 = pneg %p121
      %p207 = pneg %p118
      %p208 = pneg %p147
      %p209 = pneg %p144
      %p210 = scmp.lt.s32.totalorder %s16, 1
      %s211 = scalar_select %p210, %s16, 1
      %s212 = smul.addr %s211, 20
      %s213 = smul.addr %s212, 8
      %s214 = scalar_lea.vmem %s5, %s213
      %p215 = scmp.lt.s32.totalorder %s16, 1
      %s216 = scalar_select %p215, %s16, 1
      %s217 = smul.addr %s216, 33
      %s218 = smul.addr %s217, 8
      %s219 = scalar_lea.vmem %s0, %s218
      %p220 = scmp.lt.s32.totalorder %s16, 1
      %s221 = scalar_select %p220, %s16, 1
      %s222 = smul.addr %s221, 20
      %s223 = smul.addr %s222, 8
      %s224 = scalar_lea.vmem %s5, %s223
      %v225 = vld [vmem:[%s2] sm:$0xff]
      %v226 = vld [vmem:[%s2 + $0x8] sm:$0xff]
      %v227 = vld [vmem:[%s2 + $0x10] sm:$0xff]
      %v228 = vld [vmem:[%s2 + $0x18] sm:$0xff]
      %v229 = vld [vmem:[%s2 + $0x20] sm:$0xff]
      %v230 = vld [vmem:[%s3] sm:$0x7f]
      %v231 = vld [vmem:[%s4] sm:$0x7f]
      loop: start=0, step=1, limit=4
      $region41: #{cnn_forward.6} parent=39 // loop_pre_header
        _
      $region42: #{cnn_forward.6} parent=39 // loop_header
        %s233 = sphi 0, %s237
        %p234 = scmp.ge.s32.totalorder %s233, 4
      $region43: #{cnn_forward.6} parent=39 // loop_header_branch
        %236 = sbr.rel (%p234) target = $region47
      $region44: #{cnn_forward.6} parent=39 // loop_body
        %s238 = smul.u32 %s233, 2
        %s239 = ssub.s32 %s238, 1
        %p240 = scmp.gt.s32.totalorder %s239, 0
        %s241 = scalar_select %p240, %s239, 0
        %s242 = smul.u32 %s241, 24
        %s243 = scalar_lea.vmem %s219, %s242
        %v244 = vld [vmem:[%s243] sm:$0xff]
        %v245 = vld [vmem:[%s243 + $0x8] sm:$0xff]
        %v246 = vld [vmem:[%s243 + $0x10] sm:$0xf]
        %v247 = vld [vmem:[%s1] sm:$0xff]
        %v248 = vld [vmem:[%s1 + $0x8] sm:$0xff]
        %v249 = vld [vmem:[%s1 + $0x10] sm:$0xff]
        %v250 = vld [vmem:[%s1 + $0x18] sm:$0xff]
        %v251 = vld [vmem:[%s1 + $0x20] sm:$0xff]
        %s252 = scalar_lea.vmem %s1, 40
        %v253 = vld [vmem:[%s252] sm:$0xff]
        %v254 = vld [vmem:[%s252 + $0x8] sm:$0xff]
        %v255 = vld [vmem:[%s252 + $0x10] sm:$0xff]
        %v256 = vld [vmem:[%s252 + $0x18] sm:$0xff]
        %v257 = vld [vmem:[%s252 + $0x20] sm:$0xff]
        %261 = vrot.lane.b32.xlu0 %v244, 127
        %v262 = vpop.permute.xlu0 %261
        %263 = vrot.lane.b32.xlu0 %v245, 127
        %v264 = vpop.permute.xlu0 %263
        %265 = vrot.lane.b32.xlu0 %v246, 127
        %v266 = vpop.permute.xlu0 %265
        %vm269 = vcmask 162816
        %v271 = vsel %vm269, %v253, 0
        %v274 = vsel %vm269, %v254, 0
        %v277 = vsel %vm269, %v255, 0
        %v280 = vsel %vm269, %v256, 0
        %v283 = vsel %vm269, %v257, 0
        %vm285 = vcmask 1043456
        %v286 = vsel %vm285, %v266, 0
        %288 = vmatpush.msra.mxu0 0.0
        %289 = vmatpush.msra.mxu0 0.0
        %290 = vmatpush.msra.mxu0 0.0
        %291 = vmatpush.msra.mxu0 0.0
        %292 = vmatpush.msra.mxu0 0.0
        %293 = vmatpush.msra.mxu0 0.0
        %294 = vmatpush.msra.mxu0 0.0
        %295 = vmatpush.msra.mxu0 0.0
        %296 = vmatpush.msra.mxu0 0.0
        %297 = vmatpush.msra.mxu0 0.0
        %298 = vmatpush.msra.mxu0 0.0
        %299 = vmatpush.msra.mxu0 0.0
        %300 = vmatpush.msra.mxu0 0.0
        %301 = vmatpush.msra.mxu0 %v286
        %302 = vmatpush.msra.mxu0 %v264
        %303 = vmatpush.msra.mxu0 %v262
        %304 = vmatmul.f32.gmra.mxu0 %v271
        %v305 = vpop.f32.mrf.mxu0
        %v306 = vadd.f32 0.0, %v305
        %307 = vmatmul.f32.gmra.mxu0 %v274
        %v308 = vpop.f32.mrf.mxu0
        %v309 = vadd.f32 0.0, %v308
        %310 = vmatmul.f32.gmra.mxu0 %v277
        %v311 = vpop.f32.mrf.mxu0
        %v312 = vadd.f32 0.0, %v311
        %313 = vmatmul.f32.gmra.mxu0 %v280
        %v314 = vpop.f32.mrf.mxu0
        %v315 = vadd.f32 0.0, %v314
        %316 = vmatmul.f32.gmra.mxu0 %v283
        %v317 = vpop.f32.mrf.mxu0
        %v318 = vadd.f32 0.0, %v317
        %319 = vdwg.mxu0
        %v321 = vsel %vm269, %v247, 0
        %v324 = vsel %vm269, %v248, 0
        %v327 = vsel %vm269, %v249, 0
        %v330 = vsel %vm269, %v250, 0
        %v333 = vsel %vm269, %v251, 0
        %v335 = vsel %vm285, %v246, 0
        %337 = vmatpush.msra.mxu0 0.0
        %338 = vmatpush.msra.mxu0 0.0
        %339 = vmatpush.msra.mxu0 0.0
        %340 = vmatpush.msra.mxu0 0.0
        %341 = vmatpush.msra.mxu0 0.0
        %342 = vmatpush.msra.mxu0 0.0
        %343 = vmatpush.msra.mxu0 0.0
        %344 = vmatpush.msra.mxu0 0.0
        %345 = vmatpush.msra.mxu0 0.0
        %346 = vmatpush.msra.mxu0 0.0
        %347 = vmatpush.msra.mxu0 0.0
        %348 = vmatpush.msra.mxu0 0.0
        %349 = vmatpush.msra.mxu0 0.0
        %350 = vmatpush.msra.mxu0 %v335
        %351 = vmatpush.msra.mxu0 %v245
        %352 = vmatpush.msra.mxu0 %v244
        %353 = vmatmul.f32.gmra.mxu0 %v321
        %v354 = vpop.f32.mrf.mxu0
        %v355 = vadd.f32 %v306, %v354
        %356 = vmatmul.f32.gmra.mxu0 %v324
        %v357 = vpop.f32.mrf.mxu0
        %v358 = vadd.f32 %v309, %v357
        %359 = vmatmul.f32.gmra.mxu0 %v327
        %v360 = vpop.f32.mrf.mxu0
        %v361 = vadd.f32 %v312, %v360
        %362 = vmatmul.f32.gmra.mxu0 %v330
        %v363 = vpop.f32.mrf.mxu0
        %v364 = vadd.f32 %v315, %v363
        %365 = vmatmul.f32.gmra.mxu0 %v333
        %v366 = vpop.f32.mrf.mxu0
        %v367 = vadd.f32 %v318, %v366
        %368 = vdwg.mxu0
        %s369 = scalar_lea.vmem %s1, 80
        %v370 = vld [vmem:[%s369] sm:$0xff]
        %v371 = vld [vmem:[%s369 + $0x8] sm:$0xff]
        %v372 = vld [vmem:[%s369 + $0x10] sm:$0xff]
        %v373 = vld [vmem:[%s369 + $0x18] sm:$0xff]
        %v374 = vld [vmem:[%s369 + $0x20] sm:$0xff]
        %375 = vrot.lane.b32.xlu0 %v244, 126
        %v376 = vpop.permute.xlu0 %375
        %377 = vrot.lane.b32.xlu0 %v245, 126
        %v378 = vpop.permute.xlu0 %377
        %379 = vrot.lane.b32.xlu0 %v246, 126
        %v380 = vpop.permute.xlu0 %379
        %v384 = vsel %vm269, %v370, 0
        %v387 = vsel %vm269, %v371, 0
        %v390 = vsel %vm269, %v372, 0
        %v393 = vsel %vm269, %v373, 0
        %v396 = vsel %vm269, %v374, 0
        %v398 = vsel %vm285, %v380, 0
        %400 = vmatpush.msra.mxu0 0.0
        %401 = vmatpush.msra.mxu0 0.0
        %402 = vmatpush.msra.mxu0 0.0
        %403 = vmatpush.msra.mxu0 0.0
        %404 = vmatpush.msra.mxu0 0.0
        %405 = vmatpush.msra.mxu0 0.0
        %406 = vmatpush.msra.mxu0 0.0
        %407 = vmatpush.msra.mxu0 0.0
        %408 = vmatpush.msra.mxu0 0.0
        %409 = vmatpush.msra.mxu0 0.0
        %410 = vmatpush.msra.mxu0 0.0
        %411 = vmatpush.msra.mxu0 0.0
        %412 = vmatpush.msra.mxu0 0.0
        %413 = vmatpush.msra.mxu0 %v398
        %414 = vmatpush.msra.mxu0 %v378
        %415 = vmatpush.msra.mxu0 %v376
        %416 = vmatmul.f32.gmra.mxu0 %v384
        %v417 = vpop.f32.mrf.mxu0
        %v418 = vadd.f32 0.0, %v417
        %419 = vmatmul.f32.gmra.mxu0 %v387
        %v420 = vpop.f32.mrf.mxu0
        %v421 = vadd.f32 0.0, %v420
        %422 = vmatmul.f32.gmra.mxu0 %v390
        %v423 = vpop.f32.mrf.mxu0
        %v424 = vadd.f32 0.0, %v423
        %425 = vmatmul.f32.gmra.mxu0 %v393
        %v426 = vpop.f32.mrf.mxu0
        %v427 = vadd.f32 0.0, %v426
        %428 = vmatmul.f32.gmra.mxu0 %v396
        %v429 = vpop.f32.mrf.mxu0
        %v430 = vadd.f32 0.0, %v429
        %431 = vdwg.mxu0
        %v432 = vadd.f32 %v355, %v418
        %v433 = vadd.f32 %v358, %v421
        %v434 = vadd.f32 %v361, %v424
        %v435 = vadd.f32 %v364, %v427
        %v436 = vadd.f32 %v367, %v430
        %s437 = scalar_lea.vmem %s1, 120
        %v438 = vld [vmem:[%s437] sm:$0xff]
        %v439 = vld [vmem:[%s437 + $0x8] sm:$0xff]
        %v440 = vld [vmem:[%s437 + $0x10] sm:$0xff]
        %v441 = vld [vmem:[%s437 + $0x18] sm:$0xff]
        %v442 = vld [vmem:[%s437 + $0x20] sm:$0xff]
        %443 = vrot.lane.b32.xlu0 %v244, 125
        %v444 = vpop.permute.xlu0 %443
        %445 = vrot.lane.b32.xlu0 %v245, 125
        %v446 = vpop.permute.xlu0 %445
        %447 = vrot.lane.b32.xlu0 %v246, 125
        %v448 = vpop.permute.xlu0 %447
        %v452 = vsel %vm269, %v438, 0
        %v455 = vsel %vm269, %v439, 0
        %v458 = vsel %vm269, %v440, 0
        %v461 = vsel %vm269, %v441, 0
        %v464 = vsel %vm269, %v442, 0
        %v466 = vsel %vm285, %v448, 0
        %468 = vmatpush.msra.mxu0 0.0
        %469 = vmatpush.msra.mxu0 0.0
        %470 = vmatpush.msra.mxu0 0.0
        %471 = vmatpush.msra.mxu0 0.0
        %472 = vmatpush.msra.mxu0 0.0
        %473 = vmatpush.msra.mxu0 0.0
        %474 = vmatpush.msra.mxu0 0.0
        %475 = vmatpush.msra.mxu0 0.0
        %476 = vmatpush.msra.mxu0 0.0
        %477 = vmatpush.msra.mxu0 0.0
        %478 = vmatpush.msra.mxu0 0.0
        %479 = vmatpush.msra.mxu0 0.0
        %480 = vmatpush.msra.mxu0 0.0
        %481 = vmatpush.msra.mxu0 %v466
        %482 = vmatpush.msra.mxu0 %v446
        %483 = vmatpush.msra.mxu0 %v444
        %484 = vmatmul.f32.gmra.mxu0 %v452
        %v485 = vpop.f32.mrf.mxu0
        %v486 = vadd.f32 0.0, %v485
        %487 = vmatmul.f32.gmra.mxu0 %v455
        %v488 = vpop.f32.mrf.mxu0
        %v489 = vadd.f32 0.0, %v488
        %490 = vmatmul.f32.gmra.mxu0 %v458
        %v491 = vpop.f32.mrf.mxu0
        %v492 = vadd.f32 0.0, %v491
        %493 = vmatmul.f32.gmra.mxu0 %v461
        %v494 = vpop.f32.mrf.mxu0
        %v495 = vadd.f32 0.0, %v494
        %496 = vmatmul.f32.gmra.mxu0 %v464
        %v497 = vpop.f32.mrf.mxu0
        %v498 = vadd.f32 0.0, %v497
        %499 = vdwg.mxu0
        %v500 = vadd.f32 %v432, %v486
        %v501 = vadd.f32 %v433, %v489
        %v502 = vadd.f32 %v434, %v492
        %v503 = vadd.f32 %v435, %v495
        %v504 = vadd.f32 %v436, %v498
        %s505 = scalar_lea.vmem %s1, 160
        %v506 = vld [vmem:[%s505] sm:$0xff]
        %v507 = vld [vmem:[%s505 + $0x8] sm:$0xff]
        %v508 = vld [vmem:[%s505 + $0x10] sm:$0xff]
        %v509 = vld [vmem:[%s505 + $0x18] sm:$0xff]
        %v510 = vld [vmem:[%s505 + $0x20] sm:$0xff]
        %511 = vrot.lane.b32.xlu0 %v244, 124
        %v512 = vpop.permute.xlu0 %511
        %513 = vrot.lane.b32.xlu0 %v245, 124
        %v514 = vpop.permute.xlu0 %513
        %515 = vrot.lane.b32.xlu0 %v246, 124
        %v516 = vpop.permute.xlu0 %515
        %v520 = vsel %vm269, %v506, 0
        %v523 = vsel %vm269, %v507, 0
        %v526 = vsel %vm269, %v508, 0
        %v529 = vsel %vm269, %v509, 0
        %v532 = vsel %vm269, %v510, 0
        %v534 = vsel %vm285, %v516, 0
        %536 = vmatpush.msra.mxu0 0.0
        %537 = vmatpush.msra.mxu0 0.0
        %538 = vmatpush.msra.mxu0 0.0
        %539 = vmatpush.msra.mxu0 0.0
        %540 = vmatpush.msra.mxu0 0.0
        %541 = vmatpush.msra.mxu0 0.0
        %542 = vmatpush.msra.mxu0 0.0
        %543 = vmatpush.msra.mxu0 0.0
        %544 = vmatpush.msra.mxu0 0.0
        %545 = vmatpush.msra.mxu0 0.0
        %546 = vmatpush.msra.mxu0 0.0
        %547 = vmatpush.msra.mxu0 0.0
        %548 = vmatpush.msra.mxu0 0.0
        %549 = vmatpush.msra.mxu0 %v534
        %550 = vmatpush.msra.mxu0 %v514
        %551 = vmatpush.msra.mxu0 %v512
        %552 = vmatmul.f32.gmra.mxu0 %v520
        %v553 = vpop.f32.mrf.mxu0
        %v554 = vadd.f32 0.0, %v553
        %555 = vmatmul.f32.gmra.mxu0 %v523
        %v556 = vpop.f32.mrf.mxu0
        %v557 = vadd.f32 0.0, %v556
        %558 = vmatmul.f32.gmra.mxu0 %v526
        %v559 = vpop.f32.mrf.mxu0
        %v560 = vadd.f32 0.0, %v559
        %561 = vmatmul.f32.gmra.mxu0 %v529
        %v562 = vpop.f32.mrf.mxu0
        %v563 = vadd.f32 0.0, %v562
        %564 = vmatmul.f32.gmra.mxu0 %v532
        %v565 = vpop.f32.mrf.mxu0
        %v566 = vadd.f32 0.0, %v565
        %567 = vdwg.mxu0
        %v568 = vadd.f32 %v500, %v554
        %v569 = vadd.f32 %v501, %v557
        %v570 = vadd.f32 %v502, %v560
        %v571 = vadd.f32 %v503, %v563
        %v572 = vadd.f32 %v504, %v566
        %s573 = sadd.s32 %s241, 1
        %s574 = smul.u32 %s573, 24
        %s575 = scalar_lea.vmem %s219, %s574
        %v576 = vld [vmem:[%s575] sm:$0xff]
        %v577 = vld [vmem:[%s575 + $0x8] sm:$0xff]
        %v578 = vld [vmem:[%s575 + $0x10] sm:$0xf]
        %s579 = scalar_lea.vmem %s1, 200
        %v580 = vld [vmem:[%s579] sm:$0xff]
        %v581 = vld [vmem:[%s579 + $0x8] sm:$0xff]
        %v582 = vld [vmem:[%s579 + $0x10] sm:$0xff]
        %v583 = vld [vmem:[%s579 + $0x18] sm:$0xff]
        %v584 = vld [vmem:[%s579 + $0x20] sm:$0xff]
        %v586 = vsel %vm269, %v580, 0
        %v589 = vsel %vm269, %v581, 0
        %v592 = vsel %vm269, %v582, 0
        %v595 = vsel %vm269, %v583, 0
        %v598 = vsel %vm269, %v584, 0
        %v601 = vsel %vm285, %v578, 0
        %603 = vmatpush.msra.mxu0 0.0
        %604 = vmatpush.msra.mxu0 0.0
        %605 = vmatpush.msra.mxu0 0.0
        %606 = vmatpush.msra.mxu0 0.0
        %607 = vmatpush.msra.mxu0 0.0
        %608 = vmatpush.msra.mxu0 0.0
        %609 = vmatpush.msra.mxu0 0.0
        %610 = vmatpush.msra.mxu0 0.0
        %611 = vmatpush.msra.mxu0 0.0
        %612 = vmatpush.msra.mxu0 0.0
        %613 = vmatpush.msra.mxu0 0.0
        %614 = vmatpush.msra.mxu0 0.0
        %615 = vmatpush.msra.mxu0 0.0
        %616 = vmatpush.msra.mxu0 %v601
        %617 = vmatpush.msra.mxu0 %v577
        %618 = vmatpush.msra.mxu0 %v576
        %619 = vmatmul.f32.gmra.mxu0 %v586
        %v620 = vpop.f32.mrf.mxu0
        %v621 = vadd.f32 0.0, %v620
        %622 = vmatmul.f32.gmra.mxu0 %v589
        %v623 = vpop.f32.mrf.mxu0
        %v624 = vadd.f32 0.0, %v623
        %625 = vmatmul.f32.gmra.mxu0 %v592
        %v626 = vpop.f32.mrf.mxu0
        %v627 = vadd.f32 0.0, %v626
        %628 = vmatmul.f32.gmra.mxu0 %v595
        %v629 = vpop.f32.mrf.mxu0
        %v630 = vadd.f32 0.0, %v629
        %631 = vmatmul.f32.gmra.mxu0 %v598
        %v632 = vpop.f32.mrf.mxu0
        %v633 = vadd.f32 0.0, %v632
        %634 = vdwg.mxu0
        %v635 = vadd.f32 %v568, %v621
        %v636 = vadd.f32 %v569, %v624
        %v637 = vadd.f32 %v570, %v627
        %v638 = vadd.f32 %v571, %v630
        %v639 = vadd.f32 %v572, %v633
        %s640 = scalar_lea.vmem %s1, 240
        %v641 = vld [vmem:[%s640] sm:$0xff]
        %v642 = vld [vmem:[%s640 + $0x8] sm:$0xff]
        %v643 = vld [vmem:[%s640 + $0x10] sm:$0xff]
        %v644 = vld [vmem:[%s640 + $0x18] sm:$0xff]
        %v645 = vld [vmem:[%s640 + $0x20] sm:$0xff]
        %648 = vrot.lane.b32.xlu0 %v576, 127
        %v649 = vpop.permute.xlu0 %648
        %650 = vrot.lane.b32.xlu0 %v577, 127
        %v651 = vpop.permute.xlu0 %650
        %652 = vrot.lane.b32.xlu0 %v578, 127
        %v653 = vpop.permute.xlu0 %652
        %v657 = vsel %vm269, %v641, 0
        %v660 = vsel %vm269, %v642, 0
        %v663 = vsel %vm269, %v643, 0
        %v666 = vsel %vm269, %v644, 0
        %v669 = vsel %vm269, %v645, 0
        %v671 = vsel %vm285, %v653, 0
        %673 = vmatpush.msra.mxu0 0.0
        %674 = vmatpush.msra.mxu0 0.0
        %675 = vmatpush.msra.mxu0 0.0
        %676 = vmatpush.msra.mxu0 0.0
        %677 = vmatpush.msra.mxu0 0.0
        %678 = vmatpush.msra.mxu0 0.0
        %679 = vmatpush.msra.mxu0 0.0
        %680 = vmatpush.msra.mxu0 0.0
        %681 = vmatpush.msra.mxu0 0.0
        %682 = vmatpush.msra.mxu0 0.0
        %683 = vmatpush.msra.mxu0 0.0
        %684 = vmatpush.msra.mxu0 0.0
        %685 = vmatpush.msra.mxu0 0.0
        %686 = vmatpush.msra.mxu0 %v671
        %687 = vmatpush.msra.mxu0 %v651
        %688 = vmatpush.msra.mxu0 %v649
        %689 = vmatmul.f32.gmra.mxu0 %v657
        %v690 = vpop.f32.mrf.mxu0
        %v691 = vadd.f32 0.0, %v690
        %692 = vmatmul.f32.gmra.mxu0 %v660
        %v693 = vpop.f32.mrf.mxu0
        %v694 = vadd.f32 0.0, %v693
        %695 = vmatmul.f32.gmra.mxu0 %v663
        %v696 = vpop.f32.mrf.mxu0
        %v697 = vadd.f32 0.0, %v696
        %698 = vmatmul.f32.gmra.mxu0 %v666
        %v699 = vpop.f32.mrf.mxu0
        %v700 = vadd.f32 0.0, %v699
        %701 = vmatmul.f32.gmra.mxu0 %v669
        %v702 = vpop.f32.mrf.mxu0
        %v703 = vadd.f32 0.0, %v702
        %704 = vdwg.mxu0
        %v705 = vadd.f32 %v635, %v691
        %v706 = vadd.f32 %v636, %v694
        %v707 = vadd.f32 %v637, %v697
        %v708 = vadd.f32 %v638, %v700
        %v709 = vadd.f32 %v639, %v703
        %s710 = scalar_lea.vmem %s1, 280
        %v711 = vld [vmem:[%s710] sm:$0xff]
        %v712 = vld [vmem:[%s710 + $0x8] sm:$0xff]
        %v713 = vld [vmem:[%s710 + $0x10] sm:$0xff]
        %v714 = vld [vmem:[%s710 + $0x18] sm:$0xff]
        %v715 = vld [vmem:[%s710 + $0x20] sm:$0xff]
        %716 = vrot.lane.b32.xlu0 %v576, 126
        %v717 = vpop.permute.xlu0 %716
        %718 = vrot.lane.b32.xlu0 %v577, 126
        %v719 = vpop.permute.xlu0 %718
        %720 = vrot.lane.b32.xlu0 %v578, 126
        %v721 = vpop.permute.xlu0 %720
        %v725 = vsel %vm269, %v711, 0
        %v728 = vsel %vm269, %v712, 0
        %v731 = vsel %vm269, %v713, 0
        %v734 = vsel %vm269, %v714, 0
        %v737 = vsel %vm269, %v715, 0
        %v739 = vsel %vm285, %v721, 0
        %741 = vmatpush.msra.mxu0 0.0
        %742 = vmatpush.msra.mxu0 0.0
        %743 = vmatpush.msra.mxu0 0.0
        %744 = vmatpush.msra.mxu0 0.0
        %745 = vmatpush.msra.mxu0 0.0
        %746 = vmatpush.msra.mxu0 0.0
        %747 = vmatpush.msra.mxu0 0.0
        %748 = vmatpush.msra.mxu0 0.0
        %749 = vmatpush.msra.mxu0 0.0
        %750 = vmatpush.msra.mxu0 0.0
        %751 = vmatpush.msra.mxu0 0.0
        %752 = vmatpush.msra.mxu0 0.0
        %753 = vmatpush.msra.mxu0 0.0
        %754 = vmatpush.msra.mxu0 %v739
        %755 = vmatpush.msra.mxu0 %v719
        %756 = vmatpush.msra.mxu0 %v717
        %757 = vmatmul.f32.gmra.mxu0 %v725
        %v758 = vpop.f32.mrf.mxu0
        %v759 = vadd.f32 0.0, %v758
        %760 = vmatmul.f32.gmra.mxu0 %v728
        %v761 = vpop.f32.mrf.mxu0
        %v762 = vadd.f32 0.0, %v761
        %763 = vmatmul.f32.gmra.mxu0 %v731
        %v764 = vpop.f32.mrf.mxu0
        %v765 = vadd.f32 0.0, %v764
        %766 = vmatmul.f32.gmra.mxu0 %v734
        %v767 = vpop.f32.mrf.mxu0
        %v768 = vadd.f32 0.0, %v767
        %769 = vmatmul.f32.gmra.mxu0 %v737
        %v770 = vpop.f32.mrf.mxu0
        %v771 = vadd.f32 0.0, %v770
        %772 = vdwg.mxu0
        %v773 = vadd.f32 %v705, %v759
        %v774 = vadd.f32 %v706, %v762
        %v775 = vadd.f32 %v707, %v765
        %v776 = vadd.f32 %v708, %v768
        %v777 = vadd.f32 %v709, %v771
        %s778 = scalar_lea.vmem %s1, 320
        %v779 = vld [vmem:[%s778] sm:$0xff]
        %v780 = vld [vmem:[%s778 + $0x8] sm:$0xff]
        %v781 = vld [vmem:[%s778 + $0x10] sm:$0xff]
        %v782 = vld [vmem:[%s778 + $0x18] sm:$0xff]
        %v783 = vld [vmem:[%s778 + $0x20] sm:$0xff]
        %784 = vrot.lane.b32.xlu0 %v576, 125
        %v785 = vpop.permute.xlu0 %784
        %786 = vrot.lane.b32.xlu0 %v577, 125
        %v787 = vpop.permute.xlu0 %786
        %788 = vrot.lane.b32.xlu0 %v578, 125
        %v789 = vpop.permute.xlu0 %788
        %v793 = vsel %vm269, %v779, 0
        %v796 = vsel %vm269, %v780, 0
        %v799 = vsel %vm269, %v781, 0
        %v802 = vsel %vm269, %v782, 0
        %v805 = vsel %vm269, %v783, 0
        %v807 = vsel %vm285, %v789, 0
        %809 = vmatpush.msra.mxu0 0.0
        %810 = vmatpush.msra.mxu0 0.0
        %811 = vmatpush.msra.mxu0 0.0
        %812 = vmatpush.msra.mxu0 0.0
        %813 = vmatpush.msra.mxu0 0.0
        %814 = vmatpush.msra.mxu0 0.0
        %815 = vmatpush.msra.mxu0 0.0
        %816 = vmatpush.msra.mxu0 0.0
        %817 = vmatpush.msra.mxu0 0.0
        %818 = vmatpush.msra.mxu0 0.0
        %819 = vmatpush.msra.mxu0 0.0
        %820 = vmatpush.msra.mxu0 0.0
        %821 = vmatpush.msra.mxu0 0.0
        %822 = vmatpush.msra.mxu0 %v807
        %823 = vmatpush.msra.mxu0 %v787
        %824 = vmatpush.msra.mxu0 %v785
        %825 = vmatmul.f32.gmra.mxu0 %v793
        %v826 = vpop.f32.mrf.mxu0
        %v827 = vadd.f32 0.0, %v826
        %828 = vmatmul.f32.gmra.mxu0 %v796
        %v829 = vpop.f32.mrf.mxu0
        %v830 = vadd.f32 0.0, %v829
        %831 = vmatmul.f32.gmra.mxu0 %v799
        %v832 = vpop.f32.mrf.mxu0
        %v833 = vadd.f32 0.0, %v832
        %834 = vmatmul.f32.gmra.mxu0 %v802
        %v835 = vpop.f32.mrf.mxu0
        %v836 = vadd.f32 0.0, %v835
        %837 = vmatmul.f32.gmra.mxu0 %v805
        %v838 = vpop.f32.mrf.mxu0
        %v839 = vadd.f32 0.0, %v838
        %840 = vdwg.mxu0
        %v841 = vadd.f32 %v773, %v827
        %v842 = vadd.f32 %v774, %v830
        %v843 = vadd.f32 %v775, %v833
        %v844 = vadd.f32 %v776, %v836
        %v845 = vadd.f32 %v777, %v839
        %s846 = scalar_lea.vmem %s1, 360
        %v847 = vld [vmem:[%s846] sm:$0xff]
        %v848 = vld [vmem:[%s846 + $0x8] sm:$0xff]
        %v849 = vld [vmem:[%s846 + $0x10] sm:$0xff]
        %v850 = vld [vmem:[%s846 + $0x18] sm:$0xff]
        %v851 = vld [vmem:[%s846 + $0x20] sm:$0xff]
        %852 = vrot.lane.b32.xlu0 %v576, 124
        %v853 = vpop.permute.xlu0 %852
        %854 = vrot.lane.b32.xlu0 %v577, 124
        %v855 = vpop.permute.xlu0 %854
        %856 = vrot.lane.b32.xlu0 %v578, 124
        %v857 = vpop.permute.xlu0 %856
        %v861 = vsel %vm269, %v847, 0
        %v864 = vsel %vm269, %v848, 0
        %v867 = vsel %vm269, %v849, 0
        %v870 = vsel %vm269, %v850, 0
        %v873 = vsel %vm269, %v851, 0
        %v875 = vsel %vm285, %v857, 0
        %877 = vmatpush.msra.mxu0 0.0
        %878 = vmatpush.msra.mxu0 0.0
        %879 = vmatpush.msra.mxu0 0.0
        %880 = vmatpush.msra.mxu0 0.0
        %881 = vmatpush.msra.mxu0 0.0
        %882 = vmatpush.msra.mxu0 0.0
        %883 = vmatpush.msra.mxu0 0.0
        %884 = vmatpush.msra.mxu0 0.0
        %885 = vmatpush.msra.mxu0 0.0
        %886 = vmatpush.msra.mxu0 0.0
        %887 = vmatpush.msra.mxu0 0.0
        %888 = vmatpush.msra.mxu0 0.0
        %889 = vmatpush.msra.mxu0 0.0
        %890 = vmatpush.msra.mxu0 %v875
        %891 = vmatpush.msra.mxu0 %v855
        %892 = vmatpush.msra.mxu0 %v853
        %893 = vmatmul.f32.gmra.mxu0 %v861
        %v894 = vpop.f32.mrf.mxu0
        %v895 = vadd.f32 0.0, %v894
        %896 = vmatmul.f32.gmra.mxu0 %v864
        %v897 = vpop.f32.mrf.mxu0
        %v898 = vadd.f32 0.0, %v897
        %899 = vmatmul.f32.gmra.mxu0 %v867
        %v900 = vpop.f32.mrf.mxu0
        %v901 = vadd.f32 0.0, %v900
        %902 = vmatmul.f32.gmra.mxu0 %v870
        %v903 = vpop.f32.mrf.mxu0
        %v904 = vadd.f32 0.0, %v903
        %905 = vmatmul.f32.gmra.mxu0 %v873
        %v906 = vpop.f32.mrf.mxu0
        %v907 = vadd.f32 0.0, %v906
        %908 = vdwg.mxu0
        %v909 = vadd.f32 %v841, %v895
        %v910 = vadd.f32 %v842, %v898
        %v911 = vadd.f32 %v843, %v901
        %v912 = vadd.f32 %v844, %v904
        %v913 = vadd.f32 %v845, %v907
        %s914 = sadd.s32 %s241, 2
        %s915 = smul.u32 %s914, 24
        %s916 = scalar_lea.vmem %s219, %s915
        %v917 = vld [vmem:[%s916] sm:$0xff]
        %v918 = vld [vmem:[%s916 + $0x8] sm:$0xff]
        %v919 = vld [vmem:[%s916 + $0x10] sm:$0xf]
        %s920 = scalar_lea.vmem %s1, 400
        %v921 = vld [vmem:[%s920] sm:$0xff]
        %v922 = vld [vmem:[%s920 + $0x8] sm:$0xff]
        %v923 = vld [vmem:[%s920 + $0x10] sm:$0xff]
        %v924 = vld [vmem:[%s920 + $0x18] sm:$0xff]
        %v925 = vld [vmem:[%s920 + $0x20] sm:$0xff]
        %v927 = vsel %vm269, %v921, 0
        %v930 = vsel %vm269, %v922, 0
        %v933 = vsel %vm269, %v923, 0
        %v936 = vsel %vm269, %v924, 0
        %v939 = vsel %vm269, %v925, 0
        %v942 = vsel %vm285, %v919, 0
        %944 = vmatpush.msra.mxu0 0.0
        %945 = vmatpush.msra.mxu0 0.0
        %946 = vmatpush.msra.mxu0 0.0
        %947 = vmatpush.msra.mxu0 0.0
        %948 = vmatpush.msra.mxu0 0.0
        %949 = vmatpush.msra.mxu0 0.0
        %950 = vmatpush.msra.mxu0 0.0
        %951 = vmatpush.msra.mxu0 0.0
        %952 = vmatpush.msra.mxu0 0.0
        %953 = vmatpush.msra.mxu0 0.0
        %954 = vmatpush.msra.mxu0 0.0
        %955 = vmatpush.msra.mxu0 0.0
        %956 = vmatpush.msra.mxu0 0.0
        %957 = vmatpush.msra.mxu0 %v942
        %958 = vmatpush.msra.mxu0 %v918
        %959 = vmatpush.msra.mxu0 %v917
        %960 = vmatmul.f32.gmra.mxu0 %v927
        %v961 = vpop.f32.mrf.mxu0
        %v962 = vadd.f32 0.0, %v961
        %963 = vmatmul.f32.gmra.mxu0 %v930
        %v964 = vpop.f32.mrf.mxu0
        %v965 = vadd.f32 0.0, %v964
        %966 = vmatmul.f32.gmra.mxu0 %v933
        %v967 = vpop.f32.mrf.mxu0
        %v968 = vadd.f32 0.0, %v967
        %969 = vmatmul.f32.gmra.mxu0 %v936
        %v970 = vpop.f32.mrf.mxu0
        %v971 = vadd.f32 0.0, %v970
        %972 = vmatmul.f32.gmra.mxu0 %v939
        %v973 = vpop.f32.mrf.mxu0
        %v974 = vadd.f32 0.0, %v973
        %975 = vdwg.mxu0
        %v976 = vadd.f32 %v909, %v962
        %v977 = vadd.f32 %v910, %v965
        %v978 = vadd.f32 %v911, %v968
        %v979 = vadd.f32 %v912, %v971
        %v980 = vadd.f32 %v913, %v974
        %s981 = scalar_lea.vmem %s1, 440
        %v982 = vld [vmem:[%s981] sm:$0xff]
        %v983 = vld [vmem:[%s981 + $0x8] sm:$0xff]
        %v984 = vld [vmem:[%s981 + $0x10] sm:$0xff]
        %v985 = vld [vmem:[%s981 + $0x18] sm:$0xff]
        %v986 = vld [vmem:[%s981 + $0x20] sm:$0xff]
        %989 = vrot.lane.b32.xlu0 %v917, 127
        %v990 = vpop.permute.xlu0 %989
        %991 = vrot.lane.b32.xlu0 %v918, 127
        %v992 = vpop.permute.xlu0 %991
        %993 = vrot.lane.b32.xlu0 %v919, 127
        %v994 = vpop.permute.xlu0 %993
        %v998 = vsel %vm269, %v982, 0
        %v1001 = vsel %vm269, %v983, 0
        %v1004 = vsel %vm269, %v984, 0
        %v1007 = vsel %vm269, %v985, 0
        %v1010 = vsel %vm269, %v986, 0
        %v1012 = vsel %vm285, %v994, 0
        %1014 = vmatpush.msra.mxu0 0.0
        %1015 = vmatpush.msra.mxu0 0.0
        %1016 = vmatpush.msra.mxu0 0.0
        %1017 = vmatpush.msra.mxu0 0.0
        %1018 = vmatpush.msra.mxu0 0.0
        %1019 = vmatpush.msra.mxu0 0.0
        %1020 = vmatpush.msra.mxu0 0.0
        %1021 = vmatpush.msra.mxu0 0.0
        %1022 = vmatpush.msra.mxu0 0.0
        %1023 = vmatpush.msra.mxu0 0.0
        %1024 = vmatpush.msra.mxu0 0.0
        %1025 = vmatpush.msra.mxu0 0.0
        %1026 = vmatpush.msra.mxu0 0.0
        %1027 = vmatpush.msra.mxu0 %v1012
        %1028 = vmatpush.msra.mxu0 %v992
        %1029 = vmatpush.msra.mxu0 %v990
        %1030 = vmatmul.f32.gmra.mxu0 %v998
        %v1031 = vpop.f32.mrf.mxu0
        %v1032 = vadd.f32 0.0, %v1031
        %1033 = vmatmul.f32.gmra.mxu0 %v1001
        %v1034 = vpop.f32.mrf.mxu0
        %v1035 = vadd.f32 0.0, %v1034
        %1036 = vmatmul.f32.gmra.mxu0 %v1004
        %v1037 = vpop.f32.mrf.mxu0
        %v1038 = vadd.f32 0.0, %v1037
        %1039 = vmatmul.f32.gmra.mxu0 %v1007
        %v1040 = vpop.f32.mrf.mxu0
        %v1041 = vadd.f32 0.0, %v1040
        %1042 = vmatmul.f32.gmra.mxu0 %v1010
        %v1043 = vpop.f32.mrf.mxu0
        %v1044 = vadd.f32 0.0, %v1043
        %1045 = vdwg.mxu0
        %v1046 = vadd.f32 %v976, %v1032
        %v1047 = vadd.f32 %v977, %v1035
        %v1048 = vadd.f32 %v978, %v1038
        %v1049 = vadd.f32 %v979, %v1041
        %v1050 = vadd.f32 %v980, %v1044
        %s1051 = scalar_lea.vmem %s1, 480
        %v1052 = vld [vmem:[%s1051] sm:$0xff]
        %v1053 = vld [vmem:[%s1051 + $0x8] sm:$0xff]
        %v1054 = vld [vmem:[%s1051 + $0x10] sm:$0xff]
        %v1055 = vld [vmem:[%s1051 + $0x18] sm:$0xff]
        %v1056 = vld [vmem:[%s1051 + $0x20] sm:$0xff]
        %1057 = vrot.lane.b32.xlu0 %v917, 126
        %v1058 = vpop.permute.xlu0 %1057
        %1059 = vrot.lane.b32.xlu0 %v918, 126
        %v1060 = vpop.permute.xlu0 %1059
        %1061 = vrot.lane.b32.xlu0 %v919, 126
        %v1062 = vpop.permute.xlu0 %1061
        %v1066 = vsel %vm269, %v1052, 0
        %v1069 = vsel %vm269, %v1053, 0
        %v1072 = vsel %vm269, %v1054, 0
        %v1075 = vsel %vm269, %v1055, 0
        %v1078 = vsel %vm269, %v1056, 0
        %v1080 = vsel %vm285, %v1062, 0
        %1082 = vmatpush.msra.mxu0 0.0
        %1083 = vmatpush.msra.mxu0 0.0
        %1084 = vmatpush.msra.mxu0 0.0
        %1085 = vmatpush.msra.mxu0 0.0
        %1086 = vmatpush.msra.mxu0 0.0
        %1087 = vmatpush.msra.mxu0 0.0
        %1088 = vmatpush.msra.mxu0 0.0
        %1089 = vmatpush.msra.mxu0 0.0
        %1090 = vmatpush.msra.mxu0 0.0
        %1091 = vmatpush.msra.mxu0 0.0
        %1092 = vmatpush.msra.mxu0 0.0
        %1093 = vmatpush.msra.mxu0 0.0
        %1094 = vmatpush.msra.mxu0 0.0
        %1095 = vmatpush.msra.mxu0 %v1080
        %1096 = vmatpush.msra.mxu0 %v1060
        %1097 = vmatpush.msra.mxu0 %v1058
        %1098 = vmatmul.f32.gmra.mxu0 %v1066
        %v1099 = vpop.f32.mrf.mxu0
        %v1100 = vadd.f32 0.0, %v1099
        %1101 = vmatmul.f32.gmra.mxu0 %v1069
        %v1102 = vpop.f32.mrf.mxu0
        %v1103 = vadd.f32 0.0, %v1102
        %1104 = vmatmul.f32.gmra.mxu0 %v1072
        %v1105 = vpop.f32.mrf.mxu0
        %v1106 = vadd.f32 0.0, %v1105
        %1107 = vmatmul.f32.gmra.mxu0 %v1075
        %v1108 = vpop.f32.mrf.mxu0
        %v1109 = vadd.f32 0.0, %v1108
        %1110 = vmatmul.f32.gmra.mxu0 %v1078
        %v1111 = vpop.f32.mrf.mxu0
        %v1112 = vadd.f32 0.0, %v1111
        %1113 = vdwg.mxu0
        %v1114 = vadd.f32 %v1046, %v1100
        %v1115 = vadd.f32 %v1047, %v1103
        %v1116 = vadd.f32 %v1048, %v1106
        %v1117 = vadd.f32 %v1049, %v1109
        %v1118 = vadd.f32 %v1050, %v1112
        %s1119 = scalar_lea.vmem %s1, 520
        %v1120 = vld [vmem:[%s1119] sm:$0xff]
        %v1121 = vld [vmem:[%s1119 + $0x8] sm:$0xff]
        %v1122 = vld [vmem:[%s1119 + $0x10] sm:$0xff]
        %v1123 = vld [vmem:[%s1119 + $0x18] sm:$0xff]
        %v1124 = vld [vmem:[%s1119 + $0x20] sm:$0xff]
        %1125 = vrot.lane.b32.xlu0 %v917, 125
        %v1126 = vpop.permute.xlu0 %1125
        %1127 = vrot.lane.b32.xlu0 %v918, 125
        %v1128 = vpop.permute.xlu0 %1127
        %1129 = vrot.lane.b32.xlu0 %v919, 125
        %v1130 = vpop.permute.xlu0 %1129
        %v1134 = vsel %vm269, %v1120, 0
        %v1137 = vsel %vm269, %v1121, 0
        %v1140 = vsel %vm269, %v1122, 0
        %v1143 = vsel %vm269, %v1123, 0
        %v1146 = vsel %vm269, %v1124, 0
        %v1148 = vsel %vm285, %v1130, 0
        %1150 = vmatpush.msra.mxu0 0.0
        %1151 = vmatpush.msra.mxu0 0.0
        %1152 = vmatpush.msra.mxu0 0.0
        %1153 = vmatpush.msra.mxu0 0.0
        %1154 = vmatpush.msra.mxu0 0.0
        %1155 = vmatpush.msra.mxu0 0.0
        %1156 = vmatpush.msra.mxu0 0.0
        %1157 = vmatpush.msra.mxu0 0.0
        %1158 = vmatpush.msra.mxu0 0.0
        %1159 = vmatpush.msra.mxu0 0.0
        %1160 = vmatpush.msra.mxu0 0.0
        %1161 = vmatpush.msra.mxu0 0.0
        %1162 = vmatpush.msra.mxu0 0.0
        %1163 = vmatpush.msra.mxu0 %v1148
        %1164 = vmatpush.msra.mxu0 %v1128
        %1165 = vmatpush.msra.mxu0 %v1126
        %1166 = vmatmul.f32.gmra.mxu0 %v1134
        %v1167 = vpop.f32.mrf.mxu0
        %v1168 = vadd.f32 0.0, %v1167
        %1169 = vmatmul.f32.gmra.mxu0 %v1137
        %v1170 = vpop.f32.mrf.mxu0
        %v1171 = vadd.f32 0.0, %v1170
        %1172 = vmatmul.f32.gmra.mxu0 %v1140
        %v1173 = vpop.f32.mrf.mxu0
        %v1174 = vadd.f32 0.0, %v1173
        %1175 = vmatmul.f32.gmra.mxu0 %v1143
        %v1176 = vpop.f32.mrf.mxu0
        %v1177 = vadd.f32 0.0, %v1176
        %1178 = vmatmul.f32.gmra.mxu0 %v1146
        %v1179 = vpop.f32.mrf.mxu0
        %v1180 = vadd.f32 0.0, %v1179
        %1181 = vdwg.mxu0
        %v1182 = vadd.f32 %v1114, %v1168
        %v1183 = vadd.f32 %v1115, %v1171
        %v1184 = vadd.f32 %v1116, %v1174
        %v1185 = vadd.f32 %v1117, %v1177
        %v1186 = vadd.f32 %v1118, %v1180
        %s1187 = scalar_lea.vmem %s1, 560
        %v1188 = vld [vmem:[%s1187] sm:$0xff]
        %v1189 = vld [vmem:[%s1187 + $0x8] sm:$0xff]
        %v1190 = vld [vmem:[%s1187 + $0x10] sm:$0xff]
        %v1191 = vld [vmem:[%s1187 + $0x18] sm:$0xff]
        %v1192 = vld [vmem:[%s1187 + $0x20] sm:$0xff]
        %1193 = vrot.lane.b32.xlu0 %v917, 124
        %v1194 = vpop.permute.xlu0 %1193
        %1195 = vrot.lane.b32.xlu0 %v918, 124
        %v1196 = vpop.permute.xlu0 %1195
        %1197 = vrot.lane.b32.xlu0 %v919, 124
        %v1198 = vpop.permute.xlu0 %1197
        %v1202 = vsel %vm269, %v1188, 0
        %v1205 = vsel %vm269, %v1189, 0
        %v1208 = vsel %vm269, %v1190, 0
        %v1211 = vsel %vm269, %v1191, 0
        %v1214 = vsel %vm269, %v1192, 0
        %v1216 = vsel %vm285, %v1198, 0
        %1218 = vmatpush.msra.mxu0 0.0
        %1219 = vmatpush.msra.mxu0 0.0
        %1220 = vmatpush.msra.mxu0 0.0
        %1221 = vmatpush.msra.mxu0 0.0
        %1222 = vmatpush.msra.mxu0 0.0
        %1223 = vmatpush.msra.mxu0 0.0
        %1224 = vmatpush.msra.mxu0 0.0
        %1225 = vmatpush.msra.mxu0 0.0
        %1226 = vmatpush.msra.mxu0 0.0
        %1227 = vmatpush.msra.mxu0 0.0
        %1228 = vmatpush.msra.mxu0 0.0
        %1229 = vmatpush.msra.mxu0 0.0
        %1230 = vmatpush.msra.mxu0 0.0
        %1231 = vmatpush.msra.mxu0 %v1216
        %1232 = vmatpush.msra.mxu0 %v1196
        %1233 = vmatpush.msra.mxu0 %v1194
        %1234 = vmatmul.f32.gmra.mxu0 %v1202
        %v1235 = vpop.f32.mrf.mxu0
        %v1236 = vadd.f32 0.0, %v1235
        %1237 = vmatmul.f32.gmra.mxu0 %v1205
        %v1238 = vpop.f32.mrf.mxu0
        %v1239 = vadd.f32 0.0, %v1238
        %1240 = vmatmul.f32.gmra.mxu0 %v1208
        %v1241 = vpop.f32.mrf.mxu0
        %v1242 = vadd.f32 0.0, %v1241
        %1243 = vmatmul.f32.gmra.mxu0 %v1211
        %v1244 = vpop.f32.mrf.mxu0
        %v1245 = vadd.f32 0.0, %v1244
        %1246 = vmatmul.f32.gmra.mxu0 %v1214
        %v1247 = vpop.f32.mrf.mxu0
        %v1248 = vadd.f32 0.0, %v1247
        %1249 = vdwg.mxu0
        %v1250 = vadd.f32 %v1182, %v1236
        %v1251 = vadd.f32 %v1183, %v1239
        %v1252 = vadd.f32 %v1184, %v1242
        %v1253 = vadd.f32 %v1185, %v1245
        %v1254 = vadd.f32 %v1186, %v1248
        %s1255 = sadd.s32 %s241, 3
        %s1256 = smul.u32 %s1255, 24
        %s1257 = scalar_lea.vmem %s219, %s1256
        %v1258 = vld [vmem:[%s1257] sm:$0xff]
        %v1259 = vld [vmem:[%s1257 + $0x8] sm:$0xff]
        %v1260 = vld [vmem:[%s1257 + $0x10] sm:$0xf]
        %s1261 = scalar_lea.vmem %s1, 600
        %v1262 = vld [vmem:[%s1261] sm:$0xff]
        %v1263 = vld [vmem:[%s1261 + $0x8] sm:$0xff]
        %v1264 = vld [vmem:[%s1261 + $0x10] sm:$0xff]
        %v1265 = vld [vmem:[%s1261 + $0x18] sm:$0xff]
        %v1266 = vld [vmem:[%s1261 + $0x20] sm:$0xff]
        %v1268 = vsel %vm269, %v1262, 0
        %v1271 = vsel %vm269, %v1263, 0
        %v1274 = vsel %vm269, %v1264, 0
        %v1277 = vsel %vm269, %v1265, 0
        %v1280 = vsel %vm269, %v1266, 0
        %v1283 = vsel %vm285, %v1260, 0
        %1285 = vmatpush.msra.mxu0 0.0
        %1286 = vmatpush.msra.mxu0 0.0
        %1287 = vmatpush.msra.mxu0 0.0
        %1288 = vmatpush.msra.mxu0 0.0
        %1289 = vmatpush.msra.mxu0 0.0
        %1290 = vmatpush.msra.mxu0 0.0
        %1291 = vmatpush.msra.mxu0 0.0
        %1292 = vmatpush.msra.mxu0 0.0
        %1293 = vmatpush.msra.mxu0 0.0
        %1294 = vmatpush.msra.mxu0 0.0
        %1295 = vmatpush.msra.mxu0 0.0
        %1296 = vmatpush.msra.mxu0 0.0
        %1297 = vmatpush.msra.mxu0 0.0
        %1298 = vmatpush.msra.mxu0 %v1283
        %1299 = vmatpush.msra.mxu0 %v1259
        %1300 = vmatpush.msra.mxu0 %v1258
        %1301 = vmatmul.f32.gmra.mxu0 %v1268
        %v1302 = vpop.f32.mrf.mxu0
        %v1303 = vadd.f32 0.0, %v1302
        %1304 = vmatmul.f32.gmra.mxu0 %v1271
        %v1305 = vpop.f32.mrf.mxu0
        %v1306 = vadd.f32 0.0, %v1305
        %1307 = vmatmul.f32.gmra.mxu0 %v1274
        %v1308 = vpop.f32.mrf.mxu0
        %v1309 = vadd.f32 0.0, %v1308
        %1310 = vmatmul.f32.gmra.mxu0 %v1277
        %v1311 = vpop.f32.mrf.mxu0
        %v1312 = vadd.f32 0.0, %v1311
        %1313 = vmatmul.f32.gmra.mxu0 %v1280
        %v1314 = vpop.f32.mrf.mxu0
        %v1315 = vadd.f32 0.0, %v1314
        %1316 = vdwg.mxu0
        %v1317 = vadd.f32 %v1250, %v1303
        %v1318 = vadd.f32 %v1251, %v1306
        %v1319 = vadd.f32 %v1252, %v1309
        %v1320 = vadd.f32 %v1253, %v1312
        %v1321 = vadd.f32 %v1254, %v1315
        %s1322 = scalar_lea.vmem %s1, 640
        %v1323 = vld [vmem:[%s1322] sm:$0xff]
        %v1324 = vld [vmem:[%s1322 + $0x8] sm:$0xff]
        %v1325 = vld [vmem:[%s1322 + $0x10] sm:$0xff]
        %v1326 = vld [vmem:[%s1322 + $0x18] sm:$0xff]
        %v1327 = vld [vmem:[%s1322 + $0x20] sm:$0xff]
        %1330 = vrot.lane.b32.xlu0 %v1258, 127
        %v1331 = vpop.permute.xlu0 %1330
        %1332 = vrot.lane.b32.xlu0 %v1259, 127
        %v1333 = vpop.permute.xlu0 %1332
        %1334 = vrot.lane.b32.xlu0 %v1260, 127
        %v1335 = vpop.permute.xlu0 %1334
        %v1339 = vsel %vm269, %v1323, 0
        %v1342 = vsel %vm269, %v1324, 0
        %v1345 = vsel %vm269, %v1325, 0
        %v1348 = vsel %vm269, %v1326, 0
        %v1351 = vsel %vm269, %v1327, 0
        %v1353 = vsel %vm285, %v1335, 0
        %1355 = vmatpush.msra.mxu0 0.0
        %1356 = vmatpush.msra.mxu0 0.0
        %1357 = vmatpush.msra.mxu0 0.0
        %1358 = vmatpush.msra.mxu0 0.0
        %1359 = vmatpush.msra.mxu0 0.0
        %1360 = vmatpush.msra.mxu0 0.0
        %1361 = vmatpush.msra.mxu0 0.0
        %1362 = vmatpush.msra.mxu0 0.0
        %1363 = vmatpush.msra.mxu0 0.0
        %1364 = vmatpush.msra.mxu0 0.0
        %1365 = vmatpush.msra.mxu0 0.0
        %1366 = vmatpush.msra.mxu0 0.0
        %1367 = vmatpush.msra.mxu0 0.0
        %1368 = vmatpush.msra.mxu0 %v1353
        %1369 = vmatpush.msra.mxu0 %v1333
        %1370 = vmatpush.msra.mxu0 %v1331
        %1371 = vmatmul.f32.gmra.mxu0 %v1339
        %v1372 = vpop.f32.mrf.mxu0
        %v1373 = vadd.f32 0.0, %v1372
        %1374 = vmatmul.f32.gmra.mxu0 %v1342
        %v1375 = vpop.f32.mrf.mxu0
        %v1376 = vadd.f32 0.0, %v1375
        %1377 = vmatmul.f32.gmra.mxu0 %v1345
        %v1378 = vpop.f32.mrf.mxu0
        %v1379 = vadd.f32 0.0, %v1378
        %1380 = vmatmul.f32.gmra.mxu0 %v1348
        %v1381 = vpop.f32.mrf.mxu0
        %v1382 = vadd.f32 0.0, %v1381
        %1383 = vmatmul.f32.gmra.mxu0 %v1351
        %v1384 = vpop.f32.mrf.mxu0
        %v1385 = vadd.f32 0.0, %v1384
        %1386 = vdwg.mxu0
        %v1387 = vadd.f32 %v1317, %v1373
        %v1388 = vadd.f32 %v1318, %v1376
        %v1389 = vadd.f32 %v1319, %v1379
        %v1390 = vadd.f32 %v1320, %v1382
        %v1391 = vadd.f32 %v1321, %v1385
        %s1392 = scalar_lea.vmem %s1, 680
        %v1393 = vld [vmem:[%s1392] sm:$0xff]
        %v1394 = vld [vmem:[%s1392 + $0x8] sm:$0xff]
        %v1395 = vld [vmem:[%s1392 + $0x10] sm:$0xff]
        %v1396 = vld [vmem:[%s1392 + $0x18] sm:$0xff]
        %v1397 = vld [vmem:[%s1392 + $0x20] sm:$0xff]
        %1398 = vrot.lane.b32.xlu0 %v1258, 126
        %v1399 = vpop.permute.xlu0 %1398
        %1400 = vrot.lane.b32.xlu0 %v1259, 126
        %v1401 = vpop.permute.xlu0 %1400
        %1402 = vrot.lane.b32.xlu0 %v1260, 126
        %v1403 = vpop.permute.xlu0 %1402
        %v1407 = vsel %vm269, %v1393, 0
        %v1410 = vsel %vm269, %v1394, 0
        %v1413 = vsel %vm269, %v1395, 0
        %v1416 = vsel %vm269, %v1396, 0
        %v1419 = vsel %vm269, %v1397, 0
        %v1421 = vsel %vm285, %v1403, 0
        %1423 = vmatpush.msra.mxu0 0.0
        %1424 = vmatpush.msra.mxu0 0.0
        %1425 = vmatpush.msra.mxu0 0.0
        %1426 = vmatpush.msra.mxu0 0.0
        %1427 = vmatpush.msra.mxu0 0.0
        %1428 = vmatpush.msra.mxu0 0.0
        %1429 = vmatpush.msra.mxu0 0.0
        %1430 = vmatpush.msra.mxu0 0.0
        %1431 = vmatpush.msra.mxu0 0.0
        %1432 = vmatpush.msra.mxu0 0.0
        %1433 = vmatpush.msra.mxu0 0.0
        %1434 = vmatpush.msra.mxu0 0.0
        %1435 = vmatpush.msra.mxu0 0.0
        %1436 = vmatpush.msra.mxu0 %v1421
        %1437 = vmatpush.msra.mxu0 %v1401
        %1438 = vmatpush.msra.mxu0 %v1399
        %1439 = vmatmul.f32.gmra.mxu0 %v1407
        %v1440 = vpop.f32.mrf.mxu0
        %v1441 = vadd.f32 0.0, %v1440
        %1442 = vmatmul.f32.gmra.mxu0 %v1410
        %v1443 = vpop.f32.mrf.mxu0
        %v1444 = vadd.f32 0.0, %v1443
        %1445 = vmatmul.f32.gmra.mxu0 %v1413
        %v1446 = vpop.f32.mrf.mxu0
        %v1447 = vadd.f32 0.0, %v1446
        %1448 = vmatmul.f32.gmra.mxu0 %v1416
        %v1449 = vpop.f32.mrf.mxu0
        %v1450 = vadd.f32 0.0, %v1449
        %1451 = vmatmul.f32.gmra.mxu0 %v1419
        %v1452 = vpop.f32.mrf.mxu0
        %v1453 = vadd.f32 0.0, %v1452
        %1454 = vdwg.mxu0
        %v1455 = vadd.f32 %v1387, %v1441
        %v1456 = vadd.f32 %v1388, %v1444
        %v1457 = vadd.f32 %v1389, %v1447
        %v1458 = vadd.f32 %v1390, %v1450
        %v1459 = vadd.f32 %v1391, %v1453
        %s1460 = scalar_lea.vmem %s1, 720
        %v1461 = vld [vmem:[%s1460] sm:$0xff]
        %v1462 = vld [vmem:[%s1460 + $0x8] sm:$0xff]
        %v1463 = vld [vmem:[%s1460 + $0x10] sm:$0xff]
        %v1464 = vld [vmem:[%s1460 + $0x18] sm:$0xff]
        %v1465 = vld [vmem:[%s1460 + $0x20] sm:$0xff]
        %1466 = vrot.lane.b32.xlu0 %v1258, 125
        %v1467 = vpop.permute.xlu0 %1466
        %1468 = vrot.lane.b32.xlu0 %v1259, 125
        %v1469 = vpop.permute.xlu0 %1468
        %1470 = vrot.lane.b32.xlu0 %v1260, 125
        %v1471 = vpop.permute.xlu0 %1470
        %v1475 = vsel %vm269, %v1461, 0
        %v1478 = vsel %vm269, %v1462, 0
        %v1481 = vsel %vm269, %v1463, 0
        %v1484 = vsel %vm269, %v1464, 0
        %v1487 = vsel %vm269, %v1465, 0
        %v1489 = vsel %vm285, %v1471, 0
        %1491 = vmatpush.msra.mxu0 0.0
        %1492 = vmatpush.msra.mxu0 0.0
        %1493 = vmatpush.msra.mxu0 0.0
        %1494 = vmatpush.msra.mxu0 0.0
        %1495 = vmatpush.msra.mxu0 0.0
        %1496 = vmatpush.msra.mxu0 0.0
        %1497 = vmatpush.msra.mxu0 0.0
        %1498 = vmatpush.msra.mxu0 0.0
        %1499 = vmatpush.msra.mxu0 0.0
        %1500 = vmatpush.msra.mxu0 0.0
        %1501 = vmatpush.msra.mxu0 0.0
        %1502 = vmatpush.msra.mxu0 0.0
        %1503 = vmatpush.msra.mxu0 0.0
        %1504 = vmatpush.msra.mxu0 %v1489
        %1505 = vmatpush.msra.mxu0 %v1469
        %1506 = vmatpush.msra.mxu0 %v1467
        %1507 = vmatmul.f32.gmra.mxu0 %v1475
        %v1508 = vpop.f32.mrf.mxu0
        %v1509 = vadd.f32 0.0, %v1508
        %1510 = vmatmul.f32.gmra.mxu0 %v1478
        %v1511 = vpop.f32.mrf.mxu0
        %v1512 = vadd.f32 0.0, %v1511
        %1513 = vmatmul.f32.gmra.mxu0 %v1481
        %v1514 = vpop.f32.mrf.mxu0
        %v1515 = vadd.f32 0.0, %v1514
        %1516 = vmatmul.f32.gmra.mxu0 %v1484
        %v1517 = vpop.f32.mrf.mxu0
        %v1518 = vadd.f32 0.0, %v1517
        %1519 = vmatmul.f32.gmra.mxu0 %v1487
        %v1520 = vpop.f32.mrf.mxu0
        %v1521 = vadd.f32 0.0, %v1520
        %1522 = vdwg.mxu0
        %v1523 = vadd.f32 %v1455, %v1509
        %v1524 = vadd.f32 %v1456, %v1512
        %v1525 = vadd.f32 %v1457, %v1515
        %v1526 = vadd.f32 %v1458, %v1518
        %v1527 = vadd.f32 %v1459, %v1521
        %s1528 = scalar_lea.vmem %s1, 760
        %v1529 = vld [vmem:[%s1528] sm:$0xff]
        %v1530 = vld [vmem:[%s1528 + $0x8] sm:$0xff]
        %v1531 = vld [vmem:[%s1528 + $0x10] sm:$0xff]
        %v1532 = vld [vmem:[%s1528 + $0x18] sm:$0xff]
        %v1533 = vld [vmem:[%s1528 + $0x20] sm:$0xff]
        %1534 = vrot.lane.b32.xlu0 %v1258, 124
        %v1535 = vpop.permute.xlu0 %1534
        %1536 = vrot.lane.b32.xlu0 %v1259, 124
        %v1537 = vpop.permute.xlu0 %1536
        %1538 = vrot.lane.b32.xlu0 %v1260, 124
        %v1539 = vpop.permute.xlu0 %1538
        %v1543 = vsel %vm269, %v1529, 0
        %v1546 = vsel %vm269, %v1530, 0
        %v1549 = vsel %vm269, %v1531, 0
        %v1552 = vsel %vm269, %v1532, 0
        %v1555 = vsel %vm269, %v1533, 0
        %v1557 = vsel %vm285, %v1539, 0
        %1559 = vmatpush.msra.mxu0 0.0
        %1560 = vmatpush.msra.mxu0 0.0
        %1561 = vmatpush.msra.mxu0 0.0
        %1562 = vmatpush.msra.mxu0 0.0
        %1563 = vmatpush.msra.mxu0 0.0
        %1564 = vmatpush.msra.mxu0 0.0
        %1565 = vmatpush.msra.mxu0 0.0
        %1566 = vmatpush.msra.mxu0 0.0
        %1567 = vmatpush.msra.mxu0 0.0
        %1568 = vmatpush.msra.mxu0 0.0
        %1569 = vmatpush.msra.mxu0 0.0
        %1570 = vmatpush.msra.mxu0 0.0
        %1571 = vmatpush.msra.mxu0 0.0
        %1572 = vmatpush.msra.mxu0 %v1557
        %1573 = vmatpush.msra.mxu0 %v1537
        %1574 = vmatpush.msra.mxu0 %v1535
        %1575 = vmatmul.f32.gmra.mxu0 %v1543
        %v1576 = vpop.f32.mrf.mxu0
        %v1577 = vadd.f32 0.0, %v1576
        %1578 = vmatmul.f32.gmra.mxu0 %v1546
        %v1579 = vpop.f32.mrf.mxu0
        %v1580 = vadd.f32 0.0, %v1579
        %1581 = vmatmul.f32.gmra.mxu0 %v1549
        %v1582 = vpop.f32.mrf.mxu0
        %v1583 = vadd.f32 0.0, %v1582
        %1584 = vmatmul.f32.gmra.mxu0 %v1552
        %v1585 = vpop.f32.mrf.mxu0
        %v1586 = vadd.f32 0.0, %v1585
        %1587 = vmatmul.f32.gmra.mxu0 %v1555
        %v1588 = vpop.f32.mrf.mxu0
        %v1589 = vadd.f32 0.0, %v1588
        %1590 = vdwg.mxu0
        %v1591 = vadd.f32 %v1523, %v1577
        %v1592 = vadd.f32 %v1524, %v1580
        %v1593 = vadd.f32 %v1525, %v1583
        %v1594 = vadd.f32 %v1526, %v1586
        %v1595 = vadd.f32 %v1527, %v1589
        %s1596 = sadd.s32 %s241, 4
        %s1597 = smul.u32 %s1596, 24
        %s1598 = scalar_lea.vmem %s219, %s1597
        %v1599 = vld [vmem:[%s1598] sm:$0xff]
        %v1600 = vld [vmem:[%s1598 + $0x8] sm:$0xff]
        %v1601 = vld [vmem:[%s1598 + $0x10] sm:$0xf]
        %s1602 = scalar_lea.vmem %s1, 800
        %v1603 = vld [vmem:[%s1602] sm:$0xff]
        %v1604 = vld [vmem:[%s1602 + $0x8] sm:$0xff]
        %v1605 = vld [vmem:[%s1602 + $0x10] sm:$0xff]
        %v1606 = vld [vmem:[%s1602 + $0x18] sm:$0xff]
        %v1607 = vld [vmem:[%s1602 + $0x20] sm:$0xff]
        %v1609 = vsel %vm269, %v1603, 0
        %v1612 = vsel %vm269, %v1604, 0
        %v1615 = vsel %vm269, %v1605, 0
        %v1618 = vsel %vm269, %v1606, 0
        %v1621 = vsel %vm269, %v1607, 0
        %v1624 = vsel %vm285, %v1601, 0
        %1626 = vmatpush.msra.mxu0 0.0
        %1627 = vmatpush.msra.mxu0 0.0
        %1628 = vmatpush.msra.mxu0 0.0
        %1629 = vmatpush.msra.mxu0 0.0
        %1630 = vmatpush.msra.mxu0 0.0
        %1631 = vmatpush.msra.mxu0 0.0
        %1632 = vmatpush.msra.mxu0 0.0
        %1633 = vmatpush.msra.mxu0 0.0
        %1634 = vmatpush.msra.mxu0 0.0
        %1635 = vmatpush.msra.mxu0 0.0
        %1636 = vmatpush.msra.mxu0 0.0
        %1637 = vmatpush.msra.mxu0 0.0
        %1638 = vmatpush.msra.mxu0 0.0
        %1639 = vmatpush.msra.mxu0 %v1624
        %1640 = vmatpush.msra.mxu0 %v1600
        %1641 = vmatpush.msra.mxu0 %v1599
        %1642 = vmatmul.f32.gmra.mxu0 %v1609
        %v1643 = vpop.f32.mrf.mxu0
        %v1644 = vadd.f32 0.0, %v1643
        %1645 = vmatmul.f32.gmra.mxu0 %v1612
        %v1646 = vpop.f32.mrf.mxu0
        %v1647 = vadd.f32 0.0, %v1646
        %1648 = vmatmul.f32.gmra.mxu0 %v1615
        %v1649 = vpop.f32.mrf.mxu0
        %v1650 = vadd.f32 0.0, %v1649
        %1651 = vmatmul.f32.gmra.mxu0 %v1618
        %v1652 = vpop.f32.mrf.mxu0
        %v1653 = vadd.f32 0.0, %v1652
        %1654 = vmatmul.f32.gmra.mxu0 %v1621
        %v1655 = vpop.f32.mrf.mxu0
        %v1656 = vadd.f32 0.0, %v1655
        %1657 = vdwg.mxu0
        %v1658 = vadd.f32 %v1591, %v1644
        %v1659 = vadd.f32 %v1592, %v1647
        %v1660 = vadd.f32 %v1593, %v1650
        %v1661 = vadd.f32 %v1594, %v1653
        %v1662 = vadd.f32 %v1595, %v1656
        %s1663 = scalar_lea.vmem %s1, 840
        %v1664 = vld [vmem:[%s1663] sm:$0xff]
        %v1665 = vld [vmem:[%s1663 + $0x8] sm:$0xff]
        %v1666 = vld [vmem:[%s1663 + $0x10] sm:$0xff]
        %v1667 = vld [vmem:[%s1663 + $0x18] sm:$0xff]
        %v1668 = vld [vmem:[%s1663 + $0x20] sm:$0xff]
        %1671 = vrot.lane.b32.xlu0 %v1599, 127
        %v1672 = vpop.permute.xlu0 %1671
        %1673 = vrot.lane.b32.xlu0 %v1600, 127
        %v1674 = vpop.permute.xlu0 %1673
        %1675 = vrot.lane.b32.xlu0 %v1601, 127
        %v1676 = vpop.permute.xlu0 %1675
        %v1680 = vsel %vm269, %v1664, 0
        %v1683 = vsel %vm269, %v1665, 0
        %v1686 = vsel %vm269, %v1666, 0
        %v1689 = vsel %vm269, %v1667, 0
        %v1692 = vsel %vm269, %v1668, 0
        %v1694 = vsel %vm285, %v1676, 0
        %1696 = vmatpush.msra.mxu0 0.0
        %1697 = vmatpush.msra.mxu0 0.0
        %1698 = vmatpush.msra.mxu0 0.0
        %1699 = vmatpush.msra.mxu0 0.0
        %1700 = vmatpush.msra.mxu0 0.0
        %1701 = vmatpush.msra.mxu0 0.0
        %1702 = vmatpush.msra.mxu0 0.0
        %1703 = vmatpush.msra.mxu0 0.0
        %1704 = vmatpush.msra.mxu0 0.0
        %1705 = vmatpush.msra.mxu0 0.0
        %1706 = vmatpush.msra.mxu0 0.0
        %1707 = vmatpush.msra.mxu0 0.0
        %1708 = vmatpush.msra.mxu0 0.0
        %1709 = vmatpush.msra.mxu0 %v1694
        %1710 = vmatpush.msra.mxu0 %v1674
        %1711 = vmatpush.msra.mxu0 %v1672
        %1712 = vmatmul.f32.gmra.mxu0 %v1680
        %v1713 = vpop.f32.mrf.mxu0
        %v1714 = vadd.f32 0.0, %v1713
        %1715 = vmatmul.f32.gmra.mxu0 %v1683
        %v1716 = vpop.f32.mrf.mxu0
        %v1717 = vadd.f32 0.0, %v1716
        %1718 = vmatmul.f32.gmra.mxu0 %v1686
        %v1719 = vpop.f32.mrf.mxu0
        %v1720 = vadd.f32 0.0, %v1719
        %1721 = vmatmul.f32.gmra.mxu0 %v1689
        %v1722 = vpop.f32.mrf.mxu0
        %v1723 = vadd.f32 0.0, %v1722
        %1724 = vmatmul.f32.gmra.mxu0 %v1692
        %v1725 = vpop.f32.mrf.mxu0
        %v1726 = vadd.f32 0.0, %v1725
        %1727 = vdwg.mxu0
        %v1728 = vadd.f32 %v1658, %v1714
        %v1729 = vadd.f32 %v1659, %v1717
        %v1730 = vadd.f32 %v1660, %v1720
        %v1731 = vadd.f32 %v1661, %v1723
        %v1732 = vadd.f32 %v1662, %v1726
        %s1733 = scalar_lea.vmem %s1, 880
        %v1734 = vld [vmem:[%s1733] sm:$0xff]
        %v1735 = vld [vmem:[%s1733 + $0x8] sm:$0xff]
        %v1736 = vld [vmem:[%s1733 + $0x10] sm:$0xff]
        %v1737 = vld [vmem:[%s1733 + $0x18] sm:$0xff]
        %v1738 = vld [vmem:[%s1733 + $0x20] sm:$0xff]
        %1739 = vrot.lane.b32.xlu0 %v1599, 126
        %v1740 = vpop.permute.xlu0 %1739
        %1741 = vrot.lane.b32.xlu0 %v1600, 126
        %v1742 = vpop.permute.xlu0 %1741
        %1743 = vrot.lane.b32.xlu0 %v1601, 126
        %v1744 = vpop.permute.xlu0 %1743
        %v1748 = vsel %vm269, %v1734, 0
        %v1751 = vsel %vm269, %v1735, 0
        %v1754 = vsel %vm269, %v1736, 0
        %v1757 = vsel %vm269, %v1737, 0
        %v1760 = vsel %vm269, %v1738, 0
        %v1762 = vsel %vm285, %v1744, 0
        %1764 = vmatpush.msra.mxu0 0.0
        %1765 = vmatpush.msra.mxu0 0.0
        %1766 = vmatpush.msra.mxu0 0.0
        %1767 = vmatpush.msra.mxu0 0.0
        %1768 = vmatpush.msra.mxu0 0.0
        %1769 = vmatpush.msra.mxu0 0.0
        %1770 = vmatpush.msra.mxu0 0.0
        %1771 = vmatpush.msra.mxu0 0.0
        %1772 = vmatpush.msra.mxu0 0.0
        %1773 = vmatpush.msra.mxu0 0.0
        %1774 = vmatpush.msra.mxu0 0.0
        %1775 = vmatpush.msra.mxu0 0.0
        %1776 = vmatpush.msra.mxu0 0.0
        %1777 = vmatpush.msra.mxu0 %v1762
        %1778 = vmatpush.msra.mxu0 %v1742
        %1779 = vmatpush.msra.mxu0 %v1740
        %1780 = vmatmul.f32.gmra.mxu0 %v1748
        %v1781 = vpop.f32.mrf.mxu0
        %v1782 = vadd.f32 0.0, %v1781
        %1783 = vmatmul.f32.gmra.mxu0 %v1751
        %v1784 = vpop.f32.mrf.mxu0
        %v1785 = vadd.f32 0.0, %v1784
        %1786 = vmatmul.f32.gmra.mxu0 %v1754
        %v1787 = vpop.f32.mrf.mxu0
        %v1788 = vadd.f32 0.0, %v1787
        %1789 = vmatmul.f32.gmra.mxu0 %v1757
        %v1790 = vpop.f32.mrf.mxu0
        %v1791 = vadd.f32 0.0, %v1790
        %1792 = vmatmul.f32.gmra.mxu0 %v1760
        %v1793 = vpop.f32.mrf.mxu0
        %v1794 = vadd.f32 0.0, %v1793
        %1795 = vdwg.mxu0
        %v1796 = vadd.f32 %v1728, %v1782
        %v1797 = vadd.f32 %v1729, %v1785
        %v1798 = vadd.f32 %v1730, %v1788
        %v1799 = vadd.f32 %v1731, %v1791
        %v1800 = vadd.f32 %v1732, %v1794
        %s1801 = scalar_lea.vmem %s1, 920
        %v1802 = vld [vmem:[%s1801] sm:$0xff]
        %v1803 = vld [vmem:[%s1801 + $0x8] sm:$0xff]
        %v1804 = vld [vmem:[%s1801 + $0x10] sm:$0xff]
        %v1805 = vld [vmem:[%s1801 + $0x18] sm:$0xff]
        %v1806 = vld [vmem:[%s1801 + $0x20] sm:$0xff]
        %1807 = vrot.lane.b32.xlu0 %v1599, 125
        %v1808 = vpop.permute.xlu0 %1807
        %1809 = vrot.lane.b32.xlu0 %v1600, 125
        %v1810 = vpop.permute.xlu0 %1809
        %1811 = vrot.lane.b32.xlu0 %v1601, 125
        %v1812 = vpop.permute.xlu0 %1811
        %v1816 = vsel %vm269, %v1802, 0
        %v1819 = vsel %vm269, %v1803, 0
        %v1822 = vsel %vm269, %v1804, 0
        %v1825 = vsel %vm269, %v1805, 0
        %v1828 = vsel %vm269, %v1806, 0
        %v1830 = vsel %vm285, %v1812, 0
        %1832 = vmatpush.msra.mxu0 0.0
        %1833 = vmatpush.msra.mxu0 0.0
        %1834 = vmatpush.msra.mxu0 0.0
        %1835 = vmatpush.msra.mxu0 0.0
        %1836 = vmatpush.msra.mxu0 0.0
        %1837 = vmatpush.msra.mxu0 0.0
        %1838 = vmatpush.msra.mxu0 0.0
        %1839 = vmatpush.msra.mxu0 0.0
        %1840 = vmatpush.msra.mxu0 0.0
        %1841 = vmatpush.msra.mxu0 0.0
        %1842 = vmatpush.msra.mxu0 0.0
        %1843 = vmatpush.msra.mxu0 0.0
        %1844 = vmatpush.msra.mxu0 0.0
        %1845 = vmatpush.msra.mxu0 %v1830
        %1846 = vmatpush.msra.mxu0 %v1810
        %1847 = vmatpush.msra.mxu0 %v1808
        %1848 = vmatmul.f32.gmra.mxu0 %v1816
        %v1849 = vpop.f32.mrf.mxu0
        %v1850 = vadd.f32 0.0, %v1849
        %1851 = vmatmul.f32.gmra.mxu0 %v1819
        %v1852 = vpop.f32.mrf.mxu0
        %v1853 = vadd.f32 0.0, %v1852
        %1854 = vmatmul.f32.gmra.mxu0 %v1822
        %v1855 = vpop.f32.mrf.mxu0
        %v1856 = vadd.f32 0.0, %v1855
        %1857 = vmatmul.f32.gmra.mxu0 %v1825
        %v1858 = vpop.f32.mrf.mxu0
        %v1859 = vadd.f32 0.0, %v1858
        %1860 = vmatmul.f32.gmra.mxu0 %v1828
        %v1861 = vpop.f32.mrf.mxu0
        %v1862 = vadd.f32 0.0, %v1861
        %1863 = vdwg.mxu0
        %v1864 = vadd.f32 %v1796, %v1850
        %v1865 = vadd.f32 %v1797, %v1853
        %v1866 = vadd.f32 %v1798, %v1856
        %v1867 = vadd.f32 %v1799, %v1859
        %v1868 = vadd.f32 %v1800, %v1862
        %s1869 = scalar_lea.vmem %s1, 960
        %v1870 = vld [vmem:[%s1869] sm:$0xff]
        %v1871 = vld [vmem:[%s1869 + $0x8] sm:$0xff]
        %v1872 = vld [vmem:[%s1869 + $0x10] sm:$0xff]
        %v1873 = vld [vmem:[%s1869 + $0x18] sm:$0xff]
        %v1874 = vld [vmem:[%s1869 + $0x20] sm:$0xff]
        %1875 = vrot.lane.b32.xlu0 %v1599, 124
        %v1876 = vpop.permute.xlu0 %1875
        %1877 = vrot.lane.b32.xlu0 %v1600, 124
        %v1878 = vpop.permute.xlu0 %1877
        %1879 = vrot.lane.b32.xlu0 %v1601, 124
        %v1880 = vpop.permute.xlu0 %1879
        %v1884 = vsel %vm269, %v1870, 0
        %v1887 = vsel %vm269, %v1871, 0
        %v1890 = vsel %vm269, %v1872, 0
        %v1893 = vsel %vm269, %v1873, 0
        %v1896 = vsel %vm269, %v1874, 0
        %v1898 = vsel %vm285, %v1880, 0
        %1900 = vmatpush.msra.mxu0 0.0
        %1901 = vmatpush.msra.mxu0 0.0
        %1902 = vmatpush.msra.mxu0 0.0
        %1903 = vmatpush.msra.mxu0 0.0
        %1904 = vmatpush.msra.mxu0 0.0
        %1905 = vmatpush.msra.mxu0 0.0
        %1906 = vmatpush.msra.mxu0 0.0
        %1907 = vmatpush.msra.mxu0 0.0
        %1908 = vmatpush.msra.mxu0 0.0
        %1909 = vmatpush.msra.mxu0 0.0
        %1910 = vmatpush.msra.mxu0 0.0
        %1911 = vmatpush.msra.mxu0 0.0
        %1912 = vmatpush.msra.mxu0 0.0
        %1913 = vmatpush.msra.mxu0 %v1898
        %1914 = vmatpush.msra.mxu0 %v1878
        %1915 = vmatpush.msra.mxu0 %v1876
        %1916 = vmatmul.f32.gmra.mxu0 %v1884
        %v1917 = vpop.f32.mrf.mxu0
        %v1918 = vadd.f32 0.0, %v1917
        %1919 = vmatmul.f32.gmra.mxu0 %v1887
        %v1920 = vpop.f32.mrf.mxu0
        %v1921 = vadd.f32 0.0, %v1920
        %1922 = vmatmul.f32.gmra.mxu0 %v1890
        %v1923 = vpop.f32.mrf.mxu0
        %v1924 = vadd.f32 0.0, %v1923
        %1925 = vmatmul.f32.gmra.mxu0 %v1893
        %v1926 = vpop.f32.mrf.mxu0
        %v1927 = vadd.f32 0.0, %v1926
        %1928 = vmatmul.f32.gmra.mxu0 %v1896
        %v1929 = vpop.f32.mrf.mxu0
        %v1930 = vadd.f32 0.0, %v1929
        %1931 = vdwg.mxu0
        %v1932 = vadd.f32 %v1864, %v1918
        %v1933 = vadd.f32 %v1865, %v1921
        %v1934 = vadd.f32 %v1866, %v1924
        %v1935 = vadd.f32 %v1867, %v1927
        %v1936 = vadd.f32 %v1868, %v1930
        %1938 = vset.pattern.permute.xlu0 0
        %1939 = vperm.xlu0 %1938, %v225
        %v1940 = vpop.permute.xlu0 %1939
        %1943 = vset.pattern.permute.xlu0 0
        %1944 = vperm.xlu0 %1943, %v226
        %v1945 = vpop.permute.xlu0 %1944
        %1948 = vset.pattern.permute.xlu0 0
        %1949 = vperm.xlu0 %1948, %v227
        %v1950 = vpop.permute.xlu0 %1949
        %1953 = vset.pattern.permute.xlu0 0
        %1954 = vperm.xlu0 %1953, %v228
        %v1955 = vpop.permute.xlu0 %1954
        %1958 = vset.pattern.permute.xlu0 0
        %1959 = vperm.xlu0 %1958, %v229
        %v1960 = vpop.permute.xlu0 %1959
        %v1962 = vadd.f32 %v1932, %v1940
        %v1963 = vadd.f32 %v1933, %v1945
        %v1964 = vadd.f32 %v1934, %v1950
        %v1965 = vadd.f32 %v1935, %v1955
        %v1966 = vadd.f32 %v1936, %v1960
        %v1967 = vmax.f32 %v1962, 0.0
        %v1968 = vmax.f32 %v1963, 0.0
        %v1969 = vmax.f32 %v1964, 0.0
        %v1970 = vmax.f32 %v1965, 0.0
        %v1971 = vmax.f32 %v1966, 0.0
        %p1972 = scmp.ge.s32.totalorder %s239, 0
        %s1973 = scalar_select %p1972, 1, 0
        %s1974 = scvt.s32.f32 %s1973
        %v1975 = vstv %s1974
        %v1976 = vmul.f32 %v1967, %v1975
        %v1977 = vmul.f32 %v1968, %v1975
        %v1978 = vmul.f32 %v1969, %v1975
        %v1979 = vmul.f32 %v1970, %v1975
        %v1980 = vmul.f32 %v1971, %v1975
        %s1981 = smul.u32 %s238, 24
        %s1982 = scalar_lea.vmem %s219, %s1981
        %v1983 = vld [vmem:[%s1982] sm:$0xff]
        %v1984 = vld [vmem:[%s1982 + $0x8] sm:$0xff]
        %v1985 = vld [vmem:[%s1982 + $0x10] sm:$0xf]
        %1989 = vrot.lane.b32.xlu0 %v1983, 127
        %v1990 = vpop.permute.xlu0 %1989
        %1991 = vrot.lane.b32.xlu0 %v1984, 127
        %v1992 = vpop.permute.xlu0 %1991
        %1993 = vrot.lane.b32.xlu0 %v1985, 127
        %v1994 = vpop.permute.xlu0 %1993
        %v1997 = vsel %vm285, %v1994, 0
        %1999 = vmatpush.msra.mxu0 0.0
        %2000 = vmatpush.msra.mxu0 0.0
        %2001 = vmatpush.msra.mxu0 0.0
        %2002 = vmatpush.msra.mxu0 0.0
        %2003 = vmatpush.msra.mxu0 0.0
        %2004 = vmatpush.msra.mxu0 0.0
        %2005 = vmatpush.msra.mxu0 0.0
        %2006 = vmatpush.msra.mxu0 0.0
        %2007 = vmatpush.msra.mxu0 0.0
        %2008 = vmatpush.msra.mxu0 0.0
        %2009 = vmatpush.msra.mxu0 0.0
        %2010 = vmatpush.msra.mxu0 0.0
        %2011 = vmatpush.msra.mxu0 0.0
        %2012 = vmatpush.msra.mxu0 %v1997
        %2013 = vmatpush.msra.mxu0 %v1992
        %2014 = vmatpush.msra.mxu0 %v1990
        %2015 = vmatmul.f32.gmra.mxu0 %v271
        %v2016 = vpop.f32.mrf.mxu0
        %v2017 = vadd.f32 0.0, %v2016
        %2018 = vmatmul.f32.gmra.mxu0 %v274
        %v2019 = vpop.f32.mrf.mxu0
        %v2020 = vadd.f32 0.0, %v2019
        %2021 = vmatmul.f32.gmra.mxu0 %v277
        %v2022 = vpop.f32.mrf.mxu0
        %v2023 = vadd.f32 0.0, %v2022
        %2024 = vmatmul.f32.gmra.mxu0 %v280
        %v2025 = vpop.f32.mrf.mxu0
        %v2026 = vadd.f32 0.0, %v2025
        %2027 = vmatmul.f32.gmra.mxu0 %v283
        %v2028 = vpop.f32.mrf.mxu0
        %v2029 = vadd.f32 0.0, %v2028
        %2030 = vdwg.mxu0
        %v2031 = vsel %vm285, %v1985, 0
        %2033 = vmatpush.msra.mxu0 0.0
        %2034 = vmatpush.msra.mxu0 0.0
        %2035 = vmatpush.msra.mxu0 0.0
        %2036 = vmatpush.msra.mxu0 0.0
        %2037 = vmatpush.msra.mxu0 0.0
        %2038 = vmatpush.msra.mxu0 0.0
        %2039 = vmatpush.msra.mxu0 0.0
        %2040 = vmatpush.msra.mxu0 0.0
        %2041 = vmatpush.msra.mxu0 0.0
        %2042 = vmatpush.msra.mxu0 0.0
        %2043 = vmatpush.msra.mxu0 0.0
        %2044 = vmatpush.msra.mxu0 0.0
        %2045 = vmatpush.msra.mxu0 0.0
        %2046 = vmatpush.msra.mxu0 %v2031
        %2047 = vmatpush.msra.mxu0 %v1984
        %2048 = vmatpush.msra.mxu0 %v1983
        %2049 = vmatmul.f32.gmra.mxu0 %v321
        %v2050 = vpop.f32.mrf.mxu0
        %v2051 = vadd.f32 %v2017, %v2050
        %2052 = vmatmul.f32.gmra.mxu0 %v324
        %v2053 = vpop.f32.mrf.mxu0
        %v2054 = vadd.f32 %v2020, %v2053
        %2055 = vmatmul.f32.gmra.mxu0 %v327
        %v2056 = vpop.f32.mrf.mxu0
        %v2057 = vadd.f32 %v2023, %v2056
        %2058 = vmatmul.f32.gmra.mxu0 %v330
        %v2059 = vpop.f32.mrf.mxu0
        %v2060 = vadd.f32 %v2026, %v2059
        %2061 = vmatmul.f32.gmra.mxu0 %v333
        %v2062 = vpop.f32.mrf.mxu0
        %v2063 = vadd.f32 %v2029, %v2062
        %2064 = vdwg.mxu0
        %2065 = vrot.lane.b32.xlu0 %v1983, 126
        %v2066 = vpop.permute.xlu0 %2065
        %2067 = vrot.lane.b32.xlu0 %v1984, 126
        %v2068 = vpop.permute.xlu0 %2067
        %2069 = vrot.lane.b32.xlu0 %v1985, 126
        %v2070 = vpop.permute.xlu0 %2069
        %v2073 = vsel %vm285, %v2070, 0
        %2075 = vmatpush.msra.mxu0 0.0
        %2076 = vmatpush.msra.mxu0 0.0
        %2077 = vmatpush.msra.mxu0 0.0
        %2078 = vmatpush.msra.mxu0 0.0
        %2079 = vmatpush.msra.mxu0 0.0
        %2080 = vmatpush.msra.mxu0 0.0
        %2081 = vmatpush.msra.mxu0 0.0
        %2082 = vmatpush.msra.mxu0 0.0
        %2083 = vmatpush.msra.mxu0 0.0
        %2084 = vmatpush.msra.mxu0 0.0
        %2085 = vmatpush.msra.mxu0 0.0
        %2086 = vmatpush.msra.mxu0 0.0
        %2087 = vmatpush.msra.mxu0 0.0
        %2088 = vmatpush.msra.mxu0 %v2073
        %2089 = vmatpush.msra.mxu0 %v2068
        %2090 = vmatpush.msra.mxu0 %v2066
        %2091 = vmatmul.f32.gmra.mxu0 %v384
        %v2092 = vpop.f32.mrf.mxu0
        %v2093 = vadd.f32 0.0, %v2092
        %2094 = vmatmul.f32.gmra.mxu0 %v387
        %v2095 = vpop.f32.mrf.mxu0
        %v2096 = vadd.f32 0.0, %v2095
        %2097 = vmatmul.f32.gmra.mxu0 %v390
        %v2098 = vpop.f32.mrf.mxu0
        %v2099 = vadd.f32 0.0, %v2098
        %2100 = vmatmul.f32.gmra.mxu0 %v393
        %v2101 = vpop.f32.mrf.mxu0
        %v2102 = vadd.f32 0.0, %v2101
        %2103 = vmatmul.f32.gmra.mxu0 %v396
        %v2104 = vpop.f32.mrf.mxu0
        %v2105 = vadd.f32 0.0, %v2104
        %2106 = vdwg.mxu0
        %v2107 = vadd.f32 %v2051, %v2093
        %v2108 = vadd.f32 %v2054, %v2096
        %v2109 = vadd.f32 %v2057, %v2099
        %v2110 = vadd.f32 %v2060, %v2102
        %v2111 = vadd.f32 %v2063, %v2105
        %2112 = vrot.lane.b32.xlu0 %v1983, 125
        %v2113 = vpop.permute.xlu0 %2112
        %2114 = vrot.lane.b32.xlu0 %v1984, 125
        %v2115 = vpop.permute.xlu0 %2114
        %2116 = vrot.lane.b32.xlu0 %v1985, 125
        %v2117 = vpop.permute.xlu0 %2116
        %v2120 = vsel %vm285, %v2117, 0
        %2122 = vmatpush.msra.mxu0 0.0
        %2123 = vmatpush.msra.mxu0 0.0
        %2124 = vmatpush.msra.mxu0 0.0
        %2125 = vmatpush.msra.mxu0 0.0
        %2126 = vmatpush.msra.mxu0 0.0
        %2127 = vmatpush.msra.mxu0 0.0
        %2128 = vmatpush.msra.mxu0 0.0
        %2129 = vmatpush.msra.mxu0 0.0
        %2130 = vmatpush.msra.mxu0 0.0
        %2131 = vmatpush.msra.mxu0 0.0
        %2132 = vmatpush.msra.mxu0 0.0
        %2133 = vmatpush.msra.mxu0 0.0
        %2134 = vmatpush.msra.mxu0 0.0
        %2135 = vmatpush.msra.mxu0 %v2120
        %2136 = vmatpush.msra.mxu0 %v2115
        %2137 = vmatpush.msra.mxu0 %v2113
        %2138 = vmatmul.f32.gmra.mxu0 %v452
        %v2139 = vpop.f32.mrf.mxu0
        %v2140 = vadd.f32 0.0, %v2139
        %2141 = vmatmul.f32.gmra.mxu0 %v455
        %v2142 = vpop.f32.mrf.mxu0
        %v2143 = vadd.f32 0.0, %v2142
        %2144 = vmatmul.f32.gmra.mxu0 %v458
        %v2145 = vpop.f32.mrf.mxu0
        %v2146 = vadd.f32 0.0, %v2145
        %2147 = vmatmul.f32.gmra.mxu0 %v461
        %v2148 = vpop.f32.mrf.mxu0
        %v2149 = vadd.f32 0.0, %v2148
        %2150 = vmatmul.f32.gmra.mxu0 %v464
        %v2151 = vpop.f32.mrf.mxu0
        %v2152 = vadd.f32 0.0, %v2151
        %2153 = vdwg.mxu0
        %v2154 = vadd.f32 %v2107, %v2140
        %v2155 = vadd.f32 %v2108, %v2143
        %v2156 = vadd.f32 %v2109, %v2146
        %v2157 = vadd.f32 %v2110, %v2149
        %v2158 = vadd.f32 %v2111, %v2152
        %2159 = vrot.lane.b32.xlu0 %v1983, 124
        %v2160 = vpop.permute.xlu0 %2159
        %2161 = vrot.lane.b32.xlu0 %v1984, 124
        %v2162 = vpop.permute.xlu0 %2161
        %2163 = vrot.lane.b32.xlu0 %v1985, 124
        %v2164 = vpop.permute.xlu0 %2163
        %v2167 = vsel %vm285, %v2164, 0
        %2169 = vmatpush.msra.mxu0 0.0
        %2170 = vmatpush.msra.mxu0 0.0
        %2171 = vmatpush.msra.mxu0 0.0
        %2172 = vmatpush.msra.mxu0 0.0
        %2173 = vmatpush.msra.mxu0 0.0
        %2174 = vmatpush.msra.mxu0 0.0
        %2175 = vmatpush.msra.mxu0 0.0
        %2176 = vmatpush.msra.mxu0 0.0
        %2177 = vmatpush.msra.mxu0 0.0
        %2178 = vmatpush.msra.mxu0 0.0
        %2179 = vmatpush.msra.mxu0 0.0
        %2180 = vmatpush.msra.mxu0 0.0
        %2181 = vmatpush.msra.mxu0 0.0
        %2182 = vmatpush.msra.mxu0 %v2167
        %2183 = vmatpush.msra.mxu0 %v2162
        %2184 = vmatpush.msra.mxu0 %v2160
        %2185 = vmatmul.f32.gmra.mxu0 %v520
        %v2186 = vpop.f32.mrf.mxu0
        %v2187 = vadd.f32 0.0, %v2186
        %2188 = vmatmul.f32.gmra.mxu0 %v523
        %v2189 = vpop.f32.mrf.mxu0
        %v2190 = vadd.f32 0.0, %v2189
        %2191 = vmatmul.f32.gmra.mxu0 %v526
        %v2192 = vpop.f32.mrf.mxu0
        %v2193 = vadd.f32 0.0, %v2192
        %2194 = vmatmul.f32.gmra.mxu0 %v529
        %v2195 = vpop.f32.mrf.mxu0
        %v2196 = vadd.f32 0.0, %v2195
        %2197 = vmatmul.f32.gmra.mxu0 %v532
        %v2198 = vpop.f32.mrf.mxu0
        %v2199 = vadd.f32 0.0, %v2198
        %2200 = vdwg.mxu0
        %v2201 = vadd.f32 %v2154, %v2187
        %v2202 = vadd.f32 %v2155, %v2190
        %v2203 = vadd.f32 %v2156, %v2193
        %v2204 = vadd.f32 %v2157, %v2196
        %v2205 = vadd.f32 %v2158, %v2199
        %s2206 = sadd.s32 %s238, 1
        %s2207 = smul.u32 %s2206, 24
        %s2208 = scalar_lea.vmem %s219, %s2207
        %v2209 = vld [vmem:[%s2208] sm:$0xff]
        %v2210 = vld [vmem:[%s2208 + $0x8] sm:$0xff]
        %v2211 = vld [vmem:[%s2208 + $0x10] sm:$0xf]
        %v2213 = vsel %vm285, %v2211, 0
        %2215 = vmatpush.msra.mxu0 0.0
        %2216 = vmatpush.msra.mxu0 0.0
        %2217 = vmatpush.msra.mxu0 0.0
        %2218 = vmatpush.msra.mxu0 0.0
        %2219 = vmatpush.msra.mxu0 0.0
        %2220 = vmatpush.msra.mxu0 0.0
        %2221 = vmatpush.msra.mxu0 0.0
        %2222 = vmatpush.msra.mxu0 0.0
        %2223 = vmatpush.msra.mxu0 0.0
        %2224 = vmatpush.msra.mxu0 0.0
        %2225 = vmatpush.msra.mxu0 0.0
        %2226 = vmatpush.msra.mxu0 0.0
        %2227 = vmatpush.msra.mxu0 0.0
        %2228 = vmatpush.msra.mxu0 %v2213
        %2229 = vmatpush.msra.mxu0 %v2210
        %2230 = vmatpush.msra.mxu0 %v2209
        %2231 = vmatmul.f32.gmra.mxu0 %v586
        %v2232 = vpop.f32.mrf.mxu0
        %v2233 = vadd.f32 0.0, %v2232
        %2234 = vmatmul.f32.gmra.mxu0 %v589
        %v2235 = vpop.f32.mrf.mxu0
        %v2236 = vadd.f32 0.0, %v2235
        %2237 = vmatmul.f32.gmra.mxu0 %v592
        %v2238 = vpop.f32.mrf.mxu0
        %v2239 = vadd.f32 0.0, %v2238
        %2240 = vmatmul.f32.gmra.mxu0 %v595
        %v2241 = vpop.f32.mrf.mxu0
        %v2242 = vadd.f32 0.0, %v2241
        %2243 = vmatmul.f32.gmra.mxu0 %v598
        %v2244 = vpop.f32.mrf.mxu0
        %v2245 = vadd.f32 0.0, %v2244
        %2246 = vdwg.mxu0
        %v2247 = vadd.f32 %v2201, %v2233
        %v2248 = vadd.f32 %v2202, %v2236
        %v2249 = vadd.f32 %v2203, %v2239
        %v2250 = vadd.f32 %v2204, %v2242
        %v2251 = vadd.f32 %v2205, %v2245
        %2254 = vrot.lane.b32.xlu0 %v2209, 127
        %v2255 = vpop.permute.xlu0 %2254
        %2256 = vrot.lane.b32.xlu0 %v2210, 127
        %v2257 = vpop.permute.xlu0 %2256
        %2258 = vrot.lane.b32.xlu0 %v2211, 127
        %v2259 = vpop.permute.xlu0 %2258
        %v2262 = vsel %vm285, %v2259, 0
        %2264 = vmatpush.msra.mxu0 0.0
        %2265 = vmatpush.msra.mxu0 0.0
        %2266 = vmatpush.msra.mxu0 0.0
        %2267 = vmatpush.msra.mxu0 0.0
        %2268 = vmatpush.msra.mxu0 0.0
        %2269 = vmatpush.msra.mxu0 0.0
        %2270 = vmatpush.msra.mxu0 0.0
        %2271 = vmatpush.msra.mxu0 0.0
        %2272 = vmatpush.msra.mxu0 0.0
        %2273 = vmatpush.msra.mxu0 0.0
        %2274 = vmatpush.msra.mxu0 0.0
        %2275 = vmatpush.msra.mxu0 0.0
        %2276 = vmatpush.msra.mxu0 0.0
        %2277 = vmatpush.msra.mxu0 %v2262
        %2278 = vmatpush.msra.mxu0 %v2257
        %2279 = vmatpush.msra.mxu0 %v2255
        %2280 = vmatmul.f32.gmra.mxu0 %v657
        %v2281 = vpop.f32.mrf.mxu0
        %v2282 = vadd.f32 0.0, %v2281
        %2283 = vmatmul.f32.gmra.mxu0 %v660
        %v2284 = vpop.f32.mrf.mxu0
        %v2285 = vadd.f32 0.0, %v2284
        %2286 = vmatmul.f32.gmra.mxu0 %v663
        %v2287 = vpop.f32.mrf.mxu0
        %v2288 = vadd.f32 0.0, %v2287
        %2289 = vmatmul.f32.gmra.mxu0 %v666
        %v2290 = vpop.f32.mrf.mxu0
        %v2291 = vadd.f32 0.0, %v2290
        %2292 = vmatmul.f32.gmra.mxu0 %v669
        %v2293 = vpop.f32.mrf.mxu0
        %v2294 = vadd.f32 0.0, %v2293
        %2295 = vdwg.mxu0
        %v2296 = vadd.f32 %v2247, %v2282
        %v2297 = vadd.f32 %v2248, %v2285
        %v2298 = vadd.f32 %v2249, %v2288
        %v2299 = vadd.f32 %v2250, %v2291
        %v2300 = vadd.f32 %v2251, %v2294
        %2301 = vrot.lane.b32.xlu0 %v2209, 126
        %v2302 = vpop.permute.xlu0 %2301
        %2303 = vrot.lane.b32.xlu0 %v2210, 126
        %v2304 = vpop.permute.xlu0 %2303
        %2305 = vrot.lane.b32.xlu0 %v2211, 126
        %v2306 = vpop.permute.xlu0 %2305
        %v2309 = vsel %vm285, %v2306, 0
        %2311 = vmatpush.msra.mxu0 0.0
        %2312 = vmatpush.msra.mxu0 0.0
        %2313 = vmatpush.msra.mxu0 0.0
        %2314 = vmatpush.msra.mxu0 0.0
        %2315 = vmatpush.msra.mxu0 0.0
        %2316 = vmatpush.msra.mxu0 0.0
        %2317 = vmatpush.msra.mxu0 0.0
        %2318 = vmatpush.msra.mxu0 0.0
        %2319 = vmatpush.msra.mxu0 0.0
        %2320 = vmatpush.msra.mxu0 0.0
        %2321 = vmatpush.msra.mxu0 0.0
        %2322 = vmatpush.msra.mxu0 0.0
        %2323 = vmatpush.msra.mxu0 0.0
        %2324 = vmatpush.msra.mxu0 %v2309
        %2325 = vmatpush.msra.mxu0 %v2304
        %2326 = vmatpush.msra.mxu0 %v2302
        %2327 = vmatmul.f32.gmra.mxu0 %v725
        %v2328 = vpop.f32.mrf.mxu0
        %v2329 = vadd.f32 0.0, %v2328
        %2330 = vmatmul.f32.gmra.mxu0 %v728
        %v2331 = vpop.f32.mrf.mxu0
        %v2332 = vadd.f32 0.0, %v2331
        %2333 = vmatmul.f32.gmra.mxu0 %v731
        %v2334 = vpop.f32.mrf.mxu0
        %v2335 = vadd.f32 0.0, %v2334
        %2336 = vmatmul.f32.gmra.mxu0 %v734
        %v2337 = vpop.f32.mrf.mxu0
        %v2338 = vadd.f32 0.0, %v2337
        %2339 = vmatmul.f32.gmra.mxu0 %v737
        %v2340 = vpop.f32.mrf.mxu0
        %v2341 = vadd.f32 0.0, %v2340
        %2342 = vdwg.mxu0
        %v2343 = vadd.f32 %v2296, %v2329
        %v2344 = vadd.f32 %v2297, %v2332
        %v2345 = vadd.f32 %v2298, %v2335
        %v2346 = vadd.f32 %v2299, %v2338
        %v2347 = vadd.f32 %v2300, %v2341
        %2348 = vrot.lane.b32.xlu0 %v2209, 125
        %v2349 = vpop.permute.xlu0 %2348
        %2350 = vrot.lane.b32.xlu0 %v2210, 125
        %v2351 = vpop.permute.xlu0 %2350
        %2352 = vrot.lane.b32.xlu0 %v2211, 125
        %v2353 = vpop.permute.xlu0 %2352
        %v2356 = vsel %vm285, %v2353, 0
        %2358 = vmatpush.msra.mxu0 0.0
        %2359 = vmatpush.msra.mxu0 0.0
        %2360 = vmatpush.msra.mxu0 0.0
        %2361 = vmatpush.msra.mxu0 0.0
        %2362 = vmatpush.msra.mxu0 0.0
        %2363 = vmatpush.msra.mxu0 0.0
        %2364 = vmatpush.msra.mxu0 0.0
        %2365 = vmatpush.msra.mxu0 0.0
        %2366 = vmatpush.msra.mxu0 0.0
        %2367 = vmatpush.msra.mxu0 0.0
        %2368 = vmatpush.msra.mxu0 0.0
        %2369 = vmatpush.msra.mxu0 0.0
        %2370 = vmatpush.msra.mxu0 0.0
        %2371 = vmatpush.msra.mxu0 %v2356
        %2372 = vmatpush.msra.mxu0 %v2351
        %2373 = vmatpush.msra.mxu0 %v2349
        %2374 = vmatmul.f32.gmra.mxu0 %v793
        %v2375 = vpop.f32.mrf.mxu0
        %v2376 = vadd.f32 0.0, %v2375
        %2377 = vmatmul.f32.gmra.mxu0 %v796
        %v2378 = vpop.f32.mrf.mxu0
        %v2379 = vadd.f32 0.0, %v2378
        %2380 = vmatmul.f32.gmra.mxu0 %v799
        %v2381 = vpop.f32.mrf.mxu0
        %v2382 = vadd.f32 0.0, %v2381
        %2383 = vmatmul.f32.gmra.mxu0 %v802
        %v2384 = vpop.f32.mrf.mxu0
        %v2385 = vadd.f32 0.0, %v2384
        %2386 = vmatmul.f32.gmra.mxu0 %v805
        %v2387 = vpop.f32.mrf.mxu0
        %v2388 = vadd.f32 0.0, %v2387
        %2389 = vdwg.mxu0
        %v2390 = vadd.f32 %v2343, %v2376
        %v2391 = vadd.f32 %v2344, %v2379
        %v2392 = vadd.f32 %v2345, %v2382
        %v2393 = vadd.f32 %v2346, %v2385
        %v2394 = vadd.f32 %v2347, %v2388
        %2395 = vrot.lane.b32.xlu0 %v2209, 124
        %v2396 = vpop.permute.xlu0 %2395
        %2397 = vrot.lane.b32.xlu0 %v2210, 124
        %v2398 = vpop.permute.xlu0 %2397
        %2399 = vrot.lane.b32.xlu0 %v2211, 124
        %v2400 = vpop.permute.xlu0 %2399
        %v2403 = vsel %vm285, %v2400, 0
        %2405 = vmatpush.msra.mxu0 0.0
        %2406 = vmatpush.msra.mxu0 0.0
        %2407 = vmatpush.msra.mxu0 0.0
        %2408 = vmatpush.msra.mxu0 0.0
        %2409 = vmatpush.msra.mxu0 0.0
        %2410 = vmatpush.msra.mxu0 0.0
        %2411 = vmatpush.msra.mxu0 0.0
        %2412 = vmatpush.msra.mxu0 0.0
        %2413 = vmatpush.msra.mxu0 0.0
        %2414 = vmatpush.msra.mxu0 0.0
        %2415 = vmatpush.msra.mxu0 0.0
        %2416 = vmatpush.msra.mxu0 0.0
        %2417 = vmatpush.msra.mxu0 0.0
        %2418 = vmatpush.msra.mxu0 %v2403
        %2419 = vmatpush.msra.mxu0 %v2398
        %2420 = vmatpush.msra.mxu0 %v2396
        %2421 = vmatmul.f32.gmra.mxu0 %v861
        %v2422 = vpop.f32.mrf.mxu0
        %v2423 = vadd.f32 0.0, %v2422
        %2424 = vmatmul.f32.gmra.mxu0 %v864
        %v2425 = vpop.f32.mrf.mxu0
        %v2426 = vadd.f32 0.0, %v2425
        %2427 = vmatmul.f32.gmra.mxu0 %v867
        %v2428 = vpop.f32.mrf.mxu0
        %v2429 = vadd.f32 0.0, %v2428
        %2430 = vmatmul.f32.gmra.mxu0 %v870
        %v2431 = vpop.f32.mrf.mxu0
        %v2432 = vadd.f32 0.0, %v2431
        %2433 = vmatmul.f32.gmra.mxu0 %v873
        %v2434 = vpop.f32.mrf.mxu0
        %v2435 = vadd.f32 0.0, %v2434
        %2436 = vdwg.mxu0
        %v2437 = vadd.f32 %v2390, %v2423
        %v2438 = vadd.f32 %v2391, %v2426
        %v2439 = vadd.f32 %v2392, %v2429
        %v2440 = vadd.f32 %v2393, %v2432
        %v2441 = vadd.f32 %v2394, %v2435
        %s2442 = sadd.s32 %s238, 2
        %s2443 = smul.u32 %s2442, 24
        %s2444 = scalar_lea.vmem %s219, %s2443
        %v2445 = vld [vmem:[%s2444] sm:$0xff]
        %v2446 = vld [vmem:[%s2444 + $0x8] sm:$0xff]
        %v2447 = vld [vmem:[%s2444 + $0x10] sm:$0xf]
        %v2449 = vsel %vm285, %v2447, 0
        %2451 = vmatpush.msra.mxu0 0.0
        %2452 = vmatpush.msra.mxu0 0.0
        %2453 = vmatpush.msra.mxu0 0.0
        %2454 = vmatpush.msra.mxu0 0.0
        %2455 = vmatpush.msra.mxu0 0.0
        %2456 = vmatpush.msra.mxu0 0.0
        %2457 = vmatpush.msra.mxu0 0.0
        %2458 = vmatpush.msra.mxu0 0.0
        %2459 = vmatpush.msra.mxu0 0.0
        %2460 = vmatpush.msra.mxu0 0.0
        %2461 = vmatpush.msra.mxu0 0.0
        %2462 = vmatpush.msra.mxu0 0.0
        %2463 = vmatpush.msra.mxu0 0.0
        %2464 = vmatpush.msra.mxu0 %v2449
        %2465 = vmatpush.msra.mxu0 %v2446
        %2466 = vmatpush.msra.mxu0 %v2445
        %2467 = vmatmul.f32.gmra.mxu0 %v927
        %v2468 = vpop.f32.mrf.mxu0
        %v2469 = vadd.f32 0.0, %v2468
        %2470 = vmatmul.f32.gmra.mxu0 %v930
        %v2471 = vpop.f32.mrf.mxu0
        %v2472 = vadd.f32 0.0, %v2471
        %2473 = vmatmul.f32.gmra.mxu0 %v933
        %v2474 = vpop.f32.mrf.mxu0
        %v2475 = vadd.f32 0.0, %v2474
        %2476 = vmatmul.f32.gmra.mxu0 %v936
        %v2477 = vpop.f32.mrf.mxu0
        %v2478 = vadd.f32 0.0, %v2477
        %2479 = vmatmul.f32.gmra.mxu0 %v939
        %v2480 = vpop.f32.mrf.mxu0
        %v2481 = vadd.f32 0.0, %v2480
        %2482 = vdwg.mxu0
        %v2483 = vadd.f32 %v2437, %v2469
        %v2484 = vadd.f32 %v2438, %v2472
        %v2485 = vadd.f32 %v2439, %v2475
        %v2486 = vadd.f32 %v2440, %v2478
        %v2487 = vadd.f32 %v2441, %v2481
        %2490 = vrot.lane.b32.xlu0 %v2445, 127
        %v2491 = vpop.permute.xlu0 %2490
        %2492 = vrot.lane.b32.xlu0 %v2446, 127
        %v2493 = vpop.permute.xlu0 %2492
        %2494 = vrot.lane.b32.xlu0 %v2447, 127
        %v2495 = vpop.permute.xlu0 %2494
        %v2498 = vsel %vm285, %v2495, 0
        %2500 = vmatpush.msra.mxu0 0.0
        %2501 = vmatpush.msra.mxu0 0.0
        %2502 = vmatpush.msra.mxu0 0.0
        %2503 = vmatpush.msra.mxu0 0.0
        %2504 = vmatpush.msra.mxu0 0.0
        %2505 = vmatpush.msra.mxu0 0.0
        %2506 = vmatpush.msra.mxu0 0.0
        %2507 = vmatpush.msra.mxu0 0.0
        %2508 = vmatpush.msra.mxu0 0.0
        %2509 = vmatpush.msra.mxu0 0.0
        %2510 = vmatpush.msra.mxu0 0.0
        %2511 = vmatpush.msra.mxu0 0.0
        %2512 = vmatpush.msra.mxu0 0.0
        %2513 = vmatpush.msra.mxu0 %v2498
        %2514 = vmatpush.msra.mxu0 %v2493
        %2515 = vmatpush.msra.mxu0 %v2491
        %2516 = vmatmul.f32.gmra.mxu0 %v998
        %v2517 = vpop.f32.mrf.mxu0
        %v2518 = vadd.f32 0.0, %v2517
        %2519 = vmatmul.f32.gmra.mxu0 %v1001
        %v2520 = vpop.f32.mrf.mxu0
        %v2521 = vadd.f32 0.0, %v2520
        %2522 = vmatmul.f32.gmra.mxu0 %v1004
        %v2523 = vpop.f32.mrf.mxu0
        %v2524 = vadd.f32 0.0, %v2523
        %2525 = vmatmul.f32.gmra.mxu0 %v1007
        %v2526 = vpop.f32.mrf.mxu0
        %v2527 = vadd.f32 0.0, %v2526
        %2528 = vmatmul.f32.gmra.mxu0 %v1010
        %v2529 = vpop.f32.mrf.mxu0
        %v2530 = vadd.f32 0.0, %v2529
        %2531 = vdwg.mxu0
        %v2532 = vadd.f32 %v2483, %v2518
        %v2533 = vadd.f32 %v2484, %v2521
        %v2534 = vadd.f32 %v2485, %v2524
        %v2535 = vadd.f32 %v2486, %v2527
        %v2536 = vadd.f32 %v2487, %v2530
        %2537 = vrot.lane.b32.xlu0 %v2445, 126
        %v2538 = vpop.permute.xlu0 %2537
        %2539 = vrot.lane.b32.xlu0 %v2446, 126
        %v2540 = vpop.permute.xlu0 %2539
        %2541 = vrot.lane.b32.xlu0 %v2447, 126
        %v2542 = vpop.permute.xlu0 %2541
        %v2545 = vsel %vm285, %v2542, 0
        %2547 = vmatpush.msra.mxu0 0.0
        %2548 = vmatpush.msra.mxu0 0.0
        %2549 = vmatpush.msra.mxu0 0.0
        %2550 = vmatpush.msra.mxu0 0.0
        %2551 = vmatpush.msra.mxu0 0.0
        %2552 = vmatpush.msra.mxu0 0.0
        %2553 = vmatpush.msra.mxu0 0.0
        %2554 = vmatpush.msra.mxu0 0.0
        %2555 = vmatpush.msra.mxu0 0.0
        %2556 = vmatpush.msra.mxu0 0.0
        %2557 = vmatpush.msra.mxu0 0.0
        %2558 = vmatpush.msra.mxu0 0.0
        %2559 = vmatpush.msra.mxu0 0.0
        %2560 = vmatpush.msra.mxu0 %v2545
        %2561 = vmatpush.msra.mxu0 %v2540
        %2562 = vmatpush.msra.mxu0 %v2538
        %2563 = vmatmul.f32.gmra.mxu0 %v1066
        %v2564 = vpop.f32.mrf.mxu0
        %v2565 = vadd.f32 0.0, %v2564
        %2566 = vmatmul.f32.gmra.mxu0 %v1069
        %v2567 = vpop.f32.mrf.mxu0
        %v2568 = vadd.f32 0.0, %v2567
        %2569 = vmatmul.f32.gmra.mxu0 %v1072
        %v2570 = vpop.f32.mrf.mxu0
        %v2571 = vadd.f32 0.0, %v2570
        %2572 = vmatmul.f32.gmra.mxu0 %v1075
        %v2573 = vpop.f32.mrf.mxu0
        %v2574 = vadd.f32 0.0, %v2573
        %2575 = vmatmul.f32.gmra.mxu0 %v1078
        %v2576 = vpop.f32.mrf.mxu0
        %v2577 = vadd.f32 0.0, %v2576
        %2578 = vdwg.mxu0
        %v2579 = vadd.f32 %v2532, %v2565
        %v2580 = vadd.f32 %v2533, %v2568
        %v2581 = vadd.f32 %v2534, %v2571
        %v2582 = vadd.f32 %v2535, %v2574
        %v2583 = vadd.f32 %v2536, %v2577
        %2584 = vrot.lane.b32.xlu0 %v2445, 125
        %v2585 = vpop.permute.xlu0 %2584
        %2586 = vrot.lane.b32.xlu0 %v2446, 125
        %v2587 = vpop.permute.xlu0 %2586
        %2588 = vrot.lane.b32.xlu0 %v2447, 125
        %v2589 = vpop.permute.xlu0 %2588
        %v2592 = vsel %vm285, %v2589, 0
        %2594 = vmatpush.msra.mxu0 0.0
        %2595 = vmatpush.msra.mxu0 0.0
        %2596 = vmatpush.msra.mxu0 0.0
        %2597 = vmatpush.msra.mxu0 0.0
        %2598 = vmatpush.msra.mxu0 0.0
        %2599 = vmatpush.msra.mxu0 0.0
        %2600 = vmatpush.msra.mxu0 0.0
        %2601 = vmatpush.msra.mxu0 0.0
        %2602 = vmatpush.msra.mxu0 0.0
        %2603 = vmatpush.msra.mxu0 0.0
        %2604 = vmatpush.msra.mxu0 0.0
        %2605 = vmatpush.msra.mxu0 0.0
        %2606 = vmatpush.msra.mxu0 0.0
        %2607 = vmatpush.msra.mxu0 %v2592
        %2608 = vmatpush.msra.mxu0 %v2587
        %2609 = vmatpush.msra.mxu0 %v2585
        %2610 = vmatmul.f32.gmra.mxu0 %v1134
        %v2611 = vpop.f32.mrf.mxu0
        %v2612 = vadd.f32 0.0, %v2611
        %2613 = vmatmul.f32.gmra.mxu0 %v1137
        %v2614 = vpop.f32.mrf.mxu0
        %v2615 = vadd.f32 0.0, %v2614
        %2616 = vmatmul.f32.gmra.mxu0 %v1140
        %v2617 = vpop.f32.mrf.mxu0
        %v2618 = vadd.f32 0.0, %v2617
        %2619 = vmatmul.f32.gmra.mxu0 %v1143
        %v2620 = vpop.f32.mrf.mxu0
        %v2621 = vadd.f32 0.0, %v2620
        %2622 = vmatmul.f32.gmra.mxu0 %v1146
        %v2623 = vpop.f32.mrf.mxu0
        %v2624 = vadd.f32 0.0, %v2623
        %2625 = vdwg.mxu0
        %v2626 = vadd.f32 %v2579, %v2612
        %v2627 = vadd.f32 %v2580, %v2615
        %v2628 = vadd.f32 %v2581, %v2618
        %v2629 = vadd.f32 %v2582, %v2621
        %v2630 = vadd.f32 %v2583, %v2624
        %2631 = vrot.lane.b32.xlu0 %v2445, 124
        %v2632 = vpop.permute.xlu0 %2631
        %2633 = vrot.lane.b32.xlu0 %v2446, 124
        %v2634 = vpop.permute.xlu0 %2633
        %2635 = vrot.lane.b32.xlu0 %v2447, 124
        %v2636 = vpop.permute.xlu0 %2635
        %v2639 = vsel %vm285, %v2636, 0
        %2641 = vmatpush.msra.mxu0 0.0
        %2642 = vmatpush.msra.mxu0 0.0
        %2643 = vmatpush.msra.mxu0 0.0
        %2644 = vmatpush.msra.mxu0 0.0
        %2645 = vmatpush.msra.mxu0 0.0
        %2646 = vmatpush.msra.mxu0 0.0
        %2647 = vmatpush.msra.mxu0 0.0
        %2648 = vmatpush.msra.mxu0 0.0
        %2649 = vmatpush.msra.mxu0 0.0
        %2650 = vmatpush.msra.mxu0 0.0
        %2651 = vmatpush.msra.mxu0 0.0
        %2652 = vmatpush.msra.mxu0 0.0
        %2653 = vmatpush.msra.mxu0 0.0
        %2654 = vmatpush.msra.mxu0 %v2639
        %2655 = vmatpush.msra.mxu0 %v2634
        %2656 = vmatpush.msra.mxu0 %v2632
        %2657 = vmatmul.f32.gmra.mxu0 %v1202
        %v2658 = vpop.f32.mrf.mxu0
        %v2659 = vadd.f32 0.0, %v2658
        %2660 = vmatmul.f32.gmra.mxu0 %v1205
        %v2661 = vpop.f32.mrf.mxu0
        %v2662 = vadd.f32 0.0, %v2661
        %2663 = vmatmul.f32.gmra.mxu0 %v1208
        %v2664 = vpop.f32.mrf.mxu0
        %v2665 = vadd.f32 0.0, %v2664
        %2666 = vmatmul.f32.gmra.mxu0 %v1211
        %v2667 = vpop.f32.mrf.mxu0
        %v2668 = vadd.f32 0.0, %v2667
        %2669 = vmatmul.f32.gmra.mxu0 %v1214
        %v2670 = vpop.f32.mrf.mxu0
        %v2671 = vadd.f32 0.0, %v2670
        %2672 = vdwg.mxu0
        %v2673 = vadd.f32 %v2626, %v2659
        %v2674 = vadd.f32 %v2627, %v2662
        %v2675 = vadd.f32 %v2628, %v2665
        %v2676 = vadd.f32 %v2629, %v2668
        %v2677 = vadd.f32 %v2630, %v2671
        %s2678 = sadd.s32 %s238, 3
        %s2679 = smul.u32 %s2678, 24
        %s2680 = scalar_lea.vmem %s219, %s2679
        %v2681 = vld [vmem:[%s2680] sm:$0xff]
        %v2682 = vld [vmem:[%s2680 + $0x8] sm:$0xff]
        %v2683 = vld [vmem:[%s2680 + $0x10] sm:$0xf]
        %v2685 = vsel %vm285, %v2683, 0
        %2687 = vmatpush.msra.mxu0 0.0
        %2688 = vmatpush.msra.mxu0 0.0
        %2689 = vmatpush.msra.mxu0 0.0
        %2690 = vmatpush.msra.mxu0 0.0
        %2691 = vmatpush.msra.mxu0 0.0
        %2692 = vmatpush.msra.mxu0 0.0
        %2693 = vmatpush.msra.mxu0 0.0
        %2694 = vmatpush.msra.mxu0 0.0
        %2695 = vmatpush.msra.mxu0 0.0
        %2696 = vmatpush.msra.mxu0 0.0
        %2697 = vmatpush.msra.mxu0 0.0
        %2698 = vmatpush.msra.mxu0 0.0
        %2699 = vmatpush.msra.mxu0 0.0
        %2700 = vmatpush.msra.mxu0 %v2685
        %2701 = vmatpush.msra.mxu0 %v2682
        %2702 = vmatpush.msra.mxu0 %v2681
        %2703 = vmatmul.f32.gmra.mxu0 %v1268
        %v2704 = vpop.f32.mrf.mxu0
        %v2705 = vadd.f32 0.0, %v2704
        %2706 = vmatmul.f32.gmra.mxu0 %v1271
        %v2707 = vpop.f32.mrf.mxu0
        %v2708 = vadd.f32 0.0, %v2707
        %2709 = vmatmul.f32.gmra.mxu0 %v1274
        %v2710 = vpop.f32.mrf.mxu0
        %v2711 = vadd.f32 0.0, %v2710
        %2712 = vmatmul.f32.gmra.mxu0 %v1277
        %v2713 = vpop.f32.mrf.mxu0
        %v2714 = vadd.f32 0.0, %v2713
        %2715 = vmatmul.f32.gmra.mxu0 %v1280
        %v2716 = vpop.f32.mrf.mxu0
        %v2717 = vadd.f32 0.0, %v2716
        %2718 = vdwg.mxu0
        %v2719 = vadd.f32 %v2673, %v2705
        %v2720 = vadd.f32 %v2674, %v2708
        %v2721 = vadd.f32 %v2675, %v2711
        %v2722 = vadd.f32 %v2676, %v2714
        %v2723 = vadd.f32 %v2677, %v2717
        %2726 = vrot.lane.b32.xlu0 %v2681, 127
        %v2727 = vpop.permute.xlu0 %2726
        %2728 = vrot.lane.b32.xlu0 %v2682, 127
        %v2729 = vpop.permute.xlu0 %2728
        %2730 = vrot.lane.b32.xlu0 %v2683, 127
        %v2731 = vpop.permute.xlu0 %2730
        %v2734 = vsel %vm285, %v2731, 0
        %2736 = vmatpush.msra.mxu0 0.0
        %2737 = vmatpush.msra.mxu0 0.0
        %2738 = vmatpush.msra.mxu0 0.0
        %2739 = vmatpush.msra.mxu0 0.0
        %2740 = vmatpush.msra.mxu0 0.0
        %2741 = vmatpush.msra.mxu0 0.0
        %2742 = vmatpush.msra.mxu0 0.0
        %2743 = vmatpush.msra.mxu0 0.0
        %2744 = vmatpush.msra.mxu0 0.0
        %2745 = vmatpush.msra.mxu0 0.0
        %2746 = vmatpush.msra.mxu0 0.0
        %2747 = vmatpush.msra.mxu0 0.0
        %2748 = vmatpush.msra.mxu0 0.0
        %2749 = vmatpush.msra.mxu0 %v2734
        %2750 = vmatpush.msra.mxu0 %v2729
        %2751 = vmatpush.msra.mxu0 %v2727
        %2752 = vmatmul.f32.gmra.mxu0 %v1339
        %v2753 = vpop.f32.mrf.mxu0
        %v2754 = vadd.f32 0.0, %v2753
        %2755 = vmatmul.f32.gmra.mxu0 %v1342
        %v2756 = vpop.f32.mrf.mxu0
        %v2757 = vadd.f32 0.0, %v2756
        %2758 = vmatmul.f32.gmra.mxu0 %v1345
        %v2759 = vpop.f32.mrf.mxu0
        %v2760 = vadd.f32 0.0, %v2759
        %2761 = vmatmul.f32.gmra.mxu0 %v1348
        %v2762 = vpop.f32.mrf.mxu0
        %v2763 = vadd.f32 0.0, %v2762
        %2764 = vmatmul.f32.gmra.mxu0 %v1351
        %v2765 = vpop.f32.mrf.mxu0
        %v2766 = vadd.f32 0.0, %v2765
        %2767 = vdwg.mxu0
        %v2768 = vadd.f32 %v2719, %v2754
        %v2769 = vadd.f32 %v2720, %v2757
        %v2770 = vadd.f32 %v2721, %v2760
        %v2771 = vadd.f32 %v2722, %v2763
        %v2772 = vadd.f32 %v2723, %v2766
        %2773 = vrot.lane.b32.xlu0 %v2681, 126
        %v2774 = vpop.permute.xlu0 %2773
        %2775 = vrot.lane.b32.xlu0 %v2682, 126
        %v2776 = vpop.permute.xlu0 %2775
        %2777 = vrot.lane.b32.xlu0 %v2683, 126
        %v2778 = vpop.permute.xlu0 %2777
        %v2781 = vsel %vm285, %v2778, 0
        %2783 = vmatpush.msra.mxu0 0.0
        %2784 = vmatpush.msra.mxu0 0.0
        %2785 = vmatpush.msra.mxu0 0.0
        %2786 = vmatpush.msra.mxu0 0.0
        %2787 = vmatpush.msra.mxu0 0.0
        %2788 = vmatpush.msra.mxu0 0.0
        %2789 = vmatpush.msra.mxu0 0.0
        %2790 = vmatpush.msra.mxu0 0.0
        %2791 = vmatpush.msra.mxu0 0.0
        %2792 = vmatpush.msra.mxu0 0.0
        %2793 = vmatpush.msra.mxu0 0.0
        %2794 = vmatpush.msra.mxu0 0.0
        %2795 = vmatpush.msra.mxu0 0.0
        %2796 = vmatpush.msra.mxu0 %v2781
        %2797 = vmatpush.msra.mxu0 %v2776
        %2798 = vmatpush.msra.mxu0 %v2774
        %2799 = vmatmul.f32.gmra.mxu0 %v1407
        %v2800 = vpop.f32.mrf.mxu0
        %v2801 = vadd.f32 0.0, %v2800
        %2802 = vmatmul.f32.gmra.mxu0 %v1410
        %v2803 = vpop.f32.mrf.mxu0
        %v2804 = vadd.f32 0.0, %v2803
        %2805 = vmatmul.f32.gmra.mxu0 %v1413
        %v2806 = vpop.f32.mrf.mxu0
        %v2807 = vadd.f32 0.0, %v2806
        %2808 = vmatmul.f32.gmra.mxu0 %v1416
        %v2809 = vpop.f32.mrf.mxu0
        %v2810 = vadd.f32 0.0, %v2809
        %2811 = vmatmul.f32.gmra.mxu0 %v1419
        %v2812 = vpop.f32.mrf.mxu0
        %v2813 = vadd.f32 0.0, %v2812
        %2814 = vdwg.mxu0
        %v2815 = vadd.f32 %v2768, %v2801
        %v2816 = vadd.f32 %v2769, %v2804
        %v2817 = vadd.f32 %v2770, %v2807
        %v2818 = vadd.f32 %v2771, %v2810
        %v2819 = vadd.f32 %v2772, %v2813
        %2820 = vrot.lane.b32.xlu0 %v2681, 125
        %v2821 = vpop.permute.xlu0 %2820
        %2822 = vrot.lane.b32.xlu0 %v2682, 125
        %v2823 = vpop.permute.xlu0 %2822
        %2824 = vrot.lane.b32.xlu0 %v2683, 125
        %v2825 = vpop.permute.xlu0 %2824
        %v2828 = vsel %vm285, %v2825, 0
        %2830 = vmatpush.msra.mxu0 0.0
        %2831 = vmatpush.msra.mxu0 0.0
        %2832 = vmatpush.msra.mxu0 0.0
        %2833 = vmatpush.msra.mxu0 0.0
        %2834 = vmatpush.msra.mxu0 0.0
        %2835 = vmatpush.msra.mxu0 0.0
        %2836 = vmatpush.msra.mxu0 0.0
        %2837 = vmatpush.msra.mxu0 0.0
        %2838 = vmatpush.msra.mxu0 0.0
        %2839 = vmatpush.msra.mxu0 0.0
        %2840 = vmatpush.msra.mxu0 0.0
        %2841 = vmatpush.msra.mxu0 0.0
        %2842 = vmatpush.msra.mxu0 0.0
        %2843 = vmatpush.msra.mxu0 %v2828
        %2844 = vmatpush.msra.mxu0 %v2823
        %2845 = vmatpush.msra.mxu0 %v2821
        %2846 = vmatmul.f32.gmra.mxu0 %v1475
        %v2847 = vpop.f32.mrf.mxu0
        %v2848 = vadd.f32 0.0, %v2847
        %2849 = vmatmul.f32.gmra.mxu0 %v1478
        %v2850 = vpop.f32.mrf.mxu0
        %v2851 = vadd.f32 0.0, %v2850
        %2852 = vmatmul.f32.gmra.mxu0 %v1481
        %v2853 = vpop.f32.mrf.mxu0
        %v2854 = vadd.f32 0.0, %v2853
        %2855 = vmatmul.f32.gmra.mxu0 %v1484
        %v2856 = vpop.f32.mrf.mxu0
        %v2857 = vadd.f32 0.0, %v2856
        %2858 = vmatmul.f32.gmra.mxu0 %v1487
        %v2859 = vpop.f32.mrf.mxu0
        %v2860 = vadd.f32 0.0, %v2859
        %2861 = vdwg.mxu0
        %v2862 = vadd.f32 %v2815, %v2848
        %v2863 = vadd.f32 %v2816, %v2851
        %v2864 = vadd.f32 %v2817, %v2854
        %v2865 = vadd.f32 %v2818, %v2857
        %v2866 = vadd.f32 %v2819, %v2860
        %2867 = vrot.lane.b32.xlu0 %v2681, 124
        %v2868 = vpop.permute.xlu0 %2867
        %2869 = vrot.lane.b32.xlu0 %v2682, 124
        %v2870 = vpop.permute.xlu0 %2869
        %2871 = vrot.lane.b32.xlu0 %v2683, 124
        %v2872 = vpop.permute.xlu0 %2871
        %v2875 = vsel %vm285, %v2872, 0
        %2877 = vmatpush.msra.mxu0 0.0
        %2878 = vmatpush.msra.mxu0 0.0
        %2879 = vmatpush.msra.mxu0 0.0
        %2880 = vmatpush.msra.mxu0 0.0
        %2881 = vmatpush.msra.mxu0 0.0
        %2882 = vmatpush.msra.mxu0 0.0
        %2883 = vmatpush.msra.mxu0 0.0
        %2884 = vmatpush.msra.mxu0 0.0
        %2885 = vmatpush.msra.mxu0 0.0
        %2886 = vmatpush.msra.mxu0 0.0
        %2887 = vmatpush.msra.mxu0 0.0
        %2888 = vmatpush.msra.mxu0 0.0
        %2889 = vmatpush.msra.mxu0 0.0
        %2890 = vmatpush.msra.mxu0 %v2875
        %2891 = vmatpush.msra.mxu0 %v2870
        %2892 = vmatpush.msra.mxu0 %v2868
        %2893 = vmatmul.f32.gmra.mxu0 %v1543
        %v2894 = vpop.f32.mrf.mxu0
        %v2895 = vadd.f32 0.0, %v2894
        %2896 = vmatmul.f32.gmra.mxu0 %v1546
        %v2897 = vpop.f32.mrf.mxu0
        %v2898 = vadd.f32 0.0, %v2897
        %2899 = vmatmul.f32.gmra.mxu0 %v1549
        %v2900 = vpop.f32.mrf.mxu0
        %v2901 = vadd.f32 0.0, %v2900
        %2902 = vmatmul.f32.gmra.mxu0 %v1552
        %v2903 = vpop.f32.mrf.mxu0
        %v2904 = vadd.f32 0.0, %v2903
        %2905 = vmatmul.f32.gmra.mxu0 %v1555
        %v2906 = vpop.f32.mrf.mxu0
        %v2907 = vadd.f32 0.0, %v2906
        %2908 = vdwg.mxu0
        %v2909 = vadd.f32 %v2862, %v2895
        %v2910 = vadd.f32 %v2863, %v2898
        %v2911 = vadd.f32 %v2864, %v2901
        %v2912 = vadd.f32 %v2865, %v2904
        %v2913 = vadd.f32 %v2866, %v2907
        %s2914 = sadd.s32 %s238, 4
        %s2915 = smul.u32 %s2914, 24
        %s2916 = scalar_lea.vmem %s219, %s2915
        %v2917 = vld [vmem:[%s2916] sm:$0xff]
        %v2918 = vld [vmem:[%s2916 + $0x8] sm:$0xff]
        %v2919 = vld [vmem:[%s2916 + $0x10] sm:$0xf]
        %v2921 = vsel %vm285, %v2919, 0
        %2923 = vmatpush.msra.mxu0 0.0
        %2924 = vmatpush.msra.mxu0 0.0
        %2925 = vmatpush.msra.mxu0 0.0
        %2926 = vmatpush.msra.mxu0 0.0
        %2927 = vmatpush.msra.mxu0 0.0
        %2928 = vmatpush.msra.mxu0 0.0
        %2929 = vmatpush.msra.mxu0 0.0
        %2930 = vmatpush.msra.mxu0 0.0
        %2931 = vmatpush.msra.mxu0 0.0
        %2932 = vmatpush.msra.mxu0 0.0
        %2933 = vmatpush.msra.mxu0 0.0
        %2934 = vmatpush.msra.mxu0 0.0
        %2935 = vmatpush.msra.mxu0 0.0
        %2936 = vmatpush.msra.mxu0 %v2921
        %2937 = vmatpush.msra.mxu0 %v2918
        %2938 = vmatpush.msra.mxu0 %v2917
        %2939 = vmatmul.f32.gmra.mxu0 %v1609
        %v2940 = vpop.f32.mrf.mxu0
        %v2941 = vadd.f32 0.0, %v2940
        %2942 = vmatmul.f32.gmra.mxu0 %v1612
        %v2943 = vpop.f32.mrf.mxu0
        %v2944 = vadd.f32 0.0, %v2943
        %2945 = vmatmul.f32.gmra.mxu0 %v1615
        %v2946 = vpop.f32.mrf.mxu0
        %v2947 = vadd.f32 0.0, %v2946
        %2948 = vmatmul.f32.gmra.mxu0 %v1618
        %v2949 = vpop.f32.mrf.mxu0
        %v2950 = vadd.f32 0.0, %v2949
        %2951 = vmatmul.f32.gmra.mxu0 %v1621
        %v2952 = vpop.f32.mrf.mxu0
        %v2953 = vadd.f32 0.0, %v2952
        %2954 = vdwg.mxu0
        %v2955 = vadd.f32 %v2909, %v2941
        %v2956 = vadd.f32 %v2910, %v2944
        %v2957 = vadd.f32 %v2911, %v2947
        %v2958 = vadd.f32 %v2912, %v2950
        %v2959 = vadd.f32 %v2913, %v2953
        %2962 = vrot.lane.b32.xlu0 %v2917, 127
        %v2963 = vpop.permute.xlu0 %2962
        %2964 = vrot.lane.b32.xlu0 %v2918, 127
        %v2965 = vpop.permute.xlu0 %2964
        %2966 = vrot.lane.b32.xlu0 %v2919, 127
        %v2967 = vpop.permute.xlu0 %2966
        %v2970 = vsel %vm285, %v2967, 0
        %2972 = vmatpush.msra.mxu0 0.0
        %2973 = vmatpush.msra.mxu0 0.0
        %2974 = vmatpush.msra.mxu0 0.0
        %2975 = vmatpush.msra.mxu0 0.0
        %2976 = vmatpush.msra.mxu0 0.0
        %2977 = vmatpush.msra.mxu0 0.0
        %2978 = vmatpush.msra.mxu0 0.0
        %2979 = vmatpush.msra.mxu0 0.0
        %2980 = vmatpush.msra.mxu0 0.0
        %2981 = vmatpush.msra.mxu0 0.0
        %2982 = vmatpush.msra.mxu0 0.0
        %2983 = vmatpush.msra.mxu0 0.0
        %2984 = vmatpush.msra.mxu0 0.0
        %2985 = vmatpush.msra.mxu0 %v2970
        %2986 = vmatpush.msra.mxu0 %v2965
        %2987 = vmatpush.msra.mxu0 %v2963
        %2988 = vmatmul.f32.gmra.mxu0 %v1680
        %v2989 = vpop.f32.mrf.mxu0
        %v2990 = vadd.f32 0.0, %v2989
        %2991 = vmatmul.f32.gmra.mxu0 %v1683
        %v2992 = vpop.f32.mrf.mxu0
        %v2993 = vadd.f32 0.0, %v2992
        %2994 = vmatmul.f32.gmra.mxu0 %v1686
        %v2995 = vpop.f32.mrf.mxu0
        %v2996 = vadd.f32 0.0, %v2995
        %2997 = vmatmul.f32.gmra.mxu0 %v1689
        %v2998 = vpop.f32.mrf.mxu0
        %v2999 = vadd.f32 0.0, %v2998
        %3000 = vmatmul.f32.gmra.mxu0 %v1692
        %v3001 = vpop.f32.mrf.mxu0
        %v3002 = vadd.f32 0.0, %v3001
        %3003 = vdwg.mxu0
        %v3004 = vadd.f32 %v2955, %v2990
        %v3005 = vadd.f32 %v2956, %v2993
        %v3006 = vadd.f32 %v2957, %v2996
        %v3007 = vadd.f32 %v2958, %v2999
        %v3008 = vadd.f32 %v2959, %v3002
        %3009 = vrot.lane.b32.xlu0 %v2917, 126
        %v3010 = vpop.permute.xlu0 %3009
        %3011 = vrot.lane.b32.xlu0 %v2918, 126
        %v3012 = vpop.permute.xlu0 %3011
        %3013 = vrot.lane.b32.xlu0 %v2919, 126
        %v3014 = vpop.permute.xlu0 %3013
        %v3017 = vsel %vm285, %v3014, 0
        %3019 = vmatpush.msra.mxu0 0.0
        %3020 = vmatpush.msra.mxu0 0.0
        %3021 = vmatpush.msra.mxu0 0.0
        %3022 = vmatpush.msra.mxu0 0.0
        %3023 = vmatpush.msra.mxu0 0.0
        %3024 = vmatpush.msra.mxu0 0.0
        %3025 = vmatpush.msra.mxu0 0.0
        %3026 = vmatpush.msra.mxu0 0.0
        %3027 = vmatpush.msra.mxu0 0.0
        %3028 = vmatpush.msra.mxu0 0.0
        %3029 = vmatpush.msra.mxu0 0.0
        %3030 = vmatpush.msra.mxu0 0.0
        %3031 = vmatpush.msra.mxu0 0.0
        %3032 = vmatpush.msra.mxu0 %v3017
        %3033 = vmatpush.msra.mxu0 %v3012
        %3034 = vmatpush.msra.mxu0 %v3010
        %3035 = vmatmul.f32.gmra.mxu0 %v1748
        %v3036 = vpop.f32.mrf.mxu0
        %v3037 = vadd.f32 0.0, %v3036
        %3038 = vmatmul.f32.gmra.mxu0 %v1751
        %v3039 = vpop.f32.mrf.mxu0
        %v3040 = vadd.f32 0.0, %v3039
        %3041 = vmatmul.f32.gmra.mxu0 %v1754
        %v3042 = vpop.f32.mrf.mxu0
        %v3043 = vadd.f32 0.0, %v3042
        %3044 = vmatmul.f32.gmra.mxu0 %v1757
        %v3045 = vpop.f32.mrf.mxu0
        %v3046 = vadd.f32 0.0, %v3045
        %3047 = vmatmul.f32.gmra.mxu0 %v1760
        %v3048 = vpop.f32.mrf.mxu0
        %v3049 = vadd.f32 0.0, %v3048
        %3050 = vdwg.mxu0
        %v3051 = vadd.f32 %v3004, %v3037
        %v3052 = vadd.f32 %v3005, %v3040
        %v3053 = vadd.f32 %v3006, %v3043
        %v3054 = vadd.f32 %v3007, %v3046
        %v3055 = vadd.f32 %v3008, %v3049
        %3056 = vrot.lane.b32.xlu0 %v2917, 125
        %v3057 = vpop.permute.xlu0 %3056
        %3058 = vrot.lane.b32.xlu0 %v2918, 125
        %v3059 = vpop.permute.xlu0 %3058
        %3060 = vrot.lane.b32.xlu0 %v2919, 125
        %v3061 = vpop.permute.xlu0 %3060
        %v3064 = vsel %vm285, %v3061, 0
        %3066 = vmatpush.msra.mxu0 0.0
        %3067 = vmatpush.msra.mxu0 0.0
        %3068 = vmatpush.msra.mxu0 0.0
        %3069 = vmatpush.msra.mxu0 0.0
        %3070 = vmatpush.msra.mxu0 0.0
        %3071 = vmatpush.msra.mxu0 0.0
        %3072 = vmatpush.msra.mxu0 0.0
        %3073 = vmatpush.msra.mxu0 0.0
        %3074 = vmatpush.msra.mxu0 0.0
        %3075 = vmatpush.msra.mxu0 0.0
        %3076 = vmatpush.msra.mxu0 0.0
        %3077 = vmatpush.msra.mxu0 0.0
        %3078 = vmatpush.msra.mxu0 0.0
        %3079 = vmatpush.msra.mxu0 %v3064
        %3080 = vmatpush.msra.mxu0 %v3059
        %3081 = vmatpush.msra.mxu0 %v3057
        %3082 = vmatmul.f32.gmra.mxu0 %v1816
        %v3083 = vpop.f32.mrf.mxu0
        %v3084 = vadd.f32 0.0, %v3083
        %3085 = vmatmul.f32.gmra.mxu0 %v1819
        %v3086 = vpop.f32.mrf.mxu0
        %v3087 = vadd.f32 0.0, %v3086
        %3088 = vmatmul.f32.gmra.mxu0 %v1822
        %v3089 = vpop.f32.mrf.mxu0
        %v3090 = vadd.f32 0.0, %v3089
        %3091 = vmatmul.f32.gmra.mxu0 %v1825
        %v3092 = vpop.f32.mrf.mxu0
        %v3093 = vadd.f32 0.0, %v3092
        %3094 = vmatmul.f32.gmra.mxu0 %v1828
        %v3095 = vpop.f32.mrf.mxu0
        %v3096 = vadd.f32 0.0, %v3095
        %3097 = vdwg.mxu0
        %v3098 = vadd.f32 %v3051, %v3084
        %v3099 = vadd.f32 %v3052, %v3087
        %v3100 = vadd.f32 %v3053, %v3090
        %v3101 = vadd.f32 %v3054, %v3093
        %v3102 = vadd.f32 %v3055, %v3096
        %3103 = vrot.lane.b32.xlu0 %v2917, 124
        %v3104 = vpop.permute.xlu0 %3103
        %3105 = vrot.lane.b32.xlu0 %v2918, 124
        %v3106 = vpop.permute.xlu0 %3105
        %3107 = vrot.lane.b32.xlu0 %v2919, 124
        %v3108 = vpop.permute.xlu0 %3107
        %v3111 = vsel %vm285, %v3108, 0
        %3113 = vmatpush.msra.mxu0 0.0
        %3114 = vmatpush.msra.mxu0 0.0
        %3115 = vmatpush.msra.mxu0 0.0
        %3116 = vmatpush.msra.mxu0 0.0
        %3117 = vmatpush.msra.mxu0 0.0
        %3118 = vmatpush.msra.mxu0 0.0
        %3119 = vmatpush.msra.mxu0 0.0
        %3120 = vmatpush.msra.mxu0 0.0
        %3121 = vmatpush.msra.mxu0 0.0
        %3122 = vmatpush.msra.mxu0 0.0
        %3123 = vmatpush.msra.mxu0 0.0
        %3124 = vmatpush.msra.mxu0 0.0
        %3125 = vmatpush.msra.mxu0 0.0
        %3126 = vmatpush.msra.mxu0 %v3111
        %3127 = vmatpush.msra.mxu0 %v3106
        %3128 = vmatpush.msra.mxu0 %v3104
        %3129 = vmatmul.f32.gmra.mxu0 %v1884
        %v3130 = vpop.f32.mrf.mxu0
        %v3131 = vadd.f32 0.0, %v3130
        %3132 = vmatmul.f32.gmra.mxu0 %v1887
        %v3133 = vpop.f32.mrf.mxu0
        %v3134 = vadd.f32 0.0, %v3133
        %3135 = vmatmul.f32.gmra.mxu0 %v1890
        %v3136 = vpop.f32.mrf.mxu0
        %v3137 = vadd.f32 0.0, %v3136
        %3138 = vmatmul.f32.gmra.mxu0 %v1893
        %v3139 = vpop.f32.mrf.mxu0
        %v3140 = vadd.f32 0.0, %v3139
        %3141 = vmatmul.f32.gmra.mxu0 %v1896
        %v3142 = vpop.f32.mrf.mxu0
        %v3143 = vadd.f32 0.0, %v3142
        %3144 = vdwg.mxu0
        %v3145 = vadd.f32 %v3098, %v3131
        %v3146 = vadd.f32 %v3099, %v3134
        %v3147 = vadd.f32 %v3100, %v3137
        %v3148 = vadd.f32 %v3101, %v3140
        %v3149 = vadd.f32 %v3102, %v3143
        %v3150 = vadd.f32 %v3145, %v1940
        %v3151 = vadd.f32 %v3146, %v1945
        %v3152 = vadd.f32 %v3147, %v1950
        %v3153 = vadd.f32 %v3148, %v1955
        %v3154 = vadd.f32 %v3149, %v1960
        %v3155 = vmax.f32 %v3150, 0.0
        %v3156 = vmax.f32 %v3151, 0.0
        %v3157 = vmax.f32 %v3152, 0.0
        %v3158 = vmax.f32 %v3153, 0.0
        %v3159 = vmax.f32 %v3154, 0.0
        %v3160 = vmax.f32 %v1976, %v3155
        %v3161 = vmax.f32 %v1977, %v3156
        %v3162 = vmax.f32 %v1978, %v3157
        %v3163 = vmax.f32 %v1979, %v3158
        %v3164 = vmax.f32 %v1980, %v3159
        %vm3165 = vcmask 56320
        %v3167 = vsel %vm3165, %v3160, 0
        %v3170 = vsel %vm3165, %v3161, 0
        %v3173 = vsel %vm3165, %v3162, 0
        %v3176 = vsel %vm3165, %v3163, 0
        %v3179 = vsel %vm3165, %v3164, 0
        %vm3181 = vcmask 1046528
        %v3183 = vsel %vm3181, %v230, 0
        %3185 = vmatpush.msra.mxu0 0.0
        %3186 = vmatpush.msra.mxu0 0.0
        %3187 = vmatpush.msra.mxu0 0.0
        %3188 = vmatpush.msra.mxu0 0.0
        %3189 = vmatpush.msra.mxu0 0.0
        %3190 = vmatpush.msra.mxu0 0.0
        %3191 = vmatpush.msra.mxu0 0.0
        %3192 = vmatpush.msra.mxu0 0.0
        %3193 = vmatpush.msra.mxu0 0.0
        %3194 = vmatpush.msra.mxu0 0.0
        %3195 = vmatpush.msra.mxu0 0.0
        %3196 = vmatpush.msra.mxu0 0.0
        %3197 = vmatpush.msra.mxu0 0.0
        %3198 = vmatpush.msra.mxu0 0.0
        %3199 = vmatpush.msra.mxu0 0.0
        %3200 = vmatpush.msra.mxu0 %v3183
        %3201 = vmatmul.f32.gmra.mxu0 %v3167
        %v3202 = vpop.f32.mrf.mxu0
        %v3203 = vadd.f32 0.0, %v3202
        %3204 = vmatmul.f32.gmra.mxu0 %v3170
        %v3205 = vpop.f32.mrf.mxu0
        %v3206 = vadd.f32 0.0, %v3205
        %3207 = vmatmul.f32.gmra.mxu0 %v3173
        %v3208 = vpop.f32.mrf.mxu0
        %v3209 = vadd.f32 0.0, %v3208
        %3210 = vmatmul.f32.gmra.mxu0 %v3176
        %v3211 = vpop.f32.mrf.mxu0
        %v3212 = vadd.f32 0.0, %v3211
        %3213 = vmatmul.f32.gmra.mxu0 %v3179
        %v3214 = vpop.f32.mrf.mxu0
        %v3215 = vadd.f32 0.0, %v3214
        %3216 = vdwg.mxu0
        %v3218 = vsel %vm3181, %v231, 0
        %3220 = vmatpush.msra.mxu0 0.0
        %3221 = vmatpush.msra.mxu0 0.0
        %3222 = vmatpush.msra.mxu0 0.0
        %3223 = vmatpush.msra.mxu0 0.0
        %3224 = vmatpush.msra.mxu0 0.0
        %3225 = vmatpush.msra.mxu0 0.0
        %3226 = vmatpush.msra.mxu0 0.0
        %3227 = vmatpush.msra.mxu0 0.0
        %3228 = vmatpush.msra.mxu0 0.0
        %3229 = vmatpush.msra.mxu0 0.0
        %3230 = vmatpush.msra.mxu0 0.0
        %3231 = vmatpush.msra.mxu0 0.0
        %3232 = vmatpush.msra.mxu0 0.0
        %3233 = vmatpush.msra.mxu0 0.0
        %3234 = vmatpush.msra.mxu0 0.0
        %3235 = vmatpush.msra.mxu0 %v3218
        %3236 = vmatmul.f32.gmra.mxu0 %v3167
        %v3237 = vpop.f32.mrf.mxu0
        %v3238 = vadd.f32 0.0, %v3237
        %3239 = vmatmul.f32.gmra.mxu0 %v3170
        %v3240 = vpop.f32.mrf.mxu0
        %v3241 = vadd.f32 0.0, %v3240
        %3242 = vmatmul.f32.gmra.mxu0 %v3173
        %v3243 = vpop.f32.mrf.mxu0
        %v3244 = vadd.f32 0.0, %v3243
        %3245 = vmatmul.f32.gmra.mxu0 %v3176
        %v3246 = vpop.f32.mrf.mxu0
        %v3247 = vadd.f32 0.0, %v3246
        %3248 = vmatmul.f32.gmra.mxu0 %v3179
        %v3249 = vpop.f32.mrf.mxu0
        %v3250 = vadd.f32 0.0, %v3249
        %3251 = vdwg.mxu0
        %v3252 = vmax.f32 %v3203, %v3238
        %v3253 = vmax.f32 %v3206, %v3241
        %v3254 = vmax.f32 %v3209, %v3244
        %v3255 = vmax.f32 %v3212, %v3247
        %v3256 = vmax.f32 %v3215, %v3250
        %s3257 = smul.u32 %s233, 40
        %s3258 = scalar_lea.vmem %s224, %s3257
        %vm3259 = vcmask 31744
        %3260 = vst.msk [vmem:[%s3258] sm:$0xff] %vm3259, %v3252
        %3261 = vst.msk [vmem:[%s3258 + $0x8] sm:$0xff] %vm3259, %v3253
        %3262 = vst.msk [vmem:[%s3258 + $0x10] sm:$0xff] %vm3259, %v3254
        %3263 = vst.msk [vmem:[%s3258 + $0x18] sm:$0xff] %vm3259, %v3255
        %3264 = vst.msk [vmem:[%s3258 + $0x20] sm:$0xff] %vm3259, %v3256
      $region45: #{cnn_forward.6} parent=39 // loop_footer
        %s237 = sadd.s32 1, %s233
      $region46: #{cnn_forward.6} parent=39 // loop_footer_branch
        %232 = sbr.rel target = $region42
      $region47: #{cnn_forward.6} parent=39 // loop_exit
        _
      %p3265 = scmp.lt.s32.totalorder %s16, 1
      %s3266 = scalar_select %p3265, %s16, 1
      %s3267 = smul.addr %s3266, 20
      %s3268 = smul.addr %s3267, 8
      %s3269 = scalar_lea.vmem %s5, %s3268
      // Predicated region
      $region48: #{cnn_forward.6} parent=39 // pred_check
        %p3270 = pneg %p144
      $region49: #{cnn_forward.6} parent=39 // pred_check_branch
        %3272 = sbr.rel (%p3270) target = $region51
      $region50: #{cnn_forward.6} parent=39 // pred_region
        _
      $region51: #{cnn_forward.6} parent=39 // pred_fallthru
        _
    $region40: #{cnn_forward.6} parent=5 // pred_fallthru
      _
    %p3273 = scmp.le.s32.totalorder 2, %s11
    // Predicated region
    $region52: #{cnn_forward.6} parent=5 // pred_check
      %p3274 = pneg %p3273
    $region53: #{cnn_forward.6} parent=5 // pred_check_branch
      %3276 = sbr.rel (%p3274) target = $region55
    $region54: #{cnn_forward.6} parent=5 // pred_region
      %s3277 = ssub.s32 %s11, 2
      // Predicated region
      $region56: #{cnn_forward.6} parent=54 // pred_check
        %p3278 = pneg %p150
      $region57: #{cnn_forward.6} parent=54 // pred_check_branch
        %3280 = sbr.rel (%p3278) target = $region59
      $region58: #{cnn_forward.6} parent=54 // pred_region
        %p3281 = scmp.lt.s32.totalorder %s17, 1
        %s3282 = scalar_select %p3281, %s17, 1
        %s3283 = smul.addr %s3282, 20
        %s3284 = smul.addr %s3283, 8
        %s3285 = scalar_lea.vmem %s5, %s3284
      $region59: #{cnn_forward.6} parent=54 // pred_fallthru
        _
    $region55: #{cnn_forward.6} parent=5 // pred_fallthru
      _
  $region6: #{cnn_forward.6} parent=0 // loop_footer
    %s15 = sadd.s32 1, %s11
  $region7: #{cnn_forward.6} parent=0 // loop_footer_branch
    %10 = sbr.rel target = $region3
  $region8: #{cnn_forward.6} parent=0 // loop_exit
    _

// kernel: cnn_forward.7
$region0: #{cnn_forward.7}
  #allocation0 [shape = 'u32[]', space=smem, size = 0x4, offset = 0x4, fixed_abs, tag = 'smem constant byte address 0x4 - core index']
  #allocation1 [shape = 'u32[72,128]{1,0:T(1,128)}', space=vmem, size = 0x9000, scoped, tag = 'internal scratch']
  %s0 = inlined_call_operand.vmem [shape: f32[2,640], index: 0, kind: input, shape index: {}]
  %s1 = inlined_call_operand.vmem [shape: f32[640,40], index: 1, kind: input, shape index: {}]
  %s2 = inlined_call_operand.vmem [shape: f32[1,40], index: 2, kind: input, shape index: {}]
  %s3 = inlined_call_operand.hbm [shape: f32[2,40], index: 3, kind: output, shape index: {}]
  %s4 = sld [smem:[#allocation0]]
  $region22: #{cnn_forward.7} parent=0
    _
  %s6 = ssub.s32 1, %s4
  %s7 = scalar_select 0, %s6, %s4
  $region1: #{cnn_forward.7} parent=0
    #allocation2 [shape = 'u8[1024]{0}', space=vmem, size = 0x400, scoped, tag = 'output window, operand 0, single buffered']
    #allocation3 [shape = 's32[1]{0}', space=sflag, size = 0x4, scoped, tag = 'scoped memory for cnn_forward.7']
    %8 = vsyncpa [#allocation3], 0
    // Predicated region
    $region2: #{cnn_forward.7} parent=1 // pred_check
      _
    $region3: #{cnn_forward.7} parent=1 // pred_check_branch
      %10 = sbr.rel (0) target = $region5
    $region4: #{cnn_forward.7} parent=1 // pred_region
      _
    $region5: #{cnn_forward.7} parent=1 // pred_fallthru
      _
    // Predicated region
    $region6: #{cnn_forward.7} parent=1 // pred_check
      _
    $region7: #{cnn_forward.7} parent=1 // pred_check_branch
      %12 = sbr.rel (0) target = $region9
    $region8: #{cnn_forward.7} parent=1 // pred_region
      _
    $region9: #{cnn_forward.7} parent=1 // pred_fallthru
      _
    // Predicated region
    $region10: #{cnn_forward.7} parent=1 // pred_check
      _
    $region11: #{cnn_forward.7} parent=1 // pred_check_branch
      %14 = sbr.rel (0) target = $region13
    $region12: #{cnn_forward.7} parent=1 // pred_region
      _
    $region13: #{cnn_forward.7} parent=1 // pred_fallthru
      _
    %v15 = vld [vmem:[%s0] sm:$0xff]
    %v16 = vld [vmem:[%s0 + $0x8] sm:$0x3]
    %v17 = vld [vmem:[%s1] sm:$0xff]
    %v18 = vld [vmem:[%s1 + $0x8] sm:$0xff]
    %v19 = vld [vmem:[%s1 + $0x10] sm:$0xff]
    %v20 = vld [vmem:[%s1 + $0x18] sm:$0xff]
    %v21 = vld [vmem:[%s1 + $0x20] sm:$0xff]
    %v22 = vld [vmem:[%s1 + $0x28] sm:$0xff]
    %v23 = vld [vmem:[%s1 + $0x30] sm:$0xff]
    %v24 = vld [vmem:[%s1 + $0x38] sm:$0xff]
    %v25 = vld [vmem:[%s1 + $0x40] sm:$0xff]
    %v26 = vld [vmem:[%s1 + $0x48] sm:$0xff]
    %v27 = vld [vmem:[%s1 + $0x50] sm:$0xff]
    %v28 = vld [vmem:[%s1 + $0x58] sm:$0xff]
    %v29 = vld [vmem:[%s1 + $0x60] sm:$0xff]
    %v30 = vld [vmem:[%s1 + $0x68] sm:$0xff]
    %v31 = vld [vmem:[%s1 + $0x70] sm:$0xff]
    %v32 = vld [vmem:[%s1 + $0x78] sm:$0xff]
    %v33 = vld [vmem:[%s1 + $0x80] sm:$0xff]
    %v34 = vld [vmem:[%s1 + $0x88] sm:$0xff]
    %v35 = vld [vmem:[%s1 + $0x90] sm:$0xff]
    %v36 = vld [vmem:[%s1 + $0x98] sm:$0xff]
    %v37 = vld [vmem:[%s1 + $0xa0] sm:$0xff]
    %v38 = vld [vmem:[%s1 + $0xa8] sm:$0xff]
    %v39 = vld [vmem:[%s1 + $0xb0] sm:$0xff]
    %v40 = vld [vmem:[%s1 + $0xb8] sm:$0xff]
    %v41 = vld [vmem:[%s1 + $0xc0] sm:$0xff]
    %v42 = vld [vmem:[%s1 + $0xc8] sm:$0xff]
    %v43 = vld [vmem:[%s1 + $0xd0] sm:$0xff]
    %v44 = vld [vmem:[%s1 + $0xd8] sm:$0xff]
    %v45 = vld [vmem:[%s1 + $0xe0] sm:$0xff]
    %v46 = vld [vmem:[%s1 + $0xe8] sm:$0xff]
    %v47 = vld [vmem:[%s1 + $0xf0] sm:$0xff]
    %v48 = vld [vmem:[%s1 + $0xf8] sm:$0xff]
    %v49 = vld [vmem:[%s1 + $0x100] sm:$0xff]
    %v50 = vld [vmem:[%s1 + $0x108] sm:$0xff]
    %v51 = vld [vmem:[%s1 + $0x110] sm:$0xff]
    %v52 = vld [vmem:[%s1 + $0x118] sm:$0xff]
    %v53 = vld [vmem:[%s1 + $0x120] sm:$0xff]
    %v54 = vld [vmem:[%s1 + $0x128] sm:$0xff]
    %v55 = vld [vmem:[%s1 + $0x130] sm:$0xff]
    %v56 = vld [vmem:[%s1 + $0x138] sm:$0xff]
    %v57 = vld [vmem:[%s1 + $0x140] sm:$0xff]
    %v58 = vld [vmem:[%s1 + $0x148] sm:$0xff]
    %v59 = vld [vmem:[%s1 + $0x150] sm:$0xff]
    %v60 = vld [vmem:[%s1 + $0x158] sm:$0xff]
    %v61 = vld [vmem:[%s1 + $0x160] sm:$0xff]
    %v62 = vld [vmem:[%s1 + $0x168] sm:$0xff]
    %v63 = vld [vmem:[%s1 + $0x170] sm:$0xff]
    %v64 = vld [vmem:[%s1 + $0x178] sm:$0xff]
    %v65 = vld [vmem:[%s1 + $0x180] sm:$0xff]
    %v66 = vld [vmem:[%s1 + $0x188] sm:$0xff]
    %v67 = vld [vmem:[%s1 + $0x190] sm:$0xff]
    %v68 = vld [vmem:[%s1 + $0x198] sm:$0xff]
    %v69 = vld [vmem:[%s1 + $0x1a0] sm:$0xff]
    %v70 = vld [vmem:[%s1 + $0x1a8] sm:$0xff]
    %v71 = vld [vmem:[%s1 + $0x1b0] sm:$0xff]
    %v72 = vld [vmem:[%s1 + $0x1b8] sm:$0xff]
    %v73 = vld [vmem:[%s1 + $0x1c0] sm:$0xff]
    %v74 = vld [vmem:[%s1 + $0x1c8] sm:$0xff]
    %v75 = vld [vmem:[%s1 + $0x1d0] sm:$0xff]
    %v76 = vld [vmem:[%s1 + $0x1d8] sm:$0xff]
    %v77 = vld [vmem:[%s1 + $0x1e0] sm:$0xff]
    %v78 = vld [vmem:[%s1 + $0x1e8] sm:$0xff]
    %v79 = vld [vmem:[%s1 + $0x1f0] sm:$0xff]
    %v80 = vld [vmem:[%s1 + $0x1f8] sm:$0xff]
    %v81 = vld [vmem:[%s1 + $0x200] sm:$0xff]
    %v82 = vld [vmem:[%s1 + $0x208] sm:$0xff]
    %v83 = vld [vmem:[%s1 + $0x210] sm:$0xff]
    %v84 = vld [vmem:[%s1 + $0x218] sm:$0xff]
    %v85 = vld [vmem:[%s1 + $0x220] sm:$0xff]
    %v86 = vld [vmem:[%s1 + $0x228] sm:$0xff]
    %v87 = vld [vmem:[%s1 + $0x230] sm:$0xff]
    %v88 = vld [vmem:[%s1 + $0x238] sm:$0xff]
    %v89 = vld [vmem:[%s1 + $0x240] sm:$0xff]
    %v90 = vld [vmem:[%s1 + $0x248] sm:$0xff]
    %v91 = vld [vmem:[%s1 + $0x250] sm:$0xff]
    %v92 = vld [vmem:[%s1 + $0x258] sm:$0xff]
    %v93 = vld [vmem:[%s1 + $0x260] sm:$0xff]
    %v94 = vld [vmem:[%s1 + $0x268] sm:$0xff]
    %v95 = vld [vmem:[%s1 + $0x270] sm:$0xff]
    %v96 = vld [vmem:[%s1 + $0x278] sm:$0xff]
    %v97 = vld [vmem:[%s2] sm:$0x1]
    %v99 = vperm.slane %v97, 0
    %103 = vst [vmem:[#allocation1] ss:$4 sm:$0xff] %v15
    %s104 = scalar_lea.vmem [#allocation1], 32
    %105 = vst [vmem:[%s104] ss:$4 sm:$0xff] %v16
    %v106 = vld.sshfl [vmem:[#allocation1] sm:$0xff pattern:$0x73625140]
    %v107 = vld.sshfl [vmem:[#allocation1 + $0x8] sm:$0xff pattern:$0x73625140]
    %v108 = vld.sshfl [vmem:[#allocation1 + $0x10] sm:$0xff pattern:$0x73625140]
    %v109 = vld.sshfl [vmem:[#allocation1 + $0x18] sm:$0xff pattern:$0x73625140]
    %v110 = vld.sshfl [vmem:[#allocation1 + $0x20] sm:$0xff pattern:$0x73625140]
    %116 = vmatpush.msra.mxu0 %v32
    %117 = vmatpush.msra.mxu0 %v31
    %118 = vmatpush.msra.mxu0 %v30
    %119 = vmatpush.msra.mxu0 %v29
    %120 = vmatpush.msra.mxu0 %v28
    %121 = vmatpush.msra.mxu0 %v27
    %122 = vmatpush.msra.mxu0 %v26
    %123 = vmatpush.msra.mxu0 %v25
    %124 = vmatpush.msra.mxu0 %v24
    %125 = vmatpush.msra.mxu0 %v23
    %126 = vmatpush.msra.mxu0 %v22
    %127 = vmatpush.msra.mxu0 %v21
    %128 = vmatpush.msra.mxu0 %v20
    %129 = vmatpush.msra.mxu0 %v19
    %130 = vmatpush.msra.mxu0 %v18
    %131 = vmatpush.msra.mxu0 %v17
    %132 = vmatmul.f32.gmra.mxu0 %v106
    %v133 = vpop.f32.mrf.mxu0
    %v134 = vadd.f32 %v99, %v133
    %135 = vdwg.mxu0
    %136 = vmatpush.msra.mxu0 %v48
    %137 = vmatpush.msra.mxu0 %v47
    %138 = vmatpush.msra.mxu0 %v46
    %139 = vmatpush.msra.mxu0 %v45
    %140 = vmatpush.msra.mxu0 %v44
    %141 = vmatpush.msra.mxu0 %v43
    %142 = vmatpush.msra.mxu0 %v42
    %143 = vmatpush.msra.mxu0 %v41
    %144 = vmatpush.msra.mxu0 %v40
    %145 = vmatpush.msra.mxu0 %v39
    %146 = vmatpush.msra.mxu0 %v38
    %147 = vmatpush.msra.mxu0 %v37
    %148 = vmatpush.msra.mxu0 %v36
    %149 = vmatpush.msra.mxu0 %v35
    %150 = vmatpush.msra.mxu0 %v34
    %151 = vmatpush.msra.mxu0 %v33
    %152 = vmatmul.f32.gmra.mxu0 %v107
    %v153 = vpop.f32.mrf.mxu0
    %v154 = vadd.f32 %v134, %v153
    %155 = vdwg.mxu0
    %156 = vmatpush.msra.mxu0 %v64
    %157 = vmatpush.msra.mxu0 %v63
    %158 = vmatpush.msra.mxu0 %v62
    %159 = vmatpush.msra.mxu0 %v61
    %160 = vmatpush.msra.mxu0 %v60
    %161 = vmatpush.msra.mxu0 %v59
    %162 = vmatpush.msra.mxu0 %v58
    %163 = vmatpush.msra.mxu0 %v57
    %164 = vmatpush.msra.mxu0 %v56
    %165 = vmatpush.msra.mxu0 %v55
    %166 = vmatpush.msra.mxu0 %v54
    %167 = vmatpush.msra.mxu0 %v53
    %168 = vmatpush.msra.mxu0 %v52
    %169 = vmatpush.msra.mxu0 %v51
    %170 = vmatpush.msra.mxu0 %v50
    %171 = vmatpush.msra.mxu0 %v49
    %172 = vmatmul.f32.gmra.mxu0 %v108
    %v173 = vpop.f32.mrf.mxu0
    %v174 = vadd.f32 %v154, %v173
    %175 = vdwg.mxu0
    %176 = vmatpush.msra.mxu0 %v80
    %177 = vmatpush.msra.mxu0 %v79
    %178 = vmatpush.msra.mxu0 %v78
    %179 = vmatpush.msra.mxu0 %v77
    %180 = vmatpush.msra.mxu0 %v76
    %181 = vmatpush.msra.mxu0 %v75
    %182 = vmatpush.msra.mxu0 %v74
    %183 = vmatpush.msra.mxu0 %v73
    %184 = vmatpush.msra.mxu0 %v72
    %185 = vmatpush.msra.mxu0 %v71
    %186 = vmatpush.msra.mxu0 %v70
    %187 = vmatpush.msra.mxu0 %v69
    %188 = vmatpush.msra.mxu0 %v68
    %189 = vmatpush.msra.mxu0 %v67
    %190 = vmatpush.msra.mxu0 %v66
    %191 = vmatpush.msra.mxu0 %v65
    %192 = vmatmul.f32.gmra.mxu0 %v109
    %v193 = vpop.f32.mrf.mxu0
    %v194 = vadd.f32 %v174, %v193
    %195 = vdwg.mxu0
    %196 = vmatpush.msra.mxu0 %v96
    %197 = vmatpush.msra.mxu0 %v95
    %198 = vmatpush.msra.mxu0 %v94
    %199 = vmatpush.msra.mxu0 %v93
    %200 = vmatpush.msra.mxu0 %v92
    %201 = vmatpush.msra.mxu0 %v91
    %202 = vmatpush.msra.mxu0 %v90
    %203 = vmatpush.msra.mxu0 %v89
    %204 = vmatpush.msra.mxu0 %v88
    %205 = vmatpush.msra.mxu0 %v87
    %206 = vmatpush.msra.mxu0 %v86
    %207 = vmatpush.msra.mxu0 %v85
    %208 = vmatpush.msra.mxu0 %v84
    %209 = vmatpush.msra.mxu0 %v83
    %210 = vmatpush.msra.mxu0 %v82
    %211 = vmatpush.msra.mxu0 %v81
    %212 = vmatmul.f32.gmra.mxu0 %v110
    %v213 = vpop.f32.mrf.mxu0
    %v214 = vadd.f32 %v194, %v213
    %215 = vdwg.mxu0
    %vm216 = vcmask 320512
    %217 = vst.msk [vmem:[#allocation2] sm:$0x3] %vm216, %v214
    // Predicated region
    $region14: #{cnn_forward.7} parent=1 // pred_check
      _
    $region15: #{cnn_forward.7} parent=1 // pred_check_branch
      %219 = sbr.rel (0) target = $region17
    $region16: #{cnn_forward.7} parent=1 // pred_region
      %221 = vsyncadd [#allocation3], 0
      %s223 = sshll.u32 [#allocation2], 4
      %s224 = int_to_ptr.vmem [resolvable:$true] %s223
      %s225 = sshll.u32 %s3, 4
      %s226 = int_to_ptr.hbm [resolvable:$true] %s225
      %228 = dma.vmem_to_hbm [thread:$0]  %s224, 32, %s226, [#allocation3]
    $region17: #{cnn_forward.7} parent=1 // pred_fallthru
      _
    // Predicated region
    $region18: #{cnn_forward.7} parent=1 // pred_check
      _
    $region19: #{cnn_forward.7} parent=1 // pred_check_branch
      %230 = sbr.rel (0) target = $region21
    $region20: #{cnn_forward.7} parent=1 // pred_region
      %232 = dma.done [#allocation3], 32
    $region21: #{cnn_forward.7} parent=1 // pred_fallthru
      _
    %233 = vsyncpa [#allocation3], 1

</llo_original>
